<compile_context>
chip_gen: v6e
topology: v6e:2x2x1
jax: 0.10.0
libtpu: 0.0.40
codegen_flags: <defaults>
</compile_context>

<pallas_src>
import jax
import jax.numpy as jnp
from jax.experimental import pallas as pl
from jax.experimental.pallas import tpu as pltpu

RADII = (2, 3, 4, 5)                 # temporal paddings for widths 5, 7, 9, 11
NUM_OFFSETS = 2 * max(RADII) + 1     # 11 temporal taps total window
C_IN = 1024                          # conv kernel spans all input channels
C_OUT = 32 * len(RADII)              # 4 branches x 32 output channels = 128
K_TOTAL = NUM_OFFSETS * C_IN         # im2col contraction length = 11264
EPS = 1e-6                           # F.pairwise_distance default eps


def _interesting_cnn_kernel(xcol_ref, wflat_ref, bias_ref, afeat_ref, out_ref):
    B, T, _ = afeat_ref.shape

    # Fused 4-branch conv as a single long-K im2col matmul (bf16 in, f32 acc).
    acc = jnp.dot(xcol_ref[...], wflat_ref[...],
                  preferred_element_type=jnp.float32)          # (B*T, 128)

    conv = jnp.maximum(acc.reshape(B, T, C_OUT) + bias_ref[...], 0.0)

    # F.pairwise_distance(relu(conv).view(B,-1), afeat.view(B,-1), eps=1e-6):
    # the flatten order (channel-major vs time-major) does not affect the sum.
    diff = conv - afeat_ref[...] + EPS
    s = jnp.sum(jnp.sum(diff * diff, axis=2), axis=1, keepdims=True)   # (B, 1)
    out_ref[...] = jnp.sqrt(s)


def pack_conv_params(conv_weights, conv_biases):
    """One-time packing of the four Conv2d branches.

    conv_weights: 4 arrays of shape (32, 1, 1024, K), K = 5, 7, 9, 11.
    conv_biases:  4 arrays of shape (32,).
    Returns (wflat, bias): (11*1024, 128) bf16 weight matrix whose rows are
    ordered [tap, channel] to match the kernel's im2col slab, and a (1, 128)
    f32 bias.  Call once and reuse across forward calls.
    """
    pad = max(RADII)
    wstack = jnp.zeros((NUM_OFFSETS, C_IN, C_OUT), jnp.float32)
    for bi, (w, p) in enumerate(zip(conv_weights, RADII)):
        w = jnp.asarray(w, jnp.float32)                 # (32, 1, 1024, 2p+1)
        for k in range(2 * p + 1):
            off = k - p + pad                           # tap index in [0, 10]
            wstack = wstack.at[off, :, bi * 32:(bi + 1) * 32].set(w[:, 0, :, k].T)
    wflat = wstack.reshape(K_TOTAL, C_OUT).astype(jnp.bfloat16)
    bias = jnp.concatenate(
        [jnp.asarray(b, jnp.float32) for b in conv_biases]).reshape(1, C_OUT)
    return jax.device_put(wflat), jax.device_put(bias)


@jax.jit
def interesting_cnn_forward(vfeat, afeat, wflat, bias):
    """vfeat: (B, 1024, T) f32, afeat: (B, 128, T) f32.
    wflat/bias: precomputed by pack_conv_params().
    Returns the pairwise L2 distance, shape (B,)."""
    B, C, T = vfeat.shape
    assert C == C_IN
    pad = max(RADII)

    # ---- layout plumbing (channel-last / lane-dense) + im2col, fused by jit.
    v_t = jnp.transpose(vfeat, (0, 2, 1)).astype(jnp.bfloat16)     # (B, T, 1024)
    vpad = jnp.pad(v_t, ((0, 0), (pad, pad), (0, 0)))              # (B, T+10, 1024)
    cols = jnp.stack([vpad[:, i:i + T, :] for i in range(NUM_OFFSETS)], axis=2)
    xcol = cols.reshape(B * T, K_TOTAL)                            # (B*T, 11264)
    a_t = jnp.transpose(afeat, (0, 2, 1)).astype(jnp.float32)      # (B, T, 128)

    vmem = pl.BlockSpec(memory_space=pltpu.MemorySpace.VMEM)
    out = pl.pallas_call(
        _interesting_cnn_kernel,
        out_shape=jax.ShapeDtypeStruct((B, 1), jnp.float32),
        in_specs=[vmem] * 4,
        out_specs=vmem,
    )(xcol, wflat, bias, a_t)
    return out[:, 0]


def _xavier_uniform_conv(key, shape):
    # mirrors torch.nn.init.xavier_uniform_ for a Conv2d weight (O, I, kH, kW)
    o, i, kh, kw = shape
    fan_in = i * kh * kw
    fan_out = o * kh * kw
    bound = (6.0 / (fan_in + fan_out)) ** 0.5
    return jax.random.uniform(key, shape, minval=-bound, maxval=bound,
                              dtype=jnp.float32)


if __name__ == "__main__":
    key = jax.random.PRNGKey(0)
    k_v, k_a, *k_w = jax.random.split(key, 6)

    B, T = 4, 8                                      # small demo shapes
    vfeat = jax.random.normal(k_v, (B, C_IN, T), dtype=jnp.float32)
    afeat = jax.random.normal(k_a, (B, C_OUT, T), dtype=jnp.float32)

    widths = tuple(2 * p + 1 for p in RADII)         # (5, 7, 9, 11)
    conv_weights = [_xavier_uniform_conv(k, (32, 1, C_IN, K))
                    for k, K in zip(k_w, widths)]
    conv_biases = [jnp.zeros((32,), jnp.float32) for _ in widths]

    # One-time parameter packing (hoisted out of the per-call path).
    wflat, bias = pack_conv_params(conv_weights, conv_biases)

    dist = interesting_cnn_forward(vfeat, afeat, wflat, bias)
    jax.block_until_ready(dist)
    assert dist.shape == (B,), dist.shape

    # Plain-JAX f32 reference of the same forward pass.
    def conv_branch(x, w, b, p):
        out = jax.lax.conv_general_dilated(
            x[:, None, :, :], w, window_strides=(1, 1),
            padding=((0, 0), (p, p)),
            dimension_numbers=("NCHW", "OIHW", "NCHW"))
        return out[:, :, 0, :] + b[:, None]           # (B, 32, T)

    branches = [conv_branch(vfeat, w, b, p)
                for w, b, p in zip(conv_weights, conv_biases, RADII)]
    vf = jnp.maximum(jnp.concatenate(branches, axis=1), 0.0).reshape(B, -1)
    af = afeat.reshape(B, -1)
    d_ref = jnp.sqrt(jnp.sum((vf - af + EPS) ** 2, axis=1))

    assert jnp.allclose(dist, d_ref, rtol=5e-3, atol=5e-3), (dist, d_ref)
    print("KERNEL_OK")
</pallas_src>

<mosaic_0001>
module attributes {stable_mosaic.version = 11 : i64} {
  func.func @_interesting_cnn_kernel(%arg0: memref<32x11264xbf16, #tpu.memory_space<vmem>>, %arg1: memref<11264x128xbf16, #tpu.memory_space<vmem>>, %arg2: memref<1x128xf32, #tpu.memory_space<vmem>>, %arg3: memref<4x8x128xf32, #tpu.memory_space<vmem>>, %arg4: memref<4x1xf32, #tpu.memory_space<vmem>>) attributes {dimension_semantics = [], scalar_prefetch = 0 : i64, scratch_operands = 0 : i64, tpu.core_type = #tpu.core_type<tc>} {
    %c0 = arith.constant 0 : index
    %c0_0 = arith.constant 0 : index
    %0 = vector.load %arg0[%c0, %c0_0] : memref<32x11264xbf16, #tpu.memory_space<vmem>>, vector<32x11264xbf16>
    %c0_1 = arith.constant 0 : index
    %c0_2 = arith.constant 0 : index
    %1 = vector.load %arg1[%c0_1, %c0_2] : memref<11264x128xbf16, #tpu.memory_space<vmem>>, vector<11264x128xbf16>
    %cst = arith.constant dense<0.000000e+00> : vector<32x128xf32>
    %2 = tpu.matmul %0, %1, %cst {dimension_numbers = #tpu.dot_dimension_numbers<[1], [0], [0], [1], [0, 0, 1, 1], [], []>} : vector<32x11264xbf16>, vector<11264x128xbf16>, vector<32x128xf32> -> vector<32x128xf32>
    %3 = vector.shape_cast %2 : vector<32x128xf32> to vector<4x8x128xf32>
    %c0_3 = arith.constant 0 : index
    %c0_4 = arith.constant 0 : index
    %4 = vector.load %arg2[%c0_3, %c0_4] : memref<1x128xf32, #tpu.memory_space<vmem>>, vector<1x128xf32>
    %5 = vector.shape_cast %4 : vector<1x128xf32> to vector<1x1x128xf32>
    %6 = vector.broadcast %5 : vector<1x1x128xf32> to vector<4x8x128xf32>
    %7 = arith.addf %3, %6 : vector<4x8x128xf32>
    %cst_5 = arith.constant 0.000000e+00 : f32
    %8 = vector.broadcast %cst_5 : f32 to vector<4x8x128xf32>
    %9 = arith.maximumf %7, %8 : vector<4x8x128xf32>
    %c0_6 = arith.constant 0 : index
    %c0_7 = arith.constant 0 : index
    %c0_8 = arith.constant 0 : index
    %10 = vector.load %arg3[%c0_6, %c0_7, %c0_8] : memref<4x8x128xf32, #tpu.memory_space<vmem>>, vector<4x8x128xf32>
    %11 = arith.subf %9, %10 : vector<4x8x128xf32>
    %cst_9 = arith.constant 9.99999997E-7 : f32
    %12 = vector.broadcast %cst_9 : f32 to vector<4x8x128xf32>
    %13 = arith.addf %11, %12 : vector<4x8x128xf32>
    %14 = arith.mulf %13, %13 : vector<4x8x128xf32>
    %cst_10 = arith.constant dense<0.000000e+00> : vector<4x8xf32>
    %15 = vector.multi_reduction <add>, %14, %cst_10 [2] : vector<4x8x128xf32> to vector<4x8xf32>
    %cst_11 = arith.constant dense<0.000000e+00> : vector<4xf32>
    %16 = vector.multi_reduction <add>, %15, %cst_11 [1] : vector<4x8xf32> to vector<4xf32>
    %17 = vector.shape_cast %16 : vector<4xf32> to vector<4x1xf32>
    %18 = math.sqrt %17 : vector<4x1xf32>
    %c0_12 = arith.constant 0 : index
    %c0_13 = arith.constant 0 : index
    %19 = vector.load %arg4[%c0_12, %c0_13] : memref<4x1xf32, #tpu.memory_space<vmem>>, vector<4x1xf32>
    tpu.vector_store %arg4[%c0_12, %c0_13], %18 {strides = array<i32>} : memref<4x1xf32, #tpu.memory_space<vmem>>, vector<4x1xf32>,
    return
  }
}

</mosaic_0001>

<llo_original>
// kernel: interesting_cnn_forward.1
$region0: #{interesting_cnn_forward.1}
  #allocation0 [shape = 'u32[]', space=smem, size = 0x4, offset = 0x4, fixed_abs, tag = 'smem constant byte address 0x4 - core index']
  #allocation1 [shape = 'u32[144,128]{1,0:T(1,128)}', space=vmem, size = 0x12000, scoped, tag = 'internal scratch']
  %s0 = inlined_call_operand.vmem [shape: bf16[32,11264], index: 0, kind: input, shape index: {}]
  %s1 = inlined_call_operand.vmem [shape: bf16[11264,128], index: 1, kind: input, shape index: {}]
  %s2 = inlined_call_operand.vmem [shape: f32[1,128], index: 2, kind: input, shape index: {}]
  %s3 = inlined_call_operand.vmem [shape: f32[4,8,128], index: 3, kind: input, shape index: {}]
  %s4 = inlined_call_operand.vmem [shape: f32[4,1], index: 4, kind: output, shape index: {}]
  %s5 = sld [smem:[#allocation0]]
  $region26: #{interesting_cnn_forward.1} parent=0
    _
  %s7 = ssub.s32 1, %s5
  %s8 = scalar_select 0, %s7, %s5
  // Predicated region
  $region2: #{interesting_cnn_forward.1} parent=0 // pred_check
    _
  $region3: #{interesting_cnn_forward.1} parent=0 // pred_check_branch
    %10 = sbr.rel (0) target = $region5
  $region4: #{interesting_cnn_forward.1} parent=0 // pred_region
    _
  $region5: #{interesting_cnn_forward.1} parent=0 // pred_fallthru
    _
  // Predicated region
  $region6: #{interesting_cnn_forward.1} parent=0 // pred_check
    _
  $region7: #{interesting_cnn_forward.1} parent=0 // pred_check_branch
    %12 = sbr.rel (0) target = $region9
  $region8: #{interesting_cnn_forward.1} parent=0 // pred_region
    _
  $region9: #{interesting_cnn_forward.1} parent=0 // pred_fallthru
    _
  // Predicated region
  $region10: #{interesting_cnn_forward.1} parent=0 // pred_check
    _
  $region11: #{interesting_cnn_forward.1} parent=0 // pred_check_branch
    %14 = sbr.rel (0) target = $region13
  $region12: #{interesting_cnn_forward.1} parent=0 // pred_region
    _
  $region13: #{interesting_cnn_forward.1} parent=0 // pred_fallthru
    _
  // Predicated region
  $region14: #{interesting_cnn_forward.1} parent=0 // pred_check
    _
  $region15: #{interesting_cnn_forward.1} parent=0 // pred_check_branch
    %16 = sbr.rel (0) target = $region17
  $region16: #{interesting_cnn_forward.1} parent=0 // pred_region
    _
  $region17: #{interesting_cnn_forward.1} parent=0 // pred_fallthru
    _
  %v18 = vld [vmem:[%s0] sm:$0xff]
  %v19 = vld [vmem:[%s0 + $0x8] sm:$0xff]
  %v20 = vld [vmem:[%s0 + $0x10] sm:$0xff]
  %v21 = vld [vmem:[%s0 + $0x18] sm:$0xff]
  %v22 = vld [vmem:[%s0 + $0x20] sm:$0xff]
  %v23 = vld [vmem:[%s0 + $0x28] sm:$0xff]
  %v24 = vld [vmem:[%s0 + $0x30] sm:$0xff]
  %v25 = vld [vmem:[%s0 + $0x38] sm:$0xff]
  %v26 = vld [vmem:[%s0 + $0x40] sm:$0xff]
  %v27 = vld [vmem:[%s0 + $0x48] sm:$0xff]
  %v28 = vld [vmem:[%s0 + $0x50] sm:$0xff]
  %v29 = vld [vmem:[%s0 + $0x58] sm:$0xff]
  %v30 = vld [vmem:[%s0 + $0x60] sm:$0xff]
  %v31 = vld [vmem:[%s0 + $0x68] sm:$0xff]
  %v32 = vld [vmem:[%s0 + $0x70] sm:$0xff]
  %v33 = vld [vmem:[%s0 + $0x78] sm:$0xff]
  %v34 = vld [vmem:[%s0 + $0x80] sm:$0xff]
  %v35 = vld [vmem:[%s0 + $0x88] sm:$0xff]
  %v36 = vld [vmem:[%s0 + $0x90] sm:$0xff]
  %v37 = vld [vmem:[%s0 + $0x98] sm:$0xff]
  %v38 = vld [vmem:[%s0 + $0xa0] sm:$0xff]
  %v39 = vld [vmem:[%s0 + $0xa8] sm:$0xff]
  %v40 = vld [vmem:[%s0 + $0xb0] sm:$0xff]
  %v41 = vld [vmem:[%s0 + $0xb8] sm:$0xff]
  %v42 = vld [vmem:[%s0 + $0xc0] sm:$0xff]
  %v43 = vld [vmem:[%s0 + $0xc8] sm:$0xff]
  %v44 = vld [vmem:[%s0 + $0xd0] sm:$0xff]
  %v45 = vld [vmem:[%s0 + $0xd8] sm:$0xff]
  %v46 = vld [vmem:[%s0 + $0xe0] sm:$0xff]
  %v47 = vld [vmem:[%s0 + $0xe8] sm:$0xff]
  %v48 = vld [vmem:[%s0 + $0xf0] sm:$0xff]
  %v49 = vld [vmem:[%s0 + $0xf8] sm:$0xff]
  %v50 = vld [vmem:[%s0 + $0x100] sm:$0xff]
  %v51 = vld [vmem:[%s0 + $0x108] sm:$0xff]
  %v52 = vld [vmem:[%s0 + $0x110] sm:$0xff]
  %v53 = vld [vmem:[%s0 + $0x118] sm:$0xff]
  %v54 = vld [vmem:[%s0 + $0x120] sm:$0xff]
  %v55 = vld [vmem:[%s0 + $0x128] sm:$0xff]
  %v56 = vld [vmem:[%s0 + $0x130] sm:$0xff]
  %v57 = vld [vmem:[%s0 + $0x138] sm:$0xff]
  %v58 = vld [vmem:[%s0 + $0x140] sm:$0xff]
  %v59 = vld [vmem:[%s0 + $0x148] sm:$0xff]
  %v60 = vld [vmem:[%s0 + $0x150] sm:$0xff]
  %v61 = vld [vmem:[%s0 + $0x158] sm:$0xff]
  %v62 = vld [vmem:[%s0 + $0x160] sm:$0xff]
  %v63 = vld [vmem:[%s0 + $0x168] sm:$0xff]
  %v64 = vld [vmem:[%s0 + $0x170] sm:$0xff]
  %v65 = vld [vmem:[%s0 + $0x178] sm:$0xff]
  %v66 = vld [vmem:[%s0 + $0x180] sm:$0xff]
  %v67 = vld [vmem:[%s0 + $0x188] sm:$0xff]
  %v68 = vld [vmem:[%s0 + $0x190] sm:$0xff]
  %v69 = vld [vmem:[%s0 + $0x198] sm:$0xff]
  %v70 = vld [vmem:[%s0 + $0x1a0] sm:$0xff]
  %v71 = vld [vmem:[%s0 + $0x1a8] sm:$0xff]
  %v72 = vld [vmem:[%s0 + $0x1b0] sm:$0xff]
  %v73 = vld [vmem:[%s0 + $0x1b8] sm:$0xff]
  %v74 = vld [vmem:[%s0 + $0x1c0] sm:$0xff]
  %v75 = vld [vmem:[%s0 + $0x1c8] sm:$0xff]
  %v76 = vld [vmem:[%s0 + $0x1d0] sm:$0xff]
  %v77 = vld [vmem:[%s0 + $0x1d8] sm:$0xff]
  %v78 = vld [vmem:[%s0 + $0x1e0] sm:$0xff]
  %v79 = vld [vmem:[%s0 + $0x1e8] sm:$0xff]
  %v80 = vld [vmem:[%s0 + $0x1f0] sm:$0xff]
  %v81 = vld [vmem:[%s0 + $0x1f8] sm:$0xff]
  %v82 = vld [vmem:[%s0 + $0x200] sm:$0xff]
  %v83 = vld [vmem:[%s0 + $0x208] sm:$0xff]
  %v84 = vld [vmem:[%s0 + $0x210] sm:$0xff]
  %v85 = vld [vmem:[%s0 + $0x218] sm:$0xff]
  %v86 = vld [vmem:[%s0 + $0x220] sm:$0xff]
  %v87 = vld [vmem:[%s0 + $0x228] sm:$0xff]
  %v88 = vld [vmem:[%s0 + $0x230] sm:$0xff]
  %v89 = vld [vmem:[%s0 + $0x238] sm:$0xff]
  %v90 = vld [vmem:[%s0 + $0x240] sm:$0xff]
  %v91 = vld [vmem:[%s0 + $0x248] sm:$0xff]
  %v92 = vld [vmem:[%s0 + $0x250] sm:$0xff]
  %v93 = vld [vmem:[%s0 + $0x258] sm:$0xff]
  %v94 = vld [vmem:[%s0 + $0x260] sm:$0xff]
  %v95 = vld [vmem:[%s0 + $0x268] sm:$0xff]
  %v96 = vld [vmem:[%s0 + $0x270] sm:$0xff]
  %v97 = vld [vmem:[%s0 + $0x278] sm:$0xff]
  %v98 = vld [vmem:[%s0 + $0x280] sm:$0xff]
  %v99 = vld [vmem:[%s0 + $0x288] sm:$0xff]
  %v100 = vld [vmem:[%s0 + $0x290] sm:$0xff]
  %v101 = vld [vmem:[%s0 + $0x298] sm:$0xff]
  %v102 = vld [vmem:[%s0 + $0x2a0] sm:$0xff]
  %v103 = vld [vmem:[%s0 + $0x2a8] sm:$0xff]
  %v104 = vld [vmem:[%s0 + $0x2b0] sm:$0xff]
  %v105 = vld [vmem:[%s0 + $0x2b8] sm:$0xff]
  %v106 = vld [vmem:[%s0 + $0x2c0] sm:$0xff]
  %v107 = vld [vmem:[%s0 + $0x2c8] sm:$0xff]
  %v108 = vld [vmem:[%s0 + $0x2d0] sm:$0xff]
  %v109 = vld [vmem:[%s0 + $0x2d8] sm:$0xff]
  %v110 = vld [vmem:[%s0 + $0x2e0] sm:$0xff]
  %v111 = vld [vmem:[%s0 + $0x2e8] sm:$0xff]
  %v112 = vld [vmem:[%s0 + $0x2f0] sm:$0xff]
  %v113 = vld [vmem:[%s0 + $0x2f8] sm:$0xff]
  %v114 = vld [vmem:[%s0 + $0x300] sm:$0xff]
  %v115 = vld [vmem:[%s0 + $0x308] sm:$0xff]
  %v116 = vld [vmem:[%s0 + $0x310] sm:$0xff]
  %v117 = vld [vmem:[%s0 + $0x318] sm:$0xff]
  %v118 = vld [vmem:[%s0 + $0x320] sm:$0xff]
  %v119 = vld [vmem:[%s0 + $0x328] sm:$0xff]
  %v120 = vld [vmem:[%s0 + $0x330] sm:$0xff]
  %v121 = vld [vmem:[%s0 + $0x338] sm:$0xff]
  %v122 = vld [vmem:[%s0 + $0x340] sm:$0xff]
  %v123 = vld [vmem:[%s0 + $0x348] sm:$0xff]
  %v124 = vld [vmem:[%s0 + $0x350] sm:$0xff]
  %v125 = vld [vmem:[%s0 + $0x358] sm:$0xff]
  %v126 = vld [vmem:[%s0 + $0x360] sm:$0xff]
  %v127 = vld [vmem:[%s0 + $0x368] sm:$0xff]
  %v128 = vld [vmem:[%s0 + $0x370] sm:$0xff]
  %v129 = vld [vmem:[%s0 + $0x378] sm:$0xff]
  %v130 = vld [vmem:[%s0 + $0x380] sm:$0xff]
  %v131 = vld [vmem:[%s0 + $0x388] sm:$0xff]
  %v132 = vld [vmem:[%s0 + $0x390] sm:$0xff]
  %v133 = vld [vmem:[%s0 + $0x398] sm:$0xff]
  %v134 = vld [vmem:[%s0 + $0x3a0] sm:$0xff]
  %v135 = vld [vmem:[%s0 + $0x3a8] sm:$0xff]
  %v136 = vld [vmem:[%s0 + $0x3b0] sm:$0xff]
  %v137 = vld [vmem:[%s0 + $0x3b8] sm:$0xff]
  %v138 = vld [vmem:[%s0 + $0x3c0] sm:$0xff]
  %v139 = vld [vmem:[%s0 + $0x3c8] sm:$0xff]
  %v140 = vld [vmem:[%s0 + $0x3d0] sm:$0xff]
  %v141 = vld [vmem:[%s0 + $0x3d8] sm:$0xff]
  %v142 = vld [vmem:[%s0 + $0x3e0] sm:$0xff]
  %v143 = vld [vmem:[%s0 + $0x3e8] sm:$0xff]
  %v144 = vld [vmem:[%s0 + $0x3f0] sm:$0xff]
  %v145 = vld [vmem:[%s0 + $0x3f8] sm:$0xff]
  %v146 = vld [vmem:[%s0 + $0x400] sm:$0xff]
  %v147 = vld [vmem:[%s0 + $0x408] sm:$0xff]
  %v148 = vld [vmem:[%s0 + $0x410] sm:$0xff]
  %v149 = vld [vmem:[%s0 + $0x418] sm:$0xff]
  %v150 = vld [vmem:[%s0 + $0x420] sm:$0xff]
  %v151 = vld [vmem:[%s0 + $0x428] sm:$0xff]
  %v152 = vld [vmem:[%s0 + $0x430] sm:$0xff]
  %v153 = vld [vmem:[%s0 + $0x438] sm:$0xff]
  %v154 = vld [vmem:[%s0 + $0x440] sm:$0xff]
  %v155 = vld [vmem:[%s0 + $0x448] sm:$0xff]
  %v156 = vld [vmem:[%s0 + $0x450] sm:$0xff]
  %v157 = vld [vmem:[%s0 + $0x458] sm:$0xff]
  %v158 = vld [vmem:[%s0 + $0x460] sm:$0xff]
  %v159 = vld [vmem:[%s0 + $0x468] sm:$0xff]
  %v160 = vld [vmem:[%s0 + $0x470] sm:$0xff]
  %v161 = vld [vmem:[%s0 + $0x478] sm:$0xff]
  %v162 = vld [vmem:[%s0 + $0x480] sm:$0xff]
  %v163 = vld [vmem:[%s0 + $0x488] sm:$0xff]
  %v164 = vld [vmem:[%s0 + $0x490] sm:$0xff]
  %v165 = vld [vmem:[%s0 + $0x498] sm:$0xff]
  %v166 = vld [vmem:[%s0 + $0x4a0] sm:$0xff]
  %v167 = vld [vmem:[%s0 + $0x4a8] sm:$0xff]
  %v168 = vld [vmem:[%s0 + $0x4b0] sm:$0xff]
  %v169 = vld [vmem:[%s0 + $0x4b8] sm:$0xff]
  %v170 = vld [vmem:[%s0 + $0x4c0] sm:$0xff]
  %v171 = vld [vmem:[%s0 + $0x4c8] sm:$0xff]
  %v172 = vld [vmem:[%s0 + $0x4d0] sm:$0xff]
  %v173 = vld [vmem:[%s0 + $0x4d8] sm:$0xff]
  %v174 = vld [vmem:[%s0 + $0x4e0] sm:$0xff]
  %v175 = vld [vmem:[%s0 + $0x4e8] sm:$0xff]
  %v176 = vld [vmem:[%s0 + $0x4f0] sm:$0xff]
  %v177 = vld [vmem:[%s0 + $0x4f8] sm:$0xff]
  %v178 = vld [vmem:[%s0 + $0x500] sm:$0xff]
  %v179 = vld [vmem:[%s0 + $0x508] sm:$0xff]
  %v180 = vld [vmem:[%s0 + $0x510] sm:$0xff]
  %v181 = vld [vmem:[%s0 + $0x518] sm:$0xff]
  %v182 = vld [vmem:[%s0 + $0x520] sm:$0xff]
  %v183 = vld [vmem:[%s0 + $0x528] sm:$0xff]
  %v184 = vld [vmem:[%s0 + $0x530] sm:$0xff]
  %v185 = vld [vmem:[%s0 + $0x538] sm:$0xff]
  %v186 = vld [vmem:[%s0 + $0x540] sm:$0xff]
  %v187 = vld [vmem:[%s0 + $0x548] sm:$0xff]
  %v188 = vld [vmem:[%s0 + $0x550] sm:$0xff]
  %v189 = vld [vmem:[%s0 + $0x558] sm:$0xff]
  %v190 = vld [vmem:[%s0 + $0x560] sm:$0xff]
  %v191 = vld [vmem:[%s0 + $0x568] sm:$0xff]
  %v192 = vld [vmem:[%s0 + $0x570] sm:$0xff]
  %v193 = vld [vmem:[%s0 + $0x578] sm:$0xff]
  %v194 = vld [vmem:[%s1] sm:$0xf]
  %v195 = vld [vmem:[%s1 + $0x4] sm:$0xf]
  %v196 = vld [vmem:[%s1 + $0x8] sm:$0xf]
  %v197 = vld [vmem:[%s1 + $0xc] sm:$0xf]
  %v198 = vld [vmem:[%s1 + $0x10] sm:$0xf]
  %v199 = vld [vmem:[%s1 + $0x14] sm:$0xf]
  %v200 = vld [vmem:[%s1 + $0x18] sm:$0xf]
  %v201 = vld [vmem:[%s1 + $0x1c] sm:$0xf]
  %v202 = vld [vmem:[%s1 + $0x20] sm:$0xf]
  %v203 = vld [vmem:[%s1 + $0x24] sm:$0xf]
  %v204 = vld [vmem:[%s1 + $0x28] sm:$0xf]
  %v205 = vld [vmem:[%s1 + $0x2c] sm:$0xf]
  %v206 = vld [vmem:[%s1 + $0x30] sm:$0xf]
  %v207 = vld [vmem:[%s1 + $0x34] sm:$0xf]
  %v208 = vld [vmem:[%s1 + $0x38] sm:$0xf]
  %v209 = vld [vmem:[%s1 + $0x3c] sm:$0xf]
  %v210 = vld [vmem:[%s1 + $0x40] sm:$0xf]
  %v211 = vld [vmem:[%s1 + $0x44] sm:$0xf]
  %v212 = vld [vmem:[%s1 + $0x48] sm:$0xf]
  %v213 = vld [vmem:[%s1 + $0x4c] sm:$0xf]
  %v214 = vld [vmem:[%s1 + $0x50] sm:$0xf]
  %v215 = vld [vmem:[%s1 + $0x54] sm:$0xf]
  %v216 = vld [vmem:[%s1 + $0x58] sm:$0xf]
  %v217 = vld [vmem:[%s1 + $0x5c] sm:$0xf]
  %v218 = vld [vmem:[%s1 + $0x60] sm:$0xf]
  %v219 = vld [vmem:[%s1 + $0x64] sm:$0xf]
  %v220 = vld [vmem:[%s1 + $0x68] sm:$0xf]
  %v221 = vld [vmem:[%s1 + $0x6c] sm:$0xf]
  %v222 = vld [vmem:[%s1 + $0x70] sm:$0xf]
  %v223 = vld [vmem:[%s1 + $0x74] sm:$0xf]
  %v224 = vld [vmem:[%s1 + $0x78] sm:$0xf]
  %v225 = vld [vmem:[%s1 + $0x7c] sm:$0xf]
  %v226 = vld [vmem:[%s1 + $0x80] sm:$0xf]
  %v227 = vld [vmem:[%s1 + $0x84] sm:$0xf]
  %v228 = vld [vmem:[%s1 + $0x88] sm:$0xf]
  %v229 = vld [vmem:[%s1 + $0x8c] sm:$0xf]
  %v230 = vld [vmem:[%s1 + $0x90] sm:$0xf]
  %v231 = vld [vmem:[%s1 + $0x94] sm:$0xf]
  %v232 = vld [vmem:[%s1 + $0x98] sm:$0xf]
  %v233 = vld [vmem:[%s1 + $0x9c] sm:$0xf]
  %v234 = vld [vmem:[%s1 + $0xa0] sm:$0xf]
  %v235 = vld [vmem:[%s1 + $0xa4] sm:$0xf]
  %v236 = vld [vmem:[%s1 + $0xa8] sm:$0xf]
  %v237 = vld [vmem:[%s1 + $0xac] sm:$0xf]
  %v238 = vld [vmem:[%s1 + $0xb0] sm:$0xf]
  %v239 = vld [vmem:[%s1 + $0xb4] sm:$0xf]
  %v240 = vld [vmem:[%s1 + $0xb8] sm:$0xf]
  %v241 = vld [vmem:[%s1 + $0xbc] sm:$0xf]
  %v242 = vld [vmem:[%s1 + $0xc0] sm:$0xf]
  %v243 = vld [vmem:[%s1 + $0xc4] sm:$0xf]
  %v244 = vld [vmem:[%s1 + $0xc8] sm:$0xf]
  %v245 = vld [vmem:[%s1 + $0xcc] sm:$0xf]
  %v246 = vld [vmem:[%s1 + $0xd0] sm:$0xf]
  %v247 = vld [vmem:[%s1 + $0xd4] sm:$0xf]
  %v248 = vld [vmem:[%s1 + $0xd8] sm:$0xf]
  %v249 = vld [vmem:[%s1 + $0xdc] sm:$0xf]
  %v250 = vld [vmem:[%s1 + $0xe0] sm:$0xf]
  %v251 = vld [vmem:[%s1 + $0xe4] sm:$0xf]
  %v252 = vld [vmem:[%s1 + $0xe8] sm:$0xf]
  %v253 = vld [vmem:[%s1 + $0xec] sm:$0xf]
  %v254 = vld [vmem:[%s1 + $0xf0] sm:$0xf]
  %v255 = vld [vmem:[%s1 + $0xf4] sm:$0xf]
  %v256 = vld [vmem:[%s1 + $0xf8] sm:$0xf]
  %v257 = vld [vmem:[%s1 + $0xfc] sm:$0xf]
  %v258 = vld [vmem:[%s1 + $0x100] sm:$0xf]
  %v259 = vld [vmem:[%s1 + $0x104] sm:$0xf]
  %v260 = vld [vmem:[%s1 + $0x108] sm:$0xf]
  %v261 = vld [vmem:[%s1 + $0x10c] sm:$0xf]
  %v262 = vld [vmem:[%s1 + $0x110] sm:$0xf]
  %v263 = vld [vmem:[%s1 + $0x114] sm:$0xf]
  %v264 = vld [vmem:[%s1 + $0x118] sm:$0xf]
  %v265 = vld [vmem:[%s1 + $0x11c] sm:$0xf]
  %v266 = vld [vmem:[%s1 + $0x120] sm:$0xf]
  %v267 = vld [vmem:[%s1 + $0x124] sm:$0xf]
  %v268 = vld [vmem:[%s1 + $0x128] sm:$0xf]
  %v269 = vld [vmem:[%s1 + $0x12c] sm:$0xf]
  %v270 = vld [vmem:[%s1 + $0x130] sm:$0xf]
  %v271 = vld [vmem:[%s1 + $0x134] sm:$0xf]
  %v272 = vld [vmem:[%s1 + $0x138] sm:$0xf]
  %v273 = vld [vmem:[%s1 + $0x13c] sm:$0xf]
  %v274 = vld [vmem:[%s1 + $0x140] sm:$0xf]
  %v275 = vld [vmem:[%s1 + $0x144] sm:$0xf]
  %v276 = vld [vmem:[%s1 + $0x148] sm:$0xf]
  %v277 = vld [vmem:[%s1 + $0x14c] sm:$0xf]
  %v278 = vld [vmem:[%s1 + $0x150] sm:$0xf]
  %v279 = vld [vmem:[%s1 + $0x154] sm:$0xf]
  %v280 = vld [vmem:[%s1 + $0x158] sm:$0xf]
  %v281 = vld [vmem:[%s1 + $0x15c] sm:$0xf]
  %v282 = vld [vmem:[%s1 + $0x160] sm:$0xf]
  %v283 = vld [vmem:[%s1 + $0x164] sm:$0xf]
  %v284 = vld [vmem:[%s1 + $0x168] sm:$0xf]
  %v285 = vld [vmem:[%s1 + $0x16c] sm:$0xf]
  %v286 = vld [vmem:[%s1 + $0x170] sm:$0xf]
  %v287 = vld [vmem:[%s1 + $0x174] sm:$0xf]
  %v288 = vld [vmem:[%s1 + $0x178] sm:$0xf]
  %v289 = vld [vmem:[%s1 + $0x17c] sm:$0xf]
  %v290 = vld [vmem:[%s1 + $0x180] sm:$0xf]
  %v291 = vld [vmem:[%s1 + $0x184] sm:$0xf]
  %v292 = vld [vmem:[%s1 + $0x188] sm:$0xf]
  %v293 = vld [vmem:[%s1 + $0x18c] sm:$0xf]
  %v294 = vld [vmem:[%s1 + $0x190] sm:$0xf]
  %v295 = vld [vmem:[%s1 + $0x194] sm:$0xf]
  %v296 = vld [vmem:[%s1 + $0x198] sm:$0xf]
  %v297 = vld [vmem:[%s1 + $0x19c] sm:$0xf]
  %v298 = vld [vmem:[%s1 + $0x1a0] sm:$0xf]
  %v299 = vld [vmem:[%s1 + $0x1a4] sm:$0xf]
  %v300 = vld [vmem:[%s1 + $0x1a8] sm:$0xf]
  %v301 = vld [vmem:[%s1 + $0x1ac] sm:$0xf]
  %v302 = vld [vmem:[%s1 + $0x1b0] sm:$0xf]
  %v303 = vld [vmem:[%s1 + $0x1b4] sm:$0xf]
  %v304 = vld [vmem:[%s1 + $0x1b8] sm:$0xf]
  %v305 = vld [vmem:[%s1 + $0x1bc] sm:$0xf]
  %v306 = vld [vmem:[%s1 + $0x1c0] sm:$0xf]
  %v307 = vld [vmem:[%s1 + $0x1c4] sm:$0xf]
  %v308 = vld [vmem:[%s1 + $0x1c8] sm:$0xf]
  %v309 = vld [vmem:[%s1 + $0x1cc] sm:$0xf]
  %v310 = vld [vmem:[%s1 + $0x1d0] sm:$0xf]
  %v311 = vld [vmem:[%s1 + $0x1d4] sm:$0xf]
  %v312 = vld [vmem:[%s1 + $0x1d8] sm:$0xf]
  %v313 = vld [vmem:[%s1 + $0x1dc] sm:$0xf]
  %v314 = vld [vmem:[%s1 + $0x1e0] sm:$0xf]
  %v315 = vld [vmem:[%s1 + $0x1e4] sm:$0xf]
  %v316 = vld [vmem:[%s1 + $0x1e8] sm:$0xf]
  %v317 = vld [vmem:[%s1 + $0x1ec] sm:$0xf]
  %v318 = vld [vmem:[%s1 + $0x1f0] sm:$0xf]
  %v319 = vld [vmem:[%s1 + $0x1f4] sm:$0xf]
  %v320 = vld [vmem:[%s1 + $0x1f8] sm:$0xf]
  %v321 = vld [vmem:[%s1 + $0x1fc] sm:$0xf]
  %v322 = vld [vmem:[%s1 + $0x200] sm:$0xf]
  %v323 = vld [vmem:[%s1 + $0x204] sm:$0xf]
  %v324 = vld [vmem:[%s1 + $0x208] sm:$0xf]
  %v325 = vld [vmem:[%s1 + $0x20c] sm:$0xf]
  %v326 = vld [vmem:[%s1 + $0x210] sm:$0xf]
  %v327 = vld [vmem:[%s1 + $0x214] sm:$0xf]
  %v328 = vld [vmem:[%s1 + $0x218] sm:$0xf]
  %v329 = vld [vmem:[%s1 + $0x21c] sm:$0xf]
  %v330 = vld [vmem:[%s1 + $0x220] sm:$0xf]
  %v331 = vld [vmem:[%s1 + $0x224] sm:$0xf]
  %v332 = vld [vmem:[%s1 + $0x228] sm:$0xf]
  %v333 = vld [vmem:[%s1 + $0x22c] sm:$0xf]
  %v334 = vld [vmem:[%s1 + $0x230] sm:$0xf]
  %v335 = vld [vmem:[%s1 + $0x234] sm:$0xf]
  %v336 = vld [vmem:[%s1 + $0x238] sm:$0xf]
  %v337 = vld [vmem:[%s1 + $0x23c] sm:$0xf]
  %v338 = vld [vmem:[%s1 + $0x240] sm:$0xf]
  %v339 = vld [vmem:[%s1 + $0x244] sm:$0xf]
  %v340 = vld [vmem:[%s1 + $0x248] sm:$0xf]
  %v341 = vld [vmem:[%s1 + $0x24c] sm:$0xf]
  %v342 = vld [vmem:[%s1 + $0x250] sm:$0xf]
  %v343 = vld [vmem:[%s1 + $0x254] sm:$0xf]
  %v344 = vld [vmem:[%s1 + $0x258] sm:$0xf]
  %v345 = vld [vmem:[%s1 + $0x25c] sm:$0xf]
  %v346 = vld [vmem:[%s1 + $0x260] sm:$0xf]
  %v347 = vld [vmem:[%s1 + $0x264] sm:$0xf]
  %v348 = vld [vmem:[%s1 + $0x268] sm:$0xf]
  %v349 = vld [vmem:[%s1 + $0x26c] sm:$0xf]
  %v350 = vld [vmem:[%s1 + $0x270] sm:$0xf]
  %v351 = vld [vmem:[%s1 + $0x274] sm:$0xf]
  %v352 = vld [vmem:[%s1 + $0x278] sm:$0xf]
  %v353 = vld [vmem:[%s1 + $0x27c] sm:$0xf]
  %v354 = vld [vmem:[%s1 + $0x280] sm:$0xf]
  %v355 = vld [vmem:[%s1 + $0x284] sm:$0xf]
  %v356 = vld [vmem:[%s1 + $0x288] sm:$0xf]
  %v357 = vld [vmem:[%s1 + $0x28c] sm:$0xf]
  %v358 = vld [vmem:[%s1 + $0x290] sm:$0xf]
  %v359 = vld [vmem:[%s1 + $0x294] sm:$0xf]
  %v360 = vld [vmem:[%s1 + $0x298] sm:$0xf]
  %v361 = vld [vmem:[%s1 + $0x29c] sm:$0xf]
  %v362 = vld [vmem:[%s1 + $0x2a0] sm:$0xf]
  %v363 = vld [vmem:[%s1 + $0x2a4] sm:$0xf]
  %v364 = vld [vmem:[%s1 + $0x2a8] sm:$0xf]
  %v365 = vld [vmem:[%s1 + $0x2ac] sm:$0xf]
  %v366 = vld [vmem:[%s1 + $0x2b0] sm:$0xf]
  %v367 = vld [vmem:[%s1 + $0x2b4] sm:$0xf]
  %v368 = vld [vmem:[%s1 + $0x2b8] sm:$0xf]
  %v369 = vld [vmem:[%s1 + $0x2bc] sm:$0xf]
  %v370 = vld [vmem:[%s1 + $0x2c0] sm:$0xf]
  %v371 = vld [vmem:[%s1 + $0x2c4] sm:$0xf]
  %v372 = vld [vmem:[%s1 + $0x2c8] sm:$0xf]
  %v373 = vld [vmem:[%s1 + $0x2cc] sm:$0xf]
  %v374 = vld [vmem:[%s1 + $0x2d0] sm:$0xf]
  %v375 = vld [vmem:[%s1 + $0x2d4] sm:$0xf]
  %v376 = vld [vmem:[%s1 + $0x2d8] sm:$0xf]
  %v377 = vld [vmem:[%s1 + $0x2dc] sm:$0xf]
  %v378 = vld [vmem:[%s1 + $0x2e0] sm:$0xf]
  %v379 = vld [vmem:[%s1 + $0x2e4] sm:$0xf]
  %v380 = vld [vmem:[%s1 + $0x2e8] sm:$0xf]
  %v381 = vld [vmem:[%s1 + $0x2ec] sm:$0xf]
  %v382 = vld [vmem:[%s1 + $0x2f0] sm:$0xf]
  %v383 = vld [vmem:[%s1 + $0x2f4] sm:$0xf]
  %v384 = vld [vmem:[%s1 + $0x2f8] sm:$0xf]
  %v385 = vld [vmem:[%s1 + $0x2fc] sm:$0xf]
  %v386 = vld [vmem:[%s1 + $0x300] sm:$0xf]
  %v387 = vld [vmem:[%s1 + $0x304] sm:$0xf]
  %v388 = vld [vmem:[%s1 + $0x308] sm:$0xf]
  %v389 = vld [vmem:[%s1 + $0x30c] sm:$0xf]
  %v390 = vld [vmem:[%s1 + $0x310] sm:$0xf]
  %v391 = vld [vmem:[%s1 + $0x314] sm:$0xf]
  %v392 = vld [vmem:[%s1 + $0x318] sm:$0xf]
  %v393 = vld [vmem:[%s1 + $0x31c] sm:$0xf]
  %v394 = vld [vmem:[%s1 + $0x320] sm:$0xf]
  %v395 = vld [vmem:[%s1 + $0x324] sm:$0xf]
  %v396 = vld [vmem:[%s1 + $0x328] sm:$0xf]
  %v397 = vld [vmem:[%s1 + $0x32c] sm:$0xf]
  %v398 = vld [vmem:[%s1 + $0x330] sm:$0xf]
  %v399 = vld [vmem:[%s1 + $0x334] sm:$0xf]
  %v400 = vld [vmem:[%s1 + $0x338] sm:$0xf]
  %v401 = vld [vmem:[%s1 + $0x33c] sm:$0xf]
  %v402 = vld [vmem:[%s1 + $0x340] sm:$0xf]
  %v403 = vld [vmem:[%s1 + $0x344] sm:$0xf]
  %v404 = vld [vmem:[%s1 + $0x348] sm:$0xf]
  %v405 = vld [vmem:[%s1 + $0x34c] sm:$0xf]
  %v406 = vld [vmem:[%s1 + $0x350] sm:$0xf]
  %v407 = vld [vmem:[%s1 + $0x354] sm:$0xf]
  %v408 = vld [vmem:[%s1 + $0x358] sm:$0xf]
  %v409 = vld [vmem:[%s1 + $0x35c] sm:$0xf]
  %v410 = vld [vmem:[%s1 + $0x360] sm:$0xf]
  %v411 = vld [vmem:[%s1 + $0x364] sm:$0xf]
  %v412 = vld [vmem:[%s1 + $0x368] sm:$0xf]
  %v413 = vld [vmem:[%s1 + $0x36c] sm:$0xf]
  %v414 = vld [vmem:[%s1 + $0x370] sm:$0xf]
  %v415 = vld [vmem:[%s1 + $0x374] sm:$0xf]
  %v416 = vld [vmem:[%s1 + $0x378] sm:$0xf]
  %v417 = vld [vmem:[%s1 + $0x37c] sm:$0xf]
  %v418 = vld [vmem:[%s1 + $0x380] sm:$0xf]
  %v419 = vld [vmem:[%s1 + $0x384] sm:$0xf]
  %v420 = vld [vmem:[%s1 + $0x388] sm:$0xf]
  %v421 = vld [vmem:[%s1 + $0x38c] sm:$0xf]
  %v422 = vld [vmem:[%s1 + $0x390] sm:$0xf]
  %v423 = vld [vmem:[%s1 + $0x394] sm:$0xf]
  %v424 = vld [vmem:[%s1 + $0x398] sm:$0xf]
  %v425 = vld [vmem:[%s1 + $0x39c] sm:$0xf]
  %v426 = vld [vmem:[%s1 + $0x3a0] sm:$0xf]
  %v427 = vld [vmem:[%s1 + $0x3a4] sm:$0xf]
  %v428 = vld [vmem:[%s1 + $0x3a8] sm:$0xf]
  %v429 = vld [vmem:[%s1 + $0x3ac] sm:$0xf]
  %v430 = vld [vmem:[%s1 + $0x3b0] sm:$0xf]
  %v431 = vld [vmem:[%s1 + $0x3b4] sm:$0xf]
  %v432 = vld [vmem:[%s1 + $0x3b8] sm:$0xf]
  %v433 = vld [vmem:[%s1 + $0x3bc] sm:$0xf]
  %v434 = vld [vmem:[%s1 + $0x3c0] sm:$0xf]
  %v435 = vld [vmem:[%s1 + $0x3c4] sm:$0xf]
  %v436 = vld [vmem:[%s1 + $0x3c8] sm:$0xf]
  %v437 = vld [vmem:[%s1 + $0x3cc] sm:$0xf]
  %v438 = vld [vmem:[%s1 + $0x3d0] sm:$0xf]
  %v439 = vld [vmem:[%s1 + $0x3d4] sm:$0xf]
  %v440 = vld [vmem:[%s1 + $0x3d8] sm:$0xf]
  %v441 = vld [vmem:[%s1 + $0x3dc] sm:$0xf]
  %v442 = vld [vmem:[%s1 + $0x3e0] sm:$0xf]
  %v443 = vld [vmem:[%s1 + $0x3e4] sm:$0xf]
  %v444 = vld [vmem:[%s1 + $0x3e8] sm:$0xf]
  %v445 = vld [vmem:[%s1 + $0x3ec] sm:$0xf]
  %v446 = vld [vmem:[%s1 + $0x3f0] sm:$0xf]
  %v447 = vld [vmem:[%s1 + $0x3f4] sm:$0xf]
  %v448 = vld [vmem:[%s1 + $0x3f8] sm:$0xf]
  %v449 = vld [vmem:[%s1 + $0x3fc] sm:$0xf]
  %v450 = vld [vmem:[%s1 + $0x400] sm:$0xf]
  %v451 = vld [vmem:[%s1 + $0x404] sm:$0xf]
  %v452 = vld [vmem:[%s1 + $0x408] sm:$0xf]
  %v453 = vld [vmem:[%s1 + $0x40c] sm:$0xf]
  %v454 = vld [vmem:[%s1 + $0x410] sm:$0xf]
  %v455 = vld [vmem:[%s1 + $0x414] sm:$0xf]
  %v456 = vld [vmem:[%s1 + $0x418] sm:$0xf]
  %v457 = vld [vmem:[%s1 + $0x41c] sm:$0xf]
  %v458 = vld [vmem:[%s1 + $0x420] sm:$0xf]
  %v459 = vld [vmem:[%s1 + $0x424] sm:$0xf]
  %v460 = vld [vmem:[%s1 + $0x428] sm:$0xf]
  %v461 = vld [vmem:[%s1 + $0x42c] sm:$0xf]
  %v462 = vld [vmem:[%s1 + $0x430] sm:$0xf]
  %v463 = vld [vmem:[%s1 + $0x434] sm:$0xf]
  %v464 = vld [vmem:[%s1 + $0x438] sm:$0xf]
  %v465 = vld [vmem:[%s1 + $0x43c] sm:$0xf]
  %v466 = vld [vmem:[%s1 + $0x440] sm:$0xf]
  %v467 = vld [vmem:[%s1 + $0x444] sm:$0xf]
  %v468 = vld [vmem:[%s1 + $0x448] sm:$0xf]
  %v469 = vld [vmem:[%s1 + $0x44c] sm:$0xf]
  %v470 = vld [vmem:[%s1 + $0x450] sm:$0xf]
  %v471 = vld [vmem:[%s1 + $0x454] sm:$0xf]
  %v472 = vld [vmem:[%s1 + $0x458] sm:$0xf]
  %v473 = vld [vmem:[%s1 + $0x45c] sm:$0xf]
  %v474 = vld [vmem:[%s1 + $0x460] sm:$0xf]
  %v475 = vld [vmem:[%s1 + $0x464] sm:$0xf]
  %v476 = vld [vmem:[%s1 + $0x468] sm:$0xf]
  %v477 = vld [vmem:[%s1 + $0x46c] sm:$0xf]
  %v478 = vld [vmem:[%s1 + $0x470] sm:$0xf]
  %v479 = vld [vmem:[%s1 + $0x474] sm:$0xf]
  %v480 = vld [vmem:[%s1 + $0x478] sm:$0xf]
  %v481 = vld [vmem:[%s1 + $0x47c] sm:$0xf]
  %v482 = vld [vmem:[%s1 + $0x480] sm:$0xf]
  %v483 = vld [vmem:[%s1 + $0x484] sm:$0xf]
  %v484 = vld [vmem:[%s1 + $0x488] sm:$0xf]
  %v485 = vld [vmem:[%s1 + $0x48c] sm:$0xf]
  %v486 = vld [vmem:[%s1 + $0x490] sm:$0xf]
  %v487 = vld [vmem:[%s1 + $0x494] sm:$0xf]
  %v488 = vld [vmem:[%s1 + $0x498] sm:$0xf]
  %v489 = vld [vmem:[%s1 + $0x49c] sm:$0xf]
  %v490 = vld [vmem:[%s1 + $0x4a0] sm:$0xf]
  %v491 = vld [vmem:[%s1 + $0x4a4] sm:$0xf]
  %v492 = vld [vmem:[%s1 + $0x4a8] sm:$0xf]
  %v493 = vld [vmem:[%s1 + $0x4ac] sm:$0xf]
  %v494 = vld [vmem:[%s1 + $0x4b0] sm:$0xf]
  %v495 = vld [vmem:[%s1 + $0x4b4] sm:$0xf]
  %v496 = vld [vmem:[%s1 + $0x4b8] sm:$0xf]
  %v497 = vld [vmem:[%s1 + $0x4bc] sm:$0xf]
  %v498 = vld [vmem:[%s1 + $0x4c0] sm:$0xf]
  %v499 = vld [vmem:[%s1 + $0x4c4] sm:$0xf]
  %v500 = vld [vmem:[%s1 + $0x4c8] sm:$0xf]
  %v501 = vld [vmem:[%s1 + $0x4cc] sm:$0xf]
  %v502 = vld [vmem:[%s1 + $0x4d0] sm:$0xf]
  %v503 = vld [vmem:[%s1 + $0x4d4] sm:$0xf]
  %v504 = vld [vmem:[%s1 + $0x4d8] sm:$0xf]
  %v505 = vld [vmem:[%s1 + $0x4dc] sm:$0xf]
  %v506 = vld [vmem:[%s1 + $0x4e0] sm:$0xf]
  %v507 = vld [vmem:[%s1 + $0x4e4] sm:$0xf]
  %v508 = vld [vmem:[%s1 + $0x4e8] sm:$0xf]
  %v509 = vld [vmem:[%s1 + $0x4ec] sm:$0xf]
  %v510 = vld [vmem:[%s1 + $0x4f0] sm:$0xf]
  %v511 = vld [vmem:[%s1 + $0x4f4] sm:$0xf]
  %v512 = vld [vmem:[%s1 + $0x4f8] sm:$0xf]
  %v513 = vld [vmem:[%s1 + $0x4fc] sm:$0xf]
  %v514 = vld [vmem:[%s1 + $0x500] sm:$0xf]
  %v515 = vld [vmem:[%s1 + $0x504] sm:$0xf]
  %v516 = vld [vmem:[%s1 + $0x508] sm:$0xf]
  %v517 = vld [vmem:[%s1 + $0x50c] sm:$0xf]
  %v518 = vld [vmem:[%s1 + $0x510] sm:$0xf]
  %v519 = vld [vmem:[%s1 + $0x514] sm:$0xf]
  %v520 = vld [vmem:[%s1 + $0x518] sm:$0xf]
  %v521 = vld [vmem:[%s1 + $0x51c] sm:$0xf]
  %v522 = vld [vmem:[%s1 + $0x520] sm:$0xf]
  %v523 = vld [vmem:[%s1 + $0x524] sm:$0xf]
  %v524 = vld [vmem:[%s1 + $0x528] sm:$0xf]
  %v525 = vld [vmem:[%s1 + $0x52c] sm:$0xf]
  %v526 = vld [vmem:[%s1 + $0x530] sm:$0xf]
  %v527 = vld [vmem:[%s1 + $0x534] sm:$0xf]
  %v528 = vld [vmem:[%s1 + $0x538] sm:$0xf]
  %v529 = vld [vmem:[%s1 + $0x53c] sm:$0xf]
  %v530 = vld [vmem:[%s1 + $0x540] sm:$0xf]
  %v531 = vld [vmem:[%s1 + $0x544] sm:$0xf]
  %v532 = vld [vmem:[%s1 + $0x548] sm:$0xf]
  %v533 = vld [vmem:[%s1 + $0x54c] sm:$0xf]
  %v534 = vld [vmem:[%s1 + $0x550] sm:$0xf]
  %v535 = vld [vmem:[%s1 + $0x554] sm:$0xf]
  %v536 = vld [vmem:[%s1 + $0x558] sm:$0xf]
  %v537 = vld [vmem:[%s1 + $0x55c] sm:$0xf]
  %v538 = vld [vmem:[%s1 + $0x560] sm:$0xf]
  %v539 = vld [vmem:[%s1 + $0x564] sm:$0xf]
  %v540 = vld [vmem:[%s1 + $0x568] sm:$0xf]
  %v541 = vld [vmem:[%s1 + $0x56c] sm:$0xf]
  %v542 = vld [vmem:[%s1 + $0x570] sm:$0xf]
  %v543 = vld [vmem:[%s1 + $0x574] sm:$0xf]
  %v544 = vld [vmem:[%s1 + $0x578] sm:$0xf]
  %v545 = vld [vmem:[%s1 + $0x57c] sm:$0xf]
  %v546 = vld [vmem:[%s1 + $0x580] sm:$0xf]
  %v547 = vld [vmem:[%s1 + $0x584] sm:$0xf]
  %v548 = vld [vmem:[%s1 + $0x588] sm:$0xf]
  %v549 = vld [vmem:[%s1 + $0x58c] sm:$0xf]
  %v550 = vld [vmem:[%s1 + $0x590] sm:$0xf]
  %v551 = vld [vmem:[%s1 + $0x594] sm:$0xf]
  %v552 = vld [vmem:[%s1 + $0x598] sm:$0xf]
  %v553 = vld [vmem:[%s1 + $0x59c] sm:$0xf]
  %v554 = vld [vmem:[%s1 + $0x5a0] sm:$0xf]
  %v555 = vld [vmem:[%s1 + $0x5a4] sm:$0xf]
  %v556 = vld [vmem:[%s1 + $0x5a8] sm:$0xf]
  %v557 = vld [vmem:[%s1 + $0x5ac] sm:$0xf]
  %v558 = vld [vmem:[%s1 + $0x5b0] sm:$0xf]
  %v559 = vld [vmem:[%s1 + $0x5b4] sm:$0xf]
  %v560 = vld [vmem:[%s1 + $0x5b8] sm:$0xf]
  %v561 = vld [vmem:[%s1 + $0x5bc] sm:$0xf]
  %v562 = vld [vmem:[%s1 + $0x5c0] sm:$0xf]
  %v563 = vld [vmem:[%s1 + $0x5c4] sm:$0xf]
  %v564 = vld [vmem:[%s1 + $0x5c8] sm:$0xf]
  %v565 = vld [vmem:[%s1 + $0x5cc] sm:$0xf]
  %v566 = vld [vmem:[%s1 + $0x5d0] sm:$0xf]
  %v567 = vld [vmem:[%s1 + $0x5d4] sm:$0xf]
  %v568 = vld [vmem:[%s1 + $0x5d8] sm:$0xf]
  %v569 = vld [vmem:[%s1 + $0x5dc] sm:$0xf]
  %v570 = vld [vmem:[%s1 + $0x5e0] sm:$0xf]
  %v571 = vld [vmem:[%s1 + $0x5e4] sm:$0xf]
  %v572 = vld [vmem:[%s1 + $0x5e8] sm:$0xf]
  %v573 = vld [vmem:[%s1 + $0x5ec] sm:$0xf]
  %v574 = vld [vmem:[%s1 + $0x5f0] sm:$0xf]
  %v575 = vld [vmem:[%s1 + $0x5f4] sm:$0xf]
  %v576 = vld [vmem:[%s1 + $0x5f8] sm:$0xf]
  %v577 = vld [vmem:[%s1 + $0x5fc] sm:$0xf]
  %v578 = vld [vmem:[%s1 + $0x600] sm:$0xf]
  %v579 = vld [vmem:[%s1 + $0x604] sm:$0xf]
  %v580 = vld [vmem:[%s1 + $0x608] sm:$0xf]
  %v581 = vld [vmem:[%s1 + $0x60c] sm:$0xf]
  %v582 = vld [vmem:[%s1 + $0x610] sm:$0xf]
  %v583 = vld [vmem:[%s1 + $0x614] sm:$0xf]
  %v584 = vld [vmem:[%s1 + $0x618] sm:$0xf]
  %v585 = vld [vmem:[%s1 + $0x61c] sm:$0xf]
  %v586 = vld [vmem:[%s1 + $0x620] sm:$0xf]
  %v587 = vld [vmem:[%s1 + $0x624] sm:$0xf]
  %v588 = vld [vmem:[%s1 + $0x628] sm:$0xf]
  %v589 = vld [vmem:[%s1 + $0x62c] sm:$0xf]
  %v590 = vld [vmem:[%s1 + $0x630] sm:$0xf]
  %v591 = vld [vmem:[%s1 + $0x634] sm:$0xf]
  %v592 = vld [vmem:[%s1 + $0x638] sm:$0xf]
  %v593 = vld [vmem:[%s1 + $0x63c] sm:$0xf]
  %v594 = vld [vmem:[%s1 + $0x640] sm:$0xf]
  %v595 = vld [vmem:[%s1 + $0x644] sm:$0xf]
  %v596 = vld [vmem:[%s1 + $0x648] sm:$0xf]
  %v597 = vld [vmem:[%s1 + $0x64c] sm:$0xf]
  %v598 = vld [vmem:[%s1 + $0x650] sm:$0xf]
  %v599 = vld [vmem:[%s1 + $0x654] sm:$0xf]
  %v600 = vld [vmem:[%s1 + $0x658] sm:$0xf]
  %v601 = vld [vmem:[%s1 + $0x65c] sm:$0xf]
  %v602 = vld [vmem:[%s1 + $0x660] sm:$0xf]
  %v603 = vld [vmem:[%s1 + $0x664] sm:$0xf]
  %v604 = vld [vmem:[%s1 + $0x668] sm:$0xf]
  %v605 = vld [vmem:[%s1 + $0x66c] sm:$0xf]
  %v606 = vld [vmem:[%s1 + $0x670] sm:$0xf]
  %v607 = vld [vmem:[%s1 + $0x674] sm:$0xf]
  %v608 = vld [vmem:[%s1 + $0x678] sm:$0xf]
  %v609 = vld [vmem:[%s1 + $0x67c] sm:$0xf]
  %v610 = vld [vmem:[%s1 + $0x680] sm:$0xf]
  %v611 = vld [vmem:[%s1 + $0x684] sm:$0xf]
  %v612 = vld [vmem:[%s1 + $0x688] sm:$0xf]
  %v613 = vld [vmem:[%s1 + $0x68c] sm:$0xf]
  %v614 = vld [vmem:[%s1 + $0x690] sm:$0xf]
  %v615 = vld [vmem:[%s1 + $0x694] sm:$0xf]
  %v616 = vld [vmem:[%s1 + $0x698] sm:$0xf]
  %v617 = vld [vmem:[%s1 + $0x69c] sm:$0xf]
  %v618 = vld [vmem:[%s1 + $0x6a0] sm:$0xf]
  %v619 = vld [vmem:[%s1 + $0x6a4] sm:$0xf]
  %v620 = vld [vmem:[%s1 + $0x6a8] sm:$0xf]
  %v621 = vld [vmem:[%s1 + $0x6ac] sm:$0xf]
  %v622 = vld [vmem:[%s1 + $0x6b0] sm:$0xf]
  %v623 = vld [vmem:[%s1 + $0x6b4] sm:$0xf]
  %v624 = vld [vmem:[%s1 + $0x6b8] sm:$0xf]
  %v625 = vld [vmem:[%s1 + $0x6bc] sm:$0xf]
  %v626 = vld [vmem:[%s1 + $0x6c0] sm:$0xf]
  %v627 = vld [vmem:[%s1 + $0x6c4] sm:$0xf]
  %v628 = vld [vmem:[%s1 + $0x6c8] sm:$0xf]
  %v629 = vld [vmem:[%s1 + $0x6cc] sm:$0xf]
  %v630 = vld [vmem:[%s1 + $0x6d0] sm:$0xf]
  %v631 = vld [vmem:[%s1 + $0x6d4] sm:$0xf]
  %v632 = vld [vmem:[%s1 + $0x6d8] sm:$0xf]
  %v633 = vld [vmem:[%s1 + $0x6dc] sm:$0xf]
  %v634 = vld [vmem:[%s1 + $0x6e0] sm:$0xf]
  %v635 = vld [vmem:[%s1 + $0x6e4] sm:$0xf]
  %v636 = vld [vmem:[%s1 + $0x6e8] sm:$0xf]
  %v637 = vld [vmem:[%s1 + $0x6ec] sm:$0xf]
  %v638 = vld [vmem:[%s1 + $0x6f0] sm:$0xf]
  %v639 = vld [vmem:[%s1 + $0x6f4] sm:$0xf]
  %v640 = vld [vmem:[%s1 + $0x6f8] sm:$0xf]
  %v641 = vld [vmem:[%s1 + $0x6fc] sm:$0xf]
  %v642 = vld [vmem:[%s1 + $0x700] sm:$0xf]
  %v643 = vld [vmem:[%s1 + $0x704] sm:$0xf]
  %v644 = vld [vmem:[%s1 + $0x708] sm:$0xf]
  %v645 = vld [vmem:[%s1 + $0x70c] sm:$0xf]
  %v646 = vld [vmem:[%s1 + $0x710] sm:$0xf]
  %v647 = vld [vmem:[%s1 + $0x714] sm:$0xf]
  %v648 = vld [vmem:[%s1 + $0x718] sm:$0xf]
  %v649 = vld [vmem:[%s1 + $0x71c] sm:$0xf]
  %v650 = vld [vmem:[%s1 + $0x720] sm:$0xf]
  %v651 = vld [vmem:[%s1 + $0x724] sm:$0xf]
  %v652 = vld [vmem:[%s1 + $0x728] sm:$0xf]
  %v653 = vld [vmem:[%s1 + $0x72c] sm:$0xf]
  %v654 = vld [vmem:[%s1 + $0x730] sm:$0xf]
  %v655 = vld [vmem:[%s1 + $0x734] sm:$0xf]
  %v656 = vld [vmem:[%s1 + $0x738] sm:$0xf]
  %v657 = vld [vmem:[%s1 + $0x73c] sm:$0xf]
  %v658 = vld [vmem:[%s1 + $0x740] sm:$0xf]
  %v659 = vld [vmem:[%s1 + $0x744] sm:$0xf]
  %v660 = vld [vmem:[%s1 + $0x748] sm:$0xf]
  %v661 = vld [vmem:[%s1 + $0x74c] sm:$0xf]
  %v662 = vld [vmem:[%s1 + $0x750] sm:$0xf]
  %v663 = vld [vmem:[%s1 + $0x754] sm:$0xf]
  %v664 = vld [vmem:[%s1 + $0x758] sm:$0xf]
  %v665 = vld [vmem:[%s1 + $0x75c] sm:$0xf]
  %v666 = vld [vmem:[%s1 + $0x760] sm:$0xf]
  %v667 = vld [vmem:[%s1 + $0x764] sm:$0xf]
  %v668 = vld [vmem:[%s1 + $0x768] sm:$0xf]
  %v669 = vld [vmem:[%s1 + $0x76c] sm:$0xf]
  %v670 = vld [vmem:[%s1 + $0x770] sm:$0xf]
  %v671 = vld [vmem:[%s1 + $0x774] sm:$0xf]
  %v672 = vld [vmem:[%s1 + $0x778] sm:$0xf]
  %v673 = vld [vmem:[%s1 + $0x77c] sm:$0xf]
  %v674 = vld [vmem:[%s1 + $0x780] sm:$0xf]
  %v675 = vld [vmem:[%s1 + $0x784] sm:$0xf]
  %v676 = vld [vmem:[%s1 + $0x788] sm:$0xf]
  %v677 = vld [vmem:[%s1 + $0x78c] sm:$0xf]
  %v678 = vld [vmem:[%s1 + $0x790] sm:$0xf]
  %v679 = vld [vmem:[%s1 + $0x794] sm:$0xf]
  %v680 = vld [vmem:[%s1 + $0x798] sm:$0xf]
  %v681 = vld [vmem:[%s1 + $0x79c] sm:$0xf]
  %v682 = vld [vmem:[%s1 + $0x7a0] sm:$0xf]
  %v683 = vld [vmem:[%s1 + $0x7a4] sm:$0xf]
  %v684 = vld [vmem:[%s1 + $0x7a8] sm:$0xf]
  %v685 = vld [vmem:[%s1 + $0x7ac] sm:$0xf]
  %v686 = vld [vmem:[%s1 + $0x7b0] sm:$0xf]
  %v687 = vld [vmem:[%s1 + $0x7b4] sm:$0xf]
  %v688 = vld [vmem:[%s1 + $0x7b8] sm:$0xf]
  %v689 = vld [vmem:[%s1 + $0x7bc] sm:$0xf]
  %v690 = vld [vmem:[%s1 + $0x7c0] sm:$0xf]
  %v691 = vld [vmem:[%s1 + $0x7c4] sm:$0xf]
  %v692 = vld [vmem:[%s1 + $0x7c8] sm:$0xf]
  %v693 = vld [vmem:[%s1 + $0x7cc] sm:$0xf]
  %v694 = vld [vmem:[%s1 + $0x7d0] sm:$0xf]
  %v695 = vld [vmem:[%s1 + $0x7d4] sm:$0xf]
  %v696 = vld [vmem:[%s1 + $0x7d8] sm:$0xf]
  %v697 = vld [vmem:[%s1 + $0x7dc] sm:$0xf]
  %v698 = vld [vmem:[%s1 + $0x7e0] sm:$0xf]
  %v699 = vld [vmem:[%s1 + $0x7e4] sm:$0xf]
  %v700 = vld [vmem:[%s1 + $0x7e8] sm:$0xf]
  %v701 = vld [vmem:[%s1 + $0x7ec] sm:$0xf]
  %v702 = vld [vmem:[%s1 + $0x7f0] sm:$0xf]
  %v703 = vld [vmem:[%s1 + $0x7f4] sm:$0xf]
  %v704 = vld [vmem:[%s1 + $0x7f8] sm:$0xf]
  %v705 = vld [vmem:[%s1 + $0x7fc] sm:$0xf]
  %v706 = vld [vmem:[%s1 + $0x800] sm:$0xf]
  %v707 = vld [vmem:[%s1 + $0x804] sm:$0xf]
  %v708 = vld [vmem:[%s1 + $0x808] sm:$0xf]
  %v709 = vld [vmem:[%s1 + $0x80c] sm:$0xf]
  %v710 = vld [vmem:[%s1 + $0x810] sm:$0xf]
  %v711 = vld [vmem:[%s1 + $0x814] sm:$0xf]
  %v712 = vld [vmem:[%s1 + $0x818] sm:$0xf]
  %v713 = vld [vmem:[%s1 + $0x81c] sm:$0xf]
  %v714 = vld [vmem:[%s1 + $0x820] sm:$0xf]
  %v715 = vld [vmem:[%s1 + $0x824] sm:$0xf]
  %v716 = vld [vmem:[%s1 + $0x828] sm:$0xf]
  %v717 = vld [vmem:[%s1 + $0x82c] sm:$0xf]
  %v718 = vld [vmem:[%s1 + $0x830] sm:$0xf]
  %v719 = vld [vmem:[%s1 + $0x834] sm:$0xf]
  %v720 = vld [vmem:[%s1 + $0x838] sm:$0xf]
  %v721 = vld [vmem:[%s1 + $0x83c] sm:$0xf]
  %v722 = vld [vmem:[%s1 + $0x840] sm:$0xf]
  %v723 = vld [vmem:[%s1 + $0x844] sm:$0xf]
  %v724 = vld [vmem:[%s1 + $0x848] sm:$0xf]
  %v725 = vld [vmem:[%s1 + $0x84c] sm:$0xf]
  %v726 = vld [vmem:[%s1 + $0x850] sm:$0xf]
  %v727 = vld [vmem:[%s1 + $0x854] sm:$0xf]
  %v728 = vld [vmem:[%s1 + $0x858] sm:$0xf]
  %v729 = vld [vmem:[%s1 + $0x85c] sm:$0xf]
  %v730 = vld [vmem:[%s1 + $0x860] sm:$0xf]
  %v731 = vld [vmem:[%s1 + $0x864] sm:$0xf]
  %v732 = vld [vmem:[%s1 + $0x868] sm:$0xf]
  %v733 = vld [vmem:[%s1 + $0x86c] sm:$0xf]
  %v734 = vld [vmem:[%s1 + $0x870] sm:$0xf]
  %v735 = vld [vmem:[%s1 + $0x874] sm:$0xf]
  %v736 = vld [vmem:[%s1 + $0x878] sm:$0xf]
  %v737 = vld [vmem:[%s1 + $0x87c] sm:$0xf]
  %v738 = vld [vmem:[%s1 + $0x880] sm:$0xf]
  %v739 = vld [vmem:[%s1 + $0x884] sm:$0xf]
  %v740 = vld [vmem:[%s1 + $0x888] sm:$0xf]
  %v741 = vld [vmem:[%s1 + $0x88c] sm:$0xf]
  %v742 = vld [vmem:[%s1 + $0x890] sm:$0xf]
  %v743 = vld [vmem:[%s1 + $0x894] sm:$0xf]
  %v744 = vld [vmem:[%s1 + $0x898] sm:$0xf]
  %v745 = vld [vmem:[%s1 + $0x89c] sm:$0xf]
  %v746 = vld [vmem:[%s1 + $0x8a0] sm:$0xf]
  %v747 = vld [vmem:[%s1 + $0x8a4] sm:$0xf]
  %v748 = vld [vmem:[%s1 + $0x8a8] sm:$0xf]
  %v749 = vld [vmem:[%s1 + $0x8ac] sm:$0xf]
  %v750 = vld [vmem:[%s1 + $0x8b0] sm:$0xf]
  %v751 = vld [vmem:[%s1 + $0x8b4] sm:$0xf]
  %v752 = vld [vmem:[%s1 + $0x8b8] sm:$0xf]
  %v753 = vld [vmem:[%s1 + $0x8bc] sm:$0xf]
  %v754 = vld [vmem:[%s1 + $0x8c0] sm:$0xf]
  %v755 = vld [vmem:[%s1 + $0x8c4] sm:$0xf]
  %v756 = vld [vmem:[%s1 + $0x8c8] sm:$0xf]
  %v757 = vld [vmem:[%s1 + $0x8cc] sm:$0xf]
  %v758 = vld [vmem:[%s1 + $0x8d0] sm:$0xf]
  %v759 = vld [vmem:[%s1 + $0x8d4] sm:$0xf]
  %v760 = vld [vmem:[%s1 + $0x8d8] sm:$0xf]
  %v761 = vld [vmem:[%s1 + $0x8dc] sm:$0xf]
  %v762 = vld [vmem:[%s1 + $0x8e0] sm:$0xf]
  %v763 = vld [vmem:[%s1 + $0x8e4] sm:$0xf]
  %v764 = vld [vmem:[%s1 + $0x8e8] sm:$0xf]
  %v765 = vld [vmem:[%s1 + $0x8ec] sm:$0xf]
  %v766 = vld [vmem:[%s1 + $0x8f0] sm:$0xf]
  %v767 = vld [vmem:[%s1 + $0x8f4] sm:$0xf]
  %v768 = vld [vmem:[%s1 + $0x8f8] sm:$0xf]
  %v769 = vld [vmem:[%s1 + $0x8fc] sm:$0xf]
  %v770 = vld [vmem:[%s1 + $0x900] sm:$0xf]
  %v771 = vld [vmem:[%s1 + $0x904] sm:$0xf]
  %v772 = vld [vmem:[%s1 + $0x908] sm:$0xf]
  %v773 = vld [vmem:[%s1 + $0x90c] sm:$0xf]
  %v774 = vld [vmem:[%s1 + $0x910] sm:$0xf]
  %v775 = vld [vmem:[%s1 + $0x914] sm:$0xf]
  %v776 = vld [vmem:[%s1 + $0x918] sm:$0xf]
  %v777 = vld [vmem:[%s1 + $0x91c] sm:$0xf]
  %v778 = vld [vmem:[%s1 + $0x920] sm:$0xf]
  %v779 = vld [vmem:[%s1 + $0x924] sm:$0xf]
  %v780 = vld [vmem:[%s1 + $0x928] sm:$0xf]
  %v781 = vld [vmem:[%s1 + $0x92c] sm:$0xf]
  %v782 = vld [vmem:[%s1 + $0x930] sm:$0xf]
  %v783 = vld [vmem:[%s1 + $0x934] sm:$0xf]
  %v784 = vld [vmem:[%s1 + $0x938] sm:$0xf]
  %v785 = vld [vmem:[%s1 + $0x93c] sm:$0xf]
  %v786 = vld [vmem:[%s1 + $0x940] sm:$0xf]
  %v787 = vld [vmem:[%s1 + $0x944] sm:$0xf]
  %v788 = vld [vmem:[%s1 + $0x948] sm:$0xf]
  %v789 = vld [vmem:[%s1 + $0x94c] sm:$0xf]
  %v790 = vld [vmem:[%s1 + $0x950] sm:$0xf]
  %v791 = vld [vmem:[%s1 + $0x954] sm:$0xf]
  %v792 = vld [vmem:[%s1 + $0x958] sm:$0xf]
  %v793 = vld [vmem:[%s1 + $0x95c] sm:$0xf]
  %v794 = vld [vmem:[%s1 + $0x960] sm:$0xf]
  %v795 = vld [vmem:[%s1 + $0x964] sm:$0xf]
  %v796 = vld [vmem:[%s1 + $0x968] sm:$0xf]
  %v797 = vld [vmem:[%s1 + $0x96c] sm:$0xf]
  %v798 = vld [vmem:[%s1 + $0x970] sm:$0xf]
  %v799 = vld [vmem:[%s1 + $0x974] sm:$0xf]
  %v800 = vld [vmem:[%s1 + $0x978] sm:$0xf]
  %v801 = vld [vmem:[%s1 + $0x97c] sm:$0xf]
  %v802 = vld [vmem:[%s1 + $0x980] sm:$0xf]
  %v803 = vld [vmem:[%s1 + $0x984] sm:$0xf]
  %v804 = vld [vmem:[%s1 + $0x988] sm:$0xf]
  %v805 = vld [vmem:[%s1 + $0x98c] sm:$0xf]
  %v806 = vld [vmem:[%s1 + $0x990] sm:$0xf]
  %v807 = vld [vmem:[%s1 + $0x994] sm:$0xf]
  %v808 = vld [vmem:[%s1 + $0x998] sm:$0xf]
  %v809 = vld [vmem:[%s1 + $0x99c] sm:$0xf]
  %v810 = vld [vmem:[%s1 + $0x9a0] sm:$0xf]
  %v811 = vld [vmem:[%s1 + $0x9a4] sm:$0xf]
  %v812 = vld [vmem:[%s1 + $0x9a8] sm:$0xf]
  %v813 = vld [vmem:[%s1 + $0x9ac] sm:$0xf]
  %v814 = vld [vmem:[%s1 + $0x9b0] sm:$0xf]
  %v815 = vld [vmem:[%s1 + $0x9b4] sm:$0xf]
  %v816 = vld [vmem:[%s1 + $0x9b8] sm:$0xf]
  %v817 = vld [vmem:[%s1 + $0x9bc] sm:$0xf]
  %v818 = vld [vmem:[%s1 + $0x9c0] sm:$0xf]
  %v819 = vld [vmem:[%s1 + $0x9c4] sm:$0xf]
  %v820 = vld [vmem:[%s1 + $0x9c8] sm:$0xf]
  %v821 = vld [vmem:[%s1 + $0x9cc] sm:$0xf]
  %v822 = vld [vmem:[%s1 + $0x9d0] sm:$0xf]
  %v823 = vld [vmem:[%s1 + $0x9d4] sm:$0xf]
  %v824 = vld [vmem:[%s1 + $0x9d8] sm:$0xf]
  %v825 = vld [vmem:[%s1 + $0x9dc] sm:$0xf]
  %v826 = vld [vmem:[%s1 + $0x9e0] sm:$0xf]
  %v827 = vld [vmem:[%s1 + $0x9e4] sm:$0xf]
  %v828 = vld [vmem:[%s1 + $0x9e8] sm:$0xf]
  %v829 = vld [vmem:[%s1 + $0x9ec] sm:$0xf]
  %v830 = vld [vmem:[%s1 + $0x9f0] sm:$0xf]
  %v831 = vld [vmem:[%s1 + $0x9f4] sm:$0xf]
  %v832 = vld [vmem:[%s1 + $0x9f8] sm:$0xf]
  %v833 = vld [vmem:[%s1 + $0x9fc] sm:$0xf]
  %v834 = vld [vmem:[%s1 + $0xa00] sm:$0xf]
  %v835 = vld [vmem:[%s1 + $0xa04] sm:$0xf]
  %v836 = vld [vmem:[%s1 + $0xa08] sm:$0xf]
  %v837 = vld [vmem:[%s1 + $0xa0c] sm:$0xf]
  %v838 = vld [vmem:[%s1 + $0xa10] sm:$0xf]
  %v839 = vld [vmem:[%s1 + $0xa14] sm:$0xf]
  %v840 = vld [vmem:[%s1 + $0xa18] sm:$0xf]
  %v841 = vld [vmem:[%s1 + $0xa1c] sm:$0xf]
  %v842 = vld [vmem:[%s1 + $0xa20] sm:$0xf]
  %v843 = vld [vmem:[%s1 + $0xa24] sm:$0xf]
  %v844 = vld [vmem:[%s1 + $0xa28] sm:$0xf]
  %v845 = vld [vmem:[%s1 + $0xa2c] sm:$0xf]
  %v846 = vld [vmem:[%s1 + $0xa30] sm:$0xf]
  %v847 = vld [vmem:[%s1 + $0xa34] sm:$0xf]
  %v848 = vld [vmem:[%s1 + $0xa38] sm:$0xf]
  %v849 = vld [vmem:[%s1 + $0xa3c] sm:$0xf]
  %v850 = vld [vmem:[%s1 + $0xa40] sm:$0xf]
  %v851 = vld [vmem:[%s1 + $0xa44] sm:$0xf]
  %v852 = vld [vmem:[%s1 + $0xa48] sm:$0xf]
  %v853 = vld [vmem:[%s1 + $0xa4c] sm:$0xf]
  %v854 = vld [vmem:[%s1 + $0xa50] sm:$0xf]
  %v855 = vld [vmem:[%s1 + $0xa54] sm:$0xf]
  %v856 = vld [vmem:[%s1 + $0xa58] sm:$0xf]
  %v857 = vld [vmem:[%s1 + $0xa5c] sm:$0xf]
  %v858 = vld [vmem:[%s1 + $0xa60] sm:$0xf]
  %v859 = vld [vmem:[%s1 + $0xa64] sm:$0xf]
  %v860 = vld [vmem:[%s1 + $0xa68] sm:$0xf]
  %v861 = vld [vmem:[%s1 + $0xa6c] sm:$0xf]
  %v862 = vld [vmem:[%s1 + $0xa70] sm:$0xf]
  %v863 = vld [vmem:[%s1 + $0xa74] sm:$0xf]
  %v864 = vld [vmem:[%s1 + $0xa78] sm:$0xf]
  %v865 = vld [vmem:[%s1 + $0xa7c] sm:$0xf]
  %v866 = vld [vmem:[%s1 + $0xa80] sm:$0xf]
  %v867 = vld [vmem:[%s1 + $0xa84] sm:$0xf]
  %v868 = vld [vmem:[%s1 + $0xa88] sm:$0xf]
  %v869 = vld [vmem:[%s1 + $0xa8c] sm:$0xf]
  %v870 = vld [vmem:[%s1 + $0xa90] sm:$0xf]
  %v871 = vld [vmem:[%s1 + $0xa94] sm:$0xf]
  %v872 = vld [vmem:[%s1 + $0xa98] sm:$0xf]
  %v873 = vld [vmem:[%s1 + $0xa9c] sm:$0xf]
  %v874 = vld [vmem:[%s1 + $0xaa0] sm:$0xf]
  %v875 = vld [vmem:[%s1 + $0xaa4] sm:$0xf]
  %v876 = vld [vmem:[%s1 + $0xaa8] sm:$0xf]
  %v877 = vld [vmem:[%s1 + $0xaac] sm:$0xf]
  %v878 = vld [vmem:[%s1 + $0xab0] sm:$0xf]
  %v879 = vld [vmem:[%s1 + $0xab4] sm:$0xf]
  %v880 = vld [vmem:[%s1 + $0xab8] sm:$0xf]
  %v881 = vld [vmem:[%s1 + $0xabc] sm:$0xf]
  %v882 = vld [vmem:[%s1 + $0xac0] sm:$0xf]
  %v883 = vld [vmem:[%s1 + $0xac4] sm:$0xf]
  %v884 = vld [vmem:[%s1 + $0xac8] sm:$0xf]
  %v885 = vld [vmem:[%s1 + $0xacc] sm:$0xf]
  %v886 = vld [vmem:[%s1 + $0xad0] sm:$0xf]
  %v887 = vld [vmem:[%s1 + $0xad4] sm:$0xf]
  %v888 = vld [vmem:[%s1 + $0xad8] sm:$0xf]
  %v889 = vld [vmem:[%s1 + $0xadc] sm:$0xf]
  %v890 = vld [vmem:[%s1 + $0xae0] sm:$0xf]
  %v891 = vld [vmem:[%s1 + $0xae4] sm:$0xf]
  %v892 = vld [vmem:[%s1 + $0xae8] sm:$0xf]
  %v893 = vld [vmem:[%s1 + $0xaec] sm:$0xf]
  %v894 = vld [vmem:[%s1 + $0xaf0] sm:$0xf]
  %v895 = vld [vmem:[%s1 + $0xaf4] sm:$0xf]
  %v896 = vld [vmem:[%s1 + $0xaf8] sm:$0xf]
  %v897 = vld [vmem:[%s1 + $0xafc] sm:$0xf]
  %v898 = vld [vmem:[%s1 + $0xb00] sm:$0xf]
  %v899 = vld [vmem:[%s1 + $0xb04] sm:$0xf]
  %v900 = vld [vmem:[%s1 + $0xb08] sm:$0xf]
  %v901 = vld [vmem:[%s1 + $0xb0c] sm:$0xf]
  %v902 = vld [vmem:[%s1 + $0xb10] sm:$0xf]
  %v903 = vld [vmem:[%s1 + $0xb14] sm:$0xf]
  %v904 = vld [vmem:[%s1 + $0xb18] sm:$0xf]
  %v905 = vld [vmem:[%s1 + $0xb1c] sm:$0xf]
  %v906 = vld [vmem:[%s1 + $0xb20] sm:$0xf]
  %v907 = vld [vmem:[%s1 + $0xb24] sm:$0xf]
  %v908 = vld [vmem:[%s1 + $0xb28] sm:$0xf]
  %v909 = vld [vmem:[%s1 + $0xb2c] sm:$0xf]
  %v910 = vld [vmem:[%s1 + $0xb30] sm:$0xf]
  %v911 = vld [vmem:[%s1 + $0xb34] sm:$0xf]
  %v912 = vld [vmem:[%s1 + $0xb38] sm:$0xf]
  %v913 = vld [vmem:[%s1 + $0xb3c] sm:$0xf]
  %v914 = vld [vmem:[%s1 + $0xb40] sm:$0xf]
  %v915 = vld [vmem:[%s1 + $0xb44] sm:$0xf]
  %v916 = vld [vmem:[%s1 + $0xb48] sm:$0xf]
  %v917 = vld [vmem:[%s1 + $0xb4c] sm:$0xf]
  %v918 = vld [vmem:[%s1 + $0xb50] sm:$0xf]
  %v919 = vld [vmem:[%s1 + $0xb54] sm:$0xf]
  %v920 = vld [vmem:[%s1 + $0xb58] sm:$0xf]
  %v921 = vld [vmem:[%s1 + $0xb5c] sm:$0xf]
  %v922 = vld [vmem:[%s1 + $0xb60] sm:$0xf]
  %v923 = vld [vmem:[%s1 + $0xb64] sm:$0xf]
  %v924 = vld [vmem:[%s1 + $0xb68] sm:$0xf]
  %v925 = vld [vmem:[%s1 + $0xb6c] sm:$0xf]
  %v926 = vld [vmem:[%s1 + $0xb70] sm:$0xf]
  %v927 = vld [vmem:[%s1 + $0xb74] sm:$0xf]
  %v928 = vld [vmem:[%s1 + $0xb78] sm:$0xf]
  %v929 = vld [vmem:[%s1 + $0xb7c] sm:$0xf]
  %v930 = vld [vmem:[%s1 + $0xb80] sm:$0xf]
  %v931 = vld [vmem:[%s1 + $0xb84] sm:$0xf]
  %v932 = vld [vmem:[%s1 + $0xb88] sm:$0xf]
  %v933 = vld [vmem:[%s1 + $0xb8c] sm:$0xf]
  %v934 = vld [vmem:[%s1 + $0xb90] sm:$0xf]
  %v935 = vld [vmem:[%s1 + $0xb94] sm:$0xf]
  %v936 = vld [vmem:[%s1 + $0xb98] sm:$0xf]
  %v937 = vld [vmem:[%s1 + $0xb9c] sm:$0xf]
  %v938 = vld [vmem:[%s1 + $0xba0] sm:$0xf]
  %v939 = vld [vmem:[%s1 + $0xba4] sm:$0xf]
  %v940 = vld [vmem:[%s1 + $0xba8] sm:$0xf]
  %v941 = vld [vmem:[%s1 + $0xbac] sm:$0xf]
  %v942 = vld [vmem:[%s1 + $0xbb0] sm:$0xf]
  %v943 = vld [vmem:[%s1 + $0xbb4] sm:$0xf]
  %v944 = vld [vmem:[%s1 + $0xbb8] sm:$0xf]
  %v945 = vld [vmem:[%s1 + $0xbbc] sm:$0xf]
  %v946 = vld [vmem:[%s1 + $0xbc0] sm:$0xf]
  %v947 = vld [vmem:[%s1 + $0xbc4] sm:$0xf]
  %v948 = vld [vmem:[%s1 + $0xbc8] sm:$0xf]
  %v949 = vld [vmem:[%s1 + $0xbcc] sm:$0xf]
  %v950 = vld [vmem:[%s1 + $0xbd0] sm:$0xf]
  %v951 = vld [vmem:[%s1 + $0xbd4] sm:$0xf]
  %v952 = vld [vmem:[%s1 + $0xbd8] sm:$0xf]
  %v953 = vld [vmem:[%s1 + $0xbdc] sm:$0xf]
  %v954 = vld [vmem:[%s1 + $0xbe0] sm:$0xf]
  %v955 = vld [vmem:[%s1 + $0xbe4] sm:$0xf]
  %v956 = vld [vmem:[%s1 + $0xbe8] sm:$0xf]
  %v957 = vld [vmem:[%s1 + $0xbec] sm:$0xf]
  %v958 = vld [vmem:[%s1 + $0xbf0] sm:$0xf]
  %v959 = vld [vmem:[%s1 + $0xbf4] sm:$0xf]
  %v960 = vld [vmem:[%s1 + $0xbf8] sm:$0xf]
  %v961 = vld [vmem:[%s1 + $0xbfc] sm:$0xf]
  %v962 = vld [vmem:[%s1 + $0xc00] sm:$0xf]
  %v963 = vld [vmem:[%s1 + $0xc04] sm:$0xf]
  %v964 = vld [vmem:[%s1 + $0xc08] sm:$0xf]
  %v965 = vld [vmem:[%s1 + $0xc0c] sm:$0xf]
  %v966 = vld [vmem:[%s1 + $0xc10] sm:$0xf]
  %v967 = vld [vmem:[%s1 + $0xc14] sm:$0xf]
  %v968 = vld [vmem:[%s1 + $0xc18] sm:$0xf]
  %v969 = vld [vmem:[%s1 + $0xc1c] sm:$0xf]
  %v970 = vld [vmem:[%s1 + $0xc20] sm:$0xf]
  %v971 = vld [vmem:[%s1 + $0xc24] sm:$0xf]
  %v972 = vld [vmem:[%s1 + $0xc28] sm:$0xf]
  %v973 = vld [vmem:[%s1 + $0xc2c] sm:$0xf]
  %v974 = vld [vmem:[%s1 + $0xc30] sm:$0xf]
  %v975 = vld [vmem:[%s1 + $0xc34] sm:$0xf]
  %v976 = vld [vmem:[%s1 + $0xc38] sm:$0xf]
  %v977 = vld [vmem:[%s1 + $0xc3c] sm:$0xf]
  %v978 = vld [vmem:[%s1 + $0xc40] sm:$0xf]
  %v979 = vld [vmem:[%s1 + $0xc44] sm:$0xf]
  %v980 = vld [vmem:[%s1 + $0xc48] sm:$0xf]
  %v981 = vld [vmem:[%s1 + $0xc4c] sm:$0xf]
  %v982 = vld [vmem:[%s1 + $0xc50] sm:$0xf]
  %v983 = vld [vmem:[%s1 + $0xc54] sm:$0xf]
  %v984 = vld [vmem:[%s1 + $0xc58] sm:$0xf]
  %v985 = vld [vmem:[%s1 + $0xc5c] sm:$0xf]
  %v986 = vld [vmem:[%s1 + $0xc60] sm:$0xf]
  %v987 = vld [vmem:[%s1 + $0xc64] sm:$0xf]
  %v988 = vld [vmem:[%s1 + $0xc68] sm:$0xf]
  %v989 = vld [vmem:[%s1 + $0xc6c] sm:$0xf]
  %v990 = vld [vmem:[%s1 + $0xc70] sm:$0xf]
  %v991 = vld [vmem:[%s1 + $0xc74] sm:$0xf]
  %v992 = vld [vmem:[%s1 + $0xc78] sm:$0xf]
  %v993 = vld [vmem:[%s1 + $0xc7c] sm:$0xf]
  %v994 = vld [vmem:[%s1 + $0xc80] sm:$0xf]
  %v995 = vld [vmem:[%s1 + $0xc84] sm:$0xf]
  %v996 = vld [vmem:[%s1 + $0xc88] sm:$0xf]
  %v997 = vld [vmem:[%s1 + $0xc8c] sm:$0xf]
  %v998 = vld [vmem:[%s1 + $0xc90] sm:$0xf]
  %v999 = vld [vmem:[%s1 + $0xc94] sm:$0xf]
  %v1000 = vld [vmem:[%s1 + $0xc98] sm:$0xf]
  %v1001 = vld [vmem:[%s1 + $0xc9c] sm:$0xf]
  %v1002 = vld [vmem:[%s1 + $0xca0] sm:$0xf]
  %v1003 = vld [vmem:[%s1 + $0xca4] sm:$0xf]
  %v1004 = vld [vmem:[%s1 + $0xca8] sm:$0xf]
  %v1005 = vld [vmem:[%s1 + $0xcac] sm:$0xf]
  %v1006 = vld [vmem:[%s1 + $0xcb0] sm:$0xf]
  %v1007 = vld [vmem:[%s1 + $0xcb4] sm:$0xf]
  %v1008 = vld [vmem:[%s1 + $0xcb8] sm:$0xf]
  %v1009 = vld [vmem:[%s1 + $0xcbc] sm:$0xf]
  %v1010 = vld [vmem:[%s1 + $0xcc0] sm:$0xf]
  %v1011 = vld [vmem:[%s1 + $0xcc4] sm:$0xf]
  %v1012 = vld [vmem:[%s1 + $0xcc8] sm:$0xf]
  %v1013 = vld [vmem:[%s1 + $0xccc] sm:$0xf]
  %v1014 = vld [vmem:[%s1 + $0xcd0] sm:$0xf]
  %v1015 = vld [vmem:[%s1 + $0xcd4] sm:$0xf]
  %v1016 = vld [vmem:[%s1 + $0xcd8] sm:$0xf]
  %v1017 = vld [vmem:[%s1 + $0xcdc] sm:$0xf]
  %v1018 = vld [vmem:[%s1 + $0xce0] sm:$0xf]
  %v1019 = vld [vmem:[%s1 + $0xce4] sm:$0xf]
  %v1020 = vld [vmem:[%s1 + $0xce8] sm:$0xf]
  %v1021 = vld [vmem:[%s1 + $0xcec] sm:$0xf]
  %v1022 = vld [vmem:[%s1 + $0xcf0] sm:$0xf]
  %v1023 = vld [vmem:[%s1 + $0xcf4] sm:$0xf]
  %v1024 = vld [vmem:[%s1 + $0xcf8] sm:$0xf]
  %v1025 = vld [vmem:[%s1 + $0xcfc] sm:$0xf]
  %v1026 = vld [vmem:[%s1 + $0xd00] sm:$0xf]
  %v1027 = vld [vmem:[%s1 + $0xd04] sm:$0xf]
  %v1028 = vld [vmem:[%s1 + $0xd08] sm:$0xf]
  %v1029 = vld [vmem:[%s1 + $0xd0c] sm:$0xf]
  %v1030 = vld [vmem:[%s1 + $0xd10] sm:$0xf]
  %v1031 = vld [vmem:[%s1 + $0xd14] sm:$0xf]
  %v1032 = vld [vmem:[%s1 + $0xd18] sm:$0xf]
  %v1033 = vld [vmem:[%s1 + $0xd1c] sm:$0xf]
  %v1034 = vld [vmem:[%s1 + $0xd20] sm:$0xf]
  %v1035 = vld [vmem:[%s1 + $0xd24] sm:$0xf]
  %v1036 = vld [vmem:[%s1 + $0xd28] sm:$0xf]
  %v1037 = vld [vmem:[%s1 + $0xd2c] sm:$0xf]
  %v1038 = vld [vmem:[%s1 + $0xd30] sm:$0xf]
  %v1039 = vld [vmem:[%s1 + $0xd34] sm:$0xf]
  %v1040 = vld [vmem:[%s1 + $0xd38] sm:$0xf]
  %v1041 = vld [vmem:[%s1 + $0xd3c] sm:$0xf]
  %v1042 = vld [vmem:[%s1 + $0xd40] sm:$0xf]
  %v1043 = vld [vmem:[%s1 + $0xd44] sm:$0xf]
  %v1044 = vld [vmem:[%s1 + $0xd48] sm:$0xf]
  %v1045 = vld [vmem:[%s1 + $0xd4c] sm:$0xf]
  %v1046 = vld [vmem:[%s1 + $0xd50] sm:$0xf]
  %v1047 = vld [vmem:[%s1 + $0xd54] sm:$0xf]
  %v1048 = vld [vmem:[%s1 + $0xd58] sm:$0xf]
  %v1049 = vld [vmem:[%s1 + $0xd5c] sm:$0xf]
  %v1050 = vld [vmem:[%s1 + $0xd60] sm:$0xf]
  %v1051 = vld [vmem:[%s1 + $0xd64] sm:$0xf]
  %v1052 = vld [vmem:[%s1 + $0xd68] sm:$0xf]
  %v1053 = vld [vmem:[%s1 + $0xd6c] sm:$0xf]
  %v1054 = vld [vmem:[%s1 + $0xd70] sm:$0xf]
  %v1055 = vld [vmem:[%s1 + $0xd74] sm:$0xf]
  %v1056 = vld [vmem:[%s1 + $0xd78] sm:$0xf]
  %v1057 = vld [vmem:[%s1 + $0xd7c] sm:$0xf]
  %v1058 = vld [vmem:[%s1 + $0xd80] sm:$0xf]
  %v1059 = vld [vmem:[%s1 + $0xd84] sm:$0xf]
  %v1060 = vld [vmem:[%s1 + $0xd88] sm:$0xf]
  %v1061 = vld [vmem:[%s1 + $0xd8c] sm:$0xf]
  %v1062 = vld [vmem:[%s1 + $0xd90] sm:$0xf]
  %v1063 = vld [vmem:[%s1 + $0xd94] sm:$0xf]
  %v1064 = vld [vmem:[%s1 + $0xd98] sm:$0xf]
  %v1065 = vld [vmem:[%s1 + $0xd9c] sm:$0xf]
  %v1066 = vld [vmem:[%s1 + $0xda0] sm:$0xf]
  %v1067 = vld [vmem:[%s1 + $0xda4] sm:$0xf]
  %v1068 = vld [vmem:[%s1 + $0xda8] sm:$0xf]
  %v1069 = vld [vmem:[%s1 + $0xdac] sm:$0xf]
  %v1070 = vld [vmem:[%s1 + $0xdb0] sm:$0xf]
  %v1071 = vld [vmem:[%s1 + $0xdb4] sm:$0xf]
  %v1072 = vld [vmem:[%s1 + $0xdb8] sm:$0xf]
  %v1073 = vld [vmem:[%s1 + $0xdbc] sm:$0xf]
  %v1074 = vld [vmem:[%s1 + $0xdc0] sm:$0xf]
  %v1075 = vld [vmem:[%s1 + $0xdc4] sm:$0xf]
  %v1076 = vld [vmem:[%s1 + $0xdc8] sm:$0xf]
  %v1077 = vld [vmem:[%s1 + $0xdcc] sm:$0xf]
  %v1078 = vld [vmem:[%s1 + $0xdd0] sm:$0xf]
  %v1079 = vld [vmem:[%s1 + $0xdd4] sm:$0xf]
  %v1080 = vld [vmem:[%s1 + $0xdd8] sm:$0xf]
  %v1081 = vld [vmem:[%s1 + $0xddc] sm:$0xf]
  %v1082 = vld [vmem:[%s1 + $0xde0] sm:$0xf]
  %v1083 = vld [vmem:[%s1 + $0xde4] sm:$0xf]
  %v1084 = vld [vmem:[%s1 + $0xde8] sm:$0xf]
  %v1085 = vld [vmem:[%s1 + $0xdec] sm:$0xf]
  %v1086 = vld [vmem:[%s1 + $0xdf0] sm:$0xf]
  %v1087 = vld [vmem:[%s1 + $0xdf4] sm:$0xf]
  %v1088 = vld [vmem:[%s1 + $0xdf8] sm:$0xf]
  %v1089 = vld [vmem:[%s1 + $0xdfc] sm:$0xf]
  %v1090 = vld [vmem:[%s1 + $0xe00] sm:$0xf]
  %v1091 = vld [vmem:[%s1 + $0xe04] sm:$0xf]
  %v1092 = vld [vmem:[%s1 + $0xe08] sm:$0xf]
  %v1093 = vld [vmem:[%s1 + $0xe0c] sm:$0xf]
  %v1094 = vld [vmem:[%s1 + $0xe10] sm:$0xf]
  %v1095 = vld [vmem:[%s1 + $0xe14] sm:$0xf]
  %v1096 = vld [vmem:[%s1 + $0xe18] sm:$0xf]
  %v1097 = vld [vmem:[%s1 + $0xe1c] sm:$0xf]
  %v1098 = vld [vmem:[%s1 + $0xe20] sm:$0xf]
  %v1099 = vld [vmem:[%s1 + $0xe24] sm:$0xf]
  %v1100 = vld [vmem:[%s1 + $0xe28] sm:$0xf]
  %v1101 = vld [vmem:[%s1 + $0xe2c] sm:$0xf]
  %v1102 = vld [vmem:[%s1 + $0xe30] sm:$0xf]
  %v1103 = vld [vmem:[%s1 + $0xe34] sm:$0xf]
  %v1104 = vld [vmem:[%s1 + $0xe38] sm:$0xf]
  %v1105 = vld [vmem:[%s1 + $0xe3c] sm:$0xf]
  %v1106 = vld [vmem:[%s1 + $0xe40] sm:$0xf]
  %v1107 = vld [vmem:[%s1 + $0xe44] sm:$0xf]
  %v1108 = vld [vmem:[%s1 + $0xe48] sm:$0xf]
  %v1109 = vld [vmem:[%s1 + $0xe4c] sm:$0xf]
  %v1110 = vld [vmem:[%s1 + $0xe50] sm:$0xf]
  %v1111 = vld [vmem:[%s1 + $0xe54] sm:$0xf]
  %v1112 = vld [vmem:[%s1 + $0xe58] sm:$0xf]
  %v1113 = vld [vmem:[%s1 + $0xe5c] sm:$0xf]
  %v1114 = vld [vmem:[%s1 + $0xe60] sm:$0xf]
  %v1115 = vld [vmem:[%s1 + $0xe64] sm:$0xf]
  %v1116 = vld [vmem:[%s1 + $0xe68] sm:$0xf]
  %v1117 = vld [vmem:[%s1 + $0xe6c] sm:$0xf]
  %v1118 = vld [vmem:[%s1 + $0xe70] sm:$0xf]
  %v1119 = vld [vmem:[%s1 + $0xe74] sm:$0xf]
  %v1120 = vld [vmem:[%s1 + $0xe78] sm:$0xf]
  %v1121 = vld [vmem:[%s1 + $0xe7c] sm:$0xf]
  %v1122 = vld [vmem:[%s1 + $0xe80] sm:$0xf]
  %v1123 = vld [vmem:[%s1 + $0xe84] sm:$0xf]
  %v1124 = vld [vmem:[%s1 + $0xe88] sm:$0xf]
  %v1125 = vld [vmem:[%s1 + $0xe8c] sm:$0xf]
  %v1126 = vld [vmem:[%s1 + $0xe90] sm:$0xf]
  %v1127 = vld [vmem:[%s1 + $0xe94] sm:$0xf]
  %v1128 = vld [vmem:[%s1 + $0xe98] sm:$0xf]
  %v1129 = vld [vmem:[%s1 + $0xe9c] sm:$0xf]
  %v1130 = vld [vmem:[%s1 + $0xea0] sm:$0xf]
  %v1131 = vld [vmem:[%s1 + $0xea4] sm:$0xf]
  %v1132 = vld [vmem:[%s1 + $0xea8] sm:$0xf]
  %v1133 = vld [vmem:[%s1 + $0xeac] sm:$0xf]
  %v1134 = vld [vmem:[%s1 + $0xeb0] sm:$0xf]
  %v1135 = vld [vmem:[%s1 + $0xeb4] sm:$0xf]
  %v1136 = vld [vmem:[%s1 + $0xeb8] sm:$0xf]
  %v1137 = vld [vmem:[%s1 + $0xebc] sm:$0xf]
  %v1138 = vld [vmem:[%s1 + $0xec0] sm:$0xf]
  %v1139 = vld [vmem:[%s1 + $0xec4] sm:$0xf]
  %v1140 = vld [vmem:[%s1 + $0xec8] sm:$0xf]
  %v1141 = vld [vmem:[%s1 + $0xecc] sm:$0xf]
  %v1142 = vld [vmem:[%s1 + $0xed0] sm:$0xf]
  %v1143 = vld [vmem:[%s1 + $0xed4] sm:$0xf]
  %v1144 = vld [vmem:[%s1 + $0xed8] sm:$0xf]
  %v1145 = vld [vmem:[%s1 + $0xedc] sm:$0xf]
  %v1146 = vld [vmem:[%s1 + $0xee0] sm:$0xf]
  %v1147 = vld [vmem:[%s1 + $0xee4] sm:$0xf]
  %v1148 = vld [vmem:[%s1 + $0xee8] sm:$0xf]
  %v1149 = vld [vmem:[%s1 + $0xeec] sm:$0xf]
  %v1150 = vld [vmem:[%s1 + $0xef0] sm:$0xf]
  %v1151 = vld [vmem:[%s1 + $0xef4] sm:$0xf]
  %v1152 = vld [vmem:[%s1 + $0xef8] sm:$0xf]
  %v1153 = vld [vmem:[%s1 + $0xefc] sm:$0xf]
  %v1154 = vld [vmem:[%s1 + $0xf00] sm:$0xf]
  %v1155 = vld [vmem:[%s1 + $0xf04] sm:$0xf]
  %v1156 = vld [vmem:[%s1 + $0xf08] sm:$0xf]
  %v1157 = vld [vmem:[%s1 + $0xf0c] sm:$0xf]
  %v1158 = vld [vmem:[%s1 + $0xf10] sm:$0xf]
  %v1159 = vld [vmem:[%s1 + $0xf14] sm:$0xf]
  %v1160 = vld [vmem:[%s1 + $0xf18] sm:$0xf]
  %v1161 = vld [vmem:[%s1 + $0xf1c] sm:$0xf]
  %v1162 = vld [vmem:[%s1 + $0xf20] sm:$0xf]
  %v1163 = vld [vmem:[%s1 + $0xf24] sm:$0xf]
  %v1164 = vld [vmem:[%s1 + $0xf28] sm:$0xf]
  %v1165 = vld [vmem:[%s1 + $0xf2c] sm:$0xf]
  %v1166 = vld [vmem:[%s1 + $0xf30] sm:$0xf]
  %v1167 = vld [vmem:[%s1 + $0xf34] sm:$0xf]
  %v1168 = vld [vmem:[%s1 + $0xf38] sm:$0xf]
  %v1169 = vld [vmem:[%s1 + $0xf3c] sm:$0xf]
  %v1170 = vld [vmem:[%s1 + $0xf40] sm:$0xf]
  %v1171 = vld [vmem:[%s1 + $0xf44] sm:$0xf]
  %v1172 = vld [vmem:[%s1 + $0xf48] sm:$0xf]
  %v1173 = vld [vmem:[%s1 + $0xf4c] sm:$0xf]
  %v1174 = vld [vmem:[%s1 + $0xf50] sm:$0xf]
  %v1175 = vld [vmem:[%s1 + $0xf54] sm:$0xf]
  %v1176 = vld [vmem:[%s1 + $0xf58] sm:$0xf]
  %v1177 = vld [vmem:[%s1 + $0xf5c] sm:$0xf]
  %v1178 = vld [vmem:[%s1 + $0xf60] sm:$0xf]
  %v1179 = vld [vmem:[%s1 + $0xf64] sm:$0xf]
  %v1180 = vld [vmem:[%s1 + $0xf68] sm:$0xf]
  %v1181 = vld [vmem:[%s1 + $0xf6c] sm:$0xf]
  %v1182 = vld [vmem:[%s1 + $0xf70] sm:$0xf]
  %v1183 = vld [vmem:[%s1 + $0xf74] sm:$0xf]
  %v1184 = vld [vmem:[%s1 + $0xf78] sm:$0xf]
  %v1185 = vld [vmem:[%s1 + $0xf7c] sm:$0xf]
  %v1186 = vld [vmem:[%s1 + $0xf80] sm:$0xf]
  %v1187 = vld [vmem:[%s1 + $0xf84] sm:$0xf]
  %v1188 = vld [vmem:[%s1 + $0xf88] sm:$0xf]
  %v1189 = vld [vmem:[%s1 + $0xf8c] sm:$0xf]
  %v1190 = vld [vmem:[%s1 + $0xf90] sm:$0xf]
  %v1191 = vld [vmem:[%s1 + $0xf94] sm:$0xf]
  %v1192 = vld [vmem:[%s1 + $0xf98] sm:$0xf]
  %v1193 = vld [vmem:[%s1 + $0xf9c] sm:$0xf]
  %v1194 = vld [vmem:[%s1 + $0xfa0] sm:$0xf]
  %v1195 = vld [vmem:[%s1 + $0xfa4] sm:$0xf]
  %v1196 = vld [vmem:[%s1 + $0xfa8] sm:$0xf]
  %v1197 = vld [vmem:[%s1 + $0xfac] sm:$0xf]
  %v1198 = vld [vmem:[%s1 + $0xfb0] sm:$0xf]
  %v1199 = vld [vmem:[%s1 + $0xfb4] sm:$0xf]
  %v1200 = vld [vmem:[%s1 + $0xfb8] sm:$0xf]
  %v1201 = vld [vmem:[%s1 + $0xfbc] sm:$0xf]
  %v1202 = vld [vmem:[%s1 + $0xfc0] sm:$0xf]
  %v1203 = vld [vmem:[%s1 + $0xfc4] sm:$0xf]
  %v1204 = vld [vmem:[%s1 + $0xfc8] sm:$0xf]
  %v1205 = vld [vmem:[%s1 + $0xfcc] sm:$0xf]
  %v1206 = vld [vmem:[%s1 + $0xfd0] sm:$0xf]
  %v1207 = vld [vmem:[%s1 + $0xfd4] sm:$0xf]
  %v1208 = vld [vmem:[%s1 + $0xfd8] sm:$0xf]
  %v1209 = vld [vmem:[%s1 + $0xfdc] sm:$0xf]
  %v1210 = vld [vmem:[%s1 + $0xfe0] sm:$0xf]
  %v1211 = vld [vmem:[%s1 + $0xfe4] sm:$0xf]
  %v1212 = vld [vmem:[%s1 + $0xfe8] sm:$0xf]
  %v1213 = vld [vmem:[%s1 + $0xfec] sm:$0xf]
  %v1214 = vld [vmem:[%s1 + $0xff0] sm:$0xf]
  %v1215 = vld [vmem:[%s1 + $0xff4] sm:$0xf]
  %v1216 = vld [vmem:[%s1 + $0xff8] sm:$0xf]
  %v1217 = vld [vmem:[%s1 + $0xffc] sm:$0xf]
  %v1218 = vld [vmem:[%s1 + $0x1000] sm:$0xf]
  %v1219 = vld [vmem:[%s1 + $0x1004] sm:$0xf]
  %v1220 = vld [vmem:[%s1 + $0x1008] sm:$0xf]
  %v1221 = vld [vmem:[%s1 + $0x100c] sm:$0xf]
  %v1222 = vld [vmem:[%s1 + $0x1010] sm:$0xf]
  %v1223 = vld [vmem:[%s1 + $0x1014] sm:$0xf]
  %v1224 = vld [vmem:[%s1 + $0x1018] sm:$0xf]
  %v1225 = vld [vmem:[%s1 + $0x101c] sm:$0xf]
  %v1226 = vld [vmem:[%s1 + $0x1020] sm:$0xf]
  %v1227 = vld [vmem:[%s1 + $0x1024] sm:$0xf]
  %v1228 = vld [vmem:[%s1 + $0x1028] sm:$0xf]
  %v1229 = vld [vmem:[%s1 + $0x102c] sm:$0xf]
  %v1230 = vld [vmem:[%s1 + $0x1030] sm:$0xf]
  %v1231 = vld [vmem:[%s1 + $0x1034] sm:$0xf]
  %v1232 = vld [vmem:[%s1 + $0x1038] sm:$0xf]
  %v1233 = vld [vmem:[%s1 + $0x103c] sm:$0xf]
  %v1234 = vld [vmem:[%s1 + $0x1040] sm:$0xf]
  %v1235 = vld [vmem:[%s1 + $0x1044] sm:$0xf]
  %v1236 = vld [vmem:[%s1 + $0x1048] sm:$0xf]
  %v1237 = vld [vmem:[%s1 + $0x104c] sm:$0xf]
  %v1238 = vld [vmem:[%s1 + $0x1050] sm:$0xf]
  %v1239 = vld [vmem:[%s1 + $0x1054] sm:$0xf]
  %v1240 = vld [vmem:[%s1 + $0x1058] sm:$0xf]
  %v1241 = vld [vmem:[%s1 + $0x105c] sm:$0xf]
  %v1242 = vld [vmem:[%s1 + $0x1060] sm:$0xf]
  %v1243 = vld [vmem:[%s1 + $0x1064] sm:$0xf]
  %v1244 = vld [vmem:[%s1 + $0x1068] sm:$0xf]
  %v1245 = vld [vmem:[%s1 + $0x106c] sm:$0xf]
  %v1246 = vld [vmem:[%s1 + $0x1070] sm:$0xf]
  %v1247 = vld [vmem:[%s1 + $0x1074] sm:$0xf]
  %v1248 = vld [vmem:[%s1 + $0x1078] sm:$0xf]
  %v1249 = vld [vmem:[%s1 + $0x107c] sm:$0xf]
  %v1250 = vld [vmem:[%s1 + $0x1080] sm:$0xf]
  %v1251 = vld [vmem:[%s1 + $0x1084] sm:$0xf]
  %v1252 = vld [vmem:[%s1 + $0x1088] sm:$0xf]
  %v1253 = vld [vmem:[%s1 + $0x108c] sm:$0xf]
  %v1254 = vld [vmem:[%s1 + $0x1090] sm:$0xf]
  %v1255 = vld [vmem:[%s1 + $0x1094] sm:$0xf]
  %v1256 = vld [vmem:[%s1 + $0x1098] sm:$0xf]
  %v1257 = vld [vmem:[%s1 + $0x109c] sm:$0xf]
  %v1258 = vld [vmem:[%s1 + $0x10a0] sm:$0xf]
  %v1259 = vld [vmem:[%s1 + $0x10a4] sm:$0xf]
  %v1260 = vld [vmem:[%s1 + $0x10a8] sm:$0xf]
  %v1261 = vld [vmem:[%s1 + $0x10ac] sm:$0xf]
  %v1262 = vld [vmem:[%s1 + $0x10b0] sm:$0xf]
  %v1263 = vld [vmem:[%s1 + $0x10b4] sm:$0xf]
  %v1264 = vld [vmem:[%s1 + $0x10b8] sm:$0xf]
  %v1265 = vld [vmem:[%s1 + $0x10bc] sm:$0xf]
  %v1266 = vld [vmem:[%s1 + $0x10c0] sm:$0xf]
  %v1267 = vld [vmem:[%s1 + $0x10c4] sm:$0xf]
  %v1268 = vld [vmem:[%s1 + $0x10c8] sm:$0xf]
  %v1269 = vld [vmem:[%s1 + $0x10cc] sm:$0xf]
  %v1270 = vld [vmem:[%s1 + $0x10d0] sm:$0xf]
  %v1271 = vld [vmem:[%s1 + $0x10d4] sm:$0xf]
  %v1272 = vld [vmem:[%s1 + $0x10d8] sm:$0xf]
  %v1273 = vld [vmem:[%s1 + $0x10dc] sm:$0xf]
  %v1274 = vld [vmem:[%s1 + $0x10e0] sm:$0xf]
  %v1275 = vld [vmem:[%s1 + $0x10e4] sm:$0xf]
  %v1276 = vld [vmem:[%s1 + $0x10e8] sm:$0xf]
  %v1277 = vld [vmem:[%s1 + $0x10ec] sm:$0xf]
  %v1278 = vld [vmem:[%s1 + $0x10f0] sm:$0xf]
  %v1279 = vld [vmem:[%s1 + $0x10f4] sm:$0xf]
  %v1280 = vld [vmem:[%s1 + $0x10f8] sm:$0xf]
  %v1281 = vld [vmem:[%s1 + $0x10fc] sm:$0xf]
  %v1282 = vld [vmem:[%s1 + $0x1100] sm:$0xf]
  %v1283 = vld [vmem:[%s1 + $0x1104] sm:$0xf]
  %v1284 = vld [vmem:[%s1 + $0x1108] sm:$0xf]
  %v1285 = vld [vmem:[%s1 + $0x110c] sm:$0xf]
  %v1286 = vld [vmem:[%s1 + $0x1110] sm:$0xf]
  %v1287 = vld [vmem:[%s1 + $0x1114] sm:$0xf]
  %v1288 = vld [vmem:[%s1 + $0x1118] sm:$0xf]
  %v1289 = vld [vmem:[%s1 + $0x111c] sm:$0xf]
  %v1290 = vld [vmem:[%s1 + $0x1120] sm:$0xf]
  %v1291 = vld [vmem:[%s1 + $0x1124] sm:$0xf]
  %v1292 = vld [vmem:[%s1 + $0x1128] sm:$0xf]
  %v1293 = vld [vmem:[%s1 + $0x112c] sm:$0xf]
  %v1294 = vld [vmem:[%s1 + $0x1130] sm:$0xf]
  %v1295 = vld [vmem:[%s1 + $0x1134] sm:$0xf]
  %v1296 = vld [vmem:[%s1 + $0x1138] sm:$0xf]
  %v1297 = vld [vmem:[%s1 + $0x113c] sm:$0xf]
  %v1298 = vld [vmem:[%s1 + $0x1140] sm:$0xf]
  %v1299 = vld [vmem:[%s1 + $0x1144] sm:$0xf]
  %v1300 = vld [vmem:[%s1 + $0x1148] sm:$0xf]
  %v1301 = vld [vmem:[%s1 + $0x114c] sm:$0xf]
  %v1302 = vld [vmem:[%s1 + $0x1150] sm:$0xf]
  %v1303 = vld [vmem:[%s1 + $0x1154] sm:$0xf]
  %v1304 = vld [vmem:[%s1 + $0x1158] sm:$0xf]
  %v1305 = vld [vmem:[%s1 + $0x115c] sm:$0xf]
  %v1306 = vld [vmem:[%s1 + $0x1160] sm:$0xf]
  %v1307 = vld [vmem:[%s1 + $0x1164] sm:$0xf]
  %v1308 = vld [vmem:[%s1 + $0x1168] sm:$0xf]
  %v1309 = vld [vmem:[%s1 + $0x116c] sm:$0xf]
  %v1310 = vld [vmem:[%s1 + $0x1170] sm:$0xf]
  %v1311 = vld [vmem:[%s1 + $0x1174] sm:$0xf]
  %v1312 = vld [vmem:[%s1 + $0x1178] sm:$0xf]
  %v1313 = vld [vmem:[%s1 + $0x117c] sm:$0xf]
  %v1314 = vld [vmem:[%s1 + $0x1180] sm:$0xf]
  %v1315 = vld [vmem:[%s1 + $0x1184] sm:$0xf]
  %v1316 = vld [vmem:[%s1 + $0x1188] sm:$0xf]
  %v1317 = vld [vmem:[%s1 + $0x118c] sm:$0xf]
  %v1318 = vld [vmem:[%s1 + $0x1190] sm:$0xf]
  %v1319 = vld [vmem:[%s1 + $0x1194] sm:$0xf]
  %v1320 = vld [vmem:[%s1 + $0x1198] sm:$0xf]
  %v1321 = vld [vmem:[%s1 + $0x119c] sm:$0xf]
  %v1322 = vld [vmem:[%s1 + $0x11a0] sm:$0xf]
  %v1323 = vld [vmem:[%s1 + $0x11a4] sm:$0xf]
  %v1324 = vld [vmem:[%s1 + $0x11a8] sm:$0xf]
  %v1325 = vld [vmem:[%s1 + $0x11ac] sm:$0xf]
  %v1326 = vld [vmem:[%s1 + $0x11b0] sm:$0xf]
  %v1327 = vld [vmem:[%s1 + $0x11b4] sm:$0xf]
  %v1328 = vld [vmem:[%s1 + $0x11b8] sm:$0xf]
  %v1329 = vld [vmem:[%s1 + $0x11bc] sm:$0xf]
  %v1330 = vld [vmem:[%s1 + $0x11c0] sm:$0xf]
  %v1331 = vld [vmem:[%s1 + $0x11c4] sm:$0xf]
  %v1332 = vld [vmem:[%s1 + $0x11c8] sm:$0xf]
  %v1333 = vld [vmem:[%s1 + $0x11cc] sm:$0xf]
  %v1334 = vld [vmem:[%s1 + $0x11d0] sm:$0xf]
  %v1335 = vld [vmem:[%s1 + $0x11d4] sm:$0xf]
  %v1336 = vld [vmem:[%s1 + $0x11d8] sm:$0xf]
  %v1337 = vld [vmem:[%s1 + $0x11dc] sm:$0xf]
  %v1338 = vld [vmem:[%s1 + $0x11e0] sm:$0xf]
  %v1339 = vld [vmem:[%s1 + $0x11e4] sm:$0xf]
  %v1340 = vld [vmem:[%s1 + $0x11e8] sm:$0xf]
  %v1341 = vld [vmem:[%s1 + $0x11ec] sm:$0xf]
  %v1342 = vld [vmem:[%s1 + $0x11f0] sm:$0xf]
  %v1343 = vld [vmem:[%s1 + $0x11f4] sm:$0xf]
  %v1344 = vld [vmem:[%s1 + $0x11f8] sm:$0xf]
  %v1345 = vld [vmem:[%s1 + $0x11fc] sm:$0xf]
  %v1346 = vld [vmem:[%s1 + $0x1200] sm:$0xf]
  %v1347 = vld [vmem:[%s1 + $0x1204] sm:$0xf]
  %v1348 = vld [vmem:[%s1 + $0x1208] sm:$0xf]
  %v1349 = vld [vmem:[%s1 + $0x120c] sm:$0xf]
  %v1350 = vld [vmem:[%s1 + $0x1210] sm:$0xf]
  %v1351 = vld [vmem:[%s1 + $0x1214] sm:$0xf]
  %v1352 = vld [vmem:[%s1 + $0x1218] sm:$0xf]
  %v1353 = vld [vmem:[%s1 + $0x121c] sm:$0xf]
  %v1354 = vld [vmem:[%s1 + $0x1220] sm:$0xf]
  %v1355 = vld [vmem:[%s1 + $0x1224] sm:$0xf]
  %v1356 = vld [vmem:[%s1 + $0x1228] sm:$0xf]
  %v1357 = vld [vmem:[%s1 + $0x122c] sm:$0xf]
  %v1358 = vld [vmem:[%s1 + $0x1230] sm:$0xf]
  %v1359 = vld [vmem:[%s1 + $0x1234] sm:$0xf]
  %v1360 = vld [vmem:[%s1 + $0x1238] sm:$0xf]
  %v1361 = vld [vmem:[%s1 + $0x123c] sm:$0xf]
  %v1362 = vld [vmem:[%s1 + $0x1240] sm:$0xf]
  %v1363 = vld [vmem:[%s1 + $0x1244] sm:$0xf]
  %v1364 = vld [vmem:[%s1 + $0x1248] sm:$0xf]
  %v1365 = vld [vmem:[%s1 + $0x124c] sm:$0xf]
  %v1366 = vld [vmem:[%s1 + $0x1250] sm:$0xf]
  %v1367 = vld [vmem:[%s1 + $0x1254] sm:$0xf]
  %v1368 = vld [vmem:[%s1 + $0x1258] sm:$0xf]
  %v1369 = vld [vmem:[%s1 + $0x125c] sm:$0xf]
  %v1370 = vld [vmem:[%s1 + $0x1260] sm:$0xf]
  %v1371 = vld [vmem:[%s1 + $0x1264] sm:$0xf]
  %v1372 = vld [vmem:[%s1 + $0x1268] sm:$0xf]
  %v1373 = vld [vmem:[%s1 + $0x126c] sm:$0xf]
  %v1374 = vld [vmem:[%s1 + $0x1270] sm:$0xf]
  %v1375 = vld [vmem:[%s1 + $0x1274] sm:$0xf]
  %v1376 = vld [vmem:[%s1 + $0x1278] sm:$0xf]
  %v1377 = vld [vmem:[%s1 + $0x127c] sm:$0xf]
  %v1378 = vld [vmem:[%s1 + $0x1280] sm:$0xf]
  %v1379 = vld [vmem:[%s1 + $0x1284] sm:$0xf]
  %v1380 = vld [vmem:[%s1 + $0x1288] sm:$0xf]
  %v1381 = vld [vmem:[%s1 + $0x128c] sm:$0xf]
  %v1382 = vld [vmem:[%s1 + $0x1290] sm:$0xf]
  %v1383 = vld [vmem:[%s1 + $0x1294] sm:$0xf]
  %v1384 = vld [vmem:[%s1 + $0x1298] sm:$0xf]
  %v1385 = vld [vmem:[%s1 + $0x129c] sm:$0xf]
  %v1386 = vld [vmem:[%s1 + $0x12a0] sm:$0xf]
  %v1387 = vld [vmem:[%s1 + $0x12a4] sm:$0xf]
  %v1388 = vld [vmem:[%s1 + $0x12a8] sm:$0xf]
  %v1389 = vld [vmem:[%s1 + $0x12ac] sm:$0xf]
  %v1390 = vld [vmem:[%s1 + $0x12b0] sm:$0xf]
  %v1391 = vld [vmem:[%s1 + $0x12b4] sm:$0xf]
  %v1392 = vld [vmem:[%s1 + $0x12b8] sm:$0xf]
  %v1393 = vld [vmem:[%s1 + $0x12bc] sm:$0xf]
  %v1394 = vld [vmem:[%s1 + $0x12c0] sm:$0xf]
  %v1395 = vld [vmem:[%s1 + $0x12c4] sm:$0xf]
  %v1396 = vld [vmem:[%s1 + $0x12c8] sm:$0xf]
  %v1397 = vld [vmem:[%s1 + $0x12cc] sm:$0xf]
  %v1398 = vld [vmem:[%s1 + $0x12d0] sm:$0xf]
  %v1399 = vld [vmem:[%s1 + $0x12d4] sm:$0xf]
  %v1400 = vld [vmem:[%s1 + $0x12d8] sm:$0xf]
  %v1401 = vld [vmem:[%s1 + $0x12dc] sm:$0xf]
  %v1402 = vld [vmem:[%s1 + $0x12e0] sm:$0xf]
  %v1403 = vld [vmem:[%s1 + $0x12e4] sm:$0xf]
  %v1404 = vld [vmem:[%s1 + $0x12e8] sm:$0xf]
  %v1405 = vld [vmem:[%s1 + $0x12ec] sm:$0xf]
  %v1406 = vld [vmem:[%s1 + $0x12f0] sm:$0xf]
  %v1407 = vld [vmem:[%s1 + $0x12f4] sm:$0xf]
  %v1408 = vld [vmem:[%s1 + $0x12f8] sm:$0xf]
  %v1409 = vld [vmem:[%s1 + $0x12fc] sm:$0xf]
  %v1410 = vld [vmem:[%s1 + $0x1300] sm:$0xf]
  %v1411 = vld [vmem:[%s1 + $0x1304] sm:$0xf]
  %v1412 = vld [vmem:[%s1 + $0x1308] sm:$0xf]
  %v1413 = vld [vmem:[%s1 + $0x130c] sm:$0xf]
  %v1414 = vld [vmem:[%s1 + $0x1310] sm:$0xf]
  %v1415 = vld [vmem:[%s1 + $0x1314] sm:$0xf]
  %v1416 = vld [vmem:[%s1 + $0x1318] sm:$0xf]
  %v1417 = vld [vmem:[%s1 + $0x131c] sm:$0xf]
  %v1418 = vld [vmem:[%s1 + $0x1320] sm:$0xf]
  %v1419 = vld [vmem:[%s1 + $0x1324] sm:$0xf]
  %v1420 = vld [vmem:[%s1 + $0x1328] sm:$0xf]
  %v1421 = vld [vmem:[%s1 + $0x132c] sm:$0xf]
  %v1422 = vld [vmem:[%s1 + $0x1330] sm:$0xf]
  %v1423 = vld [vmem:[%s1 + $0x1334] sm:$0xf]
  %v1424 = vld [vmem:[%s1 + $0x1338] sm:$0xf]
  %v1425 = vld [vmem:[%s1 + $0x133c] sm:$0xf]
  %v1426 = vld [vmem:[%s1 + $0x1340] sm:$0xf]
  %v1427 = vld [vmem:[%s1 + $0x1344] sm:$0xf]
  %v1428 = vld [vmem:[%s1 + $0x1348] sm:$0xf]
  %v1429 = vld [vmem:[%s1 + $0x134c] sm:$0xf]
  %v1430 = vld [vmem:[%s1 + $0x1350] sm:$0xf]
  %v1431 = vld [vmem:[%s1 + $0x1354] sm:$0xf]
  %v1432 = vld [vmem:[%s1 + $0x1358] sm:$0xf]
  %v1433 = vld [vmem:[%s1 + $0x135c] sm:$0xf]
  %v1434 = vld [vmem:[%s1 + $0x1360] sm:$0xf]
  %v1435 = vld [vmem:[%s1 + $0x1364] sm:$0xf]
  %v1436 = vld [vmem:[%s1 + $0x1368] sm:$0xf]
  %v1437 = vld [vmem:[%s1 + $0x136c] sm:$0xf]
  %v1438 = vld [vmem:[%s1 + $0x1370] sm:$0xf]
  %v1439 = vld [vmem:[%s1 + $0x1374] sm:$0xf]
  %v1440 = vld [vmem:[%s1 + $0x1378] sm:$0xf]
  %v1441 = vld [vmem:[%s1 + $0x137c] sm:$0xf]
  %v1442 = vld [vmem:[%s1 + $0x1380] sm:$0xf]
  %v1443 = vld [vmem:[%s1 + $0x1384] sm:$0xf]
  %v1444 = vld [vmem:[%s1 + $0x1388] sm:$0xf]
  %v1445 = vld [vmem:[%s1 + $0x138c] sm:$0xf]
  %v1446 = vld [vmem:[%s1 + $0x1390] sm:$0xf]
  %v1447 = vld [vmem:[%s1 + $0x1394] sm:$0xf]
  %v1448 = vld [vmem:[%s1 + $0x1398] sm:$0xf]
  %v1449 = vld [vmem:[%s1 + $0x139c] sm:$0xf]
  %v1450 = vld [vmem:[%s1 + $0x13a0] sm:$0xf]
  %v1451 = vld [vmem:[%s1 + $0x13a4] sm:$0xf]
  %v1452 = vld [vmem:[%s1 + $0x13a8] sm:$0xf]
  %v1453 = vld [vmem:[%s1 + $0x13ac] sm:$0xf]
  %v1454 = vld [vmem:[%s1 + $0x13b0] sm:$0xf]
  %v1455 = vld [vmem:[%s1 + $0x13b4] sm:$0xf]
  %v1456 = vld [vmem:[%s1 + $0x13b8] sm:$0xf]
  %v1457 = vld [vmem:[%s1 + $0x13bc] sm:$0xf]
  %v1458 = vld [vmem:[%s1 + $0x13c0] sm:$0xf]
  %v1459 = vld [vmem:[%s1 + $0x13c4] sm:$0xf]
  %v1460 = vld [vmem:[%s1 + $0x13c8] sm:$0xf]
  %v1461 = vld [vmem:[%s1 + $0x13cc] sm:$0xf]
  %v1462 = vld [vmem:[%s1 + $0x13d0] sm:$0xf]
  %v1463 = vld [vmem:[%s1 + $0x13d4] sm:$0xf]
  %v1464 = vld [vmem:[%s1 + $0x13d8] sm:$0xf]
  %v1465 = vld [vmem:[%s1 + $0x13dc] sm:$0xf]
  %v1466 = vld [vmem:[%s1 + $0x13e0] sm:$0xf]
  %v1467 = vld [vmem:[%s1 + $0x13e4] sm:$0xf]
  %v1468 = vld [vmem:[%s1 + $0x13e8] sm:$0xf]
  %v1469 = vld [vmem:[%s1 + $0x13ec] sm:$0xf]
  %v1470 = vld [vmem:[%s1 + $0x13f0] sm:$0xf]
  %v1471 = vld [vmem:[%s1 + $0x13f4] sm:$0xf]
  %v1472 = vld [vmem:[%s1 + $0x13f8] sm:$0xf]
  %v1473 = vld [vmem:[%s1 + $0x13fc] sm:$0xf]
  %v1474 = vld [vmem:[%s1 + $0x1400] sm:$0xf]
  %v1475 = vld [vmem:[%s1 + $0x1404] sm:$0xf]
  %v1476 = vld [vmem:[%s1 + $0x1408] sm:$0xf]
  %v1477 = vld [vmem:[%s1 + $0x140c] sm:$0xf]
  %v1478 = vld [vmem:[%s1 + $0x1410] sm:$0xf]
  %v1479 = vld [vmem:[%s1 + $0x1414] sm:$0xf]
  %v1480 = vld [vmem:[%s1 + $0x1418] sm:$0xf]
  %v1481 = vld [vmem:[%s1 + $0x141c] sm:$0xf]
  %v1482 = vld [vmem:[%s1 + $0x1420] sm:$0xf]
  %v1483 = vld [vmem:[%s1 + $0x1424] sm:$0xf]
  %v1484 = vld [vmem:[%s1 + $0x1428] sm:$0xf]
  %v1485 = vld [vmem:[%s1 + $0x142c] sm:$0xf]
  %v1486 = vld [vmem:[%s1 + $0x1430] sm:$0xf]
  %v1487 = vld [vmem:[%s1 + $0x1434] sm:$0xf]
  %v1488 = vld [vmem:[%s1 + $0x1438] sm:$0xf]
  %v1489 = vld [vmem:[%s1 + $0x143c] sm:$0xf]
  %v1490 = vld [vmem:[%s1 + $0x1440] sm:$0xf]
  %v1491 = vld [vmem:[%s1 + $0x1444] sm:$0xf]
  %v1492 = vld [vmem:[%s1 + $0x1448] sm:$0xf]
  %v1493 = vld [vmem:[%s1 + $0x144c] sm:$0xf]
  %v1494 = vld [vmem:[%s1 + $0x1450] sm:$0xf]
  %v1495 = vld [vmem:[%s1 + $0x1454] sm:$0xf]
  %v1496 = vld [vmem:[%s1 + $0x1458] sm:$0xf]
  %v1497 = vld [vmem:[%s1 + $0x145c] sm:$0xf]
  %v1498 = vld [vmem:[%s1 + $0x1460] sm:$0xf]
  %v1499 = vld [vmem:[%s1 + $0x1464] sm:$0xf]
  %v1500 = vld [vmem:[%s1 + $0x1468] sm:$0xf]
  %v1501 = vld [vmem:[%s1 + $0x146c] sm:$0xf]
  %v1502 = vld [vmem:[%s1 + $0x1470] sm:$0xf]
  %v1503 = vld [vmem:[%s1 + $0x1474] sm:$0xf]
  %v1504 = vld [vmem:[%s1 + $0x1478] sm:$0xf]
  %v1505 = vld [vmem:[%s1 + $0x147c] sm:$0xf]
  %v1506 = vld [vmem:[%s1 + $0x1480] sm:$0xf]
  %v1507 = vld [vmem:[%s1 + $0x1484] sm:$0xf]
  %v1508 = vld [vmem:[%s1 + $0x1488] sm:$0xf]
  %v1509 = vld [vmem:[%s1 + $0x148c] sm:$0xf]
  %v1510 = vld [vmem:[%s1 + $0x1490] sm:$0xf]
  %v1511 = vld [vmem:[%s1 + $0x1494] sm:$0xf]
  %v1512 = vld [vmem:[%s1 + $0x1498] sm:$0xf]
  %v1513 = vld [vmem:[%s1 + $0x149c] sm:$0xf]
  %v1514 = vld [vmem:[%s1 + $0x14a0] sm:$0xf]
  %v1515 = vld [vmem:[%s1 + $0x14a4] sm:$0xf]
  %v1516 = vld [vmem:[%s1 + $0x14a8] sm:$0xf]
  %v1517 = vld [vmem:[%s1 + $0x14ac] sm:$0xf]
  %v1518 = vld [vmem:[%s1 + $0x14b0] sm:$0xf]
  %v1519 = vld [vmem:[%s1 + $0x14b4] sm:$0xf]
  %v1520 = vld [vmem:[%s1 + $0x14b8] sm:$0xf]
  %v1521 = vld [vmem:[%s1 + $0x14bc] sm:$0xf]
  %v1522 = vld [vmem:[%s1 + $0x14c0] sm:$0xf]
  %v1523 = vld [vmem:[%s1 + $0x14c4] sm:$0xf]
  %v1524 = vld [vmem:[%s1 + $0x14c8] sm:$0xf]
  %v1525 = vld [vmem:[%s1 + $0x14cc] sm:$0xf]
  %v1526 = vld [vmem:[%s1 + $0x14d0] sm:$0xf]
  %v1527 = vld [vmem:[%s1 + $0x14d4] sm:$0xf]
  %v1528 = vld [vmem:[%s1 + $0x14d8] sm:$0xf]
  %v1529 = vld [vmem:[%s1 + $0x14dc] sm:$0xf]
  %v1530 = vld [vmem:[%s1 + $0x14e0] sm:$0xf]
  %v1531 = vld [vmem:[%s1 + $0x14e4] sm:$0xf]
  %v1532 = vld [vmem:[%s1 + $0x14e8] sm:$0xf]
  %v1533 = vld [vmem:[%s1 + $0x14ec] sm:$0xf]
  %v1534 = vld [vmem:[%s1 + $0x14f0] sm:$0xf]
  %v1535 = vld [vmem:[%s1 + $0x14f4] sm:$0xf]
  %v1536 = vld [vmem:[%s1 + $0x14f8] sm:$0xf]
  %v1537 = vld [vmem:[%s1 + $0x14fc] sm:$0xf]
  %v1538 = vld [vmem:[%s1 + $0x1500] sm:$0xf]
  %v1539 = vld [vmem:[%s1 + $0x1504] sm:$0xf]
  %v1540 = vld [vmem:[%s1 + $0x1508] sm:$0xf]
  %v1541 = vld [vmem:[%s1 + $0x150c] sm:$0xf]
  %v1542 = vld [vmem:[%s1 + $0x1510] sm:$0xf]
  %v1543 = vld [vmem:[%s1 + $0x1514] sm:$0xf]
  %v1544 = vld [vmem:[%s1 + $0x1518] sm:$0xf]
  %v1545 = vld [vmem:[%s1 + $0x151c] sm:$0xf]
  %v1546 = vld [vmem:[%s1 + $0x1520] sm:$0xf]
  %v1547 = vld [vmem:[%s1 + $0x1524] sm:$0xf]
  %v1548 = vld [vmem:[%s1 + $0x1528] sm:$0xf]
  %v1549 = vld [vmem:[%s1 + $0x152c] sm:$0xf]
  %v1550 = vld [vmem:[%s1 + $0x1530] sm:$0xf]
  %v1551 = vld [vmem:[%s1 + $0x1534] sm:$0xf]
  %v1552 = vld [vmem:[%s1 + $0x1538] sm:$0xf]
  %v1553 = vld [vmem:[%s1 + $0x153c] sm:$0xf]
  %v1554 = vld [vmem:[%s1 + $0x1540] sm:$0xf]
  %v1555 = vld [vmem:[%s1 + $0x1544] sm:$0xf]
  %v1556 = vld [vmem:[%s1 + $0x1548] sm:$0xf]
  %v1557 = vld [vmem:[%s1 + $0x154c] sm:$0xf]
  %v1558 = vld [vmem:[%s1 + $0x1550] sm:$0xf]
  %v1559 = vld [vmem:[%s1 + $0x1554] sm:$0xf]
  %v1560 = vld [vmem:[%s1 + $0x1558] sm:$0xf]
  %v1561 = vld [vmem:[%s1 + $0x155c] sm:$0xf]
  %v1562 = vld [vmem:[%s1 + $0x1560] sm:$0xf]
  %v1563 = vld [vmem:[%s1 + $0x1564] sm:$0xf]
  %v1564 = vld [vmem:[%s1 + $0x1568] sm:$0xf]
  %v1565 = vld [vmem:[%s1 + $0x156c] sm:$0xf]
  %v1566 = vld [vmem:[%s1 + $0x1570] sm:$0xf]
  %v1567 = vld [vmem:[%s1 + $0x1574] sm:$0xf]
  %v1568 = vld [vmem:[%s1 + $0x1578] sm:$0xf]
  %v1569 = vld [vmem:[%s1 + $0x157c] sm:$0xf]
  %v1570 = vld [vmem:[%s1 + $0x1580] sm:$0xf]
  %v1571 = vld [vmem:[%s1 + $0x1584] sm:$0xf]
  %v1572 = vld [vmem:[%s1 + $0x1588] sm:$0xf]
  %v1573 = vld [vmem:[%s1 + $0x158c] sm:$0xf]
  %v1574 = vld [vmem:[%s1 + $0x1590] sm:$0xf]
  %v1575 = vld [vmem:[%s1 + $0x1594] sm:$0xf]
  %v1576 = vld [vmem:[%s1 + $0x1598] sm:$0xf]
  %v1577 = vld [vmem:[%s1 + $0x159c] sm:$0xf]
  %v1578 = vld [vmem:[%s1 + $0x15a0] sm:$0xf]
  %v1579 = vld [vmem:[%s1 + $0x15a4] sm:$0xf]
  %v1580 = vld [vmem:[%s1 + $0x15a8] sm:$0xf]
  %v1581 = vld [vmem:[%s1 + $0x15ac] sm:$0xf]
  %v1582 = vld [vmem:[%s1 + $0x15b0] sm:$0xf]
  %v1583 = vld [vmem:[%s1 + $0x15b4] sm:$0xf]
  %v1584 = vld [vmem:[%s1 + $0x15b8] sm:$0xf]
  %v1585 = vld [vmem:[%s1 + $0x15bc] sm:$0xf]
  %v1586 = vld [vmem:[%s1 + $0x15c0] sm:$0xf]
  %v1587 = vld [vmem:[%s1 + $0x15c4] sm:$0xf]
  %v1588 = vld [vmem:[%s1 + $0x15c8] sm:$0xf]
  %v1589 = vld [vmem:[%s1 + $0x15cc] sm:$0xf]
  %v1590 = vld [vmem:[%s1 + $0x15d0] sm:$0xf]
  %v1591 = vld [vmem:[%s1 + $0x15d4] sm:$0xf]
  %v1592 = vld [vmem:[%s1 + $0x15d8] sm:$0xf]
  %v1593 = vld [vmem:[%s1 + $0x15dc] sm:$0xf]
  %v1594 = vld [vmem:[%s1 + $0x15e0] sm:$0xf]
  %v1595 = vld [vmem:[%s1 + $0x15e4] sm:$0xf]
  %v1596 = vld [vmem:[%s1 + $0x15e8] sm:$0xf]
  %v1597 = vld [vmem:[%s1 + $0x15ec] sm:$0xf]
  %v1598 = vld [vmem:[%s1 + $0x15f0] sm:$0xf]
  %v1599 = vld [vmem:[%s1 + $0x15f4] sm:$0xf]
  %v1600 = vld [vmem:[%s1 + $0x15f8] sm:$0xf]
  %v1601 = vld [vmem:[%s1 + $0x15fc] sm:$0xf]
  %v1778 = vunpack.c.l.b16 %v18
  %v1779 = vunpack.c.h.b16 %v18
  %v1780 = vunpack.c.l.b16 %v19
  %v1781 = vunpack.c.h.b16 %v19
  %v1782 = vunpack.c.l.b16 %v20
  %v1783 = vunpack.c.h.b16 %v20
  %v1784 = vunpack.c.l.b16 %v21
  %v1785 = vunpack.c.h.b16 %v21
  %v1786 = vunpack.c.l.b16 %v22
  %v1787 = vunpack.c.h.b16 %v22
  %v1788 = vunpack.c.l.b16 %v23
  %v1789 = vunpack.c.h.b16 %v23
  %v1790 = vunpack.c.l.b16 %v24
  %v1791 = vunpack.c.h.b16 %v24
  %v1792 = vunpack.c.l.b16 %v25
  %v1793 = vunpack.c.h.b16 %v25
  %v1794 = vunpack.c.l.b16 %v26
  %v1795 = vunpack.c.h.b16 %v26
  %v1796 = vunpack.c.l.b16 %v27
  %v1797 = vunpack.c.h.b16 %v27
  %v1798 = vunpack.c.l.b16 %v28
  %v1799 = vunpack.c.h.b16 %v28
  %v1800 = vunpack.c.l.b16 %v29
  %v1801 = vunpack.c.h.b16 %v29
  %v1802 = vunpack.c.l.b16 %v30
  %v1803 = vunpack.c.h.b16 %v30
  %v1804 = vunpack.c.l.b16 %v31
  %v1805 = vunpack.c.h.b16 %v31
  %v1806 = vunpack.c.l.b16 %v32
  %v1807 = vunpack.c.h.b16 %v32
  %v1808 = vunpack.c.l.b16 %v33
  %v1809 = vunpack.c.h.b16 %v33
  %v1810 = vunpack.c.l.b16 %v34
  %v1811 = vunpack.c.h.b16 %v34
  %v1812 = vunpack.c.l.b16 %v35
  %v1813 = vunpack.c.h.b16 %v35
  %v1814 = vunpack.c.l.b16 %v36
  %v1815 = vunpack.c.h.b16 %v36
  %v1816 = vunpack.c.l.b16 %v37
  %v1817 = vunpack.c.h.b16 %v37
  %v1818 = vunpack.c.l.b16 %v38
  %v1819 = vunpack.c.h.b16 %v38
  %v1820 = vunpack.c.l.b16 %v39
  %v1821 = vunpack.c.h.b16 %v39
  %v1822 = vunpack.c.l.b16 %v40
  %v1823 = vunpack.c.h.b16 %v40
  %v1824 = vunpack.c.l.b16 %v41
  %v1825 = vunpack.c.h.b16 %v41
  %v1826 = vunpack.c.l.b16 %v42
  %v1827 = vunpack.c.h.b16 %v42
  %v1828 = vunpack.c.l.b16 %v43
  %v1829 = vunpack.c.h.b16 %v43
  %v1830 = vunpack.c.l.b16 %v44
  %v1831 = vunpack.c.h.b16 %v44
  %v1832 = vunpack.c.l.b16 %v45
  %v1833 = vunpack.c.h.b16 %v45
  %v1834 = vunpack.c.l.b16 %v46
  %v1835 = vunpack.c.h.b16 %v46
  %v1836 = vunpack.c.l.b16 %v47
  %v1837 = vunpack.c.h.b16 %v47
  %v1838 = vunpack.c.l.b16 %v48
  %v1839 = vunpack.c.h.b16 %v48
  %v1840 = vunpack.c.l.b16 %v49
  %v1841 = vunpack.c.h.b16 %v49
  %v1842 = vunpack.c.l.b16 %v50
  %v1843 = vunpack.c.h.b16 %v50
  %v1844 = vunpack.c.l.b16 %v51
  %v1845 = vunpack.c.h.b16 %v51
  %v1846 = vunpack.c.l.b16 %v52
  %v1847 = vunpack.c.h.b16 %v52
  %v1848 = vunpack.c.l.b16 %v53
  %v1849 = vunpack.c.h.b16 %v53
  %v1850 = vunpack.c.l.b16 %v54
  %v1851 = vunpack.c.h.b16 %v54
  %v1852 = vunpack.c.l.b16 %v55
  %v1853 = vunpack.c.h.b16 %v55
  %v1854 = vunpack.c.l.b16 %v56
  %v1855 = vunpack.c.h.b16 %v56
  %v1856 = vunpack.c.l.b16 %v57
  %v1857 = vunpack.c.h.b16 %v57
  %v1858 = vunpack.c.l.b16 %v58
  %v1859 = vunpack.c.h.b16 %v58
  %v1860 = vunpack.c.l.b16 %v59
  %v1861 = vunpack.c.h.b16 %v59
  %v1862 = vunpack.c.l.b16 %v60
  %v1863 = vunpack.c.h.b16 %v60
  %v1864 = vunpack.c.l.b16 %v61
  %v1865 = vunpack.c.h.b16 %v61
  %v1866 = vunpack.c.l.b16 %v62
  %v1867 = vunpack.c.h.b16 %v62
  %v1868 = vunpack.c.l.b16 %v63
  %v1869 = vunpack.c.h.b16 %v63
  %v1870 = vunpack.c.l.b16 %v64
  %v1871 = vunpack.c.h.b16 %v64
  %v1872 = vunpack.c.l.b16 %v65
  %v1873 = vunpack.c.h.b16 %v65
  %v1874 = vunpack.c.l.b16 %v66
  %v1875 = vunpack.c.h.b16 %v66
  %v1876 = vunpack.c.l.b16 %v67
  %v1877 = vunpack.c.h.b16 %v67
  %v1878 = vunpack.c.l.b16 %v68
  %v1879 = vunpack.c.h.b16 %v68
  %v1880 = vunpack.c.l.b16 %v69
  %v1881 = vunpack.c.h.b16 %v69
  %v1882 = vunpack.c.l.b16 %v70
  %v1883 = vunpack.c.h.b16 %v70
  %v1884 = vunpack.c.l.b16 %v71
  %v1885 = vunpack.c.h.b16 %v71
  %v1886 = vunpack.c.l.b16 %v72
  %v1887 = vunpack.c.h.b16 %v72
  %v1888 = vunpack.c.l.b16 %v73
  %v1889 = vunpack.c.h.b16 %v73
  %v1890 = vunpack.c.l.b16 %v74
  %v1891 = vunpack.c.h.b16 %v74
  %v1892 = vunpack.c.l.b16 %v75
  %v1893 = vunpack.c.h.b16 %v75
  %v1894 = vunpack.c.l.b16 %v76
  %v1895 = vunpack.c.h.b16 %v76
  %v1896 = vunpack.c.l.b16 %v77
  %v1897 = vunpack.c.h.b16 %v77
  %v1898 = vunpack.c.l.b16 %v78
  %v1899 = vunpack.c.h.b16 %v78
  %v1900 = vunpack.c.l.b16 %v79
  %v1901 = vunpack.c.h.b16 %v79
  %v1902 = vunpack.c.l.b16 %v80
  %v1903 = vunpack.c.h.b16 %v80
  %v1904 = vunpack.c.l.b16 %v81
  %v1905 = vunpack.c.h.b16 %v81
  %v1906 = vunpack.c.l.b16 %v82
  %v1907 = vunpack.c.h.b16 %v82
  %v1908 = vunpack.c.l.b16 %v83
  %v1909 = vunpack.c.h.b16 %v83
  %v1910 = vunpack.c.l.b16 %v84
  %v1911 = vunpack.c.h.b16 %v84
  %v1912 = vunpack.c.l.b16 %v85
  %v1913 = vunpack.c.h.b16 %v85
  %v1914 = vunpack.c.l.b16 %v86
  %v1915 = vunpack.c.h.b16 %v86
  %v1916 = vunpack.c.l.b16 %v87
  %v1917 = vunpack.c.h.b16 %v87
  %v1918 = vunpack.c.l.b16 %v88
  %v1919 = vunpack.c.h.b16 %v88
  %v1920 = vunpack.c.l.b16 %v89
  %v1921 = vunpack.c.h.b16 %v89
  %v1922 = vunpack.c.l.b16 %v90
  %v1923 = vunpack.c.h.b16 %v90
  %v1924 = vunpack.c.l.b16 %v91
  %v1925 = vunpack.c.h.b16 %v91
  %v1926 = vunpack.c.l.b16 %v92
  %v1927 = vunpack.c.h.b16 %v92
  %v1928 = vunpack.c.l.b16 %v93
  %v1929 = vunpack.c.h.b16 %v93
  %v1930 = vunpack.c.l.b16 %v94
  %v1931 = vunpack.c.h.b16 %v94
  %v1932 = vunpack.c.l.b16 %v95
  %v1933 = vunpack.c.h.b16 %v95
  %v1934 = vunpack.c.l.b16 %v96
  %v1935 = vunpack.c.h.b16 %v96
  %v1936 = vunpack.c.l.b16 %v97
  %v1937 = vunpack.c.h.b16 %v97
  %v1938 = vunpack.c.l.b16 %v98
  %v1939 = vunpack.c.h.b16 %v98
  %v1940 = vunpack.c.l.b16 %v99
  %v1941 = vunpack.c.h.b16 %v99
  %v1942 = vunpack.c.l.b16 %v100
  %v1943 = vunpack.c.h.b16 %v100
  %v1944 = vunpack.c.l.b16 %v101
  %v1945 = vunpack.c.h.b16 %v101
  %v1946 = vunpack.c.l.b16 %v102
  %v1947 = vunpack.c.h.b16 %v102
  %v1948 = vunpack.c.l.b16 %v103
  %v1949 = vunpack.c.h.b16 %v103
  %v1950 = vunpack.c.l.b16 %v104
  %v1951 = vunpack.c.h.b16 %v104
  %v1952 = vunpack.c.l.b16 %v105
  %v1953 = vunpack.c.h.b16 %v105
  %v1954 = vunpack.c.l.b16 %v106
  %v1955 = vunpack.c.h.b16 %v106
  %v1956 = vunpack.c.l.b16 %v107
  %v1957 = vunpack.c.h.b16 %v107
  %v1958 = vunpack.c.l.b16 %v108
  %v1959 = vunpack.c.h.b16 %v108
  %v1960 = vunpack.c.l.b16 %v109
  %v1961 = vunpack.c.h.b16 %v109
  %v1962 = vunpack.c.l.b16 %v110
  %v1963 = vunpack.c.h.b16 %v110
  %v1964 = vunpack.c.l.b16 %v111
  %v1965 = vunpack.c.h.b16 %v111
  %v1966 = vunpack.c.l.b16 %v112
  %v1967 = vunpack.c.h.b16 %v112
  %v1968 = vunpack.c.l.b16 %v113
  %v1969 = vunpack.c.h.b16 %v113
  %v1970 = vunpack.c.l.b16 %v114
  %v1971 = vunpack.c.h.b16 %v114
  %v1972 = vunpack.c.l.b16 %v115
  %v1973 = vunpack.c.h.b16 %v115
  %v1974 = vunpack.c.l.b16 %v116
  %v1975 = vunpack.c.h.b16 %v116
  %v1976 = vunpack.c.l.b16 %v117
  %v1977 = vunpack.c.h.b16 %v117
  %v1978 = vunpack.c.l.b16 %v118
  %v1979 = vunpack.c.h.b16 %v118
  %v1980 = vunpack.c.l.b16 %v119
  %v1981 = vunpack.c.h.b16 %v119
  %v1982 = vunpack.c.l.b16 %v120
  %v1983 = vunpack.c.h.b16 %v120
  %v1984 = vunpack.c.l.b16 %v121
  %v1985 = vunpack.c.h.b16 %v121
  %v1986 = vunpack.c.l.b16 %v122
  %v1987 = vunpack.c.h.b16 %v122
  %v1988 = vunpack.c.l.b16 %v123
  %v1989 = vunpack.c.h.b16 %v123
  %v1990 = vunpack.c.l.b16 %v124
  %v1991 = vunpack.c.h.b16 %v124
  %v1992 = vunpack.c.l.b16 %v125
  %v1993 = vunpack.c.h.b16 %v125
  %v1994 = vunpack.c.l.b16 %v126
  %v1995 = vunpack.c.h.b16 %v126
  %v1996 = vunpack.c.l.b16 %v127
  %v1997 = vunpack.c.h.b16 %v127
  %v1998 = vunpack.c.l.b16 %v128
  %v1999 = vunpack.c.h.b16 %v128
  %v2000 = vunpack.c.l.b16 %v129
  %v2001 = vunpack.c.h.b16 %v129
  %v2002 = vunpack.c.l.b16 %v130
  %v2003 = vunpack.c.h.b16 %v130
  %v2004 = vunpack.c.l.b16 %v131
  %v2005 = vunpack.c.h.b16 %v131
  %v2006 = vunpack.c.l.b16 %v132
  %v2007 = vunpack.c.h.b16 %v132
  %v2008 = vunpack.c.l.b16 %v133
  %v2009 = vunpack.c.h.b16 %v133
  %v2010 = vunpack.c.l.b16 %v134
  %v2011 = vunpack.c.h.b16 %v134
  %v2012 = vunpack.c.l.b16 %v135
  %v2013 = vunpack.c.h.b16 %v135
  %v2014 = vunpack.c.l.b16 %v136
  %v2015 = vunpack.c.h.b16 %v136
  %v2016 = vunpack.c.l.b16 %v137
  %v2017 = vunpack.c.h.b16 %v137
  %v2018 = vunpack.c.l.b16 %v138
  %v2019 = vunpack.c.h.b16 %v138
  %v2020 = vunpack.c.l.b16 %v139
  %v2021 = vunpack.c.h.b16 %v139
  %v2022 = vunpack.c.l.b16 %v140
  %v2023 = vunpack.c.h.b16 %v140
  %v2024 = vunpack.c.l.b16 %v141
  %v2025 = vunpack.c.h.b16 %v141
  %v2026 = vunpack.c.l.b16 %v142
  %v2027 = vunpack.c.h.b16 %v142
  %v2028 = vunpack.c.l.b16 %v143
  %v2029 = vunpack.c.h.b16 %v143
  %v2030 = vunpack.c.l.b16 %v144
  %v2031 = vunpack.c.h.b16 %v144
  %v2032 = vunpack.c.l.b16 %v145
  %v2033 = vunpack.c.h.b16 %v145
  %v2034 = vunpack.c.l.b16 %v146
  %v2035 = vunpack.c.h.b16 %v146
  %v2036 = vunpack.c.l.b16 %v147
  %v2037 = vunpack.c.h.b16 %v147
  %v2038 = vunpack.c.l.b16 %v148
  %v2039 = vunpack.c.h.b16 %v148
  %v2040 = vunpack.c.l.b16 %v149
  %v2041 = vunpack.c.h.b16 %v149
  %v2042 = vunpack.c.l.b16 %v150
  %v2043 = vunpack.c.h.b16 %v150
  %v2044 = vunpack.c.l.b16 %v151
  %v2045 = vunpack.c.h.b16 %v151
  %v2046 = vunpack.c.l.b16 %v152
  %v2047 = vunpack.c.h.b16 %v152
  %v2048 = vunpack.c.l.b16 %v153
  %v2049 = vunpack.c.h.b16 %v153
  %v2050 = vunpack.c.l.b16 %v154
  %v2051 = vunpack.c.h.b16 %v154
  %v2052 = vunpack.c.l.b16 %v155
  %v2053 = vunpack.c.h.b16 %v155
  %v2054 = vunpack.c.l.b16 %v156
  %v2055 = vunpack.c.h.b16 %v156
  %v2056 = vunpack.c.l.b16 %v157
  %v2057 = vunpack.c.h.b16 %v157
  %v2058 = vunpack.c.l.b16 %v158
  %v2059 = vunpack.c.h.b16 %v158
  %v2060 = vunpack.c.l.b16 %v159
  %v2061 = vunpack.c.h.b16 %v159
  %v2062 = vunpack.c.l.b16 %v160
  %v2063 = vunpack.c.h.b16 %v160
  %v2064 = vunpack.c.l.b16 %v161
  %v2065 = vunpack.c.h.b16 %v161
  %v2066 = vunpack.c.l.b16 %v162
  %v2067 = vunpack.c.h.b16 %v162
  %v2068 = vunpack.c.l.b16 %v163
  %v2069 = vunpack.c.h.b16 %v163
  %v2070 = vunpack.c.l.b16 %v164
  %v2071 = vunpack.c.h.b16 %v164
  %v2072 = vunpack.c.l.b16 %v165
  %v2073 = vunpack.c.h.b16 %v165
  %v2074 = vunpack.c.l.b16 %v166
  %v2075 = vunpack.c.h.b16 %v166
  %v2076 = vunpack.c.l.b16 %v167
  %v2077 = vunpack.c.h.b16 %v167
  %v2078 = vunpack.c.l.b16 %v168
  %v2079 = vunpack.c.h.b16 %v168
  %v2080 = vunpack.c.l.b16 %v169
  %v2081 = vunpack.c.h.b16 %v169
  %v2082 = vunpack.c.l.b16 %v170
  %v2083 = vunpack.c.h.b16 %v170
  %v2084 = vunpack.c.l.b16 %v171
  %v2085 = vunpack.c.h.b16 %v171
  %v2086 = vunpack.c.l.b16 %v172
  %v2087 = vunpack.c.h.b16 %v172
  %v2088 = vunpack.c.l.b16 %v173
  %v2089 = vunpack.c.h.b16 %v173
  %v2090 = vunpack.c.l.b16 %v174
  %v2091 = vunpack.c.h.b16 %v174
  %v2092 = vunpack.c.l.b16 %v175
  %v2093 = vunpack.c.h.b16 %v175
  %v2094 = vunpack.c.l.b16 %v176
  %v2095 = vunpack.c.h.b16 %v176
  %v2096 = vunpack.c.l.b16 %v177
  %v2097 = vunpack.c.h.b16 %v177
  %v2098 = vunpack.c.l.b16 %v178
  %v2099 = vunpack.c.h.b16 %v178
  %v2100 = vunpack.c.l.b16 %v179
  %v2101 = vunpack.c.h.b16 %v179
  %v2102 = vunpack.c.l.b16 %v180
  %v2103 = vunpack.c.h.b16 %v180
  %v2104 = vunpack.c.l.b16 %v181
  %v2105 = vunpack.c.h.b16 %v181
  %v2106 = vunpack.c.l.b16 %v182
  %v2107 = vunpack.c.h.b16 %v182
  %v2108 = vunpack.c.l.b16 %v183
  %v2109 = vunpack.c.h.b16 %v183
  %v2110 = vunpack.c.l.b16 %v184
  %v2111 = vunpack.c.h.b16 %v184
  %v2112 = vunpack.c.l.b16 %v185
  %v2113 = vunpack.c.h.b16 %v185
  %v2114 = vunpack.c.l.b16 %v186
  %v2115 = vunpack.c.h.b16 %v186
  %v2116 = vunpack.c.l.b16 %v187
  %v2117 = vunpack.c.h.b16 %v187
  %v2118 = vunpack.c.l.b16 %v188
  %v2119 = vunpack.c.h.b16 %v188
  %v2120 = vunpack.c.l.b16 %v189
  %v2121 = vunpack.c.h.b16 %v189
  %v2122 = vunpack.c.l.b16 %v190
  %v2123 = vunpack.c.h.b16 %v190
  %v2124 = vunpack.c.l.b16 %v191
  %v2125 = vunpack.c.h.b16 %v191
  %v2126 = vunpack.c.l.b16 %v192
  %v2127 = vunpack.c.h.b16 %v192
  %v2128 = vunpack.c.l.b16 %v193
  %v2129 = vunpack.c.h.b16 %v193
  %v2130 = vpack.c.b16 %v1866, %v1778
  %v2131 = vpack.c.b16 %v1867, %v1779
  %v2132 = vpack.c.b16 %v1868, %v1780
  %v2133 = vpack.c.b16 %v1869, %v1781
  %v2134 = vpack.c.b16 %v1870, %v1782
  %v2135 = vpack.c.b16 %v1871, %v1783
  %v2136 = vpack.c.b16 %v1872, %v1784
  %v2137 = vpack.c.b16 %v1873, %v1785
  %v2138 = vpack.c.b16 %v1874, %v1786
  %v2139 = vpack.c.b16 %v1875, %v1787
  %v2140 = vpack.c.b16 %v1876, %v1788
  %v2141 = vpack.c.b16 %v1877, %v1789
  %v2142 = vpack.c.b16 %v1878, %v1790
  %v2143 = vpack.c.b16 %v1879, %v1791
  %v2144 = vpack.c.b16 %v1880, %v1792
  %v2145 = vpack.c.b16 %v1881, %v1793
  %v2146 = vpack.c.b16 %v1882, %v1794
  %v2147 = vpack.c.b16 %v1883, %v1795
  %v2148 = vpack.c.b16 %v1884, %v1796
  %v2149 = vpack.c.b16 %v1885, %v1797
  %v2150 = vpack.c.b16 %v1886, %v1798
  %v2151 = vpack.c.b16 %v1887, %v1799
  %v2152 = vpack.c.b16 %v1888, %v1800
  %v2153 = vpack.c.b16 %v1889, %v1801
  %v2154 = vpack.c.b16 %v1890, %v1802
  %v2155 = vpack.c.b16 %v1891, %v1803
  %v2156 = vpack.c.b16 %v1892, %v1804
  %v2157 = vpack.c.b16 %v1893, %v1805
  %v2158 = vpack.c.b16 %v1894, %v1806
  %v2159 = vpack.c.b16 %v1895, %v1807
  %v2160 = vpack.c.b16 %v1896, %v1808
  %v2161 = vpack.c.b16 %v1897, %v1809
  %v2162 = vpack.c.b16 %v1898, %v1810
  %v2163 = vpack.c.b16 %v1899, %v1811
  %v2164 = vpack.c.b16 %v1900, %v1812
  %v2165 = vpack.c.b16 %v1901, %v1813
  %v2166 = vpack.c.b16 %v1902, %v1814
  %v2167 = vpack.c.b16 %v1903, %v1815
  %v2168 = vpack.c.b16 %v1904, %v1816
  %v2169 = vpack.c.b16 %v1905, %v1817
  %v2170 = vpack.c.b16 %v1906, %v1818
  %v2171 = vpack.c.b16 %v1907, %v1819
  %v2172 = vpack.c.b16 %v1908, %v1820
  %v2173 = vpack.c.b16 %v1909, %v1821
  %v2174 = vpack.c.b16 %v1910, %v1822
  %v2175 = vpack.c.b16 %v1911, %v1823
  %v2176 = vpack.c.b16 %v1912, %v1824
  %v2177 = vpack.c.b16 %v1913, %v1825
  %v2178 = vpack.c.b16 %v1914, %v1826
  %v2179 = vpack.c.b16 %v1915, %v1827
  %v2180 = vpack.c.b16 %v1916, %v1828
  %v2181 = vpack.c.b16 %v1917, %v1829
  %v2182 = vpack.c.b16 %v1918, %v1830
  %v2183 = vpack.c.b16 %v1919, %v1831
  %v2184 = vpack.c.b16 %v1920, %v1832
  %v2185 = vpack.c.b16 %v1921, %v1833
  %v2186 = vpack.c.b16 %v1922, %v1834
  %v2187 = vpack.c.b16 %v1923, %v1835
  %v2188 = vpack.c.b16 %v1924, %v1836
  %v2189 = vpack.c.b16 %v1925, %v1837
  %v2190 = vpack.c.b16 %v1926, %v1838
  %v2191 = vpack.c.b16 %v1927, %v1839
  %v2192 = vpack.c.b16 %v1928, %v1840
  %v2193 = vpack.c.b16 %v1929, %v1841
  %v2194 = vpack.c.b16 %v1930, %v1842
  %v2195 = vpack.c.b16 %v1931, %v1843
  %v2196 = vpack.c.b16 %v1932, %v1844
  %v2197 = vpack.c.b16 %v1933, %v1845
  %v2198 = vpack.c.b16 %v1934, %v1846
  %v2199 = vpack.c.b16 %v1935, %v1847
  %v2200 = vpack.c.b16 %v1936, %v1848
  %v2201 = vpack.c.b16 %v1937, %v1849
  %v2202 = vpack.c.b16 %v1938, %v1850
  %v2203 = vpack.c.b16 %v1939, %v1851
  %v2204 = vpack.c.b16 %v1940, %v1852
  %v2205 = vpack.c.b16 %v1941, %v1853
  %v2206 = vpack.c.b16 %v1942, %v1854
  %v2207 = vpack.c.b16 %v1943, %v1855
  %v2208 = vpack.c.b16 %v1944, %v1856
  %v2209 = vpack.c.b16 %v1945, %v1857
  %v2210 = vpack.c.b16 %v1946, %v1858
  %v2211 = vpack.c.b16 %v1947, %v1859
  %v2212 = vpack.c.b16 %v1948, %v1860
  %v2213 = vpack.c.b16 %v1949, %v1861
  %v2214 = vpack.c.b16 %v1950, %v1862
  %v2215 = vpack.c.b16 %v1951, %v1863
  %v2216 = vpack.c.b16 %v1952, %v1864
  %v2217 = vpack.c.b16 %v1953, %v1865
  %v2218 = vpack.c.b16 %v2042, %v1954
  %v2219 = vpack.c.b16 %v2043, %v1955
  %v2220 = vpack.c.b16 %v2044, %v1956
  %v2221 = vpack.c.b16 %v2045, %v1957
  %v2222 = vpack.c.b16 %v2046, %v1958
  %v2223 = vpack.c.b16 %v2047, %v1959
  %v2224 = vpack.c.b16 %v2048, %v1960
  %v2225 = vpack.c.b16 %v2049, %v1961
  %v2226 = vpack.c.b16 %v2050, %v1962
  %v2227 = vpack.c.b16 %v2051, %v1963
  %v2228 = vpack.c.b16 %v2052, %v1964
  %v2229 = vpack.c.b16 %v2053, %v1965
  %v2230 = vpack.c.b16 %v2054, %v1966
  %v2231 = vpack.c.b16 %v2055, %v1967
  %v2232 = vpack.c.b16 %v2056, %v1968
  %v2233 = vpack.c.b16 %v2057, %v1969
  %v2234 = vpack.c.b16 %v2058, %v1970
  %v2235 = vpack.c.b16 %v2059, %v1971
  %v2236 = vpack.c.b16 %v2060, %v1972
  %v2237 = vpack.c.b16 %v2061, %v1973
  %v2238 = vpack.c.b16 %v2062, %v1974
  %v2239 = vpack.c.b16 %v2063, %v1975
  %v2240 = vpack.c.b16 %v2064, %v1976
  %v2241 = vpack.c.b16 %v2065, %v1977
  %v2242 = vpack.c.b16 %v2066, %v1978
  %v2243 = vpack.c.b16 %v2067, %v1979
  %v2244 = vpack.c.b16 %v2068, %v1980
  %v2245 = vpack.c.b16 %v2069, %v1981
  %v2246 = vpack.c.b16 %v2070, %v1982
  %v2247 = vpack.c.b16 %v2071, %v1983
  %v2248 = vpack.c.b16 %v2072, %v1984
  %v2249 = vpack.c.b16 %v2073, %v1985
  %v2250 = vpack.c.b16 %v2074, %v1986
  %v2251 = vpack.c.b16 %v2075, %v1987
  %v2252 = vpack.c.b16 %v2076, %v1988
  %v2253 = vpack.c.b16 %v2077, %v1989
  %v2254 = vpack.c.b16 %v2078, %v1990
  %v2255 = vpack.c.b16 %v2079, %v1991
  %v2256 = vpack.c.b16 %v2080, %v1992
  %v2257 = vpack.c.b16 %v2081, %v1993
  %v2258 = vpack.c.b16 %v2082, %v1994
  %v2259 = vpack.c.b16 %v2083, %v1995
  %v2260 = vpack.c.b16 %v2084, %v1996
  %v2261 = vpack.c.b16 %v2085, %v1997
  %v2262 = vpack.c.b16 %v2086, %v1998
  %v2263 = vpack.c.b16 %v2087, %v1999
  %v2264 = vpack.c.b16 %v2088, %v2000
  %v2265 = vpack.c.b16 %v2089, %v2001
  %v2266 = vpack.c.b16 %v2090, %v2002
  %v2267 = vpack.c.b16 %v2091, %v2003
  %v2268 = vpack.c.b16 %v2092, %v2004
  %v2269 = vpack.c.b16 %v2093, %v2005
  %v2270 = vpack.c.b16 %v2094, %v2006
  %v2271 = vpack.c.b16 %v2095, %v2007
  %v2272 = vpack.c.b16 %v2096, %v2008
  %v2273 = vpack.c.b16 %v2097, %v2009
  %v2274 = vpack.c.b16 %v2098, %v2010
  %v2275 = vpack.c.b16 %v2099, %v2011
  %v2276 = vpack.c.b16 %v2100, %v2012
  %v2277 = vpack.c.b16 %v2101, %v2013
  %v2278 = vpack.c.b16 %v2102, %v2014
  %v2279 = vpack.c.b16 %v2103, %v2015
  %v2280 = vpack.c.b16 %v2104, %v2016
  %v2281 = vpack.c.b16 %v2105, %v2017
  %v2282 = vpack.c.b16 %v2106, %v2018
  %v2283 = vpack.c.b16 %v2107, %v2019
  %v2284 = vpack.c.b16 %v2108, %v2020
  %v2285 = vpack.c.b16 %v2109, %v2021
  %v2286 = vpack.c.b16 %v2110, %v2022
  %v2287 = vpack.c.b16 %v2111, %v2023
  %v2288 = vpack.c.b16 %v2112, %v2024
  %v2289 = vpack.c.b16 %v2113, %v2025
  %v2290 = vpack.c.b16 %v2114, %v2026
  %v2291 = vpack.c.b16 %v2115, %v2027
  %v2292 = vpack.c.b16 %v2116, %v2028
  %v2293 = vpack.c.b16 %v2117, %v2029
  %v2294 = vpack.c.b16 %v2118, %v2030
  %v2295 = vpack.c.b16 %v2119, %v2031
  %v2296 = vpack.c.b16 %v2120, %v2032
  %v2297 = vpack.c.b16 %v2121, %v2033
  %v2298 = vpack.c.b16 %v2122, %v2034
  %v2299 = vpack.c.b16 %v2123, %v2035
  %v2300 = vpack.c.b16 %v2124, %v2036
  %v2301 = vpack.c.b16 %v2125, %v2037
  %v2302 = vpack.c.b16 %v2126, %v2038
  %v2303 = vpack.c.b16 %v2127, %v2039
  %v2304 = vpack.c.b16 %v2128, %v2040
  %v2305 = vpack.c.b16 %v2129, %v2041
  %v3890 = vunpack.c.l.b16 %v194
  %v3891 = vunpack.c.l.b16 %v195
  %v3892 = vunpack.c.l.b16 %v196
  %v3893 = vunpack.c.l.b16 %v197
  %v3894 = vunpack.c.l.b16 %v198
  %v3895 = vunpack.c.l.b16 %v199
  %v3896 = vunpack.c.l.b16 %v200
  %v3897 = vunpack.c.l.b16 %v201
  %v3898 = vunpack.c.l.b16 %v202
  %v3899 = vunpack.c.l.b16 %v203
  %v3900 = vunpack.c.l.b16 %v204
  %v3901 = vunpack.c.l.b16 %v205
  %v3902 = vunpack.c.l.b16 %v206
  %v3903 = vunpack.c.l.b16 %v207
  %v3904 = vunpack.c.l.b16 %v208
  %v3905 = vunpack.c.l.b16 %v209
  %v3906 = vunpack.c.l.b16 %v210
  %v3907 = vunpack.c.l.b16 %v211
  %v3908 = vunpack.c.l.b16 %v212
  %v3909 = vunpack.c.l.b16 %v213
  %v3910 = vunpack.c.l.b16 %v214
  %v3911 = vunpack.c.l.b16 %v215
  %v3912 = vunpack.c.l.b16 %v216
  %v3913 = vunpack.c.l.b16 %v217
  %v3914 = vunpack.c.l.b16 %v218
  %v3915 = vunpack.c.l.b16 %v219
  %v3916 = vunpack.c.l.b16 %v220
  %v3917 = vunpack.c.l.b16 %v221
  %v3918 = vunpack.c.l.b16 %v222
  %v3919 = vunpack.c.l.b16 %v223
  %v3920 = vunpack.c.l.b16 %v224
  %v3921 = vunpack.c.l.b16 %v225
  %v3922 = vunpack.c.l.b16 %v226
  %v3923 = vunpack.c.l.b16 %v227
  %v3924 = vunpack.c.l.b16 %v228
  %v3925 = vunpack.c.l.b16 %v229
  %v3926 = vunpack.c.l.b16 %v230
  %v3927 = vunpack.c.l.b16 %v231
  %v3928 = vunpack.c.l.b16 %v232
  %v3929 = vunpack.c.l.b16 %v233
  %v3930 = vunpack.c.l.b16 %v234
  %v3931 = vunpack.c.l.b16 %v235
  %v3932 = vunpack.c.l.b16 %v236
  %v3933 = vunpack.c.l.b16 %v237
  %v3934 = vunpack.c.l.b16 %v238
  %v3935 = vunpack.c.l.b16 %v239
  %v3936 = vunpack.c.l.b16 %v240
  %v3937 = vunpack.c.l.b16 %v241
  %v3938 = vunpack.c.l.b16 %v242
  %v3939 = vunpack.c.l.b16 %v243
  %v3940 = vunpack.c.l.b16 %v244
  %v3941 = vunpack.c.l.b16 %v245
  %v3942 = vunpack.c.l.b16 %v246
  %v3943 = vunpack.c.l.b16 %v247
  %v3944 = vunpack.c.l.b16 %v248
  %v3945 = vunpack.c.l.b16 %v249
  %v3946 = vunpack.c.l.b16 %v250
  %v3947 = vunpack.c.l.b16 %v251
  %v3948 = vunpack.c.l.b16 %v252
  %v3949 = vunpack.c.l.b16 %v253
  %v3950 = vunpack.c.l.b16 %v254
  %v3951 = vunpack.c.l.b16 %v255
  %v3952 = vunpack.c.l.b16 %v256
  %v3953 = vunpack.c.l.b16 %v257
  %v3954 = vunpack.c.l.b16 %v258
  %v3955 = vunpack.c.l.b16 %v259
  %v3956 = vunpack.c.l.b16 %v260
  %v3957 = vunpack.c.l.b16 %v261
  %v3958 = vunpack.c.l.b16 %v262
  %v3959 = vunpack.c.l.b16 %v263
  %v3960 = vunpack.c.l.b16 %v264
  %v3961 = vunpack.c.l.b16 %v265
  %v3962 = vunpack.c.l.b16 %v266
  %v3963 = vunpack.c.l.b16 %v267
  %v3964 = vunpack.c.l.b16 %v268
  %v3965 = vunpack.c.l.b16 %v269
  %v3966 = vunpack.c.l.b16 %v270
  %v3967 = vunpack.c.l.b16 %v271
  %v3968 = vunpack.c.l.b16 %v272
  %v3969 = vunpack.c.l.b16 %v273
  %v3970 = vunpack.c.l.b16 %v274
  %v3971 = vunpack.c.l.b16 %v275
  %v3972 = vunpack.c.l.b16 %v276
  %v3973 = vunpack.c.l.b16 %v277
  %v3974 = vunpack.c.l.b16 %v278
  %v3975 = vunpack.c.l.b16 %v279
  %v3976 = vunpack.c.l.b16 %v280
  %v3977 = vunpack.c.l.b16 %v281
  %v3978 = vunpack.c.l.b16 %v282
  %v3979 = vunpack.c.l.b16 %v283
  %v3980 = vunpack.c.l.b16 %v284
  %v3981 = vunpack.c.l.b16 %v285
  %v3982 = vunpack.c.l.b16 %v286
  %v3983 = vunpack.c.l.b16 %v287
  %v3984 = vunpack.c.l.b16 %v288
  %v3985 = vunpack.c.l.b16 %v289
  %v3986 = vunpack.c.l.b16 %v290
  %v3987 = vunpack.c.l.b16 %v291
  %v3988 = vunpack.c.l.b16 %v292
  %v3989 = vunpack.c.l.b16 %v293
  %v3990 = vunpack.c.l.b16 %v294
  %v3991 = vunpack.c.l.b16 %v295
  %v3992 = vunpack.c.l.b16 %v296
  %v3993 = vunpack.c.l.b16 %v297
  %v3994 = vunpack.c.l.b16 %v298
  %v3995 = vunpack.c.l.b16 %v299
  %v3996 = vunpack.c.l.b16 %v300
  %v3997 = vunpack.c.l.b16 %v301
  %v3998 = vunpack.c.l.b16 %v302
  %v3999 = vunpack.c.l.b16 %v303
  %v4000 = vunpack.c.l.b16 %v304
  %v4001 = vunpack.c.l.b16 %v305
  %v4002 = vunpack.c.l.b16 %v306
  %v4003 = vunpack.c.l.b16 %v307
  %v4004 = vunpack.c.l.b16 %v308
  %v4005 = vunpack.c.l.b16 %v309
  %v4006 = vunpack.c.l.b16 %v310
  %v4007 = vunpack.c.l.b16 %v311
  %v4008 = vunpack.c.l.b16 %v312
  %v4009 = vunpack.c.l.b16 %v313
  %v4010 = vunpack.c.l.b16 %v314
  %v4011 = vunpack.c.l.b16 %v315
  %v4012 = vunpack.c.l.b16 %v316
  %v4013 = vunpack.c.l.b16 %v317
  %v4014 = vunpack.c.l.b16 %v318
  %v4015 = vunpack.c.l.b16 %v319
  %v4016 = vunpack.c.l.b16 %v320
  %v4017 = vunpack.c.l.b16 %v321
  %v4018 = vunpack.c.l.b16 %v322
  %v4019 = vunpack.c.l.b16 %v323
  %v4020 = vunpack.c.l.b16 %v324
  %v4021 = vunpack.c.l.b16 %v325
  %v4022 = vunpack.c.l.b16 %v326
  %v4023 = vunpack.c.l.b16 %v327
  %v4024 = vunpack.c.l.b16 %v328
  %v4025 = vunpack.c.l.b16 %v329
  %v4026 = vunpack.c.l.b16 %v330
  %v4027 = vunpack.c.l.b16 %v331
  %v4028 = vunpack.c.l.b16 %v332
  %v4029 = vunpack.c.l.b16 %v333
  %v4030 = vunpack.c.l.b16 %v334
  %v4031 = vunpack.c.l.b16 %v335
  %v4032 = vunpack.c.l.b16 %v336
  %v4033 = vunpack.c.l.b16 %v337
  %v4034 = vunpack.c.l.b16 %v338
  %v4035 = vunpack.c.l.b16 %v339
  %v4036 = vunpack.c.l.b16 %v340
  %v4037 = vunpack.c.l.b16 %v341
  %v4038 = vunpack.c.l.b16 %v342
  %v4039 = vunpack.c.l.b16 %v343
  %v4040 = vunpack.c.l.b16 %v344
  %v4041 = vunpack.c.l.b16 %v345
  %v4042 = vunpack.c.l.b16 %v346
  %v4043 = vunpack.c.l.b16 %v347
  %v4044 = vunpack.c.l.b16 %v348
  %v4045 = vunpack.c.l.b16 %v349
  %v4046 = vunpack.c.l.b16 %v350
  %v4047 = vunpack.c.l.b16 %v351
  %v4048 = vunpack.c.l.b16 %v352
  %v4049 = vunpack.c.l.b16 %v353
  %v4050 = vunpack.c.l.b16 %v354
  %v4051 = vunpack.c.l.b16 %v355
  %v4052 = vunpack.c.l.b16 %v356
  %v4053 = vunpack.c.l.b16 %v357
  %v4054 = vunpack.c.l.b16 %v358
  %v4055 = vunpack.c.l.b16 %v359
  %v4056 = vunpack.c.l.b16 %v360
  %v4057 = vunpack.c.l.b16 %v361
  %v4058 = vunpack.c.l.b16 %v362
  %v4059 = vunpack.c.l.b16 %v363
  %v4060 = vunpack.c.l.b16 %v364
  %v4061 = vunpack.c.l.b16 %v365
  %v4062 = vunpack.c.l.b16 %v366
  %v4063 = vunpack.c.l.b16 %v367
  %v4064 = vunpack.c.l.b16 %v368
  %v4065 = vunpack.c.l.b16 %v369
  %v4066 = vunpack.c.l.b16 %v370
  %v4067 = vunpack.c.l.b16 %v371
  %v4068 = vunpack.c.l.b16 %v372
  %v4069 = vunpack.c.l.b16 %v373
  %v4070 = vunpack.c.l.b16 %v374
  %v4071 = vunpack.c.l.b16 %v375
  %v4072 = vunpack.c.l.b16 %v376
  %v4073 = vunpack.c.l.b16 %v377
  %v4074 = vunpack.c.l.b16 %v378
  %v4075 = vunpack.c.l.b16 %v379
  %v4076 = vunpack.c.l.b16 %v380
  %v4077 = vunpack.c.l.b16 %v381
  %v4078 = vunpack.c.l.b16 %v382
  %v4079 = vunpack.c.l.b16 %v383
  %v4080 = vunpack.c.l.b16 %v384
  %v4081 = vunpack.c.l.b16 %v385
  %v4082 = vunpack.c.l.b16 %v386
  %v4083 = vunpack.c.l.b16 %v387
  %v4084 = vunpack.c.l.b16 %v388
  %v4085 = vunpack.c.l.b16 %v389
  %v4086 = vunpack.c.l.b16 %v390
  %v4087 = vunpack.c.l.b16 %v391
  %v4088 = vunpack.c.l.b16 %v392
  %v4089 = vunpack.c.l.b16 %v393
  %v4090 = vunpack.c.l.b16 %v394
  %v4091 = vunpack.c.l.b16 %v395
  %v4092 = vunpack.c.l.b16 %v396
  %v4093 = vunpack.c.l.b16 %v397
  %v4094 = vunpack.c.l.b16 %v398
  %v4095 = vunpack.c.l.b16 %v399
  %v4096 = vunpack.c.l.b16 %v400
  %v4097 = vunpack.c.l.b16 %v401
  %v4098 = vunpack.c.l.b16 %v402
  %v4099 = vunpack.c.l.b16 %v403
  %v4100 = vunpack.c.l.b16 %v404
  %v4101 = vunpack.c.l.b16 %v405
  %v4102 = vunpack.c.l.b16 %v406
  %v4103 = vunpack.c.l.b16 %v407
  %v4104 = vunpack.c.l.b16 %v408
  %v4105 = vunpack.c.l.b16 %v409
  %v4106 = vunpack.c.l.b16 %v410
  %v4107 = vunpack.c.l.b16 %v411
  %v4108 = vunpack.c.l.b16 %v412
  %v4109 = vunpack.c.l.b16 %v413
  %v4110 = vunpack.c.l.b16 %v414
  %v4111 = vunpack.c.l.b16 %v415
  %v4112 = vunpack.c.l.b16 %v416
  %v4113 = vunpack.c.l.b16 %v417
  %v4114 = vunpack.c.l.b16 %v418
  %v4115 = vunpack.c.l.b16 %v419
  %v4116 = vunpack.c.l.b16 %v420
  %v4117 = vunpack.c.l.b16 %v421
  %v4118 = vunpack.c.l.b16 %v422
  %v4119 = vunpack.c.l.b16 %v423
  %v4120 = vunpack.c.l.b16 %v424
  %v4121 = vunpack.c.l.b16 %v425
  %v4122 = vunpack.c.l.b16 %v426
  %v4123 = vunpack.c.l.b16 %v427
  %v4124 = vunpack.c.l.b16 %v428
  %v4125 = vunpack.c.l.b16 %v429
  %v4126 = vunpack.c.l.b16 %v430
  %v4127 = vunpack.c.l.b16 %v431
  %v4128 = vunpack.c.l.b16 %v432
  %v4129 = vunpack.c.l.b16 %v433
  %v4130 = vunpack.c.l.b16 %v434
  %v4131 = vunpack.c.l.b16 %v435
  %v4132 = vunpack.c.l.b16 %v436
  %v4133 = vunpack.c.l.b16 %v437
  %v4134 = vunpack.c.l.b16 %v438
  %v4135 = vunpack.c.l.b16 %v439
  %v4136 = vunpack.c.l.b16 %v440
  %v4137 = vunpack.c.l.b16 %v441
  %v4138 = vunpack.c.l.b16 %v442
  %v4139 = vunpack.c.l.b16 %v443
  %v4140 = vunpack.c.l.b16 %v444
  %v4141 = vunpack.c.l.b16 %v445
  %v4142 = vunpack.c.l.b16 %v446
  %v4143 = vunpack.c.l.b16 %v447
  %v4144 = vunpack.c.l.b16 %v448
  %v4145 = vunpack.c.l.b16 %v449
  %v4146 = vunpack.c.l.b16 %v450
  %v4147 = vunpack.c.l.b16 %v451
  %v4148 = vunpack.c.l.b16 %v452
  %v4149 = vunpack.c.l.b16 %v453
  %v4150 = vunpack.c.l.b16 %v454
  %v4151 = vunpack.c.l.b16 %v455
  %v4152 = vunpack.c.l.b16 %v456
  %v4153 = vunpack.c.l.b16 %v457
  %v4154 = vunpack.c.l.b16 %v458
  %v4155 = vunpack.c.l.b16 %v459
  %v4156 = vunpack.c.l.b16 %v460
  %v4157 = vunpack.c.l.b16 %v461
  %v4158 = vunpack.c.l.b16 %v462
  %v4159 = vunpack.c.l.b16 %v463
  %v4160 = vunpack.c.l.b16 %v464
  %v4161 = vunpack.c.l.b16 %v465
  %v4162 = vunpack.c.l.b16 %v466
  %v4163 = vunpack.c.l.b16 %v467
  %v4164 = vunpack.c.l.b16 %v468
  %v4165 = vunpack.c.l.b16 %v469
  %v4166 = vunpack.c.l.b16 %v470
  %v4167 = vunpack.c.l.b16 %v471
  %v4168 = vunpack.c.l.b16 %v472
  %v4169 = vunpack.c.l.b16 %v473
  %v4170 = vunpack.c.l.b16 %v474
  %v4171 = vunpack.c.l.b16 %v475
  %v4172 = vunpack.c.l.b16 %v476
  %v4173 = vunpack.c.l.b16 %v477
  %v4174 = vunpack.c.l.b16 %v478
  %v4175 = vunpack.c.l.b16 %v479
  %v4176 = vunpack.c.l.b16 %v480
  %v4177 = vunpack.c.l.b16 %v481
  %v4178 = vunpack.c.l.b16 %v482
  %v4179 = vunpack.c.l.b16 %v483
  %v4180 = vunpack.c.l.b16 %v484
  %v4181 = vunpack.c.l.b16 %v485
  %v4182 = vunpack.c.l.b16 %v486
  %v4183 = vunpack.c.l.b16 %v487
  %v4184 = vunpack.c.l.b16 %v488
  %v4185 = vunpack.c.l.b16 %v489
  %v4186 = vunpack.c.l.b16 %v490
  %v4187 = vunpack.c.l.b16 %v491
  %v4188 = vunpack.c.l.b16 %v492
  %v4189 = vunpack.c.l.b16 %v493
  %v4190 = vunpack.c.l.b16 %v494
  %v4191 = vunpack.c.l.b16 %v495
  %v4192 = vunpack.c.l.b16 %v496
  %v4193 = vunpack.c.l.b16 %v497
  %v4194 = vunpack.c.l.b16 %v498
  %v4195 = vunpack.c.l.b16 %v499
  %v4196 = vunpack.c.l.b16 %v500
  %v4197 = vunpack.c.l.b16 %v501
  %v4198 = vunpack.c.l.b16 %v502
  %v4199 = vunpack.c.l.b16 %v503
  %v4200 = vunpack.c.l.b16 %v504
  %v4201 = vunpack.c.l.b16 %v505
  %v4202 = vunpack.c.l.b16 %v506
  %v4203 = vunpack.c.l.b16 %v507
  %v4204 = vunpack.c.l.b16 %v508
  %v4205 = vunpack.c.l.b16 %v509
  %v4206 = vunpack.c.l.b16 %v510
  %v4207 = vunpack.c.l.b16 %v511
  %v4208 = vunpack.c.l.b16 %v512
  %v4209 = vunpack.c.l.b16 %v513
  %v4210 = vunpack.c.l.b16 %v514
  %v4211 = vunpack.c.l.b16 %v515
  %v4212 = vunpack.c.l.b16 %v516
  %v4213 = vunpack.c.l.b16 %v517
  %v4214 = vunpack.c.l.b16 %v518
  %v4215 = vunpack.c.l.b16 %v519
  %v4216 = vunpack.c.l.b16 %v520
  %v4217 = vunpack.c.l.b16 %v521
  %v4218 = vunpack.c.l.b16 %v522
  %v4219 = vunpack.c.l.b16 %v523
  %v4220 = vunpack.c.l.b16 %v524
  %v4221 = vunpack.c.l.b16 %v525
  %v4222 = vunpack.c.l.b16 %v526
  %v4223 = vunpack.c.l.b16 %v527
  %v4224 = vunpack.c.l.b16 %v528
  %v4225 = vunpack.c.l.b16 %v529
  %v4226 = vunpack.c.l.b16 %v530
  %v4227 = vunpack.c.l.b16 %v531
  %v4228 = vunpack.c.l.b16 %v532
  %v4229 = vunpack.c.l.b16 %v533
  %v4230 = vunpack.c.l.b16 %v534
  %v4231 = vunpack.c.l.b16 %v535
  %v4232 = vunpack.c.l.b16 %v536
  %v4233 = vunpack.c.l.b16 %v537
  %v4234 = vunpack.c.l.b16 %v538
  %v4235 = vunpack.c.l.b16 %v539
  %v4236 = vunpack.c.l.b16 %v540
  %v4237 = vunpack.c.l.b16 %v541
  %v4238 = vunpack.c.l.b16 %v542
  %v4239 = vunpack.c.l.b16 %v543
  %v4240 = vunpack.c.l.b16 %v544
  %v4241 = vunpack.c.l.b16 %v545
  %v4242 = vunpack.c.l.b16 %v546
  %v4243 = vunpack.c.l.b16 %v547
  %v4244 = vunpack.c.l.b16 %v548
  %v4245 = vunpack.c.l.b16 %v549
  %v4246 = vunpack.c.l.b16 %v550
  %v4247 = vunpack.c.l.b16 %v551
  %v4248 = vunpack.c.l.b16 %v552
  %v4249 = vunpack.c.l.b16 %v553
  %v4250 = vunpack.c.l.b16 %v554
  %v4251 = vunpack.c.l.b16 %v555
  %v4252 = vunpack.c.l.b16 %v556
  %v4253 = vunpack.c.l.b16 %v557
  %v4254 = vunpack.c.l.b16 %v558
  %v4255 = vunpack.c.l.b16 %v559
  %v4256 = vunpack.c.l.b16 %v560
  %v4257 = vunpack.c.l.b16 %v561
  %v4258 = vunpack.c.l.b16 %v562
  %v4259 = vunpack.c.l.b16 %v563
  %v4260 = vunpack.c.l.b16 %v564
  %v4261 = vunpack.c.l.b16 %v565
  %v4262 = vunpack.c.l.b16 %v566
  %v4263 = vunpack.c.l.b16 %v567
  %v4264 = vunpack.c.l.b16 %v568
  %v4265 = vunpack.c.l.b16 %v569
  %v4266 = vunpack.c.l.b16 %v570
  %v4267 = vunpack.c.l.b16 %v571
  %v4268 = vunpack.c.l.b16 %v572
  %v4269 = vunpack.c.l.b16 %v573
  %v4270 = vunpack.c.l.b16 %v574
  %v4271 = vunpack.c.l.b16 %v575
  %v4272 = vunpack.c.l.b16 %v576
  %v4273 = vunpack.c.l.b16 %v577
  %v4274 = vunpack.c.l.b16 %v578
  %v4275 = vunpack.c.l.b16 %v579
  %v4276 = vunpack.c.l.b16 %v580
  %v4277 = vunpack.c.l.b16 %v581
  %v4278 = vunpack.c.l.b16 %v582
  %v4279 = vunpack.c.l.b16 %v583
  %v4280 = vunpack.c.l.b16 %v584
  %v4281 = vunpack.c.l.b16 %v585
  %v4282 = vunpack.c.l.b16 %v586
  %v4283 = vunpack.c.l.b16 %v587
  %v4284 = vunpack.c.l.b16 %v588
  %v4285 = vunpack.c.l.b16 %v589
  %v4286 = vunpack.c.l.b16 %v590
  %v4287 = vunpack.c.l.b16 %v591
  %v4288 = vunpack.c.l.b16 %v592
  %v4289 = vunpack.c.l.b16 %v593
  %v4290 = vunpack.c.l.b16 %v594
  %v4291 = vunpack.c.l.b16 %v595
  %v4292 = vunpack.c.l.b16 %v596
  %v4293 = vunpack.c.l.b16 %v597
  %v4294 = vunpack.c.l.b16 %v598
  %v4295 = vunpack.c.l.b16 %v599
  %v4296 = vunpack.c.l.b16 %v600
  %v4297 = vunpack.c.l.b16 %v601
  %v4298 = vunpack.c.l.b16 %v602
  %v4299 = vunpack.c.l.b16 %v603
  %v4300 = vunpack.c.l.b16 %v604
  %v4301 = vunpack.c.l.b16 %v605
  %v4302 = vunpack.c.l.b16 %v606
  %v4303 = vunpack.c.l.b16 %v607
  %v4304 = vunpack.c.l.b16 %v608
  %v4305 = vunpack.c.l.b16 %v609
  %v4306 = vunpack.c.l.b16 %v610
  %v4307 = vunpack.c.l.b16 %v611
  %v4308 = vunpack.c.l.b16 %v612
  %v4309 = vunpack.c.l.b16 %v613
  %v4310 = vunpack.c.l.b16 %v614
  %v4311 = vunpack.c.l.b16 %v615
  %v4312 = vunpack.c.l.b16 %v616
  %v4313 = vunpack.c.l.b16 %v617
  %v4314 = vunpack.c.l.b16 %v618
  %v4315 = vunpack.c.l.b16 %v619
  %v4316 = vunpack.c.l.b16 %v620
  %v4317 = vunpack.c.l.b16 %v621
  %v4318 = vunpack.c.l.b16 %v622
  %v4319 = vunpack.c.l.b16 %v623
  %v4320 = vunpack.c.l.b16 %v624
  %v4321 = vunpack.c.l.b16 %v625
  %v4322 = vunpack.c.l.b16 %v626
  %v4323 = vunpack.c.l.b16 %v627
  %v4324 = vunpack.c.l.b16 %v628
  %v4325 = vunpack.c.l.b16 %v629
  %v4326 = vunpack.c.l.b16 %v630
  %v4327 = vunpack.c.l.b16 %v631
  %v4328 = vunpack.c.l.b16 %v632
  %v4329 = vunpack.c.l.b16 %v633
  %v4330 = vunpack.c.l.b16 %v634
  %v4331 = vunpack.c.l.b16 %v635
  %v4332 = vunpack.c.l.b16 %v636
  %v4333 = vunpack.c.l.b16 %v637
  %v4334 = vunpack.c.l.b16 %v638
  %v4335 = vunpack.c.l.b16 %v639
  %v4336 = vunpack.c.l.b16 %v640
  %v4337 = vunpack.c.l.b16 %v641
  %v4338 = vunpack.c.l.b16 %v642
  %v4339 = vunpack.c.l.b16 %v643
  %v4340 = vunpack.c.l.b16 %v644
  %v4341 = vunpack.c.l.b16 %v645
  %v4342 = vunpack.c.l.b16 %v646
  %v4343 = vunpack.c.l.b16 %v647
  %v4344 = vunpack.c.l.b16 %v648
  %v4345 = vunpack.c.l.b16 %v649
  %v4346 = vunpack.c.l.b16 %v650
  %v4347 = vunpack.c.l.b16 %v651
  %v4348 = vunpack.c.l.b16 %v652
  %v4349 = vunpack.c.l.b16 %v653
  %v4350 = vunpack.c.l.b16 %v654
  %v4351 = vunpack.c.l.b16 %v655
  %v4352 = vunpack.c.l.b16 %v656
  %v4353 = vunpack.c.l.b16 %v657
  %v4354 = vunpack.c.l.b16 %v658
  %v4355 = vunpack.c.l.b16 %v659
  %v4356 = vunpack.c.l.b16 %v660
  %v4357 = vunpack.c.l.b16 %v661
  %v4358 = vunpack.c.l.b16 %v662
  %v4359 = vunpack.c.l.b16 %v663
  %v4360 = vunpack.c.l.b16 %v664
  %v4361 = vunpack.c.l.b16 %v665
  %v4362 = vunpack.c.l.b16 %v666
  %v4363 = vunpack.c.l.b16 %v667
  %v4364 = vunpack.c.l.b16 %v668
  %v4365 = vunpack.c.l.b16 %v669
  %v4366 = vunpack.c.l.b16 %v670
  %v4367 = vunpack.c.l.b16 %v671
  %v4368 = vunpack.c.l.b16 %v672
  %v4369 = vunpack.c.l.b16 %v673
  %v4370 = vunpack.c.l.b16 %v674
  %v4371 = vunpack.c.l.b16 %v675
  %v4372 = vunpack.c.l.b16 %v676
  %v4373 = vunpack.c.l.b16 %v677
  %v4374 = vunpack.c.l.b16 %v678
  %v4375 = vunpack.c.l.b16 %v679
  %v4376 = vunpack.c.l.b16 %v680
  %v4377 = vunpack.c.l.b16 %v681
  %v4378 = vunpack.c.l.b16 %v682
  %v4379 = vunpack.c.l.b16 %v683
  %v4380 = vunpack.c.l.b16 %v684
  %v4381 = vunpack.c.l.b16 %v685
  %v4382 = vunpack.c.l.b16 %v686
  %v4383 = vunpack.c.l.b16 %v687
  %v4384 = vunpack.c.l.b16 %v688
  %v4385 = vunpack.c.l.b16 %v689
  %v4386 = vunpack.c.l.b16 %v690
  %v4387 = vunpack.c.l.b16 %v691
  %v4388 = vunpack.c.l.b16 %v692
  %v4389 = vunpack.c.l.b16 %v693
  %v4390 = vunpack.c.l.b16 %v694
  %v4391 = vunpack.c.l.b16 %v695
  %v4392 = vunpack.c.l.b16 %v696
  %v4393 = vunpack.c.l.b16 %v697
  %v4394 = vunpack.c.l.b16 %v698
  %v4395 = vunpack.c.l.b16 %v699
  %v4396 = vunpack.c.l.b16 %v700
  %v4397 = vunpack.c.l.b16 %v701
  %v4398 = vunpack.c.l.b16 %v702
  %v4399 = vunpack.c.l.b16 %v703
  %v4400 = vunpack.c.l.b16 %v704
  %v4401 = vunpack.c.l.b16 %v705
  %v4402 = vunpack.c.l.b16 %v706
  %v4403 = vunpack.c.l.b16 %v707
  %v4404 = vunpack.c.l.b16 %v708
  %v4405 = vunpack.c.l.b16 %v709
  %v4406 = vunpack.c.l.b16 %v710
  %v4407 = vunpack.c.l.b16 %v711
  %v4408 = vunpack.c.l.b16 %v712
  %v4409 = vunpack.c.l.b16 %v713
  %v4410 = vunpack.c.l.b16 %v714
  %v4411 = vunpack.c.l.b16 %v715
  %v4412 = vunpack.c.l.b16 %v716
  %v4413 = vunpack.c.l.b16 %v717
  %v4414 = vunpack.c.l.b16 %v718
  %v4415 = vunpack.c.l.b16 %v719
  %v4416 = vunpack.c.l.b16 %v720
  %v4417 = vunpack.c.l.b16 %v721
  %v4418 = vunpack.c.l.b16 %v722
  %v4419 = vunpack.c.l.b16 %v723
  %v4420 = vunpack.c.l.b16 %v724
  %v4421 = vunpack.c.l.b16 %v725
  %v4422 = vunpack.c.l.b16 %v726
  %v4423 = vunpack.c.l.b16 %v727
  %v4424 = vunpack.c.l.b16 %v728
  %v4425 = vunpack.c.l.b16 %v729
  %v4426 = vunpack.c.l.b16 %v730
  %v4427 = vunpack.c.l.b16 %v731
  %v4428 = vunpack.c.l.b16 %v732
  %v4429 = vunpack.c.l.b16 %v733
  %v4430 = vunpack.c.l.b16 %v734
  %v4431 = vunpack.c.l.b16 %v735
  %v4432 = vunpack.c.l.b16 %v736
  %v4433 = vunpack.c.l.b16 %v737
  %v4434 = vunpack.c.l.b16 %v738
  %v4435 = vunpack.c.l.b16 %v739
  %v4436 = vunpack.c.l.b16 %v740
  %v4437 = vunpack.c.l.b16 %v741
  %v4438 = vunpack.c.l.b16 %v742
  %v4439 = vunpack.c.l.b16 %v743
  %v4440 = vunpack.c.l.b16 %v744
  %v4441 = vunpack.c.l.b16 %v745
  %v4442 = vunpack.c.l.b16 %v746
  %v4443 = vunpack.c.l.b16 %v747
  %v4444 = vunpack.c.l.b16 %v748
  %v4445 = vunpack.c.l.b16 %v749
  %v4446 = vunpack.c.l.b16 %v750
  %v4447 = vunpack.c.l.b16 %v751
  %v4448 = vunpack.c.l.b16 %v752
  %v4449 = vunpack.c.l.b16 %v753
  %v4450 = vunpack.c.l.b16 %v754
  %v4451 = vunpack.c.l.b16 %v755
  %v4452 = vunpack.c.l.b16 %v756
  %v4453 = vunpack.c.l.b16 %v757
  %v4454 = vunpack.c.l.b16 %v758
  %v4455 = vunpack.c.l.b16 %v759
  %v4456 = vunpack.c.l.b16 %v760
  %v4457 = vunpack.c.l.b16 %v761
  %v4458 = vunpack.c.l.b16 %v762
  %v4459 = vunpack.c.l.b16 %v763
  %v4460 = vunpack.c.l.b16 %v764
  %v4461 = vunpack.c.l.b16 %v765
  %v4462 = vunpack.c.l.b16 %v766
  %v4463 = vunpack.c.l.b16 %v767
  %v4464 = vunpack.c.l.b16 %v768
  %v4465 = vunpack.c.l.b16 %v769
  %v4466 = vunpack.c.l.b16 %v770
  %v4467 = vunpack.c.l.b16 %v771
  %v4468 = vunpack.c.l.b16 %v772
  %v4469 = vunpack.c.l.b16 %v773
  %v4470 = vunpack.c.l.b16 %v774
  %v4471 = vunpack.c.l.b16 %v775
  %v4472 = vunpack.c.l.b16 %v776
  %v4473 = vunpack.c.l.b16 %v777
  %v4474 = vunpack.c.l.b16 %v778
  %v4475 = vunpack.c.l.b16 %v779
  %v4476 = vunpack.c.l.b16 %v780
  %v4477 = vunpack.c.l.b16 %v781
  %v4478 = vunpack.c.l.b16 %v782
  %v4479 = vunpack.c.l.b16 %v783
  %v4480 = vunpack.c.l.b16 %v784
  %v4481 = vunpack.c.l.b16 %v785
  %v4482 = vunpack.c.l.b16 %v786
  %v4483 = vunpack.c.l.b16 %v787
  %v4484 = vunpack.c.l.b16 %v788
  %v4485 = vunpack.c.l.b16 %v789
  %v4486 = vunpack.c.l.b16 %v790
  %v4487 = vunpack.c.l.b16 %v791
  %v4488 = vunpack.c.l.b16 %v792
  %v4489 = vunpack.c.l.b16 %v793
  %v4490 = vunpack.c.l.b16 %v794
  %v4491 = vunpack.c.l.b16 %v795
  %v4492 = vunpack.c.l.b16 %v796
  %v4493 = vunpack.c.l.b16 %v797
  %v4494 = vunpack.c.l.b16 %v798
  %v4495 = vunpack.c.l.b16 %v799
  %v4496 = vunpack.c.l.b16 %v800
  %v4497 = vunpack.c.l.b16 %v801
  %v4498 = vunpack.c.l.b16 %v802
  %v4499 = vunpack.c.l.b16 %v803
  %v4500 = vunpack.c.l.b16 %v804
  %v4501 = vunpack.c.l.b16 %v805
  %v4502 = vunpack.c.l.b16 %v806
  %v4503 = vunpack.c.l.b16 %v807
  %v4504 = vunpack.c.l.b16 %v808
  %v4505 = vunpack.c.l.b16 %v809
  %v4506 = vunpack.c.l.b16 %v810
  %v4507 = vunpack.c.l.b16 %v811
  %v4508 = vunpack.c.l.b16 %v812
  %v4509 = vunpack.c.l.b16 %v813
  %v4510 = vunpack.c.l.b16 %v814
  %v4511 = vunpack.c.l.b16 %v815
  %v4512 = vunpack.c.l.b16 %v816
  %v4513 = vunpack.c.l.b16 %v817
  %v4514 = vunpack.c.l.b16 %v818
  %v4515 = vunpack.c.l.b16 %v819
  %v4516 = vunpack.c.l.b16 %v820
  %v4517 = vunpack.c.l.b16 %v821
  %v4518 = vunpack.c.l.b16 %v822
  %v4519 = vunpack.c.l.b16 %v823
  %v4520 = vunpack.c.l.b16 %v824
  %v4521 = vunpack.c.l.b16 %v825
  %v4522 = vunpack.c.l.b16 %v826
  %v4523 = vunpack.c.l.b16 %v827
  %v4524 = vunpack.c.l.b16 %v828
  %v4525 = vunpack.c.l.b16 %v829
  %v4526 = vunpack.c.l.b16 %v830
  %v4527 = vunpack.c.l.b16 %v831
  %v4528 = vunpack.c.l.b16 %v832
  %v4529 = vunpack.c.l.b16 %v833
  %v4530 = vunpack.c.l.b16 %v834
  %v4531 = vunpack.c.l.b16 %v835
  %v4532 = vunpack.c.l.b16 %v836
  %v4533 = vunpack.c.l.b16 %v837
  %v4534 = vunpack.c.l.b16 %v838
  %v4535 = vunpack.c.l.b16 %v839
  %v4536 = vunpack.c.l.b16 %v840
  %v4537 = vunpack.c.l.b16 %v841
  %v4538 = vunpack.c.l.b16 %v842
  %v4539 = vunpack.c.l.b16 %v843
  %v4540 = vunpack.c.l.b16 %v844
  %v4541 = vunpack.c.l.b16 %v845
  %v4542 = vunpack.c.l.b16 %v846
  %v4543 = vunpack.c.l.b16 %v847
  %v4544 = vunpack.c.l.b16 %v848
  %v4545 = vunpack.c.l.b16 %v849
  %v4546 = vunpack.c.l.b16 %v850
  %v4547 = vunpack.c.l.b16 %v851
  %v4548 = vunpack.c.l.b16 %v852
  %v4549 = vunpack.c.l.b16 %v853
  %v4550 = vunpack.c.l.b16 %v854
  %v4551 = vunpack.c.l.b16 %v855
  %v4552 = vunpack.c.l.b16 %v856
  %v4553 = vunpack.c.l.b16 %v857
  %v4554 = vunpack.c.l.b16 %v858
  %v4555 = vunpack.c.l.b16 %v859
  %v4556 = vunpack.c.l.b16 %v860
  %v4557 = vunpack.c.l.b16 %v861
  %v4558 = vunpack.c.l.b16 %v862
  %v4559 = vunpack.c.l.b16 %v863
  %v4560 = vunpack.c.l.b16 %v864
  %v4561 = vunpack.c.l.b16 %v865
  %v4562 = vunpack.c.l.b16 %v866
  %v4563 = vunpack.c.l.b16 %v867
  %v4564 = vunpack.c.l.b16 %v868
  %v4565 = vunpack.c.l.b16 %v869
  %v4566 = vunpack.c.l.b16 %v870
  %v4567 = vunpack.c.l.b16 %v871
  %v4568 = vunpack.c.l.b16 %v872
  %v4569 = vunpack.c.l.b16 %v873
  %v4570 = vunpack.c.l.b16 %v874
  %v4571 = vunpack.c.l.b16 %v875
  %v4572 = vunpack.c.l.b16 %v876
  %v4573 = vunpack.c.l.b16 %v877
  %v4574 = vunpack.c.l.b16 %v878
  %v4575 = vunpack.c.l.b16 %v879
  %v4576 = vunpack.c.l.b16 %v880
  %v4577 = vunpack.c.l.b16 %v881
  %v4578 = vunpack.c.l.b16 %v882
  %v4579 = vunpack.c.l.b16 %v883
  %v4580 = vunpack.c.l.b16 %v884
  %v4581 = vunpack.c.l.b16 %v885
  %v4582 = vunpack.c.l.b16 %v886
  %v4583 = vunpack.c.l.b16 %v887
  %v4584 = vunpack.c.l.b16 %v888
  %v4585 = vunpack.c.l.b16 %v889
  %v4586 = vunpack.c.l.b16 %v890
  %v4587 = vunpack.c.l.b16 %v891
  %v4588 = vunpack.c.l.b16 %v892
  %v4589 = vunpack.c.l.b16 %v893
  %v4590 = vunpack.c.l.b16 %v894
  %v4591 = vunpack.c.l.b16 %v895
  %v4592 = vunpack.c.l.b16 %v896
  %v4593 = vunpack.c.l.b16 %v897
  %v4594 = vunpack.c.l.b16 %v898
  %v4595 = vunpack.c.l.b16 %v899
  %v4596 = vunpack.c.l.b16 %v900
  %v4597 = vunpack.c.l.b16 %v901
  %v4598 = vunpack.c.l.b16 %v902
  %v4599 = vunpack.c.l.b16 %v903
  %v4600 = vunpack.c.l.b16 %v904
  %v4601 = vunpack.c.l.b16 %v905
  %v4602 = vunpack.c.l.b16 %v906
  %v4603 = vunpack.c.l.b16 %v907
  %v4604 = vunpack.c.l.b16 %v908
  %v4605 = vunpack.c.l.b16 %v909
  %v4606 = vunpack.c.l.b16 %v910
  %v4607 = vunpack.c.l.b16 %v911
  %v4608 = vunpack.c.l.b16 %v912
  %v4609 = vunpack.c.l.b16 %v913
  %v4610 = vunpack.c.l.b16 %v914
  %v4611 = vunpack.c.l.b16 %v915
  %v4612 = vunpack.c.l.b16 %v916
  %v4613 = vunpack.c.l.b16 %v917
  %v4614 = vunpack.c.l.b16 %v918
  %v4615 = vunpack.c.l.b16 %v919
  %v4616 = vunpack.c.l.b16 %v920
  %v4617 = vunpack.c.l.b16 %v921
  %v4618 = vunpack.c.l.b16 %v922
  %v4619 = vunpack.c.l.b16 %v923
  %v4620 = vunpack.c.l.b16 %v924
  %v4621 = vunpack.c.l.b16 %v925
  %v4622 = vunpack.c.l.b16 %v926
  %v4623 = vunpack.c.l.b16 %v927
  %v4624 = vunpack.c.l.b16 %v928
  %v4625 = vunpack.c.l.b16 %v929
  %v4626 = vunpack.c.l.b16 %v930
  %v4627 = vunpack.c.l.b16 %v931
  %v4628 = vunpack.c.l.b16 %v932
  %v4629 = vunpack.c.l.b16 %v933
  %v4630 = vunpack.c.l.b16 %v934
  %v4631 = vunpack.c.l.b16 %v935
  %v4632 = vunpack.c.l.b16 %v936
  %v4633 = vunpack.c.l.b16 %v937
  %v4634 = vunpack.c.l.b16 %v938
  %v4635 = vunpack.c.l.b16 %v939
  %v4636 = vunpack.c.l.b16 %v940
  %v4637 = vunpack.c.l.b16 %v941
  %v4638 = vunpack.c.l.b16 %v942
  %v4639 = vunpack.c.l.b16 %v943
  %v4640 = vunpack.c.l.b16 %v944
  %v4641 = vunpack.c.l.b16 %v945
  %v4642 = vunpack.c.l.b16 %v946
  %v4643 = vunpack.c.l.b16 %v947
  %v4644 = vunpack.c.l.b16 %v948
  %v4645 = vunpack.c.l.b16 %v949
  %v4646 = vunpack.c.l.b16 %v950
  %v4647 = vunpack.c.l.b16 %v951
  %v4648 = vunpack.c.l.b16 %v952
  %v4649 = vunpack.c.l.b16 %v953
  %v4650 = vunpack.c.l.b16 %v954
  %v4651 = vunpack.c.l.b16 %v955
  %v4652 = vunpack.c.l.b16 %v956
  %v4653 = vunpack.c.l.b16 %v957
  %v4654 = vunpack.c.l.b16 %v958
  %v4655 = vunpack.c.l.b16 %v959
  %v4656 = vunpack.c.l.b16 %v960
  %v4657 = vunpack.c.l.b16 %v961
  %v4658 = vunpack.c.l.b16 %v962
  %v4659 = vunpack.c.l.b16 %v963
  %v4660 = vunpack.c.l.b16 %v964
  %v4661 = vunpack.c.l.b16 %v965
  %v4662 = vunpack.c.l.b16 %v966
  %v4663 = vunpack.c.l.b16 %v967
  %v4664 = vunpack.c.l.b16 %v968
  %v4665 = vunpack.c.l.b16 %v969
  %v4666 = vunpack.c.l.b16 %v970
  %v4667 = vunpack.c.l.b16 %v971
  %v4668 = vunpack.c.l.b16 %v972
  %v4669 = vunpack.c.l.b16 %v973
  %v4670 = vunpack.c.l.b16 %v974
  %v4671 = vunpack.c.l.b16 %v975
  %v4672 = vunpack.c.l.b16 %v976
  %v4673 = vunpack.c.l.b16 %v977
  %v4674 = vunpack.c.l.b16 %v978
  %v4675 = vunpack.c.l.b16 %v979
  %v4676 = vunpack.c.l.b16 %v980
  %v4677 = vunpack.c.l.b16 %v981
  %v4678 = vunpack.c.l.b16 %v982
  %v4679 = vunpack.c.l.b16 %v983
  %v4680 = vunpack.c.l.b16 %v984
  %v4681 = vunpack.c.l.b16 %v985
  %v4682 = vunpack.c.l.b16 %v986
  %v4683 = vunpack.c.l.b16 %v987
  %v4684 = vunpack.c.l.b16 %v988
  %v4685 = vunpack.c.l.b16 %v989
  %v4686 = vunpack.c.l.b16 %v990
  %v4687 = vunpack.c.l.b16 %v991
  %v4688 = vunpack.c.l.b16 %v992
  %v4689 = vunpack.c.l.b16 %v993
  %v4690 = vunpack.c.l.b16 %v994
  %v4691 = vunpack.c.l.b16 %v995
  %v4692 = vunpack.c.l.b16 %v996
  %v4693 = vunpack.c.l.b16 %v997
  %v4694 = vunpack.c.l.b16 %v998
  %v4695 = vunpack.c.l.b16 %v999
  %v4696 = vunpack.c.l.b16 %v1000
  %v4697 = vunpack.c.l.b16 %v1001
  %v4698 = vunpack.c.l.b16 %v1002
  %v4699 = vunpack.c.l.b16 %v1003
  %v4700 = vunpack.c.l.b16 %v1004
  %v4701 = vunpack.c.l.b16 %v1005
  %v4702 = vunpack.c.l.b16 %v1006
  %v4703 = vunpack.c.l.b16 %v1007
  %v4704 = vunpack.c.l.b16 %v1008
  %v4705 = vunpack.c.l.b16 %v1009
  %v4706 = vunpack.c.l.b16 %v1010
  %v4707 = vunpack.c.l.b16 %v1011
  %v4708 = vunpack.c.l.b16 %v1012
  %v4709 = vunpack.c.l.b16 %v1013
  %v4710 = vunpack.c.l.b16 %v1014
  %v4711 = vunpack.c.l.b16 %v1015
  %v4712 = vunpack.c.l.b16 %v1016
  %v4713 = vunpack.c.l.b16 %v1017
  %v4714 = vunpack.c.l.b16 %v1018
  %v4715 = vunpack.c.l.b16 %v1019
  %v4716 = vunpack.c.l.b16 %v1020
  %v4717 = vunpack.c.l.b16 %v1021
  %v4718 = vunpack.c.l.b16 %v1022
  %v4719 = vunpack.c.l.b16 %v1023
  %v4720 = vunpack.c.l.b16 %v1024
  %v4721 = vunpack.c.l.b16 %v1025
  %v4722 = vunpack.c.l.b16 %v1026
  %v4723 = vunpack.c.l.b16 %v1027
  %v4724 = vunpack.c.l.b16 %v1028
  %v4725 = vunpack.c.l.b16 %v1029
  %v4726 = vunpack.c.l.b16 %v1030
  %v4727 = vunpack.c.l.b16 %v1031
  %v4728 = vunpack.c.l.b16 %v1032
  %v4729 = vunpack.c.l.b16 %v1033
  %v4730 = vunpack.c.l.b16 %v1034
  %v4731 = vunpack.c.l.b16 %v1035
  %v4732 = vunpack.c.l.b16 %v1036
  %v4733 = vunpack.c.l.b16 %v1037
  %v4734 = vunpack.c.l.b16 %v1038
  %v4735 = vunpack.c.l.b16 %v1039
  %v4736 = vunpack.c.l.b16 %v1040
  %v4737 = vunpack.c.l.b16 %v1041
  %v4738 = vunpack.c.l.b16 %v1042
  %v4739 = vunpack.c.l.b16 %v1043
  %v4740 = vunpack.c.l.b16 %v1044
  %v4741 = vunpack.c.l.b16 %v1045
  %v4742 = vunpack.c.l.b16 %v1046
  %v4743 = vunpack.c.l.b16 %v1047
  %v4744 = vunpack.c.l.b16 %v1048
  %v4745 = vunpack.c.l.b16 %v1049
  %v4746 = vunpack.c.l.b16 %v1050
  %v4747 = vunpack.c.l.b16 %v1051
  %v4748 = vunpack.c.l.b16 %v1052
  %v4749 = vunpack.c.l.b16 %v1053
  %v4750 = vunpack.c.l.b16 %v1054
  %v4751 = vunpack.c.l.b16 %v1055
  %v4752 = vunpack.c.l.b16 %v1056
  %v4753 = vunpack.c.l.b16 %v1057
  %v4754 = vunpack.c.l.b16 %v1058
  %v4755 = vunpack.c.l.b16 %v1059
  %v4756 = vunpack.c.l.b16 %v1060
  %v4757 = vunpack.c.l.b16 %v1061
  %v4758 = vunpack.c.l.b16 %v1062
  %v4759 = vunpack.c.l.b16 %v1063
  %v4760 = vunpack.c.l.b16 %v1064
  %v4761 = vunpack.c.l.b16 %v1065
  %v4762 = vunpack.c.l.b16 %v1066
  %v4763 = vunpack.c.l.b16 %v1067
  %v4764 = vunpack.c.l.b16 %v1068
  %v4765 = vunpack.c.l.b16 %v1069
  %v4766 = vunpack.c.l.b16 %v1070
  %v4767 = vunpack.c.l.b16 %v1071
  %v4768 = vunpack.c.l.b16 %v1072
  %v4769 = vunpack.c.l.b16 %v1073
  %v4770 = vunpack.c.l.b16 %v1074
  %v4771 = vunpack.c.l.b16 %v1075
  %v4772 = vunpack.c.l.b16 %v1076
  %v4773 = vunpack.c.l.b16 %v1077
  %v4774 = vunpack.c.l.b16 %v1078
  %v4775 = vunpack.c.l.b16 %v1079
  %v4776 = vunpack.c.l.b16 %v1080
  %v4777 = vunpack.c.l.b16 %v1081
  %v4778 = vunpack.c.l.b16 %v1082
  %v4779 = vunpack.c.l.b16 %v1083
  %v4780 = vunpack.c.l.b16 %v1084
  %v4781 = vunpack.c.l.b16 %v1085
  %v4782 = vunpack.c.l.b16 %v1086
  %v4783 = vunpack.c.l.b16 %v1087
  %v4784 = vunpack.c.l.b16 %v1088
  %v4785 = vunpack.c.l.b16 %v1089
  %v4786 = vunpack.c.l.b16 %v1090
  %v4787 = vunpack.c.l.b16 %v1091
  %v4788 = vunpack.c.l.b16 %v1092
  %v4789 = vunpack.c.l.b16 %v1093
  %v4790 = vunpack.c.l.b16 %v1094
  %v4791 = vunpack.c.l.b16 %v1095
  %v4792 = vunpack.c.l.b16 %v1096
  %v4793 = vunpack.c.l.b16 %v1097
  %v4794 = vunpack.c.l.b16 %v1098
  %v4795 = vunpack.c.l.b16 %v1099
  %v4796 = vunpack.c.l.b16 %v1100
  %v4797 = vunpack.c.l.b16 %v1101
  %v4798 = vunpack.c.l.b16 %v1102
  %v4799 = vunpack.c.l.b16 %v1103
  %v4800 = vunpack.c.l.b16 %v1104
  %v4801 = vunpack.c.l.b16 %v1105
  %v4802 = vunpack.c.l.b16 %v1106
  %v4803 = vunpack.c.l.b16 %v1107
  %v4804 = vunpack.c.l.b16 %v1108
  %v4805 = vunpack.c.l.b16 %v1109
  %v4806 = vunpack.c.l.b16 %v1110
  %v4807 = vunpack.c.l.b16 %v1111
  %v4808 = vunpack.c.l.b16 %v1112
  %v4809 = vunpack.c.l.b16 %v1113
  %v4810 = vunpack.c.l.b16 %v1114
  %v4811 = vunpack.c.l.b16 %v1115
  %v4812 = vunpack.c.l.b16 %v1116
  %v4813 = vunpack.c.l.b16 %v1117
  %v4814 = vunpack.c.l.b16 %v1118
  %v4815 = vunpack.c.l.b16 %v1119
  %v4816 = vunpack.c.l.b16 %v1120
  %v4817 = vunpack.c.l.b16 %v1121
  %v4818 = vunpack.c.l.b16 %v1122
  %v4819 = vunpack.c.l.b16 %v1123
  %v4820 = vunpack.c.l.b16 %v1124
  %v4821 = vunpack.c.l.b16 %v1125
  %v4822 = vunpack.c.l.b16 %v1126
  %v4823 = vunpack.c.l.b16 %v1127
  %v4824 = vunpack.c.l.b16 %v1128
  %v4825 = vunpack.c.l.b16 %v1129
  %v4826 = vunpack.c.l.b16 %v1130
  %v4827 = vunpack.c.l.b16 %v1131
  %v4828 = vunpack.c.l.b16 %v1132
  %v4829 = vunpack.c.l.b16 %v1133
  %v4830 = vunpack.c.l.b16 %v1134
  %v4831 = vunpack.c.l.b16 %v1135
  %v4832 = vunpack.c.l.b16 %v1136
  %v4833 = vunpack.c.l.b16 %v1137
  %v4834 = vunpack.c.l.b16 %v1138
  %v4835 = vunpack.c.l.b16 %v1139
  %v4836 = vunpack.c.l.b16 %v1140
  %v4837 = vunpack.c.l.b16 %v1141
  %v4838 = vunpack.c.l.b16 %v1142
  %v4839 = vunpack.c.l.b16 %v1143
  %v4840 = vunpack.c.l.b16 %v1144
  %v4841 = vunpack.c.l.b16 %v1145
  %v4842 = vunpack.c.l.b16 %v1146
  %v4843 = vunpack.c.l.b16 %v1147
  %v4844 = vunpack.c.l.b16 %v1148
  %v4845 = vunpack.c.l.b16 %v1149
  %v4846 = vunpack.c.l.b16 %v1150
  %v4847 = vunpack.c.l.b16 %v1151
  %v4848 = vunpack.c.l.b16 %v1152
  %v4849 = vunpack.c.l.b16 %v1153
  %v4850 = vunpack.c.l.b16 %v1154
  %v4851 = vunpack.c.l.b16 %v1155
  %v4852 = vunpack.c.l.b16 %v1156
  %v4853 = vunpack.c.l.b16 %v1157
  %v4854 = vunpack.c.l.b16 %v1158
  %v4855 = vunpack.c.l.b16 %v1159
  %v4856 = vunpack.c.l.b16 %v1160
  %v4857 = vunpack.c.l.b16 %v1161
  %v4858 = vunpack.c.l.b16 %v1162
  %v4859 = vunpack.c.l.b16 %v1163
  %v4860 = vunpack.c.l.b16 %v1164
  %v4861 = vunpack.c.l.b16 %v1165
  %v4862 = vunpack.c.l.b16 %v1166
  %v4863 = vunpack.c.l.b16 %v1167
  %v4864 = vunpack.c.l.b16 %v1168
  %v4865 = vunpack.c.l.b16 %v1169
  %v4866 = vunpack.c.l.b16 %v1170
  %v4867 = vunpack.c.l.b16 %v1171
  %v4868 = vunpack.c.l.b16 %v1172
  %v4869 = vunpack.c.l.b16 %v1173
  %v4870 = vunpack.c.l.b16 %v1174
  %v4871 = vunpack.c.l.b16 %v1175
  %v4872 = vunpack.c.l.b16 %v1176
  %v4873 = vunpack.c.l.b16 %v1177
  %v4874 = vunpack.c.l.b16 %v1178
  %v4875 = vunpack.c.l.b16 %v1179
  %v4876 = vunpack.c.l.b16 %v1180
  %v4877 = vunpack.c.l.b16 %v1181
  %v4878 = vunpack.c.l.b16 %v1182
  %v4879 = vunpack.c.l.b16 %v1183
  %v4880 = vunpack.c.l.b16 %v1184
  %v4881 = vunpack.c.l.b16 %v1185
  %v4882 = vunpack.c.l.b16 %v1186
  %v4883 = vunpack.c.l.b16 %v1187
  %v4884 = vunpack.c.l.b16 %v1188
  %v4885 = vunpack.c.l.b16 %v1189
  %v4886 = vunpack.c.l.b16 %v1190
  %v4887 = vunpack.c.l.b16 %v1191
  %v4888 = vunpack.c.l.b16 %v1192
  %v4889 = vunpack.c.l.b16 %v1193
  %v4890 = vunpack.c.l.b16 %v1194
  %v4891 = vunpack.c.l.b16 %v1195
  %v4892 = vunpack.c.l.b16 %v1196
  %v4893 = vunpack.c.l.b16 %v1197
  %v4894 = vunpack.c.l.b16 %v1198
  %v4895 = vunpack.c.l.b16 %v1199
  %v4896 = vunpack.c.l.b16 %v1200
  %v4897 = vunpack.c.l.b16 %v1201
  %v4898 = vunpack.c.l.b16 %v1202
  %v4899 = vunpack.c.l.b16 %v1203
  %v4900 = vunpack.c.l.b16 %v1204
  %v4901 = vunpack.c.l.b16 %v1205
  %v4902 = vunpack.c.l.b16 %v1206
  %v4903 = vunpack.c.l.b16 %v1207
  %v4904 = vunpack.c.l.b16 %v1208
  %v4905 = vunpack.c.l.b16 %v1209
  %v4906 = vunpack.c.l.b16 %v1210
  %v4907 = vunpack.c.l.b16 %v1211
  %v4908 = vunpack.c.l.b16 %v1212
  %v4909 = vunpack.c.l.b16 %v1213
  %v4910 = vunpack.c.l.b16 %v1214
  %v4911 = vunpack.c.l.b16 %v1215
  %v4912 = vunpack.c.l.b16 %v1216
  %v4913 = vunpack.c.l.b16 %v1217
  %v4914 = vunpack.c.l.b16 %v1218
  %v4915 = vunpack.c.l.b16 %v1219
  %v4916 = vunpack.c.l.b16 %v1220
  %v4917 = vunpack.c.l.b16 %v1221
  %v4918 = vunpack.c.l.b16 %v1222
  %v4919 = vunpack.c.l.b16 %v1223
  %v4920 = vunpack.c.l.b16 %v1224
  %v4921 = vunpack.c.l.b16 %v1225
  %v4922 = vunpack.c.l.b16 %v1226
  %v4923 = vunpack.c.l.b16 %v1227
  %v4924 = vunpack.c.l.b16 %v1228
  %v4925 = vunpack.c.l.b16 %v1229
  %v4926 = vunpack.c.l.b16 %v1230
  %v4927 = vunpack.c.l.b16 %v1231
  %v4928 = vunpack.c.l.b16 %v1232
  %v4929 = vunpack.c.l.b16 %v1233
  %v4930 = vunpack.c.l.b16 %v1234
  %v4931 = vunpack.c.l.b16 %v1235
  %v4932 = vunpack.c.l.b16 %v1236
  %v4933 = vunpack.c.l.b16 %v1237
  %v4934 = vunpack.c.l.b16 %v1238
  %v4935 = vunpack.c.l.b16 %v1239
  %v4936 = vunpack.c.l.b16 %v1240
  %v4937 = vunpack.c.l.b16 %v1241
  %v4938 = vunpack.c.l.b16 %v1242
  %v4939 = vunpack.c.l.b16 %v1243
  %v4940 = vunpack.c.l.b16 %v1244
  %v4941 = vunpack.c.l.b16 %v1245
  %v4942 = vunpack.c.l.b16 %v1246
  %v4943 = vunpack.c.l.b16 %v1247
  %v4944 = vunpack.c.l.b16 %v1248
  %v4945 = vunpack.c.l.b16 %v1249
  %v4946 = vunpack.c.l.b16 %v1250
  %v4947 = vunpack.c.l.b16 %v1251
  %v4948 = vunpack.c.l.b16 %v1252
  %v4949 = vunpack.c.l.b16 %v1253
  %v4950 = vunpack.c.l.b16 %v1254
  %v4951 = vunpack.c.l.b16 %v1255
  %v4952 = vunpack.c.l.b16 %v1256
  %v4953 = vunpack.c.l.b16 %v1257
  %v4954 = vunpack.c.l.b16 %v1258
  %v4955 = vunpack.c.l.b16 %v1259
  %v4956 = vunpack.c.l.b16 %v1260
  %v4957 = vunpack.c.l.b16 %v1261
  %v4958 = vunpack.c.l.b16 %v1262
  %v4959 = vunpack.c.l.b16 %v1263
  %v4960 = vunpack.c.l.b16 %v1264
  %v4961 = vunpack.c.l.b16 %v1265
  %v4962 = vunpack.c.l.b16 %v1266
  %v4963 = vunpack.c.l.b16 %v1267
  %v4964 = vunpack.c.l.b16 %v1268
  %v4965 = vunpack.c.l.b16 %v1269
  %v4966 = vunpack.c.l.b16 %v1270
  %v4967 = vunpack.c.l.b16 %v1271
  %v4968 = vunpack.c.l.b16 %v1272
  %v4969 = vunpack.c.l.b16 %v1273
  %v4970 = vunpack.c.l.b16 %v1274
  %v4971 = vunpack.c.l.b16 %v1275
  %v4972 = vunpack.c.l.b16 %v1276
  %v4973 = vunpack.c.l.b16 %v1277
  %v4974 = vunpack.c.l.b16 %v1278
  %v4975 = vunpack.c.l.b16 %v1279
  %v4976 = vunpack.c.l.b16 %v1280
  %v4977 = vunpack.c.l.b16 %v1281
  %v4978 = vunpack.c.l.b16 %v1282
  %v4979 = vunpack.c.l.b16 %v1283
  %v4980 = vunpack.c.l.b16 %v1284
  %v4981 = vunpack.c.l.b16 %v1285
  %v4982 = vunpack.c.l.b16 %v1286
  %v4983 = vunpack.c.l.b16 %v1287
  %v4984 = vunpack.c.l.b16 %v1288
  %v4985 = vunpack.c.l.b16 %v1289
  %v4986 = vunpack.c.l.b16 %v1290
  %v4987 = vunpack.c.l.b16 %v1291
  %v4988 = vunpack.c.l.b16 %v1292
  %v4989 = vunpack.c.l.b16 %v1293
  %v4990 = vunpack.c.l.b16 %v1294
  %v4991 = vunpack.c.l.b16 %v1295
  %v4992 = vunpack.c.l.b16 %v1296
  %v4993 = vunpack.c.l.b16 %v1297
  %v4994 = vunpack.c.l.b16 %v1298
  %v4995 = vunpack.c.l.b16 %v1299
  %v4996 = vunpack.c.l.b16 %v1300
  %v4997 = vunpack.c.l.b16 %v1301
  %v4998 = vunpack.c.l.b16 %v1302
  %v4999 = vunpack.c.l.b16 %v1303
  %v5000 = vunpack.c.l.b16 %v1304
  %v5001 = vunpack.c.l.b16 %v1305
  %v5002 = vunpack.c.l.b16 %v1306
  %v5003 = vunpack.c.l.b16 %v1307
  %v5004 = vunpack.c.l.b16 %v1308
  %v5005 = vunpack.c.l.b16 %v1309
  %v5006 = vunpack.c.l.b16 %v1310
  %v5007 = vunpack.c.l.b16 %v1311
  %v5008 = vunpack.c.l.b16 %v1312
  %v5009 = vunpack.c.l.b16 %v1313
  %v5010 = vunpack.c.l.b16 %v1314
  %v5011 = vunpack.c.l.b16 %v1315
  %v5012 = vunpack.c.l.b16 %v1316
  %v5013 = vunpack.c.l.b16 %v1317
  %v5014 = vunpack.c.l.b16 %v1318
  %v5015 = vunpack.c.l.b16 %v1319
  %v5016 = vunpack.c.l.b16 %v1320
  %v5017 = vunpack.c.l.b16 %v1321
  %v5018 = vunpack.c.l.b16 %v1322
  %v5019 = vunpack.c.l.b16 %v1323
  %v5020 = vunpack.c.l.b16 %v1324
  %v5021 = vunpack.c.l.b16 %v1325
  %v5022 = vunpack.c.l.b16 %v1326
  %v5023 = vunpack.c.l.b16 %v1327
  %v5024 = vunpack.c.l.b16 %v1328
  %v5025 = vunpack.c.l.b16 %v1329
  %v5026 = vunpack.c.l.b16 %v1330
  %v5027 = vunpack.c.l.b16 %v1331
  %v5028 = vunpack.c.l.b16 %v1332
  %v5029 = vunpack.c.l.b16 %v1333
  %v5030 = vunpack.c.l.b16 %v1334
  %v5031 = vunpack.c.l.b16 %v1335
  %v5032 = vunpack.c.l.b16 %v1336
  %v5033 = vunpack.c.l.b16 %v1337
  %v5034 = vunpack.c.l.b16 %v1338
  %v5035 = vunpack.c.l.b16 %v1339
  %v5036 = vunpack.c.l.b16 %v1340
  %v5037 = vunpack.c.l.b16 %v1341
  %v5038 = vunpack.c.l.b16 %v1342
  %v5039 = vunpack.c.l.b16 %v1343
  %v5040 = vunpack.c.l.b16 %v1344
  %v5041 = vunpack.c.l.b16 %v1345
  %v5042 = vunpack.c.l.b16 %v1346
  %v5043 = vunpack.c.l.b16 %v1347
  %v5044 = vunpack.c.l.b16 %v1348
  %v5045 = vunpack.c.l.b16 %v1349
  %v5046 = vunpack.c.l.b16 %v1350
  %v5047 = vunpack.c.l.b16 %v1351
  %v5048 = vunpack.c.l.b16 %v1352
  %v5049 = vunpack.c.l.b16 %v1353
  %v5050 = vunpack.c.l.b16 %v1354
  %v5051 = vunpack.c.l.b16 %v1355
  %v5052 = vunpack.c.l.b16 %v1356
  %v5053 = vunpack.c.l.b16 %v1357
  %v5054 = vunpack.c.l.b16 %v1358
  %v5055 = vunpack.c.l.b16 %v1359
  %v5056 = vunpack.c.l.b16 %v1360
  %v5057 = vunpack.c.l.b16 %v1361
  %v5058 = vunpack.c.l.b16 %v1362
  %v5059 = vunpack.c.l.b16 %v1363
  %v5060 = vunpack.c.l.b16 %v1364
  %v5061 = vunpack.c.l.b16 %v1365
  %v5062 = vunpack.c.l.b16 %v1366
  %v5063 = vunpack.c.l.b16 %v1367
  %v5064 = vunpack.c.l.b16 %v1368
  %v5065 = vunpack.c.l.b16 %v1369
  %v5066 = vunpack.c.l.b16 %v1370
  %v5067 = vunpack.c.l.b16 %v1371
  %v5068 = vunpack.c.l.b16 %v1372
  %v5069 = vunpack.c.l.b16 %v1373
  %v5070 = vunpack.c.l.b16 %v1374
  %v5071 = vunpack.c.l.b16 %v1375
  %v5072 = vunpack.c.l.b16 %v1376
  %v5073 = vunpack.c.l.b16 %v1377
  %v5074 = vunpack.c.l.b16 %v1378
  %v5075 = vunpack.c.l.b16 %v1379
  %v5076 = vunpack.c.l.b16 %v1380
  %v5077 = vunpack.c.l.b16 %v1381
  %v5078 = vunpack.c.l.b16 %v1382
  %v5079 = vunpack.c.l.b16 %v1383
  %v5080 = vunpack.c.l.b16 %v1384
  %v5081 = vunpack.c.l.b16 %v1385
  %v5082 = vunpack.c.l.b16 %v1386
  %v5083 = vunpack.c.l.b16 %v1387
  %v5084 = vunpack.c.l.b16 %v1388
  %v5085 = vunpack.c.l.b16 %v1389
  %v5086 = vunpack.c.l.b16 %v1390
  %v5087 = vunpack.c.l.b16 %v1391
  %v5088 = vunpack.c.l.b16 %v1392
  %v5089 = vunpack.c.l.b16 %v1393
  %v5090 = vunpack.c.l.b16 %v1394
  %v5091 = vunpack.c.l.b16 %v1395
  %v5092 = vunpack.c.l.b16 %v1396
  %v5093 = vunpack.c.l.b16 %v1397
  %v5094 = vunpack.c.l.b16 %v1398
  %v5095 = vunpack.c.l.b16 %v1399
  %v5096 = vunpack.c.l.b16 %v1400
  %v5097 = vunpack.c.l.b16 %v1401
  %v5098 = vunpack.c.l.b16 %v1402
  %v5099 = vunpack.c.l.b16 %v1403
  %v5100 = vunpack.c.l.b16 %v1404
  %v5101 = vunpack.c.l.b16 %v1405
  %v5102 = vunpack.c.l.b16 %v1406
  %v5103 = vunpack.c.l.b16 %v1407
  %v5104 = vunpack.c.l.b16 %v1408
  %v5105 = vunpack.c.l.b16 %v1409
  %v5106 = vunpack.c.l.b16 %v1410
  %v5107 = vunpack.c.l.b16 %v1411
  %v5108 = vunpack.c.l.b16 %v1412
  %v5109 = vunpack.c.l.b16 %v1413
  %v5110 = vunpack.c.l.b16 %v1414
  %v5111 = vunpack.c.l.b16 %v1415
  %v5112 = vunpack.c.l.b16 %v1416
  %v5113 = vunpack.c.l.b16 %v1417
  %v5114 = vunpack.c.l.b16 %v1418
  %v5115 = vunpack.c.l.b16 %v1419
  %v5116 = vunpack.c.l.b16 %v1420
  %v5117 = vunpack.c.l.b16 %v1421
  %v5118 = vunpack.c.l.b16 %v1422
  %v5119 = vunpack.c.l.b16 %v1423
  %v5120 = vunpack.c.l.b16 %v1424
  %v5121 = vunpack.c.l.b16 %v1425
  %v5122 = vunpack.c.l.b16 %v1426
  %v5123 = vunpack.c.l.b16 %v1427
  %v5124 = vunpack.c.l.b16 %v1428
  %v5125 = vunpack.c.l.b16 %v1429
  %v5126 = vunpack.c.l.b16 %v1430
  %v5127 = vunpack.c.l.b16 %v1431
  %v5128 = vunpack.c.l.b16 %v1432
  %v5129 = vunpack.c.l.b16 %v1433
  %v5130 = vunpack.c.l.b16 %v1434
  %v5131 = vunpack.c.l.b16 %v1435
  %v5132 = vunpack.c.l.b16 %v1436
  %v5133 = vunpack.c.l.b16 %v1437
  %v5134 = vunpack.c.l.b16 %v1438
  %v5135 = vunpack.c.l.b16 %v1439
  %v5136 = vunpack.c.l.b16 %v1440
  %v5137 = vunpack.c.l.b16 %v1441
  %v5138 = vunpack.c.l.b16 %v1442
  %v5139 = vunpack.c.l.b16 %v1443
  %v5140 = vunpack.c.l.b16 %v1444
  %v5141 = vunpack.c.l.b16 %v1445
  %v5142 = vunpack.c.l.b16 %v1446
  %v5143 = vunpack.c.l.b16 %v1447
  %v5144 = vunpack.c.l.b16 %v1448
  %v5145 = vunpack.c.l.b16 %v1449
  %v5146 = vunpack.c.l.b16 %v1450
  %v5147 = vunpack.c.l.b16 %v1451
  %v5148 = vunpack.c.l.b16 %v1452
  %v5149 = vunpack.c.l.b16 %v1453
  %v5150 = vunpack.c.l.b16 %v1454
  %v5151 = vunpack.c.l.b16 %v1455
  %v5152 = vunpack.c.l.b16 %v1456
  %v5153 = vunpack.c.l.b16 %v1457
  %v5154 = vunpack.c.l.b16 %v1458
  %v5155 = vunpack.c.l.b16 %v1459
  %v5156 = vunpack.c.l.b16 %v1460
  %v5157 = vunpack.c.l.b16 %v1461
  %v5158 = vunpack.c.l.b16 %v1462
  %v5159 = vunpack.c.l.b16 %v1463
  %v5160 = vunpack.c.l.b16 %v1464
  %v5161 = vunpack.c.l.b16 %v1465
  %v5162 = vunpack.c.l.b16 %v1466
  %v5163 = vunpack.c.l.b16 %v1467
  %v5164 = vunpack.c.l.b16 %v1468
  %v5165 = vunpack.c.l.b16 %v1469
  %v5166 = vunpack.c.l.b16 %v1470
  %v5167 = vunpack.c.l.b16 %v1471
  %v5168 = vunpack.c.l.b16 %v1472
  %v5169 = vunpack.c.l.b16 %v1473
  %v5170 = vunpack.c.l.b16 %v1474
  %v5171 = vunpack.c.l.b16 %v1475
  %v5172 = vunpack.c.l.b16 %v1476
  %v5173 = vunpack.c.l.b16 %v1477
  %v5174 = vunpack.c.l.b16 %v1478
  %v5175 = vunpack.c.l.b16 %v1479
  %v5176 = vunpack.c.l.b16 %v1480
  %v5177 = vunpack.c.l.b16 %v1481
  %v5178 = vunpack.c.l.b16 %v1482
  %v5179 = vunpack.c.l.b16 %v1483
  %v5180 = vunpack.c.l.b16 %v1484
  %v5181 = vunpack.c.l.b16 %v1485
  %v5182 = vunpack.c.l.b16 %v1486
  %v5183 = vunpack.c.l.b16 %v1487
  %v5184 = vunpack.c.l.b16 %v1488
  %v5185 = vunpack.c.l.b16 %v1489
  %v5186 = vunpack.c.l.b16 %v1490
  %v5187 = vunpack.c.l.b16 %v1491
  %v5188 = vunpack.c.l.b16 %v1492
  %v5189 = vunpack.c.l.b16 %v1493
  %v5190 = vunpack.c.l.b16 %v1494
  %v5191 = vunpack.c.l.b16 %v1495
  %v5192 = vunpack.c.l.b16 %v1496
  %v5193 = vunpack.c.l.b16 %v1497
  %v5194 = vunpack.c.l.b16 %v1498
  %v5195 = vunpack.c.l.b16 %v1499
  %v5196 = vunpack.c.l.b16 %v1500
  %v5197 = vunpack.c.l.b16 %v1501
  %v5198 = vunpack.c.l.b16 %v1502
  %v5199 = vunpack.c.l.b16 %v1503
  %v5200 = vunpack.c.l.b16 %v1504
  %v5201 = vunpack.c.l.b16 %v1505
  %v5202 = vunpack.c.l.b16 %v1506
  %v5203 = vunpack.c.l.b16 %v1507
  %v5204 = vunpack.c.l.b16 %v1508
  %v5205 = vunpack.c.l.b16 %v1509
  %v5206 = vunpack.c.l.b16 %v1510
  %v5207 = vunpack.c.l.b16 %v1511
  %v5208 = vunpack.c.l.b16 %v1512
  %v5209 = vunpack.c.l.b16 %v1513
  %v5210 = vunpack.c.l.b16 %v1514
  %v5211 = vunpack.c.l.b16 %v1515
  %v5212 = vunpack.c.l.b16 %v1516
  %v5213 = vunpack.c.l.b16 %v1517
  %v5214 = vunpack.c.l.b16 %v1518
  %v5215 = vunpack.c.l.b16 %v1519
  %v5216 = vunpack.c.l.b16 %v1520
  %v5217 = vunpack.c.l.b16 %v1521
  %v5218 = vunpack.c.l.b16 %v1522
  %v5219 = vunpack.c.l.b16 %v1523
  %v5220 = vunpack.c.l.b16 %v1524
  %v5221 = vunpack.c.l.b16 %v1525
  %v5222 = vunpack.c.l.b16 %v1526
  %v5223 = vunpack.c.l.b16 %v1527
  %v5224 = vunpack.c.l.b16 %v1528
  %v5225 = vunpack.c.l.b16 %v1529
  %v5226 = vunpack.c.l.b16 %v1530
  %v5227 = vunpack.c.l.b16 %v1531
  %v5228 = vunpack.c.l.b16 %v1532
  %v5229 = vunpack.c.l.b16 %v1533
  %v5230 = vunpack.c.l.b16 %v1534
  %v5231 = vunpack.c.l.b16 %v1535
  %v5232 = vunpack.c.l.b16 %v1536
  %v5233 = vunpack.c.l.b16 %v1537
  %v5234 = vunpack.c.l.b16 %v1538
  %v5235 = vunpack.c.l.b16 %v1539
  %v5236 = vunpack.c.l.b16 %v1540
  %v5237 = vunpack.c.l.b16 %v1541
  %v5238 = vunpack.c.l.b16 %v1542
  %v5239 = vunpack.c.l.b16 %v1543
  %v5240 = vunpack.c.l.b16 %v1544
  %v5241 = vunpack.c.l.b16 %v1545
  %v5242 = vunpack.c.l.b16 %v1546
  %v5243 = vunpack.c.l.b16 %v1547
  %v5244 = vunpack.c.l.b16 %v1548
  %v5245 = vunpack.c.l.b16 %v1549
  %v5246 = vunpack.c.l.b16 %v1550
  %v5247 = vunpack.c.l.b16 %v1551
  %v5248 = vunpack.c.l.b16 %v1552
  %v5249 = vunpack.c.l.b16 %v1553
  %v5250 = vunpack.c.l.b16 %v1554
  %v5251 = vunpack.c.l.b16 %v1555
  %v5252 = vunpack.c.l.b16 %v1556
  %v5253 = vunpack.c.l.b16 %v1557
  %v5254 = vunpack.c.l.b16 %v1558
  %v5255 = vunpack.c.l.b16 %v1559
  %v5256 = vunpack.c.l.b16 %v1560
  %v5257 = vunpack.c.l.b16 %v1561
  %v5258 = vunpack.c.l.b16 %v1562
  %v5259 = vunpack.c.l.b16 %v1563
  %v5260 = vunpack.c.l.b16 %v1564
  %v5261 = vunpack.c.l.b16 %v1565
  %v5262 = vunpack.c.l.b16 %v1566
  %v5263 = vunpack.c.l.b16 %v1567
  %v5264 = vunpack.c.l.b16 %v1568
  %v5265 = vunpack.c.l.b16 %v1569
  %v5266 = vunpack.c.l.b16 %v1570
  %v5267 = vunpack.c.l.b16 %v1571
  %v5268 = vunpack.c.l.b16 %v1572
  %v5269 = vunpack.c.l.b16 %v1573
  %v5270 = vunpack.c.l.b16 %v1574
  %v5271 = vunpack.c.l.b16 %v1575
  %v5272 = vunpack.c.l.b16 %v1576
  %v5273 = vunpack.c.l.b16 %v1577
  %v5274 = vunpack.c.l.b16 %v1578
  %v5275 = vunpack.c.l.b16 %v1579
  %v5276 = vunpack.c.l.b16 %v1580
  %v5277 = vunpack.c.l.b16 %v1581
  %v5278 = vunpack.c.l.b16 %v1582
  %v5279 = vunpack.c.l.b16 %v1583
  %v5280 = vunpack.c.l.b16 %v1584
  %v5281 = vunpack.c.l.b16 %v1585
  %v5282 = vunpack.c.l.b16 %v1586
  %v5283 = vunpack.c.l.b16 %v1587
  %v5284 = vunpack.c.l.b16 %v1588
  %v5285 = vunpack.c.l.b16 %v1589
  %v5286 = vunpack.c.l.b16 %v1590
  %v5287 = vunpack.c.l.b16 %v1591
  %v5288 = vunpack.c.l.b16 %v1592
  %v5289 = vunpack.c.l.b16 %v1593
  %v5290 = vunpack.c.l.b16 %v1594
  %v5291 = vunpack.c.l.b16 %v1595
  %v5292 = vunpack.c.l.b16 %v1596
  %v5293 = vunpack.c.l.b16 %v1597
  %v5294 = vunpack.c.l.b16 %v1598
  %v5295 = vunpack.c.l.b16 %v1599
  %v5296 = vunpack.c.l.b16 %v1600
  %v5297 = vunpack.c.l.b16 %v1601
  %v5298 = vpack.c.b16 %v3891, %v3890
  %v5299 = vpack.c.b16 %v3893, %v3892
  %v5300 = vpack.c.b16 %v3895, %v3894
  %v5301 = vpack.c.b16 %v3897, %v3896
  %v5302 = vpack.c.b16 %v3899, %v3898
  %v5303 = vpack.c.b16 %v3901, %v3900
  %v5304 = vpack.c.b16 %v3903, %v3902
  %v5305 = vpack.c.b16 %v3905, %v3904
  %v5306 = vpack.c.b16 %v3907, %v3906
  %v5307 = vpack.c.b16 %v3909, %v3908
  %v5308 = vpack.c.b16 %v3911, %v3910
  %v5309 = vpack.c.b16 %v3913, %v3912
  %v5310 = vpack.c.b16 %v3915, %v3914
  %v5311 = vpack.c.b16 %v3917, %v3916
  %v5312 = vpack.c.b16 %v3919, %v3918
  %v5313 = vpack.c.b16 %v3921, %v3920
  %v5314 = vpack.c.b16 %v3923, %v3922
  %v5315 = vpack.c.b16 %v3925, %v3924
  %v5316 = vpack.c.b16 %v3927, %v3926
  %v5317 = vpack.c.b16 %v3929, %v3928
  %v5318 = vpack.c.b16 %v3931, %v3930
  %v5319 = vpack.c.b16 %v3933, %v3932
  %v5320 = vpack.c.b16 %v3935, %v3934
  %v5321 = vpack.c.b16 %v3937, %v3936
  %v5322 = vpack.c.b16 %v3939, %v3938
  %v5323 = vpack.c.b16 %v3941, %v3940
  %v5324 = vpack.c.b16 %v3943, %v3942
  %v5325 = vpack.c.b16 %v3945, %v3944
  %v5326 = vpack.c.b16 %v3947, %v3946
  %v5327 = vpack.c.b16 %v3949, %v3948
  %v5328 = vpack.c.b16 %v3951, %v3950
  %v5329 = vpack.c.b16 %v3953, %v3952
  %v5330 = vpack.c.b16 %v3955, %v3954
  %v5331 = vpack.c.b16 %v3957, %v3956
  %v5332 = vpack.c.b16 %v3959, %v3958
  %v5333 = vpack.c.b16 %v3961, %v3960
  %v5334 = vpack.c.b16 %v3963, %v3962
  %v5335 = vpack.c.b16 %v3965, %v3964
  %v5336 = vpack.c.b16 %v3967, %v3966
  %v5337 = vpack.c.b16 %v3969, %v3968
  %v5338 = vpack.c.b16 %v3971, %v3970
  %v5339 = vpack.c.b16 %v3973, %v3972
  %v5340 = vpack.c.b16 %v3975, %v3974
  %v5341 = vpack.c.b16 %v3977, %v3976
  %v5342 = vpack.c.b16 %v3979, %v3978
  %v5343 = vpack.c.b16 %v3981, %v3980
  %v5344 = vpack.c.b16 %v3983, %v3982
  %v5345 = vpack.c.b16 %v3985, %v3984
  %v5346 = vpack.c.b16 %v3987, %v3986
  %v5347 = vpack.c.b16 %v3989, %v3988
  %v5348 = vpack.c.b16 %v3991, %v3990
  %v5349 = vpack.c.b16 %v3993, %v3992
  %v5350 = vpack.c.b16 %v3995, %v3994
  %v5351 = vpack.c.b16 %v3997, %v3996
  %v5352 = vpack.c.b16 %v3999, %v3998
  %v5353 = vpack.c.b16 %v4001, %v4000
  %v5354 = vpack.c.b16 %v4003, %v4002
  %v5355 = vpack.c.b16 %v4005, %v4004
  %v5356 = vpack.c.b16 %v4007, %v4006
  %v5357 = vpack.c.b16 %v4009, %v4008
  %v5358 = vpack.c.b16 %v4011, %v4010
  %v5359 = vpack.c.b16 %v4013, %v4012
  %v5360 = vpack.c.b16 %v4015, %v4014
  %v5361 = vpack.c.b16 %v4017, %v4016
  %v5362 = vpack.c.b16 %v4019, %v4018
  %v5363 = vpack.c.b16 %v4021, %v4020
  %v5364 = vpack.c.b16 %v4023, %v4022
  %v5365 = vpack.c.b16 %v4025, %v4024
  %v5366 = vpack.c.b16 %v4027, %v4026
  %v5367 = vpack.c.b16 %v4029, %v4028
  %v5368 = vpack.c.b16 %v4031, %v4030
  %v5369 = vpack.c.b16 %v4033, %v4032
  %v5370 = vpack.c.b16 %v4035, %v4034
  %v5371 = vpack.c.b16 %v4037, %v4036
  %v5372 = vpack.c.b16 %v4039, %v4038
  %v5373 = vpack.c.b16 %v4041, %v4040
  %v5374 = vpack.c.b16 %v4043, %v4042
  %v5375 = vpack.c.b16 %v4045, %v4044
  %v5376 = vpack.c.b16 %v4047, %v4046
  %v5377 = vpack.c.b16 %v4049, %v4048
  %v5378 = vpack.c.b16 %v4051, %v4050
  %v5379 = vpack.c.b16 %v4053, %v4052
  %v5380 = vpack.c.b16 %v4055, %v4054
  %v5381 = vpack.c.b16 %v4057, %v4056
  %v5382 = vpack.c.b16 %v4059, %v4058
  %v5383 = vpack.c.b16 %v4061, %v4060
  %v5384 = vpack.c.b16 %v4063, %v4062
  %v5385 = vpack.c.b16 %v4065, %v4064
  %v5386 = vpack.c.b16 %v4067, %v4066
  %v5387 = vpack.c.b16 %v4069, %v4068
  %v5388 = vpack.c.b16 %v4071, %v4070
  %v5389 = vpack.c.b16 %v4073, %v4072
  %v5390 = vpack.c.b16 %v4075, %v4074
  %v5391 = vpack.c.b16 %v4077, %v4076
  %v5392 = vpack.c.b16 %v4079, %v4078
  %v5393 = vpack.c.b16 %v4081, %v4080
  %v5394 = vpack.c.b16 %v4083, %v4082
  %v5395 = vpack.c.b16 %v4085, %v4084
  %v5396 = vpack.c.b16 %v4087, %v4086
  %v5397 = vpack.c.b16 %v4089, %v4088
  %v5398 = vpack.c.b16 %v4091, %v4090
  %v5399 = vpack.c.b16 %v4093, %v4092
  %v5400 = vpack.c.b16 %v4095, %v4094
  %v5401 = vpack.c.b16 %v4097, %v4096
  %v5402 = vpack.c.b16 %v4099, %v4098
  %v5403 = vpack.c.b16 %v4101, %v4100
  %v5404 = vpack.c.b16 %v4103, %v4102
  %v5405 = vpack.c.b16 %v4105, %v4104
  %v5406 = vpack.c.b16 %v4107, %v4106
  %v5407 = vpack.c.b16 %v4109, %v4108
  %v5408 = vpack.c.b16 %v4111, %v4110
  %v5409 = vpack.c.b16 %v4113, %v4112
  %v5410 = vpack.c.b16 %v4115, %v4114
  %v5411 = vpack.c.b16 %v4117, %v4116
  %v5412 = vpack.c.b16 %v4119, %v4118
  %v5413 = vpack.c.b16 %v4121, %v4120
  %v5414 = vpack.c.b16 %v4123, %v4122
  %v5415 = vpack.c.b16 %v4125, %v4124
  %v5416 = vpack.c.b16 %v4127, %v4126
  %v5417 = vpack.c.b16 %v4129, %v4128
  %v5418 = vpack.c.b16 %v4131, %v4130
  %v5419 = vpack.c.b16 %v4133, %v4132
  %v5420 = vpack.c.b16 %v4135, %v4134
  %v5421 = vpack.c.b16 %v4137, %v4136
  %v5422 = vpack.c.b16 %v4139, %v4138
  %v5423 = vpack.c.b16 %v4141, %v4140
  %v5424 = vpack.c.b16 %v4143, %v4142
  %v5425 = vpack.c.b16 %v4145, %v4144
  %v5426 = vpack.c.b16 %v4147, %v4146
  %v5427 = vpack.c.b16 %v4149, %v4148
  %v5428 = vpack.c.b16 %v4151, %v4150
  %v5429 = vpack.c.b16 %v4153, %v4152
  %v5430 = vpack.c.b16 %v4155, %v4154
  %v5431 = vpack.c.b16 %v4157, %v4156
  %v5432 = vpack.c.b16 %v4159, %v4158
  %v5433 = vpack.c.b16 %v4161, %v4160
  %v5434 = vpack.c.b16 %v4163, %v4162
  %v5435 = vpack.c.b16 %v4165, %v4164
  %v5436 = vpack.c.b16 %v4167, %v4166
  %v5437 = vpack.c.b16 %v4169, %v4168
  %v5438 = vpack.c.b16 %v4171, %v4170
  %v5439 = vpack.c.b16 %v4173, %v4172
  %v5440 = vpack.c.b16 %v4175, %v4174
  %v5441 = vpack.c.b16 %v4177, %v4176
  %v5442 = vpack.c.b16 %v4179, %v4178
  %v5443 = vpack.c.b16 %v4181, %v4180
  %v5444 = vpack.c.b16 %v4183, %v4182
  %v5445 = vpack.c.b16 %v4185, %v4184
  %v5446 = vpack.c.b16 %v4187, %v4186
  %v5447 = vpack.c.b16 %v4189, %v4188
  %v5448 = vpack.c.b16 %v4191, %v4190
  %v5449 = vpack.c.b16 %v4193, %v4192
  %v5450 = vpack.c.b16 %v4195, %v4194
  %v5451 = vpack.c.b16 %v4197, %v4196
  %v5452 = vpack.c.b16 %v4199, %v4198
  %v5453 = vpack.c.b16 %v4201, %v4200
  %v5454 = vpack.c.b16 %v4203, %v4202
  %v5455 = vpack.c.b16 %v4205, %v4204
  %v5456 = vpack.c.b16 %v4207, %v4206
  %v5457 = vpack.c.b16 %v4209, %v4208
  %v5458 = vpack.c.b16 %v4211, %v4210
  %v5459 = vpack.c.b16 %v4213, %v4212
  %v5460 = vpack.c.b16 %v4215, %v4214
  %v5461 = vpack.c.b16 %v4217, %v4216
  %v5462 = vpack.c.b16 %v4219, %v4218
  %v5463 = vpack.c.b16 %v4221, %v4220
  %v5464 = vpack.c.b16 %v4223, %v4222
  %v5465 = vpack.c.b16 %v4225, %v4224
  %v5466 = vpack.c.b16 %v4227, %v4226
  %v5467 = vpack.c.b16 %v4229, %v4228
  %v5468 = vpack.c.b16 %v4231, %v4230
  %v5469 = vpack.c.b16 %v4233, %v4232
  %v5470 = vpack.c.b16 %v4235, %v4234
  %v5471 = vpack.c.b16 %v4237, %v4236
  %v5472 = vpack.c.b16 %v4239, %v4238
  %v5473 = vpack.c.b16 %v4241, %v4240
  %v5474 = vpack.c.b16 %v4243, %v4242
  %v5475 = vpack.c.b16 %v4245, %v4244
  %v5476 = vpack.c.b16 %v4247, %v4246
  %v5477 = vpack.c.b16 %v4249, %v4248
  %v5478 = vpack.c.b16 %v4251, %v4250
  %v5479 = vpack.c.b16 %v4253, %v4252
  %v5480 = vpack.c.b16 %v4255, %v4254
  %v5481 = vpack.c.b16 %v4257, %v4256
  %v5482 = vpack.c.b16 %v4259, %v4258
  %v5483 = vpack.c.b16 %v4261, %v4260
  %v5484 = vpack.c.b16 %v4263, %v4262
  %v5485 = vpack.c.b16 %v4265, %v4264
  %v5486 = vpack.c.b16 %v4267, %v4266
  %v5487 = vpack.c.b16 %v4269, %v4268
  %v5488 = vpack.c.b16 %v4271, %v4270
  %v5489 = vpack.c.b16 %v4273, %v4272
  %v5490 = vpack.c.b16 %v4275, %v4274
  %v5491 = vpack.c.b16 %v4277, %v4276
  %v5492 = vpack.c.b16 %v4279, %v4278
  %v5493 = vpack.c.b16 %v4281, %v4280
  %v5494 = vpack.c.b16 %v4283, %v4282
  %v5495 = vpack.c.b16 %v4285, %v4284
  %v5496 = vpack.c.b16 %v4287, %v4286
  %v5497 = vpack.c.b16 %v4289, %v4288
  %v5498 = vpack.c.b16 %v4291, %v4290
  %v5499 = vpack.c.b16 %v4293, %v4292
  %v5500 = vpack.c.b16 %v4295, %v4294
  %v5501 = vpack.c.b16 %v4297, %v4296
  %v5502 = vpack.c.b16 %v4299, %v4298
  %v5503 = vpack.c.b16 %v4301, %v4300
  %v5504 = vpack.c.b16 %v4303, %v4302
  %v5505 = vpack.c.b16 %v4305, %v4304
  %v5506 = vpack.c.b16 %v4307, %v4306
  %v5507 = vpack.c.b16 %v4309, %v4308
  %v5508 = vpack.c.b16 %v4311, %v4310
  %v5509 = vpack.c.b16 %v4313, %v4312
  %v5510 = vpack.c.b16 %v4315, %v4314
  %v5511 = vpack.c.b16 %v4317, %v4316
  %v5512 = vpack.c.b16 %v4319, %v4318
  %v5513 = vpack.c.b16 %v4321, %v4320
  %v5514 = vpack.c.b16 %v4323, %v4322
  %v5515 = vpack.c.b16 %v4325, %v4324
  %v5516 = vpack.c.b16 %v4327, %v4326
  %v5517 = vpack.c.b16 %v4329, %v4328
  %v5518 = vpack.c.b16 %v4331, %v4330
  %v5519 = vpack.c.b16 %v4333, %v4332
  %v5520 = vpack.c.b16 %v4335, %v4334
  %v5521 = vpack.c.b16 %v4337, %v4336
  %v5522 = vpack.c.b16 %v4339, %v4338
  %v5523 = vpack.c.b16 %v4341, %v4340
  %v5524 = vpack.c.b16 %v4343, %v4342
  %v5525 = vpack.c.b16 %v4345, %v4344
  %v5526 = vpack.c.b16 %v4347, %v4346
  %v5527 = vpack.c.b16 %v4349, %v4348
  %v5528 = vpack.c.b16 %v4351, %v4350
  %v5529 = vpack.c.b16 %v4353, %v4352
  %v5530 = vpack.c.b16 %v4355, %v4354
  %v5531 = vpack.c.b16 %v4357, %v4356
  %v5532 = vpack.c.b16 %v4359, %v4358
  %v5533 = vpack.c.b16 %v4361, %v4360
  %v5534 = vpack.c.b16 %v4363, %v4362
  %v5535 = vpack.c.b16 %v4365, %v4364
  %v5536 = vpack.c.b16 %v4367, %v4366
  %v5537 = vpack.c.b16 %v4369, %v4368
  %v5538 = vpack.c.b16 %v4371, %v4370
  %v5539 = vpack.c.b16 %v4373, %v4372
  %v5540 = vpack.c.b16 %v4375, %v4374
  %v5541 = vpack.c.b16 %v4377, %v4376
  %v5542 = vpack.c.b16 %v4379, %v4378
  %v5543 = vpack.c.b16 %v4381, %v4380
  %v5544 = vpack.c.b16 %v4383, %v4382
  %v5545 = vpack.c.b16 %v4385, %v4384
  %v5546 = vpack.c.b16 %v4387, %v4386
  %v5547 = vpack.c.b16 %v4389, %v4388
  %v5548 = vpack.c.b16 %v4391, %v4390
  %v5549 = vpack.c.b16 %v4393, %v4392
  %v5550 = vpack.c.b16 %v4395, %v4394
  %v5551 = vpack.c.b16 %v4397, %v4396
  %v5552 = vpack.c.b16 %v4399, %v4398
  %v5553 = vpack.c.b16 %v4401, %v4400
  %v5554 = vpack.c.b16 %v4403, %v4402
  %v5555 = vpack.c.b16 %v4405, %v4404
  %v5556 = vpack.c.b16 %v4407, %v4406
  %v5557 = vpack.c.b16 %v4409, %v4408
  %v5558 = vpack.c.b16 %v4411, %v4410
  %v5559 = vpack.c.b16 %v4413, %v4412
  %v5560 = vpack.c.b16 %v4415, %v4414
  %v5561 = vpack.c.b16 %v4417, %v4416
  %v5562 = vpack.c.b16 %v4419, %v4418
  %v5563 = vpack.c.b16 %v4421, %v4420
  %v5564 = vpack.c.b16 %v4423, %v4422
  %v5565 = vpack.c.b16 %v4425, %v4424
  %v5566 = vpack.c.b16 %v4427, %v4426
  %v5567 = vpack.c.b16 %v4429, %v4428
  %v5568 = vpack.c.b16 %v4431, %v4430
  %v5569 = vpack.c.b16 %v4433, %v4432
  %v5570 = vpack.c.b16 %v4435, %v4434
  %v5571 = vpack.c.b16 %v4437, %v4436
  %v5572 = vpack.c.b16 %v4439, %v4438
  %v5573 = vpack.c.b16 %v4441, %v4440
  %v5574 = vpack.c.b16 %v4443, %v4442
  %v5575 = vpack.c.b16 %v4445, %v4444
  %v5576 = vpack.c.b16 %v4447, %v4446
  %v5577 = vpack.c.b16 %v4449, %v4448
  %v5578 = vpack.c.b16 %v4451, %v4450
  %v5579 = vpack.c.b16 %v4453, %v4452
  %v5580 = vpack.c.b16 %v4455, %v4454
  %v5581 = vpack.c.b16 %v4457, %v4456
  %v5582 = vpack.c.b16 %v4459, %v4458
  %v5583 = vpack.c.b16 %v4461, %v4460
  %v5584 = vpack.c.b16 %v4463, %v4462
  %v5585 = vpack.c.b16 %v4465, %v4464
  %v5586 = vpack.c.b16 %v4467, %v4466
  %v5587 = vpack.c.b16 %v4469, %v4468
  %v5588 = vpack.c.b16 %v4471, %v4470
  %v5589 = vpack.c.b16 %v4473, %v4472
  %v5590 = vpack.c.b16 %v4475, %v4474
  %v5591 = vpack.c.b16 %v4477, %v4476
  %v5592 = vpack.c.b16 %v4479, %v4478
  %v5593 = vpack.c.b16 %v4481, %v4480
  %v5594 = vpack.c.b16 %v4483, %v4482
  %v5595 = vpack.c.b16 %v4485, %v4484
  %v5596 = vpack.c.b16 %v4487, %v4486
  %v5597 = vpack.c.b16 %v4489, %v4488
  %v5598 = vpack.c.b16 %v4491, %v4490
  %v5599 = vpack.c.b16 %v4493, %v4492
  %v5600 = vpack.c.b16 %v4495, %v4494
  %v5601 = vpack.c.b16 %v4497, %v4496
  %v5602 = vpack.c.b16 %v4499, %v4498
  %v5603 = vpack.c.b16 %v4501, %v4500
  %v5604 = vpack.c.b16 %v4503, %v4502
  %v5605 = vpack.c.b16 %v4505, %v4504
  %v5606 = vpack.c.b16 %v4507, %v4506
  %v5607 = vpack.c.b16 %v4509, %v4508
  %v5608 = vpack.c.b16 %v4511, %v4510
  %v5609 = vpack.c.b16 %v4513, %v4512
  %v5610 = vpack.c.b16 %v4515, %v4514
  %v5611 = vpack.c.b16 %v4517, %v4516
  %v5612 = vpack.c.b16 %v4519, %v4518
  %v5613 = vpack.c.b16 %v4521, %v4520
  %v5614 = vpack.c.b16 %v4523, %v4522
  %v5615 = vpack.c.b16 %v4525, %v4524
  %v5616 = vpack.c.b16 %v4527, %v4526
  %v5617 = vpack.c.b16 %v4529, %v4528
  %v5618 = vpack.c.b16 %v4531, %v4530
  %v5619 = vpack.c.b16 %v4533, %v4532
  %v5620 = vpack.c.b16 %v4535, %v4534
  %v5621 = vpack.c.b16 %v4537, %v4536
  %v5622 = vpack.c.b16 %v4539, %v4538
  %v5623 = vpack.c.b16 %v4541, %v4540
  %v5624 = vpack.c.b16 %v4543, %v4542
  %v5625 = vpack.c.b16 %v4545, %v4544
  %v5626 = vpack.c.b16 %v4547, %v4546
  %v5627 = vpack.c.b16 %v4549, %v4548
  %v5628 = vpack.c.b16 %v4551, %v4550
  %v5629 = vpack.c.b16 %v4553, %v4552
  %v5630 = vpack.c.b16 %v4555, %v4554
  %v5631 = vpack.c.b16 %v4557, %v4556
  %v5632 = vpack.c.b16 %v4559, %v4558
  %v5633 = vpack.c.b16 %v4561, %v4560
  %v5634 = vpack.c.b16 %v4563, %v4562
  %v5635 = vpack.c.b16 %v4565, %v4564
  %v5636 = vpack.c.b16 %v4567, %v4566
  %v5637 = vpack.c.b16 %v4569, %v4568
  %v5638 = vpack.c.b16 %v4571, %v4570
  %v5639 = vpack.c.b16 %v4573, %v4572
  %v5640 = vpack.c.b16 %v4575, %v4574
  %v5641 = vpack.c.b16 %v4577, %v4576
  %v5642 = vpack.c.b16 %v4579, %v4578
  %v5643 = vpack.c.b16 %v4581, %v4580
  %v5644 = vpack.c.b16 %v4583, %v4582
  %v5645 = vpack.c.b16 %v4585, %v4584
  %v5646 = vpack.c.b16 %v4587, %v4586
  %v5647 = vpack.c.b16 %v4589, %v4588
  %v5648 = vpack.c.b16 %v4591, %v4590
  %v5649 = vpack.c.b16 %v4593, %v4592
  %v5650 = vpack.c.b16 %v4595, %v4594
  %v5651 = vpack.c.b16 %v4597, %v4596
  %v5652 = vpack.c.b16 %v4599, %v4598
  %v5653 = vpack.c.b16 %v4601, %v4600
  %v5654 = vpack.c.b16 %v4603, %v4602
  %v5655 = vpack.c.b16 %v4605, %v4604
  %v5656 = vpack.c.b16 %v4607, %v4606
  %v5657 = vpack.c.b16 %v4609, %v4608
  %v5658 = vpack.c.b16 %v4611, %v4610
  %v5659 = vpack.c.b16 %v4613, %v4612
  %v5660 = vpack.c.b16 %v4615, %v4614
  %v5661 = vpack.c.b16 %v4617, %v4616
  %v5662 = vpack.c.b16 %v4619, %v4618
  %v5663 = vpack.c.b16 %v4621, %v4620
  %v5664 = vpack.c.b16 %v4623, %v4622
  %v5665 = vpack.c.b16 %v4625, %v4624
  %v5666 = vpack.c.b16 %v4627, %v4626
  %v5667 = vpack.c.b16 %v4629, %v4628
  %v5668 = vpack.c.b16 %v4631, %v4630
  %v5669 = vpack.c.b16 %v4633, %v4632
  %v5670 = vpack.c.b16 %v4635, %v4634
  %v5671 = vpack.c.b16 %v4637, %v4636
  %v5672 = vpack.c.b16 %v4639, %v4638
  %v5673 = vpack.c.b16 %v4641, %v4640
  %v5674 = vpack.c.b16 %v4643, %v4642
  %v5675 = vpack.c.b16 %v4645, %v4644
  %v5676 = vpack.c.b16 %v4647, %v4646
  %v5677 = vpack.c.b16 %v4649, %v4648
  %v5678 = vpack.c.b16 %v4651, %v4650
  %v5679 = vpack.c.b16 %v4653, %v4652
  %v5680 = vpack.c.b16 %v4655, %v4654
  %v5681 = vpack.c.b16 %v4657, %v4656
  %v5682 = vpack.c.b16 %v4659, %v4658
  %v5683 = vpack.c.b16 %v4661, %v4660
  %v5684 = vpack.c.b16 %v4663, %v4662
  %v5685 = vpack.c.b16 %v4665, %v4664
  %v5686 = vpack.c.b16 %v4667, %v4666
  %v5687 = vpack.c.b16 %v4669, %v4668
  %v5688 = vpack.c.b16 %v4671, %v4670
  %v5689 = vpack.c.b16 %v4673, %v4672
  %v5690 = vpack.c.b16 %v4675, %v4674
  %v5691 = vpack.c.b16 %v4677, %v4676
  %v5692 = vpack.c.b16 %v4679, %v4678
  %v5693 = vpack.c.b16 %v4681, %v4680
  %v5694 = vpack.c.b16 %v4683, %v4682
  %v5695 = vpack.c.b16 %v4685, %v4684
  %v5696 = vpack.c.b16 %v4687, %v4686
  %v5697 = vpack.c.b16 %v4689, %v4688
  %v5698 = vpack.c.b16 %v4691, %v4690
  %v5699 = vpack.c.b16 %v4693, %v4692
  %v5700 = vpack.c.b16 %v4695, %v4694
  %v5701 = vpack.c.b16 %v4697, %v4696
  %v5702 = vpack.c.b16 %v4699, %v4698
  %v5703 = vpack.c.b16 %v4701, %v4700
  %v5704 = vpack.c.b16 %v4703, %v4702
  %v5705 = vpack.c.b16 %v4705, %v4704
  %v5706 = vpack.c.b16 %v4707, %v4706
  %v5707 = vpack.c.b16 %v4709, %v4708
  %v5708 = vpack.c.b16 %v4711, %v4710
  %v5709 = vpack.c.b16 %v4713, %v4712
  %v5710 = vpack.c.b16 %v4715, %v4714
  %v5711 = vpack.c.b16 %v4717, %v4716
  %v5712 = vpack.c.b16 %v4719, %v4718
  %v5713 = vpack.c.b16 %v4721, %v4720
  %v5714 = vpack.c.b16 %v4723, %v4722
  %v5715 = vpack.c.b16 %v4725, %v4724
  %v5716 = vpack.c.b16 %v4727, %v4726
  %v5717 = vpack.c.b16 %v4729, %v4728
  %v5718 = vpack.c.b16 %v4731, %v4730
  %v5719 = vpack.c.b16 %v4733, %v4732
  %v5720 = vpack.c.b16 %v4735, %v4734
  %v5721 = vpack.c.b16 %v4737, %v4736
  %v5722 = vpack.c.b16 %v4739, %v4738
  %v5723 = vpack.c.b16 %v4741, %v4740
  %v5724 = vpack.c.b16 %v4743, %v4742
  %v5725 = vpack.c.b16 %v4745, %v4744
  %v5726 = vpack.c.b16 %v4747, %v4746
  %v5727 = vpack.c.b16 %v4749, %v4748
  %v5728 = vpack.c.b16 %v4751, %v4750
  %v5729 = vpack.c.b16 %v4753, %v4752
  %v5730 = vpack.c.b16 %v4755, %v4754
  %v5731 = vpack.c.b16 %v4757, %v4756
  %v5732 = vpack.c.b16 %v4759, %v4758
  %v5733 = vpack.c.b16 %v4761, %v4760
  %v5734 = vpack.c.b16 %v4763, %v4762
  %v5735 = vpack.c.b16 %v4765, %v4764
  %v5736 = vpack.c.b16 %v4767, %v4766
  %v5737 = vpack.c.b16 %v4769, %v4768
  %v5738 = vpack.c.b16 %v4771, %v4770
  %v5739 = vpack.c.b16 %v4773, %v4772
  %v5740 = vpack.c.b16 %v4775, %v4774
  %v5741 = vpack.c.b16 %v4777, %v4776
  %v5742 = vpack.c.b16 %v4779, %v4778
  %v5743 = vpack.c.b16 %v4781, %v4780
  %v5744 = vpack.c.b16 %v4783, %v4782
  %v5745 = vpack.c.b16 %v4785, %v4784
  %v5746 = vpack.c.b16 %v4787, %v4786
  %v5747 = vpack.c.b16 %v4789, %v4788
  %v5748 = vpack.c.b16 %v4791, %v4790
  %v5749 = vpack.c.b16 %v4793, %v4792
  %v5750 = vpack.c.b16 %v4795, %v4794
  %v5751 = vpack.c.b16 %v4797, %v4796
  %v5752 = vpack.c.b16 %v4799, %v4798
  %v5753 = vpack.c.b16 %v4801, %v4800
  %v5754 = vpack.c.b16 %v4803, %v4802
  %v5755 = vpack.c.b16 %v4805, %v4804
  %v5756 = vpack.c.b16 %v4807, %v4806
  %v5757 = vpack.c.b16 %v4809, %v4808
  %v5758 = vpack.c.b16 %v4811, %v4810
  %v5759 = vpack.c.b16 %v4813, %v4812
  %v5760 = vpack.c.b16 %v4815, %v4814
  %v5761 = vpack.c.b16 %v4817, %v4816
  %v5762 = vpack.c.b16 %v4819, %v4818
  %v5763 = vpack.c.b16 %v4821, %v4820
  %v5764 = vpack.c.b16 %v4823, %v4822
  %v5765 = vpack.c.b16 %v4825, %v4824
  %v5766 = vpack.c.b16 %v4827, %v4826
  %v5767 = vpack.c.b16 %v4829, %v4828
  %v5768 = vpack.c.b16 %v4831, %v4830
  %v5769 = vpack.c.b16 %v4833, %v4832
  %v5770 = vpack.c.b16 %v4835, %v4834
  %v5771 = vpack.c.b16 %v4837, %v4836
  %v5772 = vpack.c.b16 %v4839, %v4838
  %v5773 = vpack.c.b16 %v4841, %v4840
  %v5774 = vpack.c.b16 %v4843, %v4842
  %v5775 = vpack.c.b16 %v4845, %v4844
  %v5776 = vpack.c.b16 %v4847, %v4846
  %v5777 = vpack.c.b16 %v4849, %v4848
  %v5778 = vpack.c.b16 %v4851, %v4850
  %v5779 = vpack.c.b16 %v4853, %v4852
  %v5780 = vpack.c.b16 %v4855, %v4854
  %v5781 = vpack.c.b16 %v4857, %v4856
  %v5782 = vpack.c.b16 %v4859, %v4858
  %v5783 = vpack.c.b16 %v4861, %v4860
  %v5784 = vpack.c.b16 %v4863, %v4862
  %v5785 = vpack.c.b16 %v4865, %v4864
  %v5786 = vpack.c.b16 %v4867, %v4866
  %v5787 = vpack.c.b16 %v4869, %v4868
  %v5788 = vpack.c.b16 %v4871, %v4870
  %v5789 = vpack.c.b16 %v4873, %v4872
  %v5790 = vpack.c.b16 %v4875, %v4874
  %v5791 = vpack.c.b16 %v4877, %v4876
  %v5792 = vpack.c.b16 %v4879, %v4878
  %v5793 = vpack.c.b16 %v4881, %v4880
  %v5794 = vpack.c.b16 %v4883, %v4882
  %v5795 = vpack.c.b16 %v4885, %v4884
  %v5796 = vpack.c.b16 %v4887, %v4886
  %v5797 = vpack.c.b16 %v4889, %v4888
  %v5798 = vpack.c.b16 %v4891, %v4890
  %v5799 = vpack.c.b16 %v4893, %v4892
  %v5800 = vpack.c.b16 %v4895, %v4894
  %v5801 = vpack.c.b16 %v4897, %v4896
  %v5802 = vpack.c.b16 %v4899, %v4898
  %v5803 = vpack.c.b16 %v4901, %v4900
  %v5804 = vpack.c.b16 %v4903, %v4902
  %v5805 = vpack.c.b16 %v4905, %v4904
  %v5806 = vpack.c.b16 %v4907, %v4906
  %v5807 = vpack.c.b16 %v4909, %v4908
  %v5808 = vpack.c.b16 %v4911, %v4910
  %v5809 = vpack.c.b16 %v4913, %v4912
  %v5810 = vpack.c.b16 %v4915, %v4914
  %v5811 = vpack.c.b16 %v4917, %v4916
  %v5812 = vpack.c.b16 %v4919, %v4918
  %v5813 = vpack.c.b16 %v4921, %v4920
  %v5814 = vpack.c.b16 %v4923, %v4922
  %v5815 = vpack.c.b16 %v4925, %v4924
  %v5816 = vpack.c.b16 %v4927, %v4926
  %v5817 = vpack.c.b16 %v4929, %v4928
  %v5818 = vpack.c.b16 %v4931, %v4930
  %v5819 = vpack.c.b16 %v4933, %v4932
  %v5820 = vpack.c.b16 %v4935, %v4934
  %v5821 = vpack.c.b16 %v4937, %v4936
  %v5822 = vpack.c.b16 %v4939, %v4938
  %v5823 = vpack.c.b16 %v4941, %v4940
  %v5824 = vpack.c.b16 %v4943, %v4942
  %v5825 = vpack.c.b16 %v4945, %v4944
  %v5826 = vpack.c.b16 %v4947, %v4946
  %v5827 = vpack.c.b16 %v4949, %v4948
  %v5828 = vpack.c.b16 %v4951, %v4950
  %v5829 = vpack.c.b16 %v4953, %v4952
  %v5830 = vpack.c.b16 %v4955, %v4954
  %v5831 = vpack.c.b16 %v4957, %v4956
  %v5832 = vpack.c.b16 %v4959, %v4958
  %v5833 = vpack.c.b16 %v4961, %v4960
  %v5834 = vpack.c.b16 %v4963, %v4962
  %v5835 = vpack.c.b16 %v4965, %v4964
  %v5836 = vpack.c.b16 %v4967, %v4966
  %v5837 = vpack.c.b16 %v4969, %v4968
  %v5838 = vpack.c.b16 %v4971, %v4970
  %v5839 = vpack.c.b16 %v4973, %v4972
  %v5840 = vpack.c.b16 %v4975, %v4974
  %v5841 = vpack.c.b16 %v4977, %v4976
  %v5842 = vpack.c.b16 %v4979, %v4978
  %v5843 = vpack.c.b16 %v4981, %v4980
  %v5844 = vpack.c.b16 %v4983, %v4982
  %v5845 = vpack.c.b16 %v4985, %v4984
  %v5846 = vpack.c.b16 %v4987, %v4986
  %v5847 = vpack.c.b16 %v4989, %v4988
  %v5848 = vpack.c.b16 %v4991, %v4990
  %v5849 = vpack.c.b16 %v4993, %v4992
  %v5850 = vpack.c.b16 %v4995, %v4994
  %v5851 = vpack.c.b16 %v4997, %v4996
  %v5852 = vpack.c.b16 %v4999, %v4998
  %v5853 = vpack.c.b16 %v5001, %v5000
  %v5854 = vpack.c.b16 %v5003, %v5002
  %v5855 = vpack.c.b16 %v5005, %v5004
  %v5856 = vpack.c.b16 %v5007, %v5006
  %v5857 = vpack.c.b16 %v5009, %v5008
  %v5858 = vpack.c.b16 %v5011, %v5010
  %v5859 = vpack.c.b16 %v5013, %v5012
  %v5860 = vpack.c.b16 %v5015, %v5014
  %v5861 = vpack.c.b16 %v5017, %v5016
  %v5862 = vpack.c.b16 %v5019, %v5018
  %v5863 = vpack.c.b16 %v5021, %v5020
  %v5864 = vpack.c.b16 %v5023, %v5022
  %v5865 = vpack.c.b16 %v5025, %v5024
  %v5866 = vpack.c.b16 %v5027, %v5026
  %v5867 = vpack.c.b16 %v5029, %v5028
  %v5868 = vpack.c.b16 %v5031, %v5030
  %v5869 = vpack.c.b16 %v5033, %v5032
  %v5870 = vpack.c.b16 %v5035, %v5034
  %v5871 = vpack.c.b16 %v5037, %v5036
  %v5872 = vpack.c.b16 %v5039, %v5038
  %v5873 = vpack.c.b16 %v5041, %v5040
  %v5874 = vpack.c.b16 %v5043, %v5042
  %v5875 = vpack.c.b16 %v5045, %v5044
  %v5876 = vpack.c.b16 %v5047, %v5046
  %v5877 = vpack.c.b16 %v5049, %v5048
  %v5878 = vpack.c.b16 %v5051, %v5050
  %v5879 = vpack.c.b16 %v5053, %v5052
  %v5880 = vpack.c.b16 %v5055, %v5054
  %v5881 = vpack.c.b16 %v5057, %v5056
  %v5882 = vpack.c.b16 %v5059, %v5058
  %v5883 = vpack.c.b16 %v5061, %v5060
  %v5884 = vpack.c.b16 %v5063, %v5062
  %v5885 = vpack.c.b16 %v5065, %v5064
  %v5886 = vpack.c.b16 %v5067, %v5066
  %v5887 = vpack.c.b16 %v5069, %v5068
  %v5888 = vpack.c.b16 %v5071, %v5070
  %v5889 = vpack.c.b16 %v5073, %v5072
  %v5890 = vpack.c.b16 %v5075, %v5074
  %v5891 = vpack.c.b16 %v5077, %v5076
  %v5892 = vpack.c.b16 %v5079, %v5078
  %v5893 = vpack.c.b16 %v5081, %v5080
  %v5894 = vpack.c.b16 %v5083, %v5082
  %v5895 = vpack.c.b16 %v5085, %v5084
  %v5896 = vpack.c.b16 %v5087, %v5086
  %v5897 = vpack.c.b16 %v5089, %v5088
  %v5898 = vpack.c.b16 %v5091, %v5090
  %v5899 = vpack.c.b16 %v5093, %v5092
  %v5900 = vpack.c.b16 %v5095, %v5094
  %v5901 = vpack.c.b16 %v5097, %v5096
  %v5902 = vpack.c.b16 %v5099, %v5098
  %v5903 = vpack.c.b16 %v5101, %v5100
  %v5904 = vpack.c.b16 %v5103, %v5102
  %v5905 = vpack.c.b16 %v5105, %v5104
  %v5906 = vpack.c.b16 %v5107, %v5106
  %v5907 = vpack.c.b16 %v5109, %v5108
  %v5908 = vpack.c.b16 %v5111, %v5110
  %v5909 = vpack.c.b16 %v5113, %v5112
  %v5910 = vpack.c.b16 %v5115, %v5114
  %v5911 = vpack.c.b16 %v5117, %v5116
  %v5912 = vpack.c.b16 %v5119, %v5118
  %v5913 = vpack.c.b16 %v5121, %v5120
  %v5914 = vpack.c.b16 %v5123, %v5122
  %v5915 = vpack.c.b16 %v5125, %v5124
  %v5916 = vpack.c.b16 %v5127, %v5126
  %v5917 = vpack.c.b16 %v5129, %v5128
  %v5918 = vpack.c.b16 %v5131, %v5130
  %v5919 = vpack.c.b16 %v5133, %v5132
  %v5920 = vpack.c.b16 %v5135, %v5134
  %v5921 = vpack.c.b16 %v5137, %v5136
  %v5922 = vpack.c.b16 %v5139, %v5138
  %v5923 = vpack.c.b16 %v5141, %v5140
  %v5924 = vpack.c.b16 %v5143, %v5142
  %v5925 = vpack.c.b16 %v5145, %v5144
  %v5926 = vpack.c.b16 %v5147, %v5146
  %v5927 = vpack.c.b16 %v5149, %v5148
  %v5928 = vpack.c.b16 %v5151, %v5150
  %v5929 = vpack.c.b16 %v5153, %v5152
  %v5930 = vpack.c.b16 %v5155, %v5154
  %v5931 = vpack.c.b16 %v5157, %v5156
  %v5932 = vpack.c.b16 %v5159, %v5158
  %v5933 = vpack.c.b16 %v5161, %v5160
  %v5934 = vpack.c.b16 %v5163, %v5162
  %v5935 = vpack.c.b16 %v5165, %v5164
  %v5936 = vpack.c.b16 %v5167, %v5166
  %v5937 = vpack.c.b16 %v5169, %v5168
  %v5938 = vpack.c.b16 %v5171, %v5170
  %v5939 = vpack.c.b16 %v5173, %v5172
  %v5940 = vpack.c.b16 %v5175, %v5174
  %v5941 = vpack.c.b16 %v5177, %v5176
  %v5942 = vpack.c.b16 %v5179, %v5178
  %v5943 = vpack.c.b16 %v5181, %v5180
  %v5944 = vpack.c.b16 %v5183, %v5182
  %v5945 = vpack.c.b16 %v5185, %v5184
  %v5946 = vpack.c.b16 %v5187, %v5186
  %v5947 = vpack.c.b16 %v5189, %v5188
  %v5948 = vpack.c.b16 %v5191, %v5190
  %v5949 = vpack.c.b16 %v5193, %v5192
  %v5950 = vpack.c.b16 %v5195, %v5194
  %v5951 = vpack.c.b16 %v5197, %v5196
  %v5952 = vpack.c.b16 %v5199, %v5198
  %v5953 = vpack.c.b16 %v5201, %v5200
  %v5954 = vpack.c.b16 %v5203, %v5202
  %v5955 = vpack.c.b16 %v5205, %v5204
  %v5956 = vpack.c.b16 %v5207, %v5206
  %v5957 = vpack.c.b16 %v5209, %v5208
  %v5958 = vpack.c.b16 %v5211, %v5210
  %v5959 = vpack.c.b16 %v5213, %v5212
  %v5960 = vpack.c.b16 %v5215, %v5214
  %v5961 = vpack.c.b16 %v5217, %v5216
  %v5962 = vpack.c.b16 %v5219, %v5218
  %v5963 = vpack.c.b16 %v5221, %v5220
  %v5964 = vpack.c.b16 %v5223, %v5222
  %v5965 = vpack.c.b16 %v5225, %v5224
  %v5966 = vpack.c.b16 %v5227, %v5226
  %v5967 = vpack.c.b16 %v5229, %v5228
  %v5968 = vpack.c.b16 %v5231, %v5230
  %v5969 = vpack.c.b16 %v5233, %v5232
  %v5970 = vpack.c.b16 %v5235, %v5234
  %v5971 = vpack.c.b16 %v5237, %v5236
  %v5972 = vpack.c.b16 %v5239, %v5238
  %v5973 = vpack.c.b16 %v5241, %v5240
  %v5974 = vpack.c.b16 %v5243, %v5242
  %v5975 = vpack.c.b16 %v5245, %v5244
  %v5976 = vpack.c.b16 %v5247, %v5246
  %v5977 = vpack.c.b16 %v5249, %v5248
  %v5978 = vpack.c.b16 %v5251, %v5250
  %v5979 = vpack.c.b16 %v5253, %v5252
  %v5980 = vpack.c.b16 %v5255, %v5254
  %v5981 = vpack.c.b16 %v5257, %v5256
  %v5982 = vpack.c.b16 %v5259, %v5258
  %v5983 = vpack.c.b16 %v5261, %v5260
  %v5984 = vpack.c.b16 %v5263, %v5262
  %v5985 = vpack.c.b16 %v5265, %v5264
  %v5986 = vpack.c.b16 %v5267, %v5266
  %v5987 = vpack.c.b16 %v5269, %v5268
  %v5988 = vpack.c.b16 %v5271, %v5270
  %v5989 = vpack.c.b16 %v5273, %v5272
  %v5990 = vpack.c.b16 %v5275, %v5274
  %v5991 = vpack.c.b16 %v5277, %v5276
  %v5992 = vpack.c.b16 %v5279, %v5278
  %v5993 = vpack.c.b16 %v5281, %v5280
  %v5994 = vpack.c.b16 %v5283, %v5282
  %v5995 = vpack.c.b16 %v5285, %v5284
  %v5996 = vpack.c.b16 %v5287, %v5286
  %v5997 = vpack.c.b16 %v5289, %v5288
  %v5998 = vpack.c.b16 %v5291, %v5290
  %v5999 = vpack.c.b16 %v5293, %v5292
  %v6000 = vpack.c.b16 %v5295, %v5294
  %v6001 = vpack.c.b16 %v5297, %v5296
  %6706 = vmatprep.subr.bf16.mxu0 0
  %6707 = vmatpush1.bf16.msra.mxu0 %v5305
  %6708 = vmatprep.subr.bf16.mxu0 0
  %6709 = vmatpush1.bf16.msra.mxu0 %v5304
  %6710 = vmatprep.subr.bf16.mxu0 0
  %6711 = vmatpush1.bf16.msra.mxu0 %v5303
  %6712 = vmatprep.subr.bf16.mxu0 0
  %6713 = vmatpush1.bf16.msra.mxu0 %v5302
  %6714 = vmatprep.subr.bf16.mxu0 0
  %6715 = vmatpush1.bf16.msra.mxu0 %v5301
  %6716 = vmatprep.subr.bf16.mxu0 0
  %6717 = vmatpush1.bf16.msra.mxu0 %v5300
  %6718 = vmatprep.subr.bf16.mxu0 0
  %6719 = vmatpush1.bf16.msra.mxu0 %v5299
  %6720 = vmatprep.subr.bf16.mxu0 0
  %6721 = vmatpush1.bf16.msra.mxu0 %v5298
  %6722 = vmatprep.subr.bf16.mxu0 0
  %6723 = vmatpush2.bf16.msra.mxu0 %v5313
  %6724 = vmatprep.subr.bf16.mxu0 0
  %6725 = vmatpush2.bf16.msra.mxu0 %v5312
  %6726 = vmatprep.subr.bf16.mxu0 0
  %6727 = vmatpush2.bf16.msra.mxu0 %v5311
  %6728 = vmatprep.subr.bf16.mxu0 0
  %6729 = vmatpush2.bf16.msra.mxu0 %v5310
  %6730 = vmatprep.subr.bf16.mxu0 0
  %6731 = vmatpush2.bf16.msra.mxu0 %v5309
  %6732 = vmatprep.subr.bf16.mxu0 0
  %6733 = vmatpush2.bf16.msra.mxu0 %v5308
  %6734 = vmatprep.subr.bf16.mxu0 0
  %6735 = vmatpush2.bf16.msra.mxu0 %v5307
  %6736 = vmatprep.subr.bf16.mxu0 0
  %6737 = vmatpush2.bf16.msra.mxu0 %v5306
  %6738 = vmatprep.mubr.bf16.mxu0 %v2131
  %6739 = vmatmul.mubr.bf16.gmra.mxu0 %v2130
  %v6740 = vpop.f32.mrf.mxu0
  %v6741 = vadd.f32 0.0, %v6740
  %v6742 = vpop.f32.mrf.mxu0
  %v6743 = vpop.f32.mrf.mxu0
  %v6744 = vadd.f32 0.0, %v6743
  %v6745 = vpop.f32.mrf.mxu0
  %6746 = vmatprep.mubr.bf16.mxu0 %v2219
  %6747 = vmatmul.mubr.bf16.gmra.mxu0 %v2218
  %v6748 = vpop.f32.mrf.mxu0
  %v6749 = vadd.f32 0.0, %v6748
  %v6750 = vpop.f32.mrf.mxu0
  %v6751 = vpop.f32.mrf.mxu0
  %v6752 = vadd.f32 0.0, %v6751
  %v6753 = vpop.f32.mrf.mxu0
  %6754 = vdwg.mxu0
  %6755 = vmatprep.subr.bf16.mxu0 0
  %6756 = vmatpush1.bf16.msra.mxu0 %v5321
  %6757 = vmatprep.subr.bf16.mxu0 0
  %6758 = vmatpush1.bf16.msra.mxu0 %v5320
  %6759 = vmatprep.subr.bf16.mxu0 0
  %6760 = vmatpush1.bf16.msra.mxu0 %v5319
  %6761 = vmatprep.subr.bf16.mxu0 0
  %6762 = vmatpush1.bf16.msra.mxu0 %v5318
  %6763 = vmatprep.subr.bf16.mxu0 0
  %6764 = vmatpush1.bf16.msra.mxu0 %v5317
  %6765 = vmatprep.subr.bf16.mxu0 0
  %6766 = vmatpush1.bf16.msra.mxu0 %v5316
  %6767 = vmatprep.subr.bf16.mxu0 0
  %6768 = vmatpush1.bf16.msra.mxu0 %v5315
  %6769 = vmatprep.subr.bf16.mxu0 0
  %6770 = vmatpush1.bf16.msra.mxu0 %v5314
  %6771 = vmatprep.subr.bf16.mxu0 0
  %6772 = vmatpush2.bf16.msra.mxu0 %v5329
  %6773 = vmatprep.subr.bf16.mxu0 0
  %6774 = vmatpush2.bf16.msra.mxu0 %v5328
  %6775 = vmatprep.subr.bf16.mxu0 0
  %6776 = vmatpush2.bf16.msra.mxu0 %v5327
  %6777 = vmatprep.subr.bf16.mxu0 0
  %6778 = vmatpush2.bf16.msra.mxu0 %v5326
  %6779 = vmatprep.subr.bf16.mxu0 0
  %6780 = vmatpush2.bf16.msra.mxu0 %v5325
  %6781 = vmatprep.subr.bf16.mxu0 0
  %6782 = vmatpush2.bf16.msra.mxu0 %v5324
  %6783 = vmatprep.subr.bf16.mxu0 0
  %6784 = vmatpush2.bf16.msra.mxu0 %v5323
  %6785 = vmatprep.subr.bf16.mxu0 0
  %6786 = vmatpush2.bf16.msra.mxu0 %v5322
  %6787 = vmatprep.mubr.bf16.mxu0 %v2133
  %6788 = vmatmul.mubr.bf16.gmra.mxu0 %v2132
  %v6789 = vpop.f32.mrf.mxu0
  %v6790 = vadd.f32 %v6741, %v6789
  %v6791 = vpop.f32.mrf.mxu0
  %v6792 = vpop.f32.mrf.mxu0
  %v6793 = vadd.f32 %v6744, %v6792
  %v6794 = vpop.f32.mrf.mxu0
  %6795 = vmatprep.mubr.bf16.mxu0 %v2221
  %6796 = vmatmul.mubr.bf16.gmra.mxu0 %v2220
  %v6797 = vpop.f32.mrf.mxu0
  %v6798 = vadd.f32 %v6749, %v6797
  %v6799 = vpop.f32.mrf.mxu0
  %v6800 = vpop.f32.mrf.mxu0
  %v6801 = vadd.f32 %v6752, %v6800
  %v6802 = vpop.f32.mrf.mxu0
  %6803 = vdwg.mxu0
  %6804 = vmatprep.subr.bf16.mxu0 0
  %6805 = vmatpush1.bf16.msra.mxu0 %v5337
  %6806 = vmatprep.subr.bf16.mxu0 0
  %6807 = vmatpush1.bf16.msra.mxu0 %v5336
  %6808 = vmatprep.subr.bf16.mxu0 0
  %6809 = vmatpush1.bf16.msra.mxu0 %v5335
  %6810 = vmatprep.subr.bf16.mxu0 0
  %6811 = vmatpush1.bf16.msra.mxu0 %v5334
  %6812 = vmatprep.subr.bf16.mxu0 0
  %6813 = vmatpush1.bf16.msra.mxu0 %v5333
  %6814 = vmatprep.subr.bf16.mxu0 0
  %6815 = vmatpush1.bf16.msra.mxu0 %v5332
  %6816 = vmatprep.subr.bf16.mxu0 0
  %6817 = vmatpush1.bf16.msra.mxu0 %v5331
  %6818 = vmatprep.subr.bf16.mxu0 0
  %6819 = vmatpush1.bf16.msra.mxu0 %v5330
  %6820 = vmatprep.subr.bf16.mxu0 0
  %6821 = vmatpush2.bf16.msra.mxu0 %v5345
  %6822 = vmatprep.subr.bf16.mxu0 0
  %6823 = vmatpush2.bf16.msra.mxu0 %v5344
  %6824 = vmatprep.subr.bf16.mxu0 0
  %6825 = vmatpush2.bf16.msra.mxu0 %v5343
  %6826 = vmatprep.subr.bf16.mxu0 0
  %6827 = vmatpush2.bf16.msra.mxu0 %v5342
  %6828 = vmatprep.subr.bf16.mxu0 0
  %6829 = vmatpush2.bf16.msra.mxu0 %v5341
  %6830 = vmatprep.subr.bf16.mxu0 0
  %6831 = vmatpush2.bf16.msra.mxu0 %v5340
  %6832 = vmatprep.subr.bf16.mxu0 0
  %6833 = vmatpush2.bf16.msra.mxu0 %v5339
  %6834 = vmatprep.subr.bf16.mxu0 0
  %6835 = vmatpush2.bf16.msra.mxu0 %v5338
  %6836 = vmatprep.mubr.bf16.mxu0 %v2135
  %6837 = vmatmul.mubr.bf16.gmra.mxu0 %v2134
  %v6838 = vpop.f32.mrf.mxu0
  %v6839 = vadd.f32 %v6790, %v6838
  %v6840 = vpop.f32.mrf.mxu0
  %v6841 = vpop.f32.mrf.mxu0
  %v6842 = vadd.f32 %v6793, %v6841
  %v6843 = vpop.f32.mrf.mxu0
  %6844 = vmatprep.mubr.bf16.mxu0 %v2223
  %6845 = vmatmul.mubr.bf16.gmra.mxu0 %v2222
  %v6846 = vpop.f32.mrf.mxu0
  %v6847 = vadd.f32 %v6798, %v6846
  %v6848 = vpop.f32.mrf.mxu0
  %v6849 = vpop.f32.mrf.mxu0
  %v6850 = vadd.f32 %v6801, %v6849
  %v6851 = vpop.f32.mrf.mxu0
  %6852 = vdwg.mxu0
  %6853 = vmatprep.subr.bf16.mxu0 0
  %6854 = vmatpush1.bf16.msra.mxu0 %v5353
  %6855 = vmatprep.subr.bf16.mxu0 0
  %6856 = vmatpush1.bf16.msra.mxu0 %v5352
  %6857 = vmatprep.subr.bf16.mxu0 0
  %6858 = vmatpush1.bf16.msra.mxu0 %v5351
  %6859 = vmatprep.subr.bf16.mxu0 0
  %6860 = vmatpush1.bf16.msra.mxu0 %v5350
  %6861 = vmatprep.subr.bf16.mxu0 0
  %6862 = vmatpush1.bf16.msra.mxu0 %v5349
  %6863 = vmatprep.subr.bf16.mxu0 0
  %6864 = vmatpush1.bf16.msra.mxu0 %v5348
  %6865 = vmatprep.subr.bf16.mxu0 0
  %6866 = vmatpush1.bf16.msra.mxu0 %v5347
  %6867 = vmatprep.subr.bf16.mxu0 0
  %6868 = vmatpush1.bf16.msra.mxu0 %v5346
  %6869 = vmatprep.subr.bf16.mxu0 0
  %6870 = vmatpush2.bf16.msra.mxu0 %v5361
  %6871 = vmatprep.subr.bf16.mxu0 0
  %6872 = vmatpush2.bf16.msra.mxu0 %v5360
  %6873 = vmatprep.subr.bf16.mxu0 0
  %6874 = vmatpush2.bf16.msra.mxu0 %v5359
  %6875 = vmatprep.subr.bf16.mxu0 0
  %6876 = vmatpush2.bf16.msra.mxu0 %v5358
  %6877 = vmatprep.subr.bf16.mxu0 0
  %6878 = vmatpush2.bf16.msra.mxu0 %v5357
  %6879 = vmatprep.subr.bf16.mxu0 0
  %6880 = vmatpush2.bf16.msra.mxu0 %v5356
  %6881 = vmatprep.subr.bf16.mxu0 0
  %6882 = vmatpush2.bf16.msra.mxu0 %v5355
  %6883 = vmatprep.subr.bf16.mxu0 0
  %6884 = vmatpush2.bf16.msra.mxu0 %v5354
  %6885 = vmatprep.mubr.bf16.mxu0 %v2137
  %6886 = vmatmul.mubr.bf16.gmra.mxu0 %v2136
  %v6887 = vpop.f32.mrf.mxu0
  %v6888 = vadd.f32 %v6839, %v6887
  %v6889 = vpop.f32.mrf.mxu0
  %v6890 = vpop.f32.mrf.mxu0
  %v6891 = vadd.f32 %v6842, %v6890
  %v6892 = vpop.f32.mrf.mxu0
  %6893 = vmatprep.mubr.bf16.mxu0 %v2225
  %6894 = vmatmul.mubr.bf16.gmra.mxu0 %v2224
  %v6895 = vpop.f32.mrf.mxu0
  %v6896 = vadd.f32 %v6847, %v6895
  %v6897 = vpop.f32.mrf.mxu0
  %v6898 = vpop.f32.mrf.mxu0
  %v6899 = vadd.f32 %v6850, %v6898
  %v6900 = vpop.f32.mrf.mxu0
  %6901 = vdwg.mxu0
  %6902 = vmatprep.subr.bf16.mxu0 0
  %6903 = vmatpush1.bf16.msra.mxu0 %v5369
  %6904 = vmatprep.subr.bf16.mxu0 0
  %6905 = vmatpush1.bf16.msra.mxu0 %v5368
  %6906 = vmatprep.subr.bf16.mxu0 0
  %6907 = vmatpush1.bf16.msra.mxu0 %v5367
  %6908 = vmatprep.subr.bf16.mxu0 0
  %6909 = vmatpush1.bf16.msra.mxu0 %v5366
  %6910 = vmatprep.subr.bf16.mxu0 0
  %6911 = vmatpush1.bf16.msra.mxu0 %v5365
  %6912 = vmatprep.subr.bf16.mxu0 0
  %6913 = vmatpush1.bf16.msra.mxu0 %v5364
  %6914 = vmatprep.subr.bf16.mxu0 0
  %6915 = vmatpush1.bf16.msra.mxu0 %v5363
  %6916 = vmatprep.subr.bf16.mxu0 0
  %6917 = vmatpush1.bf16.msra.mxu0 %v5362
  %6918 = vmatprep.subr.bf16.mxu0 0
  %6919 = vmatpush2.bf16.msra.mxu0 %v5377
  %6920 = vmatprep.subr.bf16.mxu0 0
  %6921 = vmatpush2.bf16.msra.mxu0 %v5376
  %6922 = vmatprep.subr.bf16.mxu0 0
  %6923 = vmatpush2.bf16.msra.mxu0 %v5375
  %6924 = vmatprep.subr.bf16.mxu0 0
  %6925 = vmatpush2.bf16.msra.mxu0 %v5374
  %6926 = vmatprep.subr.bf16.mxu0 0
  %6927 = vmatpush2.bf16.msra.mxu0 %v5373
  %6928 = vmatprep.subr.bf16.mxu0 0
  %6929 = vmatpush2.bf16.msra.mxu0 %v5372
  %6930 = vmatprep.subr.bf16.mxu0 0
  %6931 = vmatpush2.bf16.msra.mxu0 %v5371
  %6932 = vmatprep.subr.bf16.mxu0 0
  %6933 = vmatpush2.bf16.msra.mxu0 %v5370
  %6934 = vmatprep.mubr.bf16.mxu0 %v2139
  %6935 = vmatmul.mubr.bf16.gmra.mxu0 %v2138
  %v6936 = vpop.f32.mrf.mxu0
  %v6937 = vadd.f32 %v6888, %v6936
  %v6938 = vpop.f32.mrf.mxu0
  %v6939 = vpop.f32.mrf.mxu0
  %v6940 = vadd.f32 %v6891, %v6939
  %v6941 = vpop.f32.mrf.mxu0
  %6942 = vmatprep.mubr.bf16.mxu0 %v2227
  %6943 = vmatmul.mubr.bf16.gmra.mxu0 %v2226
  %v6944 = vpop.f32.mrf.mxu0
  %v6945 = vadd.f32 %v6896, %v6944
  %v6946 = vpop.f32.mrf.mxu0
  %v6947 = vpop.f32.mrf.mxu0
  %v6948 = vadd.f32 %v6899, %v6947
  %v6949 = vpop.f32.mrf.mxu0
  %6950 = vdwg.mxu0
  %6951 = vmatprep.subr.bf16.mxu0 0
  %6952 = vmatpush1.bf16.msra.mxu0 %v5385
  %6953 = vmatprep.subr.bf16.mxu0 0
  %6954 = vmatpush1.bf16.msra.mxu0 %v5384
  %6955 = vmatprep.subr.bf16.mxu0 0
  %6956 = vmatpush1.bf16.msra.mxu0 %v5383
  %6957 = vmatprep.subr.bf16.mxu0 0
  %6958 = vmatpush1.bf16.msra.mxu0 %v5382
  %6959 = vmatprep.subr.bf16.mxu0 0
  %6960 = vmatpush1.bf16.msra.mxu0 %v5381
  %6961 = vmatprep.subr.bf16.mxu0 0
  %6962 = vmatpush1.bf16.msra.mxu0 %v5380
  %6963 = vmatprep.subr.bf16.mxu0 0
  %6964 = vmatpush1.bf16.msra.mxu0 %v5379
  %6965 = vmatprep.subr.bf16.mxu0 0
  %6966 = vmatpush1.bf16.msra.mxu0 %v5378
  %6967 = vmatprep.subr.bf16.mxu0 0
  %6968 = vmatpush2.bf16.msra.mxu0 %v5393
  %6969 = vmatprep.subr.bf16.mxu0 0
  %6970 = vmatpush2.bf16.msra.mxu0 %v5392
  %6971 = vmatprep.subr.bf16.mxu0 0
  %6972 = vmatpush2.bf16.msra.mxu0 %v5391
  %6973 = vmatprep.subr.bf16.mxu0 0
  %6974 = vmatpush2.bf16.msra.mxu0 %v5390
  %6975 = vmatprep.subr.bf16.mxu0 0
  %6976 = vmatpush2.bf16.msra.mxu0 %v5389
  %6977 = vmatprep.subr.bf16.mxu0 0
  %6978 = vmatpush2.bf16.msra.mxu0 %v5388
  %6979 = vmatprep.subr.bf16.mxu0 0
  %6980 = vmatpush2.bf16.msra.mxu0 %v5387
  %6981 = vmatprep.subr.bf16.mxu0 0
  %6982 = vmatpush2.bf16.msra.mxu0 %v5386
  %6983 = vmatprep.mubr.bf16.mxu0 %v2141
  %6984 = vmatmul.mubr.bf16.gmra.mxu0 %v2140
  %v6985 = vpop.f32.mrf.mxu0
  %v6986 = vadd.f32 %v6937, %v6985
  %v6987 = vpop.f32.mrf.mxu0
  %v6988 = vpop.f32.mrf.mxu0
  %v6989 = vadd.f32 %v6940, %v6988
  %v6990 = vpop.f32.mrf.mxu0
  %6991 = vmatprep.mubr.bf16.mxu0 %v2229
  %6992 = vmatmul.mubr.bf16.gmra.mxu0 %v2228
  %v6993 = vpop.f32.mrf.mxu0
  %v6994 = vadd.f32 %v6945, %v6993
  %v6995 = vpop.f32.mrf.mxu0
  %v6996 = vpop.f32.mrf.mxu0
  %v6997 = vadd.f32 %v6948, %v6996
  %v6998 = vpop.f32.mrf.mxu0
  %6999 = vdwg.mxu0
  %7000 = vmatprep.subr.bf16.mxu0 0
  %7001 = vmatpush1.bf16.msra.mxu0 %v5401
  %7002 = vmatprep.subr.bf16.mxu0 0
  %7003 = vmatpush1.bf16.msra.mxu0 %v5400
  %7004 = vmatprep.subr.bf16.mxu0 0
  %7005 = vmatpush1.bf16.msra.mxu0 %v5399
  %7006 = vmatprep.subr.bf16.mxu0 0
  %7007 = vmatpush1.bf16.msra.mxu0 %v5398
  %7008 = vmatprep.subr.bf16.mxu0 0
  %7009 = vmatpush1.bf16.msra.mxu0 %v5397
  %7010 = vmatprep.subr.bf16.mxu0 0
  %7011 = vmatpush1.bf16.msra.mxu0 %v5396
  %7012 = vmatprep.subr.bf16.mxu0 0
  %7013 = vmatpush1.bf16.msra.mxu0 %v5395
  %7014 = vmatprep.subr.bf16.mxu0 0
  %7015 = vmatpush1.bf16.msra.mxu0 %v5394
  %7016 = vmatprep.subr.bf16.mxu0 0
  %7017 = vmatpush2.bf16.msra.mxu0 %v5409
  %7018 = vmatprep.subr.bf16.mxu0 0
  %7019 = vmatpush2.bf16.msra.mxu0 %v5408
  %7020 = vmatprep.subr.bf16.mxu0 0
  %7021 = vmatpush2.bf16.msra.mxu0 %v5407
  %7022 = vmatprep.subr.bf16.mxu0 0
  %7023 = vmatpush2.bf16.msra.mxu0 %v5406
  %7024 = vmatprep.subr.bf16.mxu0 0
  %7025 = vmatpush2.bf16.msra.mxu0 %v5405
  %7026 = vmatprep.subr.bf16.mxu0 0
  %7027 = vmatpush2.bf16.msra.mxu0 %v5404
  %7028 = vmatprep.subr.bf16.mxu0 0
  %7029 = vmatpush2.bf16.msra.mxu0 %v5403
  %7030 = vmatprep.subr.bf16.mxu0 0
  %7031 = vmatpush2.bf16.msra.mxu0 %v5402
  %7032 = vmatprep.mubr.bf16.mxu0 %v2143
  %7033 = vmatmul.mubr.bf16.gmra.mxu0 %v2142
  %v7034 = vpop.f32.mrf.mxu0
  %v7035 = vadd.f32 %v6986, %v7034
  %v7036 = vpop.f32.mrf.mxu0
  %v7037 = vpop.f32.mrf.mxu0
  %v7038 = vadd.f32 %v6989, %v7037
  %v7039 = vpop.f32.mrf.mxu0
  %7040 = vmatprep.mubr.bf16.mxu0 %v2231
  %7041 = vmatmul.mubr.bf16.gmra.mxu0 %v2230
  %v7042 = vpop.f32.mrf.mxu0
  %v7043 = vadd.f32 %v6994, %v7042
  %v7044 = vpop.f32.mrf.mxu0
  %v7045 = vpop.f32.mrf.mxu0
  %v7046 = vadd.f32 %v6997, %v7045
  %v7047 = vpop.f32.mrf.mxu0
  %7048 = vdwg.mxu0
  %7049 = vmatprep.subr.bf16.mxu0 0
  %7050 = vmatpush1.bf16.msra.mxu0 %v5417
  %7051 = vmatprep.subr.bf16.mxu0 0
  %7052 = vmatpush1.bf16.msra.mxu0 %v5416
  %7053 = vmatprep.subr.bf16.mxu0 0
  %7054 = vmatpush1.bf16.msra.mxu0 %v5415
  %7055 = vmatprep.subr.bf16.mxu0 0
  %7056 = vmatpush1.bf16.msra.mxu0 %v5414
  %7057 = vmatprep.subr.bf16.mxu0 0
  %7058 = vmatpush1.bf16.msra.mxu0 %v5413
  %7059 = vmatprep.subr.bf16.mxu0 0
  %7060 = vmatpush1.bf16.msra.mxu0 %v5412
  %7061 = vmatprep.subr.bf16.mxu0 0
  %7062 = vmatpush1.bf16.msra.mxu0 %v5411
  %7063 = vmatprep.subr.bf16.mxu0 0
  %7064 = vmatpush1.bf16.msra.mxu0 %v5410
  %7065 = vmatprep.subr.bf16.mxu0 0
  %7066 = vmatpush2.bf16.msra.mxu0 %v5425
  %7067 = vmatprep.subr.bf16.mxu0 0
  %7068 = vmatpush2.bf16.msra.mxu0 %v5424
  %7069 = vmatprep.subr.bf16.mxu0 0
  %7070 = vmatpush2.bf16.msra.mxu0 %v5423
  %7071 = vmatprep.subr.bf16.mxu0 0
  %7072 = vmatpush2.bf16.msra.mxu0 %v5422
  %7073 = vmatprep.subr.bf16.mxu0 0
  %7074 = vmatpush2.bf16.msra.mxu0 %v5421
  %7075 = vmatprep.subr.bf16.mxu0 0
  %7076 = vmatpush2.bf16.msra.mxu0 %v5420
  %7077 = vmatprep.subr.bf16.mxu0 0
  %7078 = vmatpush2.bf16.msra.mxu0 %v5419
  %7079 = vmatprep.subr.bf16.mxu0 0
  %7080 = vmatpush2.bf16.msra.mxu0 %v5418
  %7081 = vmatprep.mubr.bf16.mxu0 %v2145
  %7082 = vmatmul.mubr.bf16.gmra.mxu0 %v2144
  %v7083 = vpop.f32.mrf.mxu0
  %v7084 = vadd.f32 %v7035, %v7083
  %v7085 = vpop.f32.mrf.mxu0
  %v7086 = vpop.f32.mrf.mxu0
  %v7087 = vadd.f32 %v7038, %v7086
  %v7088 = vpop.f32.mrf.mxu0
  %7089 = vmatprep.mubr.bf16.mxu0 %v2233
  %7090 = vmatmul.mubr.bf16.gmra.mxu0 %v2232
  %v7091 = vpop.f32.mrf.mxu0
  %v7092 = vadd.f32 %v7043, %v7091
  %v7093 = vpop.f32.mrf.mxu0
  %v7094 = vpop.f32.mrf.mxu0
  %v7095 = vadd.f32 %v7046, %v7094
  %v7096 = vpop.f32.mrf.mxu0
  %7097 = vdwg.mxu0
  %7098 = vmatprep.subr.bf16.mxu0 0
  %7099 = vmatpush1.bf16.msra.mxu0 %v5433
  %7100 = vmatprep.subr.bf16.mxu0 0
  %7101 = vmatpush1.bf16.msra.mxu0 %v5432
  %7102 = vmatprep.subr.bf16.mxu0 0
  %7103 = vmatpush1.bf16.msra.mxu0 %v5431
  %7104 = vmatprep.subr.bf16.mxu0 0
  %7105 = vmatpush1.bf16.msra.mxu0 %v5430
  %7106 = vmatprep.subr.bf16.mxu0 0
  %7107 = vmatpush1.bf16.msra.mxu0 %v5429
  %7108 = vmatprep.subr.bf16.mxu0 0
  %7109 = vmatpush1.bf16.msra.mxu0 %v5428
  %7110 = vmatprep.subr.bf16.mxu0 0
  %7111 = vmatpush1.bf16.msra.mxu0 %v5427
  %7112 = vmatprep.subr.bf16.mxu0 0
  %7113 = vmatpush1.bf16.msra.mxu0 %v5426
  %7114 = vmatprep.subr.bf16.mxu0 0
  %7115 = vmatpush2.bf16.msra.mxu0 %v5441
  %7116 = vmatprep.subr.bf16.mxu0 0
  %7117 = vmatpush2.bf16.msra.mxu0 %v5440
  %7118 = vmatprep.subr.bf16.mxu0 0
  %7119 = vmatpush2.bf16.msra.mxu0 %v5439
  %7120 = vmatprep.subr.bf16.mxu0 0
  %7121 = vmatpush2.bf16.msra.mxu0 %v5438
  %7122 = vmatprep.subr.bf16.mxu0 0
  %7123 = vmatpush2.bf16.msra.mxu0 %v5437
  %7124 = vmatprep.subr.bf16.mxu0 0
  %7125 = vmatpush2.bf16.msra.mxu0 %v5436
  %7126 = vmatprep.subr.bf16.mxu0 0
  %7127 = vmatpush2.bf16.msra.mxu0 %v5435
  %7128 = vmatprep.subr.bf16.mxu0 0
  %7129 = vmatpush2.bf16.msra.mxu0 %v5434
  %7130 = vmatprep.mubr.bf16.mxu0 %v2147
  %7131 = vmatmul.mubr.bf16.gmra.mxu0 %v2146
  %v7132 = vpop.f32.mrf.mxu0
  %v7133 = vadd.f32 %v7084, %v7132
  %v7134 = vpop.f32.mrf.mxu0
  %v7135 = vpop.f32.mrf.mxu0
  %v7136 = vadd.f32 %v7087, %v7135
  %v7137 = vpop.f32.mrf.mxu0
  %7138 = vmatprep.mubr.bf16.mxu0 %v2235
  %7139 = vmatmul.mubr.bf16.gmra.mxu0 %v2234
  %v7140 = vpop.f32.mrf.mxu0
  %v7141 = vadd.f32 %v7092, %v7140
  %v7142 = vpop.f32.mrf.mxu0
  %v7143 = vpop.f32.mrf.mxu0
  %v7144 = vadd.f32 %v7095, %v7143
  %v7145 = vpop.f32.mrf.mxu0
  %7146 = vdwg.mxu0
  %7147 = vmatprep.subr.bf16.mxu0 0
  %7148 = vmatpush1.bf16.msra.mxu0 %v5449
  %7149 = vmatprep.subr.bf16.mxu0 0
  %7150 = vmatpush1.bf16.msra.mxu0 %v5448
  %7151 = vmatprep.subr.bf16.mxu0 0
  %7152 = vmatpush1.bf16.msra.mxu0 %v5447
  %7153 = vmatprep.subr.bf16.mxu0 0
  %7154 = vmatpush1.bf16.msra.mxu0 %v5446
  %7155 = vmatprep.subr.bf16.mxu0 0
  %7156 = vmatpush1.bf16.msra.mxu0 %v5445
  %7157 = vmatprep.subr.bf16.mxu0 0
  %7158 = vmatpush1.bf16.msra.mxu0 %v5444
  %7159 = vmatprep.subr.bf16.mxu0 0
  %7160 = vmatpush1.bf16.msra.mxu0 %v5443
  %7161 = vmatprep.subr.bf16.mxu0 0
  %7162 = vmatpush1.bf16.msra.mxu0 %v5442
  %7163 = vmatprep.subr.bf16.mxu0 0
  %7164 = vmatpush2.bf16.msra.mxu0 %v5457
  %7165 = vmatprep.subr.bf16.mxu0 0
  %7166 = vmatpush2.bf16.msra.mxu0 %v5456
  %7167 = vmatprep.subr.bf16.mxu0 0
  %7168 = vmatpush2.bf16.msra.mxu0 %v5455
  %7169 = vmatprep.subr.bf16.mxu0 0
  %7170 = vmatpush2.bf16.msra.mxu0 %v5454
  %7171 = vmatprep.subr.bf16.mxu0 0
  %7172 = vmatpush2.bf16.msra.mxu0 %v5453
  %7173 = vmatprep.subr.bf16.mxu0 0
  %7174 = vmatpush2.bf16.msra.mxu0 %v5452
  %7175 = vmatprep.subr.bf16.mxu0 0
  %7176 = vmatpush2.bf16.msra.mxu0 %v5451
  %7177 = vmatprep.subr.bf16.mxu0 0
  %7178 = vmatpush2.bf16.msra.mxu0 %v5450
  %7179 = vmatprep.mubr.bf16.mxu0 %v2149
  %7180 = vmatmul.mubr.bf16.gmra.mxu0 %v2148
  %v7181 = vpop.f32.mrf.mxu0
  %v7182 = vadd.f32 %v7133, %v7181
  %v7183 = vpop.f32.mrf.mxu0
  %v7184 = vpop.f32.mrf.mxu0
  %v7185 = vadd.f32 %v7136, %v7184
  %v7186 = vpop.f32.mrf.mxu0
  %7187 = vmatprep.mubr.bf16.mxu0 %v2237
  %7188 = vmatmul.mubr.bf16.gmra.mxu0 %v2236
  %v7189 = vpop.f32.mrf.mxu0
  %v7190 = vadd.f32 %v7141, %v7189
  %v7191 = vpop.f32.mrf.mxu0
  %v7192 = vpop.f32.mrf.mxu0
  %v7193 = vadd.f32 %v7144, %v7192
  %v7194 = vpop.f32.mrf.mxu0
  %7195 = vdwg.mxu0
  %7196 = vmatprep.subr.bf16.mxu0 0
  %7197 = vmatpush1.bf16.msra.mxu0 %v5465
  %7198 = vmatprep.subr.bf16.mxu0 0
  %7199 = vmatpush1.bf16.msra.mxu0 %v5464
  %7200 = vmatprep.subr.bf16.mxu0 0
  %7201 = vmatpush1.bf16.msra.mxu0 %v5463
  %7202 = vmatprep.subr.bf16.mxu0 0
  %7203 = vmatpush1.bf16.msra.mxu0 %v5462
  %7204 = vmatprep.subr.bf16.mxu0 0
  %7205 = vmatpush1.bf16.msra.mxu0 %v5461
  %7206 = vmatprep.subr.bf16.mxu0 0
  %7207 = vmatpush1.bf16.msra.mxu0 %v5460
  %7208 = vmatprep.subr.bf16.mxu0 0
  %7209 = vmatpush1.bf16.msra.mxu0 %v5459
  %7210 = vmatprep.subr.bf16.mxu0 0
  %7211 = vmatpush1.bf16.msra.mxu0 %v5458
  %7212 = vmatprep.subr.bf16.mxu0 0
  %7213 = vmatpush2.bf16.msra.mxu0 %v5473
  %7214 = vmatprep.subr.bf16.mxu0 0
  %7215 = vmatpush2.bf16.msra.mxu0 %v5472
  %7216 = vmatprep.subr.bf16.mxu0 0
  %7217 = vmatpush2.bf16.msra.mxu0 %v5471
  %7218 = vmatprep.subr.bf16.mxu0 0
  %7219 = vmatpush2.bf16.msra.mxu0 %v5470
  %7220 = vmatprep.subr.bf16.mxu0 0
  %7221 = vmatpush2.bf16.msra.mxu0 %v5469
  %7222 = vmatprep.subr.bf16.mxu0 0
  %7223 = vmatpush2.bf16.msra.mxu0 %v5468
  %7224 = vmatprep.subr.bf16.mxu0 0
  %7225 = vmatpush2.bf16.msra.mxu0 %v5467
  %7226 = vmatprep.subr.bf16.mxu0 0
  %7227 = vmatpush2.bf16.msra.mxu0 %v5466
  %7228 = vmatprep.mubr.bf16.mxu0 %v2151
  %7229 = vmatmul.mubr.bf16.gmra.mxu0 %v2150
  %v7230 = vpop.f32.mrf.mxu0
  %v7231 = vadd.f32 %v7182, %v7230
  %v7232 = vpop.f32.mrf.mxu0
  %v7233 = vpop.f32.mrf.mxu0
  %v7234 = vadd.f32 %v7185, %v7233
  %v7235 = vpop.f32.mrf.mxu0
  %7236 = vmatprep.mubr.bf16.mxu0 %v2239
  %7237 = vmatmul.mubr.bf16.gmra.mxu0 %v2238
  %v7238 = vpop.f32.mrf.mxu0
  %v7239 = vadd.f32 %v7190, %v7238
  %v7240 = vpop.f32.mrf.mxu0
  %v7241 = vpop.f32.mrf.mxu0
  %v7242 = vadd.f32 %v7193, %v7241
  %v7243 = vpop.f32.mrf.mxu0
  %7244 = vdwg.mxu0
  %7245 = vmatprep.subr.bf16.mxu0 0
  %7246 = vmatpush1.bf16.msra.mxu0 %v5481
  %7247 = vmatprep.subr.bf16.mxu0 0
  %7248 = vmatpush1.bf16.msra.mxu0 %v5480
  %7249 = vmatprep.subr.bf16.mxu0 0
  %7250 = vmatpush1.bf16.msra.mxu0 %v5479
  %7251 = vmatprep.subr.bf16.mxu0 0
  %7252 = vmatpush1.bf16.msra.mxu0 %v5478
  %7253 = vmatprep.subr.bf16.mxu0 0
  %7254 = vmatpush1.bf16.msra.mxu0 %v5477
  %7255 = vmatprep.subr.bf16.mxu0 0
  %7256 = vmatpush1.bf16.msra.mxu0 %v5476
  %7257 = vmatprep.subr.bf16.mxu0 0
  %7258 = vmatpush1.bf16.msra.mxu0 %v5475
  %7259 = vmatprep.subr.bf16.mxu0 0
  %7260 = vmatpush1.bf16.msra.mxu0 %v5474
  %7261 = vmatprep.subr.bf16.mxu0 0
  %7262 = vmatpush2.bf16.msra.mxu0 %v5489
  %7263 = vmatprep.subr.bf16.mxu0 0
  %7264 = vmatpush2.bf16.msra.mxu0 %v5488
  %7265 = vmatprep.subr.bf16.mxu0 0
  %7266 = vmatpush2.bf16.msra.mxu0 %v5487
  %7267 = vmatprep.subr.bf16.mxu0 0
  %7268 = vmatpush2.bf16.msra.mxu0 %v5486
  %7269 = vmatprep.subr.bf16.mxu0 0
  %7270 = vmatpush2.bf16.msra.mxu0 %v5485
  %7271 = vmatprep.subr.bf16.mxu0 0
  %7272 = vmatpush2.bf16.msra.mxu0 %v5484
  %7273 = vmatprep.subr.bf16.mxu0 0
  %7274 = vmatpush2.bf16.msra.mxu0 %v5483
  %7275 = vmatprep.subr.bf16.mxu0 0
  %7276 = vmatpush2.bf16.msra.mxu0 %v5482
  %7277 = vmatprep.mubr.bf16.mxu0 %v2153
  %7278 = vmatmul.mubr.bf16.gmra.mxu0 %v2152
  %v7279 = vpop.f32.mrf.mxu0
  %v7280 = vadd.f32 %v7231, %v7279
  %v7281 = vpop.f32.mrf.mxu0
  %v7282 = vpop.f32.mrf.mxu0
  %v7283 = vadd.f32 %v7234, %v7282
  %v7284 = vpop.f32.mrf.mxu0
  %7285 = vmatprep.mubr.bf16.mxu0 %v2241
  %7286 = vmatmul.mubr.bf16.gmra.mxu0 %v2240
  %v7287 = vpop.f32.mrf.mxu0
  %v7288 = vadd.f32 %v7239, %v7287
  %v7289 = vpop.f32.mrf.mxu0
  %v7290 = vpop.f32.mrf.mxu0
  %v7291 = vadd.f32 %v7242, %v7290
  %v7292 = vpop.f32.mrf.mxu0
  %7293 = vdwg.mxu0
  %7294 = vmatprep.subr.bf16.mxu0 0
  %7295 = vmatpush1.bf16.msra.mxu0 %v5497
  %7296 = vmatprep.subr.bf16.mxu0 0
  %7297 = vmatpush1.bf16.msra.mxu0 %v5496
  %7298 = vmatprep.subr.bf16.mxu0 0
  %7299 = vmatpush1.bf16.msra.mxu0 %v5495
  %7300 = vmatprep.subr.bf16.mxu0 0
  %7301 = vmatpush1.bf16.msra.mxu0 %v5494
  %7302 = vmatprep.subr.bf16.mxu0 0
  %7303 = vmatpush1.bf16.msra.mxu0 %v5493
  %7304 = vmatprep.subr.bf16.mxu0 0
  %7305 = vmatpush1.bf16.msra.mxu0 %v5492
  %7306 = vmatprep.subr.bf16.mxu0 0
  %7307 = vmatpush1.bf16.msra.mxu0 %v5491
  %7308 = vmatprep.subr.bf16.mxu0 0
  %7309 = vmatpush1.bf16.msra.mxu0 %v5490
  %7310 = vmatprep.subr.bf16.mxu0 0
  %7311 = vmatpush2.bf16.msra.mxu0 %v5505
  %7312 = vmatprep.subr.bf16.mxu0 0
  %7313 = vmatpush2.bf16.msra.mxu0 %v5504
  %7314 = vmatprep.subr.bf16.mxu0 0
  %7315 = vmatpush2.bf16.msra.mxu0 %v5503
  %7316 = vmatprep.subr.bf16.mxu0 0
  %7317 = vmatpush2.bf16.msra.mxu0 %v5502
  %7318 = vmatprep.subr.bf16.mxu0 0
  %7319 = vmatpush2.bf16.msra.mxu0 %v5501
  %7320 = vmatprep.subr.bf16.mxu0 0
  %7321 = vmatpush2.bf16.msra.mxu0 %v5500
  %7322 = vmatprep.subr.bf16.mxu0 0
  %7323 = vmatpush2.bf16.msra.mxu0 %v5499
  %7324 = vmatprep.subr.bf16.mxu0 0
  %7325 = vmatpush2.bf16.msra.mxu0 %v5498
  %7326 = vmatprep.mubr.bf16.mxu0 %v2155
  %7327 = vmatmul.mubr.bf16.gmra.mxu0 %v2154
  %v7328 = vpop.f32.mrf.mxu0
  %v7329 = vadd.f32 %v7280, %v7328
  %v7330 = vpop.f32.mrf.mxu0
  %v7331 = vpop.f32.mrf.mxu0
  %v7332 = vadd.f32 %v7283, %v7331
  %v7333 = vpop.f32.mrf.mxu0
  %7334 = vmatprep.mubr.bf16.mxu0 %v2243
  %7335 = vmatmul.mubr.bf16.gmra.mxu0 %v2242
  %v7336 = vpop.f32.mrf.mxu0
  %v7337 = vadd.f32 %v7288, %v7336
  %v7338 = vpop.f32.mrf.mxu0
  %v7339 = vpop.f32.mrf.mxu0
  %v7340 = vadd.f32 %v7291, %v7339
  %v7341 = vpop.f32.mrf.mxu0
  %7342 = vdwg.mxu0
  %7343 = vmatprep.subr.bf16.mxu0 0
  %7344 = vmatpush1.bf16.msra.mxu0 %v5513
  %7345 = vmatprep.subr.bf16.mxu0 0
  %7346 = vmatpush1.bf16.msra.mxu0 %v5512
  %7347 = vmatprep.subr.bf16.mxu0 0
  %7348 = vmatpush1.bf16.msra.mxu0 %v5511
  %7349 = vmatprep.subr.bf16.mxu0 0
  %7350 = vmatpush1.bf16.msra.mxu0 %v5510
  %7351 = vmatprep.subr.bf16.mxu0 0
  %7352 = vmatpush1.bf16.msra.mxu0 %v5509
  %7353 = vmatprep.subr.bf16.mxu0 0
  %7354 = vmatpush1.bf16.msra.mxu0 %v5508
  %7355 = vmatprep.subr.bf16.mxu0 0
  %7356 = vmatpush1.bf16.msra.mxu0 %v5507
  %7357 = vmatprep.subr.bf16.mxu0 0
  %7358 = vmatpush1.bf16.msra.mxu0 %v5506
  %7359 = vmatprep.subr.bf16.mxu0 0
  %7360 = vmatpush2.bf16.msra.mxu0 %v5521
  %7361 = vmatprep.subr.bf16.mxu0 0
  %7362 = vmatpush2.bf16.msra.mxu0 %v5520
  %7363 = vmatprep.subr.bf16.mxu0 0
  %7364 = vmatpush2.bf16.msra.mxu0 %v5519
  %7365 = vmatprep.subr.bf16.mxu0 0
  %7366 = vmatpush2.bf16.msra.mxu0 %v5518
  %7367 = vmatprep.subr.bf16.mxu0 0
  %7368 = vmatpush2.bf16.msra.mxu0 %v5517
  %7369 = vmatprep.subr.bf16.mxu0 0
  %7370 = vmatpush2.bf16.msra.mxu0 %v5516
  %7371 = vmatprep.subr.bf16.mxu0 0
  %7372 = vmatpush2.bf16.msra.mxu0 %v5515
  %7373 = vmatprep.subr.bf16.mxu0 0
  %7374 = vmatpush2.bf16.msra.mxu0 %v5514
  %7375 = vmatprep.mubr.bf16.mxu0 %v2157
  %7376 = vmatmul.mubr.bf16.gmra.mxu0 %v2156
  %v7377 = vpop.f32.mrf.mxu0
  %v7378 = vadd.f32 %v7329, %v7377
  %v7379 = vpop.f32.mrf.mxu0
  %v7380 = vpop.f32.mrf.mxu0
  %v7381 = vadd.f32 %v7332, %v7380
  %v7382 = vpop.f32.mrf.mxu0
  %7383 = vmatprep.mubr.bf16.mxu0 %v2245
  %7384 = vmatmul.mubr.bf16.gmra.mxu0 %v2244
  %v7385 = vpop.f32.mrf.mxu0
  %v7386 = vadd.f32 %v7337, %v7385
  %v7387 = vpop.f32.mrf.mxu0
  %v7388 = vpop.f32.mrf.mxu0
  %v7389 = vadd.f32 %v7340, %v7388
  %v7390 = vpop.f32.mrf.mxu0
  %7391 = vdwg.mxu0
  %7392 = vmatprep.subr.bf16.mxu0 0
  %7393 = vmatpush1.bf16.msra.mxu0 %v5529
  %7394 = vmatprep.subr.bf16.mxu0 0
  %7395 = vmatpush1.bf16.msra.mxu0 %v5528
  %7396 = vmatprep.subr.bf16.mxu0 0
  %7397 = vmatpush1.bf16.msra.mxu0 %v5527
  %7398 = vmatprep.subr.bf16.mxu0 0
  %7399 = vmatpush1.bf16.msra.mxu0 %v5526
  %7400 = vmatprep.subr.bf16.mxu0 0
  %7401 = vmatpush1.bf16.msra.mxu0 %v5525
  %7402 = vmatprep.subr.bf16.mxu0 0
  %7403 = vmatpush1.bf16.msra.mxu0 %v5524
  %7404 = vmatprep.subr.bf16.mxu0 0
  %7405 = vmatpush1.bf16.msra.mxu0 %v5523
  %7406 = vmatprep.subr.bf16.mxu0 0
  %7407 = vmatpush1.bf16.msra.mxu0 %v5522
  %7408 = vmatprep.subr.bf16.mxu0 0
  %7409 = vmatpush2.bf16.msra.mxu0 %v5537
  %7410 = vmatprep.subr.bf16.mxu0 0
  %7411 = vmatpush2.bf16.msra.mxu0 %v5536
  %7412 = vmatprep.subr.bf16.mxu0 0
  %7413 = vmatpush2.bf16.msra.mxu0 %v5535
  %7414 = vmatprep.subr.bf16.mxu0 0
  %7415 = vmatpush2.bf16.msra.mxu0 %v5534
  %7416 = vmatprep.subr.bf16.mxu0 0
  %7417 = vmatpush2.bf16.msra.mxu0 %v5533
  %7418 = vmatprep.subr.bf16.mxu0 0
  %7419 = vmatpush2.bf16.msra.mxu0 %v5532
  %7420 = vmatprep.subr.bf16.mxu0 0
  %7421 = vmatpush2.bf16.msra.mxu0 %v5531
  %7422 = vmatprep.subr.bf16.mxu0 0
  %7423 = vmatpush2.bf16.msra.mxu0 %v5530
  %7424 = vmatprep.mubr.bf16.mxu0 %v2159
  %7425 = vmatmul.mubr.bf16.gmra.mxu0 %v2158
  %v7426 = vpop.f32.mrf.mxu0
  %v7427 = vadd.f32 %v7378, %v7426
  %v7428 = vpop.f32.mrf.mxu0
  %v7429 = vpop.f32.mrf.mxu0
  %v7430 = vadd.f32 %v7381, %v7429
  %v7431 = vpop.f32.mrf.mxu0
  %7432 = vmatprep.mubr.bf16.mxu0 %v2247
  %7433 = vmatmul.mubr.bf16.gmra.mxu0 %v2246
  %v7434 = vpop.f32.mrf.mxu0
  %v7435 = vadd.f32 %v7386, %v7434
  %v7436 = vpop.f32.mrf.mxu0
  %v7437 = vpop.f32.mrf.mxu0
  %v7438 = vadd.f32 %v7389, %v7437
  %v7439 = vpop.f32.mrf.mxu0
  %7440 = vdwg.mxu0
  %7441 = vmatprep.subr.bf16.mxu0 0
  %7442 = vmatpush1.bf16.msra.mxu0 %v5545
  %7443 = vmatprep.subr.bf16.mxu0 0
  %7444 = vmatpush1.bf16.msra.mxu0 %v5544
  %7445 = vmatprep.subr.bf16.mxu0 0
  %7446 = vmatpush1.bf16.msra.mxu0 %v5543
  %7447 = vmatprep.subr.bf16.mxu0 0
  %7448 = vmatpush1.bf16.msra.mxu0 %v5542
  %7449 = vmatprep.subr.bf16.mxu0 0
  %7450 = vmatpush1.bf16.msra.mxu0 %v5541
  %7451 = vmatprep.subr.bf16.mxu0 0
  %7452 = vmatpush1.bf16.msra.mxu0 %v5540
  %7453 = vmatprep.subr.bf16.mxu0 0
  %7454 = vmatpush1.bf16.msra.mxu0 %v5539
  %7455 = vmatprep.subr.bf16.mxu0 0
  %7456 = vmatpush1.bf16.msra.mxu0 %v5538
  %7457 = vmatprep.subr.bf16.mxu0 0
  %7458 = vmatpush2.bf16.msra.mxu0 %v5553
  %7459 = vmatprep.subr.bf16.mxu0 0
  %7460 = vmatpush2.bf16.msra.mxu0 %v5552
  %7461 = vmatprep.subr.bf16.mxu0 0
  %7462 = vmatpush2.bf16.msra.mxu0 %v5551
  %7463 = vmatprep.subr.bf16.mxu0 0
  %7464 = vmatpush2.bf16.msra.mxu0 %v5550
  %7465 = vmatprep.subr.bf16.mxu0 0
  %7466 = vmatpush2.bf16.msra.mxu0 %v5549
  %7467 = vmatprep.subr.bf16.mxu0 0
  %7468 = vmatpush2.bf16.msra.mxu0 %v5548
  %7469 = vmatprep.subr.bf16.mxu0 0
  %7470 = vmatpush2.bf16.msra.mxu0 %v5547
  %7471 = vmatprep.subr.bf16.mxu0 0
  %7472 = vmatpush2.bf16.msra.mxu0 %v5546
  %7473 = vmatprep.mubr.bf16.mxu0 %v2161
  %7474 = vmatmul.mubr.bf16.gmra.mxu0 %v2160
  %v7475 = vpop.f32.mrf.mxu0
  %v7476 = vadd.f32 %v7427, %v7475
  %v7477 = vpop.f32.mrf.mxu0
  %v7478 = vpop.f32.mrf.mxu0
  %v7479 = vadd.f32 %v7430, %v7478
  %v7480 = vpop.f32.mrf.mxu0
  %7481 = vmatprep.mubr.bf16.mxu0 %v2249
  %7482 = vmatmul.mubr.bf16.gmra.mxu0 %v2248
  %v7483 = vpop.f32.mrf.mxu0
  %v7484 = vadd.f32 %v7435, %v7483
  %v7485 = vpop.f32.mrf.mxu0
  %v7486 = vpop.f32.mrf.mxu0
  %v7487 = vadd.f32 %v7438, %v7486
  %v7488 = vpop.f32.mrf.mxu0
  %7489 = vdwg.mxu0
  %7490 = vmatprep.subr.bf16.mxu0 0
  %7491 = vmatpush1.bf16.msra.mxu0 %v5561
  %7492 = vmatprep.subr.bf16.mxu0 0
  %7493 = vmatpush1.bf16.msra.mxu0 %v5560
  %7494 = vmatprep.subr.bf16.mxu0 0
  %7495 = vmatpush1.bf16.msra.mxu0 %v5559
  %7496 = vmatprep.subr.bf16.mxu0 0
  %7497 = vmatpush1.bf16.msra.mxu0 %v5558
  %7498 = vmatprep.subr.bf16.mxu0 0
  %7499 = vmatpush1.bf16.msra.mxu0 %v5557
  %7500 = vmatprep.subr.bf16.mxu0 0
  %7501 = vmatpush1.bf16.msra.mxu0 %v5556
  %7502 = vmatprep.subr.bf16.mxu0 0
  %7503 = vmatpush1.bf16.msra.mxu0 %v5555
  %7504 = vmatprep.subr.bf16.mxu0 0
  %7505 = vmatpush1.bf16.msra.mxu0 %v5554
  %7506 = vmatprep.subr.bf16.mxu0 0
  %7507 = vmatpush2.bf16.msra.mxu0 %v5569
  %7508 = vmatprep.subr.bf16.mxu0 0
  %7509 = vmatpush2.bf16.msra.mxu0 %v5568
  %7510 = vmatprep.subr.bf16.mxu0 0
  %7511 = vmatpush2.bf16.msra.mxu0 %v5567
  %7512 = vmatprep.subr.bf16.mxu0 0
  %7513 = vmatpush2.bf16.msra.mxu0 %v5566
  %7514 = vmatprep.subr.bf16.mxu0 0
  %7515 = vmatpush2.bf16.msra.mxu0 %v5565
  %7516 = vmatprep.subr.bf16.mxu0 0
  %7517 = vmatpush2.bf16.msra.mxu0 %v5564
  %7518 = vmatprep.subr.bf16.mxu0 0
  %7519 = vmatpush2.bf16.msra.mxu0 %v5563
  %7520 = vmatprep.subr.bf16.mxu0 0
  %7521 = vmatpush2.bf16.msra.mxu0 %v5562
  %7522 = vmatprep.mubr.bf16.mxu0 %v2163
  %7523 = vmatmul.mubr.bf16.gmra.mxu0 %v2162
  %v7524 = vpop.f32.mrf.mxu0
  %v7525 = vadd.f32 %v7476, %v7524
  %v7526 = vpop.f32.mrf.mxu0
  %v7527 = vpop.f32.mrf.mxu0
  %v7528 = vadd.f32 %v7479, %v7527
  %v7529 = vpop.f32.mrf.mxu0
  %7530 = vmatprep.mubr.bf16.mxu0 %v2251
  %7531 = vmatmul.mubr.bf16.gmra.mxu0 %v2250
  %v7532 = vpop.f32.mrf.mxu0
  %v7533 = vadd.f32 %v7484, %v7532
  %v7534 = vpop.f32.mrf.mxu0
  %v7535 = vpop.f32.mrf.mxu0
  %v7536 = vadd.f32 %v7487, %v7535
  %v7537 = vpop.f32.mrf.mxu0
  %7538 = vdwg.mxu0
  %7539 = vmatprep.subr.bf16.mxu0 0
  %7540 = vmatpush1.bf16.msra.mxu0 %v5577
  %7541 = vmatprep.subr.bf16.mxu0 0
  %7542 = vmatpush1.bf16.msra.mxu0 %v5576
  %7543 = vmatprep.subr.bf16.mxu0 0
  %7544 = vmatpush1.bf16.msra.mxu0 %v5575
  %7545 = vmatprep.subr.bf16.mxu0 0
  %7546 = vmatpush1.bf16.msra.mxu0 %v5574
  %7547 = vmatprep.subr.bf16.mxu0 0
  %7548 = vmatpush1.bf16.msra.mxu0 %v5573
  %7549 = vmatprep.subr.bf16.mxu0 0
  %7550 = vmatpush1.bf16.msra.mxu0 %v5572
  %7551 = vmatprep.subr.bf16.mxu0 0
  %7552 = vmatpush1.bf16.msra.mxu0 %v5571
  %7553 = vmatprep.subr.bf16.mxu0 0
  %7554 = vmatpush1.bf16.msra.mxu0 %v5570
  %7555 = vmatprep.subr.bf16.mxu0 0
  %7556 = vmatpush2.bf16.msra.mxu0 %v5585
  %7557 = vmatprep.subr.bf16.mxu0 0
  %7558 = vmatpush2.bf16.msra.mxu0 %v5584
  %7559 = vmatprep.subr.bf16.mxu0 0
  %7560 = vmatpush2.bf16.msra.mxu0 %v5583
  %7561 = vmatprep.subr.bf16.mxu0 0
  %7562 = vmatpush2.bf16.msra.mxu0 %v5582
  %7563 = vmatprep.subr.bf16.mxu0 0
  %7564 = vmatpush2.bf16.msra.mxu0 %v5581
  %7565 = vmatprep.subr.bf16.mxu0 0
  %7566 = vmatpush2.bf16.msra.mxu0 %v5580
  %7567 = vmatprep.subr.bf16.mxu0 0
  %7568 = vmatpush2.bf16.msra.mxu0 %v5579
  %7569 = vmatprep.subr.bf16.mxu0 0
  %7570 = vmatpush2.bf16.msra.mxu0 %v5578
  %7571 = vmatprep.mubr.bf16.mxu0 %v2165
  %7572 = vmatmul.mubr.bf16.gmra.mxu0 %v2164
  %v7573 = vpop.f32.mrf.mxu0
  %v7574 = vadd.f32 %v7525, %v7573
  %v7575 = vpop.f32.mrf.mxu0
  %v7576 = vpop.f32.mrf.mxu0
  %v7577 = vadd.f32 %v7528, %v7576
  %v7578 = vpop.f32.mrf.mxu0
  %7579 = vmatprep.mubr.bf16.mxu0 %v2253
  %7580 = vmatmul.mubr.bf16.gmra.mxu0 %v2252
  %v7581 = vpop.f32.mrf.mxu0
  %v7582 = vadd.f32 %v7533, %v7581
  %v7583 = vpop.f32.mrf.mxu0
  %v7584 = vpop.f32.mrf.mxu0
  %v7585 = vadd.f32 %v7536, %v7584
  %v7586 = vpop.f32.mrf.mxu0
  %7587 = vdwg.mxu0
  %7588 = vmatprep.subr.bf16.mxu0 0
  %7589 = vmatpush1.bf16.msra.mxu0 %v5593
  %7590 = vmatprep.subr.bf16.mxu0 0
  %7591 = vmatpush1.bf16.msra.mxu0 %v5592
  %7592 = vmatprep.subr.bf16.mxu0 0
  %7593 = vmatpush1.bf16.msra.mxu0 %v5591
  %7594 = vmatprep.subr.bf16.mxu0 0
  %7595 = vmatpush1.bf16.msra.mxu0 %v5590
  %7596 = vmatprep.subr.bf16.mxu0 0
  %7597 = vmatpush1.bf16.msra.mxu0 %v5589
  %7598 = vmatprep.subr.bf16.mxu0 0
  %7599 = vmatpush1.bf16.msra.mxu0 %v5588
  %7600 = vmatprep.subr.bf16.mxu0 0
  %7601 = vmatpush1.bf16.msra.mxu0 %v5587
  %7602 = vmatprep.subr.bf16.mxu0 0
  %7603 = vmatpush1.bf16.msra.mxu0 %v5586
  %7604 = vmatprep.subr.bf16.mxu0 0
  %7605 = vmatpush2.bf16.msra.mxu0 %v5601
  %7606 = vmatprep.subr.bf16.mxu0 0
  %7607 = vmatpush2.bf16.msra.mxu0 %v5600
  %7608 = vmatprep.subr.bf16.mxu0 0
  %7609 = vmatpush2.bf16.msra.mxu0 %v5599
  %7610 = vmatprep.subr.bf16.mxu0 0
  %7611 = vmatpush2.bf16.msra.mxu0 %v5598
  %7612 = vmatprep.subr.bf16.mxu0 0
  %7613 = vmatpush2.bf16.msra.mxu0 %v5597
  %7614 = vmatprep.subr.bf16.mxu0 0
  %7615 = vmatpush2.bf16.msra.mxu0 %v5596
  %7616 = vmatprep.subr.bf16.mxu0 0
  %7617 = vmatpush2.bf16.msra.mxu0 %v5595
  %7618 = vmatprep.subr.bf16.mxu0 0
  %7619 = vmatpush2.bf16.msra.mxu0 %v5594
  %7620 = vmatprep.mubr.bf16.mxu0 %v2167
  %7621 = vmatmul.mubr.bf16.gmra.mxu0 %v2166
  %v7622 = vpop.f32.mrf.mxu0
  %v7623 = vadd.f32 %v7574, %v7622
  %v7624 = vpop.f32.mrf.mxu0
  %v7625 = vpop.f32.mrf.mxu0
  %v7626 = vadd.f32 %v7577, %v7625
  %v7627 = vpop.f32.mrf.mxu0
  %7628 = vmatprep.mubr.bf16.mxu0 %v2255
  %7629 = vmatmul.mubr.bf16.gmra.mxu0 %v2254
  %v7630 = vpop.f32.mrf.mxu0
  %v7631 = vadd.f32 %v7582, %v7630
  %v7632 = vpop.f32.mrf.mxu0
  %v7633 = vpop.f32.mrf.mxu0
  %v7634 = vadd.f32 %v7585, %v7633
  %v7635 = vpop.f32.mrf.mxu0
  %7636 = vdwg.mxu0
  %7637 = vmatprep.subr.bf16.mxu0 0
  %7638 = vmatpush1.bf16.msra.mxu0 %v5609
  %7639 = vmatprep.subr.bf16.mxu0 0
  %7640 = vmatpush1.bf16.msra.mxu0 %v5608
  %7641 = vmatprep.subr.bf16.mxu0 0
  %7642 = vmatpush1.bf16.msra.mxu0 %v5607
  %7643 = vmatprep.subr.bf16.mxu0 0
  %7644 = vmatpush1.bf16.msra.mxu0 %v5606
  %7645 = vmatprep.subr.bf16.mxu0 0
  %7646 = vmatpush1.bf16.msra.mxu0 %v5605
  %7647 = vmatprep.subr.bf16.mxu0 0
  %7648 = vmatpush1.bf16.msra.mxu0 %v5604
  %7649 = vmatprep.subr.bf16.mxu0 0
  %7650 = vmatpush1.bf16.msra.mxu0 %v5603
  %7651 = vmatprep.subr.bf16.mxu0 0
  %7652 = vmatpush1.bf16.msra.mxu0 %v5602
  %7653 = vmatprep.subr.bf16.mxu0 0
  %7654 = vmatpush2.bf16.msra.mxu0 %v5617
  %7655 = vmatprep.subr.bf16.mxu0 0
  %7656 = vmatpush2.bf16.msra.mxu0 %v5616
  %7657 = vmatprep.subr.bf16.mxu0 0
  %7658 = vmatpush2.bf16.msra.mxu0 %v5615
  %7659 = vmatprep.subr.bf16.mxu0 0
  %7660 = vmatpush2.bf16.msra.mxu0 %v5614
  %7661 = vmatprep.subr.bf16.mxu0 0
  %7662 = vmatpush2.bf16.msra.mxu0 %v5613
  %7663 = vmatprep.subr.bf16.mxu0 0
  %7664 = vmatpush2.bf16.msra.mxu0 %v5612
  %7665 = vmatprep.subr.bf16.mxu0 0
  %7666 = vmatpush2.bf16.msra.mxu0 %v5611
  %7667 = vmatprep.subr.bf16.mxu0 0
  %7668 = vmatpush2.bf16.msra.mxu0 %v5610
  %7669 = vmatprep.mubr.bf16.mxu0 %v2169
  %7670 = vmatmul.mubr.bf16.gmra.mxu0 %v2168
  %v7671 = vpop.f32.mrf.mxu0
  %v7672 = vadd.f32 %v7623, %v7671
  %v7673 = vpop.f32.mrf.mxu0
  %v7674 = vpop.f32.mrf.mxu0
  %v7675 = vadd.f32 %v7626, %v7674
  %v7676 = vpop.f32.mrf.mxu0
  %7677 = vmatprep.mubr.bf16.mxu0 %v2257
  %7678 = vmatmul.mubr.bf16.gmra.mxu0 %v2256
  %v7679 = vpop.f32.mrf.mxu0
  %v7680 = vadd.f32 %v7631, %v7679
  %v7681 = vpop.f32.mrf.mxu0
  %v7682 = vpop.f32.mrf.mxu0
  %v7683 = vadd.f32 %v7634, %v7682
  %v7684 = vpop.f32.mrf.mxu0
  %7685 = vdwg.mxu0
  %7686 = vmatprep.subr.bf16.mxu0 0
  %7687 = vmatpush1.bf16.msra.mxu0 %v5625
  %7688 = vmatprep.subr.bf16.mxu0 0
  %7689 = vmatpush1.bf16.msra.mxu0 %v5624
  %7690 = vmatprep.subr.bf16.mxu0 0
  %7691 = vmatpush1.bf16.msra.mxu0 %v5623
  %7692 = vmatprep.subr.bf16.mxu0 0
  %7693 = vmatpush1.bf16.msra.mxu0 %v5622
  %7694 = vmatprep.subr.bf16.mxu0 0
  %7695 = vmatpush1.bf16.msra.mxu0 %v5621
  %7696 = vmatprep.subr.bf16.mxu0 0
  %7697 = vmatpush1.bf16.msra.mxu0 %v5620
  %7698 = vmatprep.subr.bf16.mxu0 0
  %7699 = vmatpush1.bf16.msra.mxu0 %v5619
  %7700 = vmatprep.subr.bf16.mxu0 0
  %7701 = vmatpush1.bf16.msra.mxu0 %v5618
  %7702 = vmatprep.subr.bf16.mxu0 0
  %7703 = vmatpush2.bf16.msra.mxu0 %v5633
  %7704 = vmatprep.subr.bf16.mxu0 0
  %7705 = vmatpush2.bf16.msra.mxu0 %v5632
  %7706 = vmatprep.subr.bf16.mxu0 0
  %7707 = vmatpush2.bf16.msra.mxu0 %v5631
  %7708 = vmatprep.subr.bf16.mxu0 0
  %7709 = vmatpush2.bf16.msra.mxu0 %v5630
  %7710 = vmatprep.subr.bf16.mxu0 0
  %7711 = vmatpush2.bf16.msra.mxu0 %v5629
  %7712 = vmatprep.subr.bf16.mxu0 0
  %7713 = vmatpush2.bf16.msra.mxu0 %v5628
  %7714 = vmatprep.subr.bf16.mxu0 0
  %7715 = vmatpush2.bf16.msra.mxu0 %v5627
  %7716 = vmatprep.subr.bf16.mxu0 0
  %7717 = vmatpush2.bf16.msra.mxu0 %v5626
  %7718 = vmatprep.mubr.bf16.mxu0 %v2171
  %7719 = vmatmul.mubr.bf16.gmra.mxu0 %v2170
  %v7720 = vpop.f32.mrf.mxu0
  %v7721 = vadd.f32 %v7672, %v7720
  %v7722 = vpop.f32.mrf.mxu0
  %v7723 = vpop.f32.mrf.mxu0
  %v7724 = vadd.f32 %v7675, %v7723
  %v7725 = vpop.f32.mrf.mxu0
  %7726 = vmatprep.mubr.bf16.mxu0 %v2259
  %7727 = vmatmul.mubr.bf16.gmra.mxu0 %v2258
  %v7728 = vpop.f32.mrf.mxu0
  %v7729 = vadd.f32 %v7680, %v7728
  %v7730 = vpop.f32.mrf.mxu0
  %v7731 = vpop.f32.mrf.mxu0
  %v7732 = vadd.f32 %v7683, %v7731
  %v7733 = vpop.f32.mrf.mxu0
  %7734 = vdwg.mxu0
  %7735 = vmatprep.subr.bf16.mxu0 0
  %7736 = vmatpush1.bf16.msra.mxu0 %v5641
  %7737 = vmatprep.subr.bf16.mxu0 0
  %7738 = vmatpush1.bf16.msra.mxu0 %v5640
  %7739 = vmatprep.subr.bf16.mxu0 0
  %7740 = vmatpush1.bf16.msra.mxu0 %v5639
  %7741 = vmatprep.subr.bf16.mxu0 0
  %7742 = vmatpush1.bf16.msra.mxu0 %v5638
  %7743 = vmatprep.subr.bf16.mxu0 0
  %7744 = vmatpush1.bf16.msra.mxu0 %v5637
  %7745 = vmatprep.subr.bf16.mxu0 0
  %7746 = vmatpush1.bf16.msra.mxu0 %v5636
  %7747 = vmatprep.subr.bf16.mxu0 0
  %7748 = vmatpush1.bf16.msra.mxu0 %v5635
  %7749 = vmatprep.subr.bf16.mxu0 0
  %7750 = vmatpush1.bf16.msra.mxu0 %v5634
  %7751 = vmatprep.subr.bf16.mxu0 0
  %7752 = vmatpush2.bf16.msra.mxu0 %v5649
  %7753 = vmatprep.subr.bf16.mxu0 0
  %7754 = vmatpush2.bf16.msra.mxu0 %v5648
  %7755 = vmatprep.subr.bf16.mxu0 0
  %7756 = vmatpush2.bf16.msra.mxu0 %v5647
  %7757 = vmatprep.subr.bf16.mxu0 0
  %7758 = vmatpush2.bf16.msra.mxu0 %v5646
  %7759 = vmatprep.subr.bf16.mxu0 0
  %7760 = vmatpush2.bf16.msra.mxu0 %v5645
  %7761 = vmatprep.subr.bf16.mxu0 0
  %7762 = vmatpush2.bf16.msra.mxu0 %v5644
  %7763 = vmatprep.subr.bf16.mxu0 0
  %7764 = vmatpush2.bf16.msra.mxu0 %v5643
  %7765 = vmatprep.subr.bf16.mxu0 0
  %7766 = vmatpush2.bf16.msra.mxu0 %v5642
  %7767 = vmatprep.mubr.bf16.mxu0 %v2173
  %7768 = vmatmul.mubr.bf16.gmra.mxu0 %v2172
  %v7769 = vpop.f32.mrf.mxu0
  %v7770 = vadd.f32 %v7721, %v7769
  %v7771 = vpop.f32.mrf.mxu0
  %v7772 = vpop.f32.mrf.mxu0
  %v7773 = vadd.f32 %v7724, %v7772
  %v7774 = vpop.f32.mrf.mxu0
  %7775 = vmatprep.mubr.bf16.mxu0 %v2261
  %7776 = vmatmul.mubr.bf16.gmra.mxu0 %v2260
  %v7777 = vpop.f32.mrf.mxu0
  %v7778 = vadd.f32 %v7729, %v7777
  %v7779 = vpop.f32.mrf.mxu0
  %v7780 = vpop.f32.mrf.mxu0
  %v7781 = vadd.f32 %v7732, %v7780
  %v7782 = vpop.f32.mrf.mxu0
  %7783 = vdwg.mxu0
  %7784 = vmatprep.subr.bf16.mxu0 0
  %7785 = vmatpush1.bf16.msra.mxu0 %v5657
  %7786 = vmatprep.subr.bf16.mxu0 0
  %7787 = vmatpush1.bf16.msra.mxu0 %v5656
  %7788 = vmatprep.subr.bf16.mxu0 0
  %7789 = vmatpush1.bf16.msra.mxu0 %v5655
  %7790 = vmatprep.subr.bf16.mxu0 0
  %7791 = vmatpush1.bf16.msra.mxu0 %v5654
  %7792 = vmatprep.subr.bf16.mxu0 0
  %7793 = vmatpush1.bf16.msra.mxu0 %v5653
  %7794 = vmatprep.subr.bf16.mxu0 0
  %7795 = vmatpush1.bf16.msra.mxu0 %v5652
  %7796 = vmatprep.subr.bf16.mxu0 0
  %7797 = vmatpush1.bf16.msra.mxu0 %v5651
  %7798 = vmatprep.subr.bf16.mxu0 0
  %7799 = vmatpush1.bf16.msra.mxu0 %v5650
  %7800 = vmatprep.subr.bf16.mxu0 0
  %7801 = vmatpush2.bf16.msra.mxu0 %v5665
  %7802 = vmatprep.subr.bf16.mxu0 0
  %7803 = vmatpush2.bf16.msra.mxu0 %v5664
  %7804 = vmatprep.subr.bf16.mxu0 0
  %7805 = vmatpush2.bf16.msra.mxu0 %v5663
  %7806 = vmatprep.subr.bf16.mxu0 0
  %7807 = vmatpush2.bf16.msra.mxu0 %v5662
  %7808 = vmatprep.subr.bf16.mxu0 0
  %7809 = vmatpush2.bf16.msra.mxu0 %v5661
  %7810 = vmatprep.subr.bf16.mxu0 0
  %7811 = vmatpush2.bf16.msra.mxu0 %v5660
  %7812 = vmatprep.subr.bf16.mxu0 0
  %7813 = vmatpush2.bf16.msra.mxu0 %v5659
  %7814 = vmatprep.subr.bf16.mxu0 0
  %7815 = vmatpush2.bf16.msra.mxu0 %v5658
  %7816 = vmatprep.mubr.bf16.mxu0 %v2175
  %7817 = vmatmul.mubr.bf16.gmra.mxu0 %v2174
  %v7818 = vpop.f32.mrf.mxu0
  %v7819 = vadd.f32 %v7770, %v7818
  %v7820 = vpop.f32.mrf.mxu0
  %v7821 = vpop.f32.mrf.mxu0
  %v7822 = vadd.f32 %v7773, %v7821
  %v7823 = vpop.f32.mrf.mxu0
  %7824 = vmatprep.mubr.bf16.mxu0 %v2263
  %7825 = vmatmul.mubr.bf16.gmra.mxu0 %v2262
  %v7826 = vpop.f32.mrf.mxu0
  %v7827 = vadd.f32 %v7778, %v7826
  %v7828 = vpop.f32.mrf.mxu0
  %v7829 = vpop.f32.mrf.mxu0
  %v7830 = vadd.f32 %v7781, %v7829
  %v7831 = vpop.f32.mrf.mxu0
  %7832 = vdwg.mxu0
  %7833 = vmatprep.subr.bf16.mxu0 0
  %7834 = vmatpush1.bf16.msra.mxu0 %v5673
  %7835 = vmatprep.subr.bf16.mxu0 0
  %7836 = vmatpush1.bf16.msra.mxu0 %v5672
  %7837 = vmatprep.subr.bf16.mxu0 0
  %7838 = vmatpush1.bf16.msra.mxu0 %v5671
  %7839 = vmatprep.subr.bf16.mxu0 0
  %7840 = vmatpush1.bf16.msra.mxu0 %v5670
  %7841 = vmatprep.subr.bf16.mxu0 0
  %7842 = vmatpush1.bf16.msra.mxu0 %v5669
  %7843 = vmatprep.subr.bf16.mxu0 0
  %7844 = vmatpush1.bf16.msra.mxu0 %v5668
  %7845 = vmatprep.subr.bf16.mxu0 0
  %7846 = vmatpush1.bf16.msra.mxu0 %v5667
  %7847 = vmatprep.subr.bf16.mxu0 0
  %7848 = vmatpush1.bf16.msra.mxu0 %v5666
  %7849 = vmatprep.subr.bf16.mxu0 0
  %7850 = vmatpush2.bf16.msra.mxu0 %v5681
  %7851 = vmatprep.subr.bf16.mxu0 0
  %7852 = vmatpush2.bf16.msra.mxu0 %v5680
  %7853 = vmatprep.subr.bf16.mxu0 0
  %7854 = vmatpush2.bf16.msra.mxu0 %v5679
  %7855 = vmatprep.subr.bf16.mxu0 0
  %7856 = vmatpush2.bf16.msra.mxu0 %v5678
  %7857 = vmatprep.subr.bf16.mxu0 0
  %7858 = vmatpush2.bf16.msra.mxu0 %v5677
  %7859 = vmatprep.subr.bf16.mxu0 0
  %7860 = vmatpush2.bf16.msra.mxu0 %v5676
  %7861 = vmatprep.subr.bf16.mxu0 0
  %7862 = vmatpush2.bf16.msra.mxu0 %v5675
  %7863 = vmatprep.subr.bf16.mxu0 0
  %7864 = vmatpush2.bf16.msra.mxu0 %v5674
  %7865 = vmatprep.mubr.bf16.mxu0 %v2177
  %7866 = vmatmul.mubr.bf16.gmra.mxu0 %v2176
  %v7867 = vpop.f32.mrf.mxu0
  %v7868 = vadd.f32 %v7819, %v7867
  %v7869 = vpop.f32.mrf.mxu0
  %v7870 = vpop.f32.mrf.mxu0
  %v7871 = vadd.f32 %v7822, %v7870
  %v7872 = vpop.f32.mrf.mxu0
  %7873 = vmatprep.mubr.bf16.mxu0 %v2265
  %7874 = vmatmul.mubr.bf16.gmra.mxu0 %v2264
  %v7875 = vpop.f32.mrf.mxu0
  %v7876 = vadd.f32 %v7827, %v7875
  %v7877 = vpop.f32.mrf.mxu0
  %v7878 = vpop.f32.mrf.mxu0
  %v7879 = vadd.f32 %v7830, %v7878
  %v7880 = vpop.f32.mrf.mxu0
  %7881 = vdwg.mxu0
  %7882 = vmatprep.subr.bf16.mxu0 0
  %7883 = vmatpush1.bf16.msra.mxu0 %v5689
  %7884 = vmatprep.subr.bf16.mxu0 0
  %7885 = vmatpush1.bf16.msra.mxu0 %v5688
  %7886 = vmatprep.subr.bf16.mxu0 0
  %7887 = vmatpush1.bf16.msra.mxu0 %v5687
  %7888 = vmatprep.subr.bf16.mxu0 0
  %7889 = vmatpush1.bf16.msra.mxu0 %v5686
  %7890 = vmatprep.subr.bf16.mxu0 0
  %7891 = vmatpush1.bf16.msra.mxu0 %v5685
  %7892 = vmatprep.subr.bf16.mxu0 0
  %7893 = vmatpush1.bf16.msra.mxu0 %v5684
  %7894 = vmatprep.subr.bf16.mxu0 0
  %7895 = vmatpush1.bf16.msra.mxu0 %v5683
  %7896 = vmatprep.subr.bf16.mxu0 0
  %7897 = vmatpush1.bf16.msra.mxu0 %v5682
  %7898 = vmatprep.subr.bf16.mxu0 0
  %7899 = vmatpush2.bf16.msra.mxu0 %v5697
  %7900 = vmatprep.subr.bf16.mxu0 0
  %7901 = vmatpush2.bf16.msra.mxu0 %v5696
  %7902 = vmatprep.subr.bf16.mxu0 0
  %7903 = vmatpush2.bf16.msra.mxu0 %v5695
  %7904 = vmatprep.subr.bf16.mxu0 0
  %7905 = vmatpush2.bf16.msra.mxu0 %v5694
  %7906 = vmatprep.subr.bf16.mxu0 0
  %7907 = vmatpush2.bf16.msra.mxu0 %v5693
  %7908 = vmatprep.subr.bf16.mxu0 0
  %7909 = vmatpush2.bf16.msra.mxu0 %v5692
  %7910 = vmatprep.subr.bf16.mxu0 0
  %7911 = vmatpush2.bf16.msra.mxu0 %v5691
  %7912 = vmatprep.subr.bf16.mxu0 0
  %7913 = vmatpush2.bf16.msra.mxu0 %v5690
  %7914 = vmatprep.mubr.bf16.mxu0 %v2179
  %7915 = vmatmul.mubr.bf16.gmra.mxu0 %v2178
  %v7916 = vpop.f32.mrf.mxu0
  %v7917 = vadd.f32 %v7868, %v7916
  %v7918 = vpop.f32.mrf.mxu0
  %v7919 = vpop.f32.mrf.mxu0
  %v7920 = vadd.f32 %v7871, %v7919
  %v7921 = vpop.f32.mrf.mxu0
  %7922 = vmatprep.mubr.bf16.mxu0 %v2267
  %7923 = vmatmul.mubr.bf16.gmra.mxu0 %v2266
  %v7924 = vpop.f32.mrf.mxu0
  %v7925 = vadd.f32 %v7876, %v7924
  %v7926 = vpop.f32.mrf.mxu0
  %v7927 = vpop.f32.mrf.mxu0
  %v7928 = vadd.f32 %v7879, %v7927
  %v7929 = vpop.f32.mrf.mxu0
  %7930 = vdwg.mxu0
  %7931 = vmatprep.subr.bf16.mxu0 0
  %7932 = vmatpush1.bf16.msra.mxu0 %v5705
  %7933 = vmatprep.subr.bf16.mxu0 0
  %7934 = vmatpush1.bf16.msra.mxu0 %v5704
  %7935 = vmatprep.subr.bf16.mxu0 0
  %7936 = vmatpush1.bf16.msra.mxu0 %v5703
  %7937 = vmatprep.subr.bf16.mxu0 0
  %7938 = vmatpush1.bf16.msra.mxu0 %v5702
  %7939 = vmatprep.subr.bf16.mxu0 0
  %7940 = vmatpush1.bf16.msra.mxu0 %v5701
  %7941 = vmatprep.subr.bf16.mxu0 0
  %7942 = vmatpush1.bf16.msra.mxu0 %v5700
  %7943 = vmatprep.subr.bf16.mxu0 0
  %7944 = vmatpush1.bf16.msra.mxu0 %v5699
  %7945 = vmatprep.subr.bf16.mxu0 0
  %7946 = vmatpush1.bf16.msra.mxu0 %v5698
  %7947 = vmatprep.subr.bf16.mxu0 0
  %7948 = vmatpush2.bf16.msra.mxu0 %v5713
  %7949 = vmatprep.subr.bf16.mxu0 0
  %7950 = vmatpush2.bf16.msra.mxu0 %v5712
  %7951 = vmatprep.subr.bf16.mxu0 0
  %7952 = vmatpush2.bf16.msra.mxu0 %v5711
  %7953 = vmatprep.subr.bf16.mxu0 0
  %7954 = vmatpush2.bf16.msra.mxu0 %v5710
  %7955 = vmatprep.subr.bf16.mxu0 0
  %7956 = vmatpush2.bf16.msra.mxu0 %v5709
  %7957 = vmatprep.subr.bf16.mxu0 0
  %7958 = vmatpush2.bf16.msra.mxu0 %v5708
  %7959 = vmatprep.subr.bf16.mxu0 0
  %7960 = vmatpush2.bf16.msra.mxu0 %v5707
  %7961 = vmatprep.subr.bf16.mxu0 0
  %7962 = vmatpush2.bf16.msra.mxu0 %v5706
  %7963 = vmatprep.mubr.bf16.mxu0 %v2181
  %7964 = vmatmul.mubr.bf16.gmra.mxu0 %v2180
  %v7965 = vpop.f32.mrf.mxu0
  %v7966 = vadd.f32 %v7917, %v7965
  %v7967 = vpop.f32.mrf.mxu0
  %v7968 = vpop.f32.mrf.mxu0
  %v7969 = vadd.f32 %v7920, %v7968
  %v7970 = vpop.f32.mrf.mxu0
  %7971 = vmatprep.mubr.bf16.mxu0 %v2269
  %7972 = vmatmul.mubr.bf16.gmra.mxu0 %v2268
  %v7973 = vpop.f32.mrf.mxu0
  %v7974 = vadd.f32 %v7925, %v7973
  %v7975 = vpop.f32.mrf.mxu0
  %v7976 = vpop.f32.mrf.mxu0
  %v7977 = vadd.f32 %v7928, %v7976
  %v7978 = vpop.f32.mrf.mxu0
  %7979 = vdwg.mxu0
  %7980 = vmatprep.subr.bf16.mxu0 0
  %7981 = vmatpush1.bf16.msra.mxu0 %v5721
  %7982 = vmatprep.subr.bf16.mxu0 0
  %7983 = vmatpush1.bf16.msra.mxu0 %v5720
  %7984 = vmatprep.subr.bf16.mxu0 0
  %7985 = vmatpush1.bf16.msra.mxu0 %v5719
  %7986 = vmatprep.subr.bf16.mxu0 0
  %7987 = vmatpush1.bf16.msra.mxu0 %v5718
  %7988 = vmatprep.subr.bf16.mxu0 0
  %7989 = vmatpush1.bf16.msra.mxu0 %v5717
  %7990 = vmatprep.subr.bf16.mxu0 0
  %7991 = vmatpush1.bf16.msra.mxu0 %v5716
  %7992 = vmatprep.subr.bf16.mxu0 0
  %7993 = vmatpush1.bf16.msra.mxu0 %v5715
  %7994 = vmatprep.subr.bf16.mxu0 0
  %7995 = vmatpush1.bf16.msra.mxu0 %v5714
  %7996 = vmatprep.subr.bf16.mxu0 0
  %7997 = vmatpush2.bf16.msra.mxu0 %v5729
  %7998 = vmatprep.subr.bf16.mxu0 0
  %7999 = vmatpush2.bf16.msra.mxu0 %v5728
  %8000 = vmatprep.subr.bf16.mxu0 0
  %8001 = vmatpush2.bf16.msra.mxu0 %v5727
  %8002 = vmatprep.subr.bf16.mxu0 0
  %8003 = vmatpush2.bf16.msra.mxu0 %v5726
  %8004 = vmatprep.subr.bf16.mxu0 0
  %8005 = vmatpush2.bf16.msra.mxu0 %v5725
  %8006 = vmatprep.subr.bf16.mxu0 0
  %8007 = vmatpush2.bf16.msra.mxu0 %v5724
  %8008 = vmatprep.subr.bf16.mxu0 0
  %8009 = vmatpush2.bf16.msra.mxu0 %v5723
  %8010 = vmatprep.subr.bf16.mxu0 0
  %8011 = vmatpush2.bf16.msra.mxu0 %v5722
  %8012 = vmatprep.mubr.bf16.mxu0 %v2183
  %8013 = vmatmul.mubr.bf16.gmra.mxu0 %v2182
  %v8014 = vpop.f32.mrf.mxu0
  %v8015 = vadd.f32 %v7966, %v8014
  %v8016 = vpop.f32.mrf.mxu0
  %v8017 = vpop.f32.mrf.mxu0
  %v8018 = vadd.f32 %v7969, %v8017
  %v8019 = vpop.f32.mrf.mxu0
  %8020 = vmatprep.mubr.bf16.mxu0 %v2271
  %8021 = vmatmul.mubr.bf16.gmra.mxu0 %v2270
  %v8022 = vpop.f32.mrf.mxu0
  %v8023 = vadd.f32 %v7974, %v8022
  %v8024 = vpop.f32.mrf.mxu0
  %v8025 = vpop.f32.mrf.mxu0
  %v8026 = vadd.f32 %v7977, %v8025
  %v8027 = vpop.f32.mrf.mxu0
  %8028 = vdwg.mxu0
  %8029 = vmatprep.subr.bf16.mxu0 0
  %8030 = vmatpush1.bf16.msra.mxu0 %v5737
  %8031 = vmatprep.subr.bf16.mxu0 0
  %8032 = vmatpush1.bf16.msra.mxu0 %v5736
  %8033 = vmatprep.subr.bf16.mxu0 0
  %8034 = vmatpush1.bf16.msra.mxu0 %v5735
  %8035 = vmatprep.subr.bf16.mxu0 0
  %8036 = vmatpush1.bf16.msra.mxu0 %v5734
  %8037 = vmatprep.subr.bf16.mxu0 0
  %8038 = vmatpush1.bf16.msra.mxu0 %v5733
  %8039 = vmatprep.subr.bf16.mxu0 0
  %8040 = vmatpush1.bf16.msra.mxu0 %v5732
  %8041 = vmatprep.subr.bf16.mxu0 0
  %8042 = vmatpush1.bf16.msra.mxu0 %v5731
  %8043 = vmatprep.subr.bf16.mxu0 0
  %8044 = vmatpush1.bf16.msra.mxu0 %v5730
  %8045 = vmatprep.subr.bf16.mxu0 0
  %8046 = vmatpush2.bf16.msra.mxu0 %v5745
  %8047 = vmatprep.subr.bf16.mxu0 0
  %8048 = vmatpush2.bf16.msra.mxu0 %v5744
  %8049 = vmatprep.subr.bf16.mxu0 0
  %8050 = vmatpush2.bf16.msra.mxu0 %v5743
  %8051 = vmatprep.subr.bf16.mxu0 0
  %8052 = vmatpush2.bf16.msra.mxu0 %v5742
  %8053 = vmatprep.subr.bf16.mxu0 0
  %8054 = vmatpush2.bf16.msra.mxu0 %v5741
  %8055 = vmatprep.subr.bf16.mxu0 0
  %8056 = vmatpush2.bf16.msra.mxu0 %v5740
  %8057 = vmatprep.subr.bf16.mxu0 0
  %8058 = vmatpush2.bf16.msra.mxu0 %v5739
  %8059 = vmatprep.subr.bf16.mxu0 0
  %8060 = vmatpush2.bf16.msra.mxu0 %v5738
  %8061 = vmatprep.mubr.bf16.mxu0 %v2185
  %8062 = vmatmul.mubr.bf16.gmra.mxu0 %v2184
  %v8063 = vpop.f32.mrf.mxu0
  %v8064 = vadd.f32 %v8015, %v8063
  %v8065 = vpop.f32.mrf.mxu0
  %v8066 = vpop.f32.mrf.mxu0
  %v8067 = vadd.f32 %v8018, %v8066
  %v8068 = vpop.f32.mrf.mxu0
  %8069 = vmatprep.mubr.bf16.mxu0 %v2273
  %8070 = vmatmul.mubr.bf16.gmra.mxu0 %v2272
  %v8071 = vpop.f32.mrf.mxu0
  %v8072 = vadd.f32 %v8023, %v8071
  %v8073 = vpop.f32.mrf.mxu0
  %v8074 = vpop.f32.mrf.mxu0
  %v8075 = vadd.f32 %v8026, %v8074
  %v8076 = vpop.f32.mrf.mxu0
  %8077 = vdwg.mxu0
  %8078 = vmatprep.subr.bf16.mxu0 0
  %8079 = vmatpush1.bf16.msra.mxu0 %v5753
  %8080 = vmatprep.subr.bf16.mxu0 0
  %8081 = vmatpush1.bf16.msra.mxu0 %v5752
  %8082 = vmatprep.subr.bf16.mxu0 0
  %8083 = vmatpush1.bf16.msra.mxu0 %v5751
  %8084 = vmatprep.subr.bf16.mxu0 0
  %8085 = vmatpush1.bf16.msra.mxu0 %v5750
  %8086 = vmatprep.subr.bf16.mxu0 0
  %8087 = vmatpush1.bf16.msra.mxu0 %v5749
  %8088 = vmatprep.subr.bf16.mxu0 0
  %8089 = vmatpush1.bf16.msra.mxu0 %v5748
  %8090 = vmatprep.subr.bf16.mxu0 0
  %8091 = vmatpush1.bf16.msra.mxu0 %v5747
  %8092 = vmatprep.subr.bf16.mxu0 0
  %8093 = vmatpush1.bf16.msra.mxu0 %v5746
  %8094 = vmatprep.subr.bf16.mxu0 0
  %8095 = vmatpush2.bf16.msra.mxu0 %v5761
  %8096 = vmatprep.subr.bf16.mxu0 0
  %8097 = vmatpush2.bf16.msra.mxu0 %v5760
  %8098 = vmatprep.subr.bf16.mxu0 0
  %8099 = vmatpush2.bf16.msra.mxu0 %v5759
  %8100 = vmatprep.subr.bf16.mxu0 0
  %8101 = vmatpush2.bf16.msra.mxu0 %v5758
  %8102 = vmatprep.subr.bf16.mxu0 0
  %8103 = vmatpush2.bf16.msra.mxu0 %v5757
  %8104 = vmatprep.subr.bf16.mxu0 0
  %8105 = vmatpush2.bf16.msra.mxu0 %v5756
  %8106 = vmatprep.subr.bf16.mxu0 0
  %8107 = vmatpush2.bf16.msra.mxu0 %v5755
  %8108 = vmatprep.subr.bf16.mxu0 0
  %8109 = vmatpush2.bf16.msra.mxu0 %v5754
  %8110 = vmatprep.mubr.bf16.mxu0 %v2187
  %8111 = vmatmul.mubr.bf16.gmra.mxu0 %v2186
  %v8112 = vpop.f32.mrf.mxu0
  %v8113 = vadd.f32 %v8064, %v8112
  %v8114 = vpop.f32.mrf.mxu0
  %v8115 = vpop.f32.mrf.mxu0
  %v8116 = vadd.f32 %v8067, %v8115
  %v8117 = vpop.f32.mrf.mxu0
  %8118 = vmatprep.mubr.bf16.mxu0 %v2275
  %8119 = vmatmul.mubr.bf16.gmra.mxu0 %v2274
  %v8120 = vpop.f32.mrf.mxu0
  %v8121 = vadd.f32 %v8072, %v8120
  %v8122 = vpop.f32.mrf.mxu0
  %v8123 = vpop.f32.mrf.mxu0
  %v8124 = vadd.f32 %v8075, %v8123
  %v8125 = vpop.f32.mrf.mxu0
  %8126 = vdwg.mxu0
  %8127 = vmatprep.subr.bf16.mxu0 0
  %8128 = vmatpush1.bf16.msra.mxu0 %v5769
  %8129 = vmatprep.subr.bf16.mxu0 0
  %8130 = vmatpush1.bf16.msra.mxu0 %v5768
  %8131 = vmatprep.subr.bf16.mxu0 0
  %8132 = vmatpush1.bf16.msra.mxu0 %v5767
  %8133 = vmatprep.subr.bf16.mxu0 0
  %8134 = vmatpush1.bf16.msra.mxu0 %v5766
  %8135 = vmatprep.subr.bf16.mxu0 0
  %8136 = vmatpush1.bf16.msra.mxu0 %v5765
  %8137 = vmatprep.subr.bf16.mxu0 0
  %8138 = vmatpush1.bf16.msra.mxu0 %v5764
  %8139 = vmatprep.subr.bf16.mxu0 0
  %8140 = vmatpush1.bf16.msra.mxu0 %v5763
  %8141 = vmatprep.subr.bf16.mxu0 0
  %8142 = vmatpush1.bf16.msra.mxu0 %v5762
  %8143 = vmatprep.subr.bf16.mxu0 0
  %8144 = vmatpush2.bf16.msra.mxu0 %v5777
  %8145 = vmatprep.subr.bf16.mxu0 0
  %8146 = vmatpush2.bf16.msra.mxu0 %v5776
  %8147 = vmatprep.subr.bf16.mxu0 0
  %8148 = vmatpush2.bf16.msra.mxu0 %v5775
  %8149 = vmatprep.subr.bf16.mxu0 0
  %8150 = vmatpush2.bf16.msra.mxu0 %v5774
  %8151 = vmatprep.subr.bf16.mxu0 0
  %8152 = vmatpush2.bf16.msra.mxu0 %v5773
  %8153 = vmatprep.subr.bf16.mxu0 0
  %8154 = vmatpush2.bf16.msra.mxu0 %v5772
  %8155 = vmatprep.subr.bf16.mxu0 0
  %8156 = vmatpush2.bf16.msra.mxu0 %v5771
  %8157 = vmatprep.subr.bf16.mxu0 0
  %8158 = vmatpush2.bf16.msra.mxu0 %v5770
  %8159 = vmatprep.mubr.bf16.mxu0 %v2189
  %8160 = vmatmul.mubr.bf16.gmra.mxu0 %v2188
  %v8161 = vpop.f32.mrf.mxu0
  %v8162 = vadd.f32 %v8113, %v8161
  %v8163 = vpop.f32.mrf.mxu0
  %v8164 = vpop.f32.mrf.mxu0
  %v8165 = vadd.f32 %v8116, %v8164
  %v8166 = vpop.f32.mrf.mxu0
  %8167 = vmatprep.mubr.bf16.mxu0 %v2277
  %8168 = vmatmul.mubr.bf16.gmra.mxu0 %v2276
  %v8169 = vpop.f32.mrf.mxu0
  %v8170 = vadd.f32 %v8121, %v8169
  %v8171 = vpop.f32.mrf.mxu0
  %v8172 = vpop.f32.mrf.mxu0
  %v8173 = vadd.f32 %v8124, %v8172
  %v8174 = vpop.f32.mrf.mxu0
  %8175 = vdwg.mxu0
  %8176 = vmatprep.subr.bf16.mxu0 0
  %8177 = vmatpush1.bf16.msra.mxu0 %v5785
  %8178 = vmatprep.subr.bf16.mxu0 0
  %8179 = vmatpush1.bf16.msra.mxu0 %v5784
  %8180 = vmatprep.subr.bf16.mxu0 0
  %8181 = vmatpush1.bf16.msra.mxu0 %v5783
  %8182 = vmatprep.subr.bf16.mxu0 0
  %8183 = vmatpush1.bf16.msra.mxu0 %v5782
  %8184 = vmatprep.subr.bf16.mxu0 0
  %8185 = vmatpush1.bf16.msra.mxu0 %v5781
  %8186 = vmatprep.subr.bf16.mxu0 0
  %8187 = vmatpush1.bf16.msra.mxu0 %v5780
  %8188 = vmatprep.subr.bf16.mxu0 0
  %8189 = vmatpush1.bf16.msra.mxu0 %v5779
  %8190 = vmatprep.subr.bf16.mxu0 0
  %8191 = vmatpush1.bf16.msra.mxu0 %v5778
  %8192 = vmatprep.subr.bf16.mxu0 0
  %8193 = vmatpush2.bf16.msra.mxu0 %v5793
  %8194 = vmatprep.subr.bf16.mxu0 0
  %8195 = vmatpush2.bf16.msra.mxu0 %v5792
  %8196 = vmatprep.subr.bf16.mxu0 0
  %8197 = vmatpush2.bf16.msra.mxu0 %v5791
  %8198 = vmatprep.subr.bf16.mxu0 0
  %8199 = vmatpush2.bf16.msra.mxu0 %v5790
  %8200 = vmatprep.subr.bf16.mxu0 0
  %8201 = vmatpush2.bf16.msra.mxu0 %v5789
  %8202 = vmatprep.subr.bf16.mxu0 0
  %8203 = vmatpush2.bf16.msra.mxu0 %v5788
  %8204 = vmatprep.subr.bf16.mxu0 0
  %8205 = vmatpush2.bf16.msra.mxu0 %v5787
  %8206 = vmatprep.subr.bf16.mxu0 0
  %8207 = vmatpush2.bf16.msra.mxu0 %v5786
  %8208 = vmatprep.mubr.bf16.mxu0 %v2191
  %8209 = vmatmul.mubr.bf16.gmra.mxu0 %v2190
  %v8210 = vpop.f32.mrf.mxu0
  %v8211 = vadd.f32 %v8162, %v8210
  %v8212 = vpop.f32.mrf.mxu0
  %v8213 = vpop.f32.mrf.mxu0
  %v8214 = vadd.f32 %v8165, %v8213
  %v8215 = vpop.f32.mrf.mxu0
  %8216 = vmatprep.mubr.bf16.mxu0 %v2279
  %8217 = vmatmul.mubr.bf16.gmra.mxu0 %v2278
  %v8218 = vpop.f32.mrf.mxu0
  %v8219 = vadd.f32 %v8170, %v8218
  %v8220 = vpop.f32.mrf.mxu0
  %v8221 = vpop.f32.mrf.mxu0
  %v8222 = vadd.f32 %v8173, %v8221
  %v8223 = vpop.f32.mrf.mxu0
  %8224 = vdwg.mxu0
  %8225 = vmatprep.subr.bf16.mxu0 0
  %8226 = vmatpush1.bf16.msra.mxu0 %v5801
  %8227 = vmatprep.subr.bf16.mxu0 0
  %8228 = vmatpush1.bf16.msra.mxu0 %v5800
  %8229 = vmatprep.subr.bf16.mxu0 0
  %8230 = vmatpush1.bf16.msra.mxu0 %v5799
  %8231 = vmatprep.subr.bf16.mxu0 0
  %8232 = vmatpush1.bf16.msra.mxu0 %v5798
  %8233 = vmatprep.subr.bf16.mxu0 0
  %8234 = vmatpush1.bf16.msra.mxu0 %v5797
  %8235 = vmatprep.subr.bf16.mxu0 0
  %8236 = vmatpush1.bf16.msra.mxu0 %v5796
  %8237 = vmatprep.subr.bf16.mxu0 0
  %8238 = vmatpush1.bf16.msra.mxu0 %v5795
  %8239 = vmatprep.subr.bf16.mxu0 0
  %8240 = vmatpush1.bf16.msra.mxu0 %v5794
  %8241 = vmatprep.subr.bf16.mxu0 0
  %8242 = vmatpush2.bf16.msra.mxu0 %v5809
  %8243 = vmatprep.subr.bf16.mxu0 0
  %8244 = vmatpush2.bf16.msra.mxu0 %v5808
  %8245 = vmatprep.subr.bf16.mxu0 0
  %8246 = vmatpush2.bf16.msra.mxu0 %v5807
  %8247 = vmatprep.subr.bf16.mxu0 0
  %8248 = vmatpush2.bf16.msra.mxu0 %v5806
  %8249 = vmatprep.subr.bf16.mxu0 0
  %8250 = vmatpush2.bf16.msra.mxu0 %v5805
  %8251 = vmatprep.subr.bf16.mxu0 0
  %8252 = vmatpush2.bf16.msra.mxu0 %v5804
  %8253 = vmatprep.subr.bf16.mxu0 0
  %8254 = vmatpush2.bf16.msra.mxu0 %v5803
  %8255 = vmatprep.subr.bf16.mxu0 0
  %8256 = vmatpush2.bf16.msra.mxu0 %v5802
  %8257 = vmatprep.mubr.bf16.mxu0 %v2193
  %8258 = vmatmul.mubr.bf16.gmra.mxu0 %v2192
  %v8259 = vpop.f32.mrf.mxu0
  %v8260 = vadd.f32 %v8211, %v8259
  %v8261 = vpop.f32.mrf.mxu0
  %v8262 = vpop.f32.mrf.mxu0
  %v8263 = vadd.f32 %v8214, %v8262
  %v8264 = vpop.f32.mrf.mxu0
  %8265 = vmatprep.mubr.bf16.mxu0 %v2281
  %8266 = vmatmul.mubr.bf16.gmra.mxu0 %v2280
  %v8267 = vpop.f32.mrf.mxu0
  %v8268 = vadd.f32 %v8219, %v8267
  %v8269 = vpop.f32.mrf.mxu0
  %v8270 = vpop.f32.mrf.mxu0
  %v8271 = vadd.f32 %v8222, %v8270
  %v8272 = vpop.f32.mrf.mxu0
  %8273 = vdwg.mxu0
  %8274 = vmatprep.subr.bf16.mxu0 0
  %8275 = vmatpush1.bf16.msra.mxu0 %v5817
  %8276 = vmatprep.subr.bf16.mxu0 0
  %8277 = vmatpush1.bf16.msra.mxu0 %v5816
  %8278 = vmatprep.subr.bf16.mxu0 0
  %8279 = vmatpush1.bf16.msra.mxu0 %v5815
  %8280 = vmatprep.subr.bf16.mxu0 0
  %8281 = vmatpush1.bf16.msra.mxu0 %v5814
  %8282 = vmatprep.subr.bf16.mxu0 0
  %8283 = vmatpush1.bf16.msra.mxu0 %v5813
  %8284 = vmatprep.subr.bf16.mxu0 0
  %8285 = vmatpush1.bf16.msra.mxu0 %v5812
  %8286 = vmatprep.subr.bf16.mxu0 0
  %8287 = vmatpush1.bf16.msra.mxu0 %v5811
  %8288 = vmatprep.subr.bf16.mxu0 0
  %8289 = vmatpush1.bf16.msra.mxu0 %v5810
  %8290 = vmatprep.subr.bf16.mxu0 0
  %8291 = vmatpush2.bf16.msra.mxu0 %v5825
  %8292 = vmatprep.subr.bf16.mxu0 0
  %8293 = vmatpush2.bf16.msra.mxu0 %v5824
  %8294 = vmatprep.subr.bf16.mxu0 0
  %8295 = vmatpush2.bf16.msra.mxu0 %v5823
  %8296 = vmatprep.subr.bf16.mxu0 0
  %8297 = vmatpush2.bf16.msra.mxu0 %v5822
  %8298 = vmatprep.subr.bf16.mxu0 0
  %8299 = vmatpush2.bf16.msra.mxu0 %v5821
  %8300 = vmatprep.subr.bf16.mxu0 0
  %8301 = vmatpush2.bf16.msra.mxu0 %v5820
  %8302 = vmatprep.subr.bf16.mxu0 0
  %8303 = vmatpush2.bf16.msra.mxu0 %v5819
  %8304 = vmatprep.subr.bf16.mxu0 0
  %8305 = vmatpush2.bf16.msra.mxu0 %v5818
  %8306 = vmatprep.mubr.bf16.mxu0 %v2195
  %8307 = vmatmul.mubr.bf16.gmra.mxu0 %v2194
  %v8308 = vpop.f32.mrf.mxu0
  %v8309 = vadd.f32 %v8260, %v8308
  %v8310 = vpop.f32.mrf.mxu0
  %v8311 = vpop.f32.mrf.mxu0
  %v8312 = vadd.f32 %v8263, %v8311
  %v8313 = vpop.f32.mrf.mxu0
  %8314 = vmatprep.mubr.bf16.mxu0 %v2283
  %8315 = vmatmul.mubr.bf16.gmra.mxu0 %v2282
  %v8316 = vpop.f32.mrf.mxu0
  %v8317 = vadd.f32 %v8268, %v8316
  %v8318 = vpop.f32.mrf.mxu0
  %v8319 = vpop.f32.mrf.mxu0
  %v8320 = vadd.f32 %v8271, %v8319
  %v8321 = vpop.f32.mrf.mxu0
  %8322 = vdwg.mxu0
  %8323 = vmatprep.subr.bf16.mxu0 0
  %8324 = vmatpush1.bf16.msra.mxu0 %v5833
  %8325 = vmatprep.subr.bf16.mxu0 0
  %8326 = vmatpush1.bf16.msra.mxu0 %v5832
  %8327 = vmatprep.subr.bf16.mxu0 0
  %8328 = vmatpush1.bf16.msra.mxu0 %v5831
  %8329 = vmatprep.subr.bf16.mxu0 0
  %8330 = vmatpush1.bf16.msra.mxu0 %v5830
  %8331 = vmatprep.subr.bf16.mxu0 0
  %8332 = vmatpush1.bf16.msra.mxu0 %v5829
  %8333 = vmatprep.subr.bf16.mxu0 0
  %8334 = vmatpush1.bf16.msra.mxu0 %v5828
  %8335 = vmatprep.subr.bf16.mxu0 0
  %8336 = vmatpush1.bf16.msra.mxu0 %v5827
  %8337 = vmatprep.subr.bf16.mxu0 0
  %8338 = vmatpush1.bf16.msra.mxu0 %v5826
  %8339 = vmatprep.subr.bf16.mxu0 0
  %8340 = vmatpush2.bf16.msra.mxu0 %v5841
  %8341 = vmatprep.subr.bf16.mxu0 0
  %8342 = vmatpush2.bf16.msra.mxu0 %v5840
  %8343 = vmatprep.subr.bf16.mxu0 0
  %8344 = vmatpush2.bf16.msra.mxu0 %v5839
  %8345 = vmatprep.subr.bf16.mxu0 0
  %8346 = vmatpush2.bf16.msra.mxu0 %v5838
  %8347 = vmatprep.subr.bf16.mxu0 0
  %8348 = vmatpush2.bf16.msra.mxu0 %v5837
  %8349 = vmatprep.subr.bf16.mxu0 0
  %8350 = vmatpush2.bf16.msra.mxu0 %v5836
  %8351 = vmatprep.subr.bf16.mxu0 0
  %8352 = vmatpush2.bf16.msra.mxu0 %v5835
  %8353 = vmatprep.subr.bf16.mxu0 0
  %8354 = vmatpush2.bf16.msra.mxu0 %v5834
  %8355 = vmatprep.mubr.bf16.mxu0 %v2197
  %8356 = vmatmul.mubr.bf16.gmra.mxu0 %v2196
  %v8357 = vpop.f32.mrf.mxu0
  %v8358 = vadd.f32 %v8309, %v8357
  %v8359 = vpop.f32.mrf.mxu0
  %v8360 = vpop.f32.mrf.mxu0
  %v8361 = vadd.f32 %v8312, %v8360
  %v8362 = vpop.f32.mrf.mxu0
  %8363 = vmatprep.mubr.bf16.mxu0 %v2285
  %8364 = vmatmul.mubr.bf16.gmra.mxu0 %v2284
  %v8365 = vpop.f32.mrf.mxu0
  %v8366 = vadd.f32 %v8317, %v8365
  %v8367 = vpop.f32.mrf.mxu0
  %v8368 = vpop.f32.mrf.mxu0
  %v8369 = vadd.f32 %v8320, %v8368
  %v8370 = vpop.f32.mrf.mxu0
  %8371 = vdwg.mxu0
  %8372 = vmatprep.subr.bf16.mxu0 0
  %8373 = vmatpush1.bf16.msra.mxu0 %v5849
  %8374 = vmatprep.subr.bf16.mxu0 0
  %8375 = vmatpush1.bf16.msra.mxu0 %v5848
  %8376 = vmatprep.subr.bf16.mxu0 0
  %8377 = vmatpush1.bf16.msra.mxu0 %v5847
  %8378 = vmatprep.subr.bf16.mxu0 0
  %8379 = vmatpush1.bf16.msra.mxu0 %v5846
  %8380 = vmatprep.subr.bf16.mxu0 0
  %8381 = vmatpush1.bf16.msra.mxu0 %v5845
  %8382 = vmatprep.subr.bf16.mxu0 0
  %8383 = vmatpush1.bf16.msra.mxu0 %v5844
  %8384 = vmatprep.subr.bf16.mxu0 0
  %8385 = vmatpush1.bf16.msra.mxu0 %v5843
  %8386 = vmatprep.subr.bf16.mxu0 0
  %8387 = vmatpush1.bf16.msra.mxu0 %v5842
  %8388 = vmatprep.subr.bf16.mxu0 0
  %8389 = vmatpush2.bf16.msra.mxu0 %v5857
  %8390 = vmatprep.subr.bf16.mxu0 0
  %8391 = vmatpush2.bf16.msra.mxu0 %v5856
  %8392 = vmatprep.subr.bf16.mxu0 0
  %8393 = vmatpush2.bf16.msra.mxu0 %v5855
  %8394 = vmatprep.subr.bf16.mxu0 0
  %8395 = vmatpush2.bf16.msra.mxu0 %v5854
  %8396 = vmatprep.subr.bf16.mxu0 0
  %8397 = vmatpush2.bf16.msra.mxu0 %v5853
  %8398 = vmatprep.subr.bf16.mxu0 0
  %8399 = vmatpush2.bf16.msra.mxu0 %v5852
  %8400 = vmatprep.subr.bf16.mxu0 0
  %8401 = vmatpush2.bf16.msra.mxu0 %v5851
  %8402 = vmatprep.subr.bf16.mxu0 0
  %8403 = vmatpush2.bf16.msra.mxu0 %v5850
  %8404 = vmatprep.mubr.bf16.mxu0 %v2199
  %8405 = vmatmul.mubr.bf16.gmra.mxu0 %v2198
  %v8406 = vpop.f32.mrf.mxu0
  %v8407 = vadd.f32 %v8358, %v8406
  %v8408 = vpop.f32.mrf.mxu0
  %v8409 = vpop.f32.mrf.mxu0
  %v8410 = vadd.f32 %v8361, %v8409
  %v8411 = vpop.f32.mrf.mxu0
  %8412 = vmatprep.mubr.bf16.mxu0 %v2287
  %8413 = vmatmul.mubr.bf16.gmra.mxu0 %v2286
  %v8414 = vpop.f32.mrf.mxu0
  %v8415 = vadd.f32 %v8366, %v8414
  %v8416 = vpop.f32.mrf.mxu0
  %v8417 = vpop.f32.mrf.mxu0
  %v8418 = vadd.f32 %v8369, %v8417
  %v8419 = vpop.f32.mrf.mxu0
  %8420 = vdwg.mxu0
  %8421 = vmatprep.subr.bf16.mxu0 0
  %8422 = vmatpush1.bf16.msra.mxu0 %v5865
  %8423 = vmatprep.subr.bf16.mxu0 0
  %8424 = vmatpush1.bf16.msra.mxu0 %v5864
  %8425 = vmatprep.subr.bf16.mxu0 0
  %8426 = vmatpush1.bf16.msra.mxu0 %v5863
  %8427 = vmatprep.subr.bf16.mxu0 0
  %8428 = vmatpush1.bf16.msra.mxu0 %v5862
  %8429 = vmatprep.subr.bf16.mxu0 0
  %8430 = vmatpush1.bf16.msra.mxu0 %v5861
  %8431 = vmatprep.subr.bf16.mxu0 0
  %8432 = vmatpush1.bf16.msra.mxu0 %v5860
  %8433 = vmatprep.subr.bf16.mxu0 0
  %8434 = vmatpush1.bf16.msra.mxu0 %v5859
  %8435 = vmatprep.subr.bf16.mxu0 0
  %8436 = vmatpush1.bf16.msra.mxu0 %v5858
  %8437 = vmatprep.subr.bf16.mxu0 0
  %8438 = vmatpush2.bf16.msra.mxu0 %v5873
  %8439 = vmatprep.subr.bf16.mxu0 0
  %8440 = vmatpush2.bf16.msra.mxu0 %v5872
  %8441 = vmatprep.subr.bf16.mxu0 0
  %8442 = vmatpush2.bf16.msra.mxu0 %v5871
  %8443 = vmatprep.subr.bf16.mxu0 0
  %8444 = vmatpush2.bf16.msra.mxu0 %v5870
  %8445 = vmatprep.subr.bf16.mxu0 0
  %8446 = vmatpush2.bf16.msra.mxu0 %v5869
  %8447 = vmatprep.subr.bf16.mxu0 0
  %8448 = vmatpush2.bf16.msra.mxu0 %v5868
  %8449 = vmatprep.subr.bf16.mxu0 0
  %8450 = vmatpush2.bf16.msra.mxu0 %v5867
  %8451 = vmatprep.subr.bf16.mxu0 0
  %8452 = vmatpush2.bf16.msra.mxu0 %v5866
  %8453 = vmatprep.mubr.bf16.mxu0 %v2201
  %8454 = vmatmul.mubr.bf16.gmra.mxu0 %v2200
  %v8455 = vpop.f32.mrf.mxu0
  %v8456 = vadd.f32 %v8407, %v8455
  %v8457 = vpop.f32.mrf.mxu0
  %v8458 = vpop.f32.mrf.mxu0
  %v8459 = vadd.f32 %v8410, %v8458
  %v8460 = vpop.f32.mrf.mxu0
  %8461 = vmatprep.mubr.bf16.mxu0 %v2289
  %8462 = vmatmul.mubr.bf16.gmra.mxu0 %v2288
  %v8463 = vpop.f32.mrf.mxu0
  %v8464 = vadd.f32 %v8415, %v8463
  %v8465 = vpop.f32.mrf.mxu0
  %v8466 = vpop.f32.mrf.mxu0
  %v8467 = vadd.f32 %v8418, %v8466
  %v8468 = vpop.f32.mrf.mxu0
  %8469 = vdwg.mxu0
  %8470 = vmatprep.subr.bf16.mxu0 0
  %8471 = vmatpush1.bf16.msra.mxu0 %v5881
  %8472 = vmatprep.subr.bf16.mxu0 0
  %8473 = vmatpush1.bf16.msra.mxu0 %v5880
  %8474 = vmatprep.subr.bf16.mxu0 0
  %8475 = vmatpush1.bf16.msra.mxu0 %v5879
  %8476 = vmatprep.subr.bf16.mxu0 0
  %8477 = vmatpush1.bf16.msra.mxu0 %v5878
  %8478 = vmatprep.subr.bf16.mxu0 0
  %8479 = vmatpush1.bf16.msra.mxu0 %v5877
  %8480 = vmatprep.subr.bf16.mxu0 0
  %8481 = vmatpush1.bf16.msra.mxu0 %v5876
  %8482 = vmatprep.subr.bf16.mxu0 0
  %8483 = vmatpush1.bf16.msra.mxu0 %v5875
  %8484 = vmatprep.subr.bf16.mxu0 0
  %8485 = vmatpush1.bf16.msra.mxu0 %v5874
  %8486 = vmatprep.subr.bf16.mxu0 0
  %8487 = vmatpush2.bf16.msra.mxu0 %v5889
  %8488 = vmatprep.subr.bf16.mxu0 0
  %8489 = vmatpush2.bf16.msra.mxu0 %v5888
  %8490 = vmatprep.subr.bf16.mxu0 0
  %8491 = vmatpush2.bf16.msra.mxu0 %v5887
  %8492 = vmatprep.subr.bf16.mxu0 0
  %8493 = vmatpush2.bf16.msra.mxu0 %v5886
  %8494 = vmatprep.subr.bf16.mxu0 0
  %8495 = vmatpush2.bf16.msra.mxu0 %v5885
  %8496 = vmatprep.subr.bf16.mxu0 0
  %8497 = vmatpush2.bf16.msra.mxu0 %v5884
  %8498 = vmatprep.subr.bf16.mxu0 0
  %8499 = vmatpush2.bf16.msra.mxu0 %v5883
  %8500 = vmatprep.subr.bf16.mxu0 0
  %8501 = vmatpush2.bf16.msra.mxu0 %v5882
  %8502 = vmatprep.mubr.bf16.mxu0 %v2203
  %8503 = vmatmul.mubr.bf16.gmra.mxu0 %v2202
  %v8504 = vpop.f32.mrf.mxu0
  %v8505 = vadd.f32 %v8456, %v8504
  %v8506 = vpop.f32.mrf.mxu0
  %v8507 = vpop.f32.mrf.mxu0
  %v8508 = vadd.f32 %v8459, %v8507
  %v8509 = vpop.f32.mrf.mxu0
  %8510 = vmatprep.mubr.bf16.mxu0 %v2291
  %8511 = vmatmul.mubr.bf16.gmra.mxu0 %v2290
  %v8512 = vpop.f32.mrf.mxu0
  %v8513 = vadd.f32 %v8464, %v8512
  %v8514 = vpop.f32.mrf.mxu0
  %v8515 = vpop.f32.mrf.mxu0
  %v8516 = vadd.f32 %v8467, %v8515
  %v8517 = vpop.f32.mrf.mxu0
  %8518 = vdwg.mxu0
  %8519 = vmatprep.subr.bf16.mxu0 0
  %8520 = vmatpush1.bf16.msra.mxu0 %v5897
  %8521 = vmatprep.subr.bf16.mxu0 0
  %8522 = vmatpush1.bf16.msra.mxu0 %v5896
  %8523 = vmatprep.subr.bf16.mxu0 0
  %8524 = vmatpush1.bf16.msra.mxu0 %v5895
  %8525 = vmatprep.subr.bf16.mxu0 0
  %8526 = vmatpush1.bf16.msra.mxu0 %v5894
  %8527 = vmatprep.subr.bf16.mxu0 0
  %8528 = vmatpush1.bf16.msra.mxu0 %v5893
  %8529 = vmatprep.subr.bf16.mxu0 0
  %8530 = vmatpush1.bf16.msra.mxu0 %v5892
  %8531 = vmatprep.subr.bf16.mxu0 0
  %8532 = vmatpush1.bf16.msra.mxu0 %v5891
  %8533 = vmatprep.subr.bf16.mxu0 0
  %8534 = vmatpush1.bf16.msra.mxu0 %v5890
  %8535 = vmatprep.subr.bf16.mxu0 0
  %8536 = vmatpush2.bf16.msra.mxu0 %v5905
  %8537 = vmatprep.subr.bf16.mxu0 0
  %8538 = vmatpush2.bf16.msra.mxu0 %v5904
  %8539 = vmatprep.subr.bf16.mxu0 0
  %8540 = vmatpush2.bf16.msra.mxu0 %v5903
  %8541 = vmatprep.subr.bf16.mxu0 0
  %8542 = vmatpush2.bf16.msra.mxu0 %v5902
  %8543 = vmatprep.subr.bf16.mxu0 0
  %8544 = vmatpush2.bf16.msra.mxu0 %v5901
  %8545 = vmatprep.subr.bf16.mxu0 0
  %8546 = vmatpush2.bf16.msra.mxu0 %v5900
  %8547 = vmatprep.subr.bf16.mxu0 0
  %8548 = vmatpush2.bf16.msra.mxu0 %v5899
  %8549 = vmatprep.subr.bf16.mxu0 0
  %8550 = vmatpush2.bf16.msra.mxu0 %v5898
  %8551 = vmatprep.mubr.bf16.mxu0 %v2205
  %8552 = vmatmul.mubr.bf16.gmra.mxu0 %v2204
  %v8553 = vpop.f32.mrf.mxu0
  %v8554 = vadd.f32 %v8505, %v8553
  %v8555 = vpop.f32.mrf.mxu0
  %v8556 = vpop.f32.mrf.mxu0
  %v8557 = vadd.f32 %v8508, %v8556
  %v8558 = vpop.f32.mrf.mxu0
  %8559 = vmatprep.mubr.bf16.mxu0 %v2293
  %8560 = vmatmul.mubr.bf16.gmra.mxu0 %v2292
  %v8561 = vpop.f32.mrf.mxu0
  %v8562 = vadd.f32 %v8513, %v8561
  %v8563 = vpop.f32.mrf.mxu0
  %v8564 = vpop.f32.mrf.mxu0
  %v8565 = vadd.f32 %v8516, %v8564
  %v8566 = vpop.f32.mrf.mxu0
  %8567 = vdwg.mxu0
  %8568 = vmatprep.subr.bf16.mxu0 0
  %8569 = vmatpush1.bf16.msra.mxu0 %v5913
  %8570 = vmatprep.subr.bf16.mxu0 0
  %8571 = vmatpush1.bf16.msra.mxu0 %v5912
  %8572 = vmatprep.subr.bf16.mxu0 0
  %8573 = vmatpush1.bf16.msra.mxu0 %v5911
  %8574 = vmatprep.subr.bf16.mxu0 0
  %8575 = vmatpush1.bf16.msra.mxu0 %v5910
  %8576 = vmatprep.subr.bf16.mxu0 0
  %8577 = vmatpush1.bf16.msra.mxu0 %v5909
  %8578 = vmatprep.subr.bf16.mxu0 0
  %8579 = vmatpush1.bf16.msra.mxu0 %v5908
  %8580 = vmatprep.subr.bf16.mxu0 0
  %8581 = vmatpush1.bf16.msra.mxu0 %v5907
  %8582 = vmatprep.subr.bf16.mxu0 0
  %8583 = vmatpush1.bf16.msra.mxu0 %v5906
  %8584 = vmatprep.subr.bf16.mxu0 0
  %8585 = vmatpush2.bf16.msra.mxu0 %v5921
  %8586 = vmatprep.subr.bf16.mxu0 0
  %8587 = vmatpush2.bf16.msra.mxu0 %v5920
  %8588 = vmatprep.subr.bf16.mxu0 0
  %8589 = vmatpush2.bf16.msra.mxu0 %v5919
  %8590 = vmatprep.subr.bf16.mxu0 0
  %8591 = vmatpush2.bf16.msra.mxu0 %v5918
  %8592 = vmatprep.subr.bf16.mxu0 0
  %8593 = vmatpush2.bf16.msra.mxu0 %v5917
  %8594 = vmatprep.subr.bf16.mxu0 0
  %8595 = vmatpush2.bf16.msra.mxu0 %v5916
  %8596 = vmatprep.subr.bf16.mxu0 0
  %8597 = vmatpush2.bf16.msra.mxu0 %v5915
  %8598 = vmatprep.subr.bf16.mxu0 0
  %8599 = vmatpush2.bf16.msra.mxu0 %v5914
  %8600 = vmatprep.mubr.bf16.mxu0 %v2207
  %8601 = vmatmul.mubr.bf16.gmra.mxu0 %v2206
  %v8602 = vpop.f32.mrf.mxu0
  %v8603 = vadd.f32 %v8554, %v8602
  %v8604 = vpop.f32.mrf.mxu0
  %v8605 = vpop.f32.mrf.mxu0
  %v8606 = vadd.f32 %v8557, %v8605
  %v8607 = vpop.f32.mrf.mxu0
  %8608 = vmatprep.mubr.bf16.mxu0 %v2295
  %8609 = vmatmul.mubr.bf16.gmra.mxu0 %v2294
  %v8610 = vpop.f32.mrf.mxu0
  %v8611 = vadd.f32 %v8562, %v8610
  %v8612 = vpop.f32.mrf.mxu0
  %v8613 = vpop.f32.mrf.mxu0
  %v8614 = vadd.f32 %v8565, %v8613
  %v8615 = vpop.f32.mrf.mxu0
  %8616 = vdwg.mxu0
  %8617 = vmatprep.subr.bf16.mxu0 0
  %8618 = vmatpush1.bf16.msra.mxu0 %v5929
  %8619 = vmatprep.subr.bf16.mxu0 0
  %8620 = vmatpush1.bf16.msra.mxu0 %v5928
  %8621 = vmatprep.subr.bf16.mxu0 0
  %8622 = vmatpush1.bf16.msra.mxu0 %v5927
  %8623 = vmatprep.subr.bf16.mxu0 0
  %8624 = vmatpush1.bf16.msra.mxu0 %v5926
  %8625 = vmatprep.subr.bf16.mxu0 0
  %8626 = vmatpush1.bf16.msra.mxu0 %v5925
  %8627 = vmatprep.subr.bf16.mxu0 0
  %8628 = vmatpush1.bf16.msra.mxu0 %v5924
  %8629 = vmatprep.subr.bf16.mxu0 0
  %8630 = vmatpush1.bf16.msra.mxu0 %v5923
  %8631 = vmatprep.subr.bf16.mxu0 0
  %8632 = vmatpush1.bf16.msra.mxu0 %v5922
  %8633 = vmatprep.subr.bf16.mxu0 0
  %8634 = vmatpush2.bf16.msra.mxu0 %v5937
  %8635 = vmatprep.subr.bf16.mxu0 0
  %8636 = vmatpush2.bf16.msra.mxu0 %v5936
  %8637 = vmatprep.subr.bf16.mxu0 0
  %8638 = vmatpush2.bf16.msra.mxu0 %v5935
  %8639 = vmatprep.subr.bf16.mxu0 0
  %8640 = vmatpush2.bf16.msra.mxu0 %v5934
  %8641 = vmatprep.subr.bf16.mxu0 0
  %8642 = vmatpush2.bf16.msra.mxu0 %v5933
  %8643 = vmatprep.subr.bf16.mxu0 0
  %8644 = vmatpush2.bf16.msra.mxu0 %v5932
  %8645 = vmatprep.subr.bf16.mxu0 0
  %8646 = vmatpush2.bf16.msra.mxu0 %v5931
  %8647 = vmatprep.subr.bf16.mxu0 0
  %8648 = vmatpush2.bf16.msra.mxu0 %v5930
  %8649 = vmatprep.mubr.bf16.mxu0 %v2209
  %8650 = vmatmul.mubr.bf16.gmra.mxu0 %v2208
  %v8651 = vpop.f32.mrf.mxu0
  %v8652 = vadd.f32 %v8603, %v8651
  %v8653 = vpop.f32.mrf.mxu0
  %v8654 = vpop.f32.mrf.mxu0
  %v8655 = vadd.f32 %v8606, %v8654
  %v8656 = vpop.f32.mrf.mxu0
  %8657 = vmatprep.mubr.bf16.mxu0 %v2297
  %8658 = vmatmul.mubr.bf16.gmra.mxu0 %v2296
  %v8659 = vpop.f32.mrf.mxu0
  %v8660 = vadd.f32 %v8611, %v8659
  %v8661 = vpop.f32.mrf.mxu0
  %v8662 = vpop.f32.mrf.mxu0
  %v8663 = vadd.f32 %v8614, %v8662
  %v8664 = vpop.f32.mrf.mxu0
  %8665 = vdwg.mxu0
  %8666 = vmatprep.subr.bf16.mxu0 0
  %8667 = vmatpush1.bf16.msra.mxu0 %v5945
  %8668 = vmatprep.subr.bf16.mxu0 0
  %8669 = vmatpush1.bf16.msra.mxu0 %v5944
  %8670 = vmatprep.subr.bf16.mxu0 0
  %8671 = vmatpush1.bf16.msra.mxu0 %v5943
  %8672 = vmatprep.subr.bf16.mxu0 0
  %8673 = vmatpush1.bf16.msra.mxu0 %v5942
  %8674 = vmatprep.subr.bf16.mxu0 0
  %8675 = vmatpush1.bf16.msra.mxu0 %v5941
  %8676 = vmatprep.subr.bf16.mxu0 0
  %8677 = vmatpush1.bf16.msra.mxu0 %v5940
  %8678 = vmatprep.subr.bf16.mxu0 0
  %8679 = vmatpush1.bf16.msra.mxu0 %v5939
  %8680 = vmatprep.subr.bf16.mxu0 0
  %8681 = vmatpush1.bf16.msra.mxu0 %v5938
  %8682 = vmatprep.subr.bf16.mxu0 0
  %8683 = vmatpush2.bf16.msra.mxu0 %v5953
  %8684 = vmatprep.subr.bf16.mxu0 0
  %8685 = vmatpush2.bf16.msra.mxu0 %v5952
  %8686 = vmatprep.subr.bf16.mxu0 0
  %8687 = vmatpush2.bf16.msra.mxu0 %v5951
  %8688 = vmatprep.subr.bf16.mxu0 0
  %8689 = vmatpush2.bf16.msra.mxu0 %v5950
  %8690 = vmatprep.subr.bf16.mxu0 0
  %8691 = vmatpush2.bf16.msra.mxu0 %v5949
  %8692 = vmatprep.subr.bf16.mxu0 0
  %8693 = vmatpush2.bf16.msra.mxu0 %v5948
  %8694 = vmatprep.subr.bf16.mxu0 0
  %8695 = vmatpush2.bf16.msra.mxu0 %v5947
  %8696 = vmatprep.subr.bf16.mxu0 0
  %8697 = vmatpush2.bf16.msra.mxu0 %v5946
  %8698 = vmatprep.mubr.bf16.mxu0 %v2211
  %8699 = vmatmul.mubr.bf16.gmra.mxu0 %v2210
  %v8700 = vpop.f32.mrf.mxu0
  %v8701 = vadd.f32 %v8652, %v8700
  %v8702 = vpop.f32.mrf.mxu0
  %v8703 = vpop.f32.mrf.mxu0
  %v8704 = vadd.f32 %v8655, %v8703
  %v8705 = vpop.f32.mrf.mxu0
  %8706 = vmatprep.mubr.bf16.mxu0 %v2299
  %8707 = vmatmul.mubr.bf16.gmra.mxu0 %v2298
  %v8708 = vpop.f32.mrf.mxu0
  %v8709 = vadd.f32 %v8660, %v8708
  %v8710 = vpop.f32.mrf.mxu0
  %v8711 = vpop.f32.mrf.mxu0
  %v8712 = vadd.f32 %v8663, %v8711
  %v8713 = vpop.f32.mrf.mxu0
  %8714 = vdwg.mxu0
  %8715 = vmatprep.subr.bf16.mxu0 0
  %8716 = vmatpush1.bf16.msra.mxu0 %v5961
  %8717 = vmatprep.subr.bf16.mxu0 0
  %8718 = vmatpush1.bf16.msra.mxu0 %v5960
  %8719 = vmatprep.subr.bf16.mxu0 0
  %8720 = vmatpush1.bf16.msra.mxu0 %v5959
  %8721 = vmatprep.subr.bf16.mxu0 0
  %8722 = vmatpush1.bf16.msra.mxu0 %v5958
  %8723 = vmatprep.subr.bf16.mxu0 0
  %8724 = vmatpush1.bf16.msra.mxu0 %v5957
  %8725 = vmatprep.subr.bf16.mxu0 0
  %8726 = vmatpush1.bf16.msra.mxu0 %v5956
  %8727 = vmatprep.subr.bf16.mxu0 0
  %8728 = vmatpush1.bf16.msra.mxu0 %v5955
  %8729 = vmatprep.subr.bf16.mxu0 0
  %8730 = vmatpush1.bf16.msra.mxu0 %v5954
  %8731 = vmatprep.subr.bf16.mxu0 0
  %8732 = vmatpush2.bf16.msra.mxu0 %v5969
  %8733 = vmatprep.subr.bf16.mxu0 0
  %8734 = vmatpush2.bf16.msra.mxu0 %v5968
  %8735 = vmatprep.subr.bf16.mxu0 0
  %8736 = vmatpush2.bf16.msra.mxu0 %v5967
  %8737 = vmatprep.subr.bf16.mxu0 0
  %8738 = vmatpush2.bf16.msra.mxu0 %v5966
  %8739 = vmatprep.subr.bf16.mxu0 0
  %8740 = vmatpush2.bf16.msra.mxu0 %v5965
  %8741 = vmatprep.subr.bf16.mxu0 0
  %8742 = vmatpush2.bf16.msra.mxu0 %v5964
  %8743 = vmatprep.subr.bf16.mxu0 0
  %8744 = vmatpush2.bf16.msra.mxu0 %v5963
  %8745 = vmatprep.subr.bf16.mxu0 0
  %8746 = vmatpush2.bf16.msra.mxu0 %v5962
  %8747 = vmatprep.mubr.bf16.mxu0 %v2213
  %8748 = vmatmul.mubr.bf16.gmra.mxu0 %v2212
  %v8749 = vpop.f32.mrf.mxu0
  %v8750 = vadd.f32 %v8701, %v8749
  %v8751 = vpop.f32.mrf.mxu0
  %v8752 = vpop.f32.mrf.mxu0
  %v8753 = vadd.f32 %v8704, %v8752
  %v8754 = vpop.f32.mrf.mxu0
  %8755 = vmatprep.mubr.bf16.mxu0 %v2301
  %8756 = vmatmul.mubr.bf16.gmra.mxu0 %v2300
  %v8757 = vpop.f32.mrf.mxu0
  %v8758 = vadd.f32 %v8709, %v8757
  %v8759 = vpop.f32.mrf.mxu0
  %v8760 = vpop.f32.mrf.mxu0
  %v8761 = vadd.f32 %v8712, %v8760
  %v8762 = vpop.f32.mrf.mxu0
  %8763 = vdwg.mxu0
  %8764 = vmatprep.subr.bf16.mxu0 0
  %8765 = vmatpush1.bf16.msra.mxu0 %v5977
  %8766 = vmatprep.subr.bf16.mxu0 0
  %8767 = vmatpush1.bf16.msra.mxu0 %v5976
  %8768 = vmatprep.subr.bf16.mxu0 0
  %8769 = vmatpush1.bf16.msra.mxu0 %v5975
  %8770 = vmatprep.subr.bf16.mxu0 0
  %8771 = vmatpush1.bf16.msra.mxu0 %v5974
  %8772 = vmatprep.subr.bf16.mxu0 0
  %8773 = vmatpush1.bf16.msra.mxu0 %v5973
  %8774 = vmatprep.subr.bf16.mxu0 0
  %8775 = vmatpush1.bf16.msra.mxu0 %v5972
  %8776 = vmatprep.subr.bf16.mxu0 0
  %8777 = vmatpush1.bf16.msra.mxu0 %v5971
  %8778 = vmatprep.subr.bf16.mxu0 0
  %8779 = vmatpush1.bf16.msra.mxu0 %v5970
  %8780 = vmatprep.subr.bf16.mxu0 0
  %8781 = vmatpush2.bf16.msra.mxu0 %v5985
  %8782 = vmatprep.subr.bf16.mxu0 0
  %8783 = vmatpush2.bf16.msra.mxu0 %v5984
  %8784 = vmatprep.subr.bf16.mxu0 0
  %8785 = vmatpush2.bf16.msra.mxu0 %v5983
  %8786 = vmatprep.subr.bf16.mxu0 0
  %8787 = vmatpush2.bf16.msra.mxu0 %v5982
  %8788 = vmatprep.subr.bf16.mxu0 0
  %8789 = vmatpush2.bf16.msra.mxu0 %v5981
  %8790 = vmatprep.subr.bf16.mxu0 0
  %8791 = vmatpush2.bf16.msra.mxu0 %v5980
  %8792 = vmatprep.subr.bf16.mxu0 0
  %8793 = vmatpush2.bf16.msra.mxu0 %v5979
  %8794 = vmatprep.subr.bf16.mxu0 0
  %8795 = vmatpush2.bf16.msra.mxu0 %v5978
  %8796 = vmatprep.mubr.bf16.mxu0 %v2215
  %8797 = vmatmul.mubr.bf16.gmra.mxu0 %v2214
  %v8798 = vpop.f32.mrf.mxu0
  %v8799 = vadd.f32 %v8750, %v8798
  %v8800 = vpop.f32.mrf.mxu0
  %v8801 = vpop.f32.mrf.mxu0
  %v8802 = vadd.f32 %v8753, %v8801
  %v8803 = vpop.f32.mrf.mxu0
  %8804 = vmatprep.mubr.bf16.mxu0 %v2303
  %8805 = vmatmul.mubr.bf16.gmra.mxu0 %v2302
  %v8806 = vpop.f32.mrf.mxu0
  %v8807 = vadd.f32 %v8758, %v8806
  %v8808 = vpop.f32.mrf.mxu0
  %v8809 = vpop.f32.mrf.mxu0
  %v8810 = vadd.f32 %v8761, %v8809
  %v8811 = vpop.f32.mrf.mxu0
  %8812 = vdwg.mxu0
  %8813 = vmatprep.subr.bf16.mxu0 0
  %8814 = vmatpush1.bf16.msra.mxu0 %v5993
  %8815 = vmatprep.subr.bf16.mxu0 0
  %8816 = vmatpush1.bf16.msra.mxu0 %v5992
  %8817 = vmatprep.subr.bf16.mxu0 0
  %8818 = vmatpush1.bf16.msra.mxu0 %v5991
  %8819 = vmatprep.subr.bf16.mxu0 0
  %8820 = vmatpush1.bf16.msra.mxu0 %v5990
  %8821 = vmatprep.subr.bf16.mxu0 0
  %8822 = vmatpush1.bf16.msra.mxu0 %v5989
  %8823 = vmatprep.subr.bf16.mxu0 0
  %8824 = vmatpush1.bf16.msra.mxu0 %v5988
  %8825 = vmatprep.subr.bf16.mxu0 0
  %8826 = vmatpush1.bf16.msra.mxu0 %v5987
  %8827 = vmatprep.subr.bf16.mxu0 0
  %8828 = vmatpush1.bf16.msra.mxu0 %v5986
  %8829 = vmatprep.subr.bf16.mxu0 0
  %8830 = vmatpush2.bf16.msra.mxu0 %v6001
  %8831 = vmatprep.subr.bf16.mxu0 0
  %8832 = vmatpush2.bf16.msra.mxu0 %v6000
  %8833 = vmatprep.subr.bf16.mxu0 0
  %8834 = vmatpush2.bf16.msra.mxu0 %v5999
  %8835 = vmatprep.subr.bf16.mxu0 0
  %8836 = vmatpush2.bf16.msra.mxu0 %v5998
  %8837 = vmatprep.subr.bf16.mxu0 0
  %8838 = vmatpush2.bf16.msra.mxu0 %v5997
  %8839 = vmatprep.subr.bf16.mxu0 0
  %8840 = vmatpush2.bf16.msra.mxu0 %v5996
  %8841 = vmatprep.subr.bf16.mxu0 0
  %8842 = vmatpush2.bf16.msra.mxu0 %v5995
  %8843 = vmatprep.subr.bf16.mxu0 0
  %8844 = vmatpush2.bf16.msra.mxu0 %v5994
  %8845 = vmatprep.mubr.bf16.mxu0 %v2217
  %8846 = vmatmul.mubr.bf16.gmra.mxu0 %v2216
  %v8847 = vpop.f32.mrf.mxu0
  %v8848 = vadd.f32 %v8799, %v8847
  %v8849 = vpop.f32.mrf.mxu0
  %v8850 = vpop.f32.mrf.mxu0
  %v8851 = vadd.f32 %v8802, %v8850
  %v8852 = vpop.f32.mrf.mxu0
  %8853 = vmatprep.mubr.bf16.mxu0 %v2305
  %8854 = vmatmul.mubr.bf16.gmra.mxu0 %v2304
  %v8855 = vpop.f32.mrf.mxu0
  %v8856 = vadd.f32 %v8807, %v8855
  %v8857 = vpop.f32.mrf.mxu0
  %v8858 = vpop.f32.mrf.mxu0
  %v8859 = vadd.f32 %v8810, %v8858
  %v8860 = vpop.f32.mrf.mxu0
  %8861 = vdwg.mxu0
  %v8862 = vld [vmem:[%s2] sm:$0x1]
  %v8864 = vlaneseq
  %v8865 = vshrl.u32 %v8864, 7
  %v8866 = vsub.s32 0, %v8865
  %v8867 = vrot.slane %v8862, %v8866
  %v8869 = vadd.f32 %v8848, %v8867
  %v8870 = vadd.f32 %v8851, %v8867
  %v8871 = vadd.f32 %v8856, %v8867
  %v8872 = vadd.f32 %v8859, %v8867
  %v8873 = vmax.f32 %v8869, 0.0
  %v8874 = vmax.f32 %v8870, 0.0
  %v8875 = vmax.f32 %v8871, 0.0
  %v8876 = vmax.f32 %v8872, 0.0
  %v8877 = vld [vmem:[%s3] sm:$0xff]
  %v8878 = vld [vmem:[%s3 + $0x8] sm:$0xff]
  %v8879 = vld [vmem:[%s3 + $0x10] sm:$0xff]
  %v8880 = vld [vmem:[%s3 + $0x18] sm:$0xff]
  %v8881 = vsub.f32 %v8873, %v8877
  %v8882 = vsub.f32 %v8874, %v8878
  %v8883 = vsub.f32 %v8875, %v8879
  %v8884 = vsub.f32 %v8876, %v8880
  %v8885 = vadd.f32 %v8881, 1e-06
  %v8886 = vadd.f32 %v8882, 1e-06
  %v8887 = vadd.f32 %v8883, 1e-06
  %v8888 = vadd.f32 %v8884, 1e-06
  %v8889 = vmul.f32 %v8885, %v8885
  %v8890 = vmul.f32 %v8886, %v8886
  %v8891 = vmul.f32 %v8887, %v8887
  %v8892 = vmul.f32 %v8888, %v8888
  %8893 = vadd.xlane.f32.xlu0 %v8889
  %v8894 = vpop.xlane.xlu0 %8893
  %8895 = vadd.xlane.f32.xlu0 %v8890
  %v8896 = vpop.xlane.xlu0 %8895
  %8897 = vadd.xlane.f32.xlu0 %v8891
  %v8898 = vpop.xlane.xlu0 %8897
  %8899 = vadd.xlane.f32.xlu0 %v8892
  %v8900 = vpop.xlane.xlu0 %8899
  %v8905 = vlaneseq
  %v8906 = vand.u32 %v8905, 127
  %v8907 = vlaneseq
  %v8908 = vshrl.u32 %v8907, 7
  %v8909 = vsub.s32 %v8906, %v8908
  %v8910 = vrot.slane %v8894, %v8909
  %v8911 = vlaneseq
  %v8912 = vshrl.u32 %v8911, 7
  %v8913 = vsub.s32 %v8906, %v8912
  %v8914 = vrot.slane %v8896, %v8913
  %v8915 = vlaneseq
  %v8916 = vshrl.u32 %v8915, 7
  %v8917 = vsub.s32 %v8906, %v8916
  %v8918 = vrot.slane %v8898, %v8917
  %v8919 = vlaneseq
  %v8920 = vshrl.u32 %v8919, 7
  %v8921 = vsub.s32 %v8906, %v8920
  %v8922 = vrot.slane %v8900, %v8921
  %vm8923 = vcmask 1041409
  %v8924 = vsel %vm8923, %v8914, %v8910
  %vm8925 = vcmask 1042434
  %v8926 = vsel %vm8925, %v8918, %v8924
  %vm8927 = vcmask 1043459
  %v8928 = vsel %vm8927, %v8922, %v8926
  %vm8930 = vcmask 60416
  %v8931 = vsel %vm8930, %v8928, 0.0
  %8932 = vadd.xlane.f32.xlu0 %v8931
  %v8933 = vpop.xlane.xlu0 %8932
  %v8934 = vrsqrt.pop %v8933
  %v8935 = vmul.f32 %v8933, %v8934
  %vm8936 = vcmp.eq.f32.partialorder %v8933, inf
  %v8937 = vsel %vm8936, %v8933, %v8935
  %vm8938 = vcmp.eq.f32.partialorder %v8933, 0.0
  %v8939 = vand.u32 %v8933, 2147483648
  %v8940 = vsel %vm8938, %v8939, %v8937
  %vm8941 = vcmask 3072
  %8942 = vst.msk [vmem:[%s4] sm:$0xf] %vm8941, %v8940
  // Predicated region
  $region18: #{interesting_cnn_forward.1} parent=0 // pred_check
    _
  $region19: #{interesting_cnn_forward.1} parent=0 // pred_check_branch
    %8944 = sbr.rel (0) target = $region21
  $region20: #{interesting_cnn_forward.1} parent=0 // pred_region
    _
  $region21: #{interesting_cnn_forward.1} parent=0 // pred_fallthru
    _
  // Predicated region
  $region22: #{interesting_cnn_forward.1} parent=0 // pred_check
    _
  $region23: #{interesting_cnn_forward.1} parent=0 // pred_check_branch
    %8946 = sbr.rel (0) target = $region25
  $region24: #{interesting_cnn_forward.1} parent=0 // pred_region
    _
  $region25: #{interesting_cnn_forward.1} parent=0 // pred_fallthru
    _

</llo_original>
